<compile_context>
chip_gen: v7x
topology: tpu7x:2x2x1
jax: 0.10.0
libtpu: 0.0.40
codegen_flags: <defaults>
</compile_context>

<pallas_src>
import functools

import numpy as np
import jax
import jax.numpy as jnp
from jax import lax
from jax.experimental import pallas as pl
from jax.experimental.pallas import tpu as pltpu


# ----------------------------------------------------------------------------
# Pallas kernel: fully fused window attention for a block of WB windows
# ----------------------------------------------------------------------------

def _window_attention_kernel(x_ref, wqkv_ref, bqkv_ref, wproj_ref, bproj_ref,
                             bias_ref, mask_ref, o_ref, *, num_heads):
    """Shapes seen by the kernel (per grid step):
       x_ref:    (WB, N, C)   bf16 activations (q-scale already folded in wqkv)
       wqkv_ref: (C, 3C)      bf16
       bqkv_ref: (1, 3C)      f32
       wproj_ref:(C, C)       bf16
       bproj_ref:(1, C)       f32
       bias_ref: (nh, N, N)   f32 relative position bias (gathered on host)
       mask_ref: (WB, N, N)   f32 additive attention mask (zeros if mask=None)
       o_ref:    (WB, N, C)   f32
    """
    WB, N, C = x_ref.shape
    hd = C // num_heads

    # weights / biases loaded once, kept resident across the unrolled loop
    wqkv = wqkv_ref[...]
    wproj = wproj_ref[...]
    bqkv = bqkv_ref[...]
    bproj = bproj_ref[...]

    for w in range(WB):                       # static unroll over windows
        x = x_ref[w]                                                    # (N, C) bf16
        # fused qkv projection, f32 accumulation on the MXU
        qkv = jnp.dot(x, wqkv, preferred_element_type=jnp.float32) + bqkv  # (N, 3C)
        mask_w = mask_ref[w]                                            # (N, N)

        head_out = []
        for h in range(num_heads):            # static unroll over heads
            q = qkv[:, h * hd:(h + 1) * hd].astype(jnp.bfloat16)        # (N, hd)
            k = qkv[:, C + h * hd:C + (h + 1) * hd].astype(jnp.bfloat16)
            v = qkv[:, 2 * C + h * hd:2 * C + (h + 1) * hd].astype(jnp.bfloat16)

            # q @ k^T (contract head_dim) -> (N, N) attention logits in f32
            attn = lax.dot_general(q, k, (((1,), (1,)), ((), ())),
                                   preferred_element_type=jnp.float32)
            attn = attn + bias_ref[h] + mask_w

            # numerically stable softmax; denominator via EUP reciprocal
            attn = attn - jnp.max(attn, axis=-1, keepdims=True)
            p = jnp.exp(attn)
            p = p * pl.reciprocal(jnp.sum(p, axis=-1, keepdims=True), approx=True)

            head_out.append(jnp.dot(p.astype(jnp.bfloat16), v,
                                    preferred_element_type=jnp.float32))  # (N, hd)

        # concat heads -> lane-dense (N, C), then output projection
        ctx = jnp.concatenate(head_out, axis=-1).astype(jnp.bfloat16)
        y = jnp.dot(ctx, wproj, preferred_element_type=jnp.float32) + bproj
        o_ref[w] = y.astype(o_ref.dtype)


# ----------------------------------------------------------------------------
# Host-side helpers
# ----------------------------------------------------------------------------

def make_relative_position_index(Wh, Ww):
    """Exactly reproduces the buffer built in WindowAttention.__init__."""
    coords = np.stack(np.meshgrid(np.arange(Wh), np.arange(Ww), indexing="ij"))
    coords_flatten = coords.reshape(2, -1)                       # (2, N)
    rel = coords_flatten[:, :, None] - coords_flatten[:, None, :]  # (2, N, N)
    rel = rel.transpose(1, 2, 0).astype(np.int64)                # (N, N, 2)
    rel[:, :, 0] += Wh - 1
    rel[:, :, 1] += Ww - 1
    rel[:, :, 0] *= 2 * Ww - 1
    return rel.sum(-1)                                           # (N, N)


def gather_relative_position_bias(rel_table, rel_index, N, num_heads):
    flat = rel_table[jnp.asarray(rel_index.reshape(-1))]         # (N*N, nh)
    return jnp.transpose(flat.reshape(N, N, num_heads), (2, 0, 1))  # (nh, N, N)


def _pick_window_block(B_, nW, mask_given, max_wb=4):
    """Windows per grid step: must divide B_ (and nW when a mask is used)."""
    for cand in (4, 2, 1):
        if cand > max_wb:
            continue
        if B_ % cand == 0 and (not mask_given or nW % cand == 0):
            return cand
    return 1


def window_attention_forward(x, params, rel_index, *, num_heads, mask=None):
    """Pallas forward matching WindowAttention.forward (eval mode).

    x: (B_, N, C) f32, mask: (nW, N, N) additive 0/-100 mask or None.
    Returns (B_, N, C) f32.
    """
    B_, N, C = x.shape
    assert C % num_heads == 0
    hd = C // num_heads
    scale = hd ** -0.5

    nW = int(mask.shape[0]) if mask is not None else 1
    if mask is not None:
        assert B_ % nW == 0
    WB = _pick_window_block(B_, nW, mask is not None)
    grid = (B_ // WB,)

    # ---- host-side folding (one-time, tiny) ----
    # fold the q scale into the q columns of the qkv projection
    col_scale = jnp.concatenate([jnp.full((C,), scale, jnp.float32),
                                 jnp.ones((2 * C,), jnp.float32)])
    wqkv = (params['wqkv'] * col_scale[None, :]).astype(jnp.bfloat16)
    bqkv = (params['bqkv'] * col_scale).reshape(1, 3 * C).astype(jnp.float32)
    wproj = params['wproj'].astype(jnp.bfloat16)
    bproj = params['bproj'].reshape(1, C).astype(jnp.float32)

    # relative position bias gathered once with the static index
    rel_bias = gather_relative_position_bias(params['rel_table'], rel_index,
                                             N, num_heads)       # (nh, N, N) f32

    if mask is not None:
        mask_arr = mask.astype(jnp.float32)                      # (nW, N, N)
        n_mask_blocks = nW // WB
        mask_index = lambda i: (i % n_mask_blocks, 0, 0)
    else:
        mask_arr = jnp.zeros((WB, N, N), jnp.float32)
        mask_index = lambda i: (0, 0, 0)

    x_bf = x.astype(jnp.bfloat16)

    kernel = functools.partial(_window_attention_kernel, num_heads=num_heads)
    return pl.pallas_call(
        kernel,
        out_shape=jax.ShapeDtypeStruct((B_, N, C), jnp.float32),
        grid=grid,
        in_specs=[
            pl.BlockSpec((WB, N, C), lambda i: (i, 0, 0)),        # x
            pl.BlockSpec((C, 3 * C), lambda i: (0, 0)),           # wqkv
            pl.BlockSpec((1, 3 * C), lambda i: (0, 0)),           # bqkv
            pl.BlockSpec((C, C), lambda i: (0, 0)),               # wproj
            pl.BlockSpec((1, C), lambda i: (0, 0)),               # bproj
            pl.BlockSpec((num_heads, N, N), lambda i: (0, 0, 0)), # rel-pos bias
            pl.BlockSpec((WB, N, N), mask_index),                 # attention mask
        ],
        out_specs=pl.BlockSpec((WB, N, C), lambda i: (i, 0, 0)),
        compiler_params=pltpu.CompilerParams(
            dimension_semantics=("parallel",)),
    )(x_bf, wqkv, bqkv, wproj, bproj, rel_bias, mask_arr)


# ----------------------------------------------------------------------------
# Pure-JAX f32 reference (mirrors the PyTorch forward, eval mode)
# ----------------------------------------------------------------------------

def window_attention_reference(x, params, rel_index, *, num_heads, mask=None):
    B_, N, C = x.shape
    hd = C // num_heads
    scale = hd ** -0.5
    qkv = x @ params['wqkv'] + params['bqkv']
    qkv = jnp.transpose(qkv.reshape(B_, N, 3, num_heads, hd), (2, 0, 3, 1, 4))
    q, k, v = qkv[0] * scale, qkv[1], qkv[2]
    attn = jnp.einsum('bhqd,bhkd->bhqk', q, k)
    rel_bias = gather_relative_position_bias(params['rel_table'], rel_index,
                                             N, num_heads)
    attn = attn + rel_bias[None]
    if mask is not None:
        nW = mask.shape[0]
        attn = attn.reshape(B_ // nW, nW, num_heads, N, N) + mask[None, :, None]
        attn = attn.reshape(B_, num_heads, N, N)
    attn = jax.nn.softmax(attn, axis=-1)
    out = jnp.einsum('bhqk,bhkd->bhqd', attn, v)
    out = jnp.transpose(out, (0, 2, 1, 3)).reshape(B_, N, C)
    return out @ params['wproj'] + params['bproj']


# ----------------------------------------------------------------------------
# Deterministic synthetic parameters / mask
# ----------------------------------------------------------------------------

def init_params(key, dim, window_size, num_heads):
    k1, k2, k3, k4, k5 = jax.random.split(key, 5)
    table_size = (2 * window_size[0] - 1) * (2 * window_size[1] - 1)
    return dict(
        wqkv=jax.random.normal(k1, (dim, 3 * dim), jnp.float32) * (dim ** -0.5),
        bqkv=jax.random.normal(k2, (3 * dim,), jnp.float32) * 0.02,
        wproj=jax.random.normal(k3, (dim, dim), jnp.float32) * (dim ** -0.5),
        bproj=jax.random.normal(k4, (dim,), jnp.float32) * 0.02,
        # truncated-normal table (larger std than 0.02 so the bias path is
        # actually exercised by the numeric check; init scale is not semantics)
        rel_table=jax.random.truncated_normal(
            k5, -2.0, 2.0, (table_size, num_heads), jnp.float32) * 0.5,
    )


def make_attention_mask(nW, N):
    """Deterministic shifted-window-style additive mask (0 / -100)."""
    masks = []
    for w in range(nW):
        groups = (np.arange(N) * (w + 1)) // N        # w+1 token groups
        m = np.where(groups[:, None] == groups[None, :], 0.0, -100.0)
        masks.append(m.astype(np.float32))
    return jnp.asarray(np.stack(masks))               # (nW, N, N)


# ----------------------------------------------------------------------------
# main
# ----------------------------------------------------------------------------

if __name__ == "__main__":
    key = jax.random.PRNGKey(0)

    dim = 128                      # lane-dense channel dim
    num_heads = 4                  # head_dim = 32
    window_size = (8, 8)
    N = window_size[0] * window_size[1]   # 64 tokens per window
    B, nW = 2, 4                   # 2 images, 4 windows each
    B_ = B * nW                    # 8 windows total

    kx, kp = jax.random.split(key)
    x = jax.random.normal(kx, (B_, N, dim), jnp.float32)
    params = init_params(kp, dim, window_size, num_heads)
    rel_index = make_relative_position_index(*window_size)
    mask = make_attention_mask(nW, N)

    # shifted-window (masked) and plain paths
    out_masked = window_attention_forward(x, params, rel_index,
                                          num_heads=num_heads, mask=mask)
    out_plain = window_attention_forward(x, params, rel_index,
                                         num_heads=num_heads, mask=None)
    jax.block_until_ready(out_masked)
    jax.block_until_ready(out_plain)

    ref_masked = window_attention_reference(x, params, rel_index,
                                            num_heads=num_heads, mask=mask)
    ref_plain = window_attention_reference(x, params, rel_index,
                                           num_heads=num_heads, mask=None)

    assert out_masked.shape == (B_, N, dim)
    assert out_plain.shape == (B_, N, dim)

    err_max_m = float(jnp.max(jnp.abs(out_masked - ref_masked)))
    err_max_p = float(jnp.max(jnp.abs(out_plain - ref_plain)))
    err_mean_m = float(jnp.mean(jnp.abs(out_masked - ref_masked)))
    err_mean_p = float(jnp.mean(jnp.abs(out_plain - ref_plain)))
    # bf16 MXU inputs with f32 accumulation -> small drift vs the f32 reference
    assert err_max_m < 2e-1 and err_max_p < 2e-1, (err_max_m, err_max_p)
    assert err_mean_m < 2e-2 and err_mean_p < 2e-2, (err_mean_m, err_mean_p)

    print("KERNEL_OK")
</pallas_src>

<mosaic_0001>
module attributes {stable_mosaic.version = 11 : i64} {
  func.func @_window_attention_kernel(%arg0: i32, %arg1: memref<4x64x128xbf16, #tpu.memory_space<vmem>>, %arg2: memref<128x384xbf16, #tpu.memory_space<vmem>>, %arg3: memref<1x384xf32, #tpu.memory_space<vmem>>, %arg4: memref<128x128xbf16, #tpu.memory_space<vmem>>, %arg5: memref<1x128xf32, #tpu.memory_space<vmem>>, %arg6: memref<4x64x64xf32, #tpu.memory_space<vmem>>, %arg7: memref<4x64x64xf32, #tpu.memory_space<vmem>>, %arg8: memref<4x64x128xf32, #tpu.memory_space<vmem>>) attributes {dimension_semantics = [#tpu.dimension_semantics<parallel>], iteration_bounds = array<i64: 2>, scalar_prefetch = 0 : i64, scratch_operands = 0 : i64, tpu.core_type = #tpu.core_type<tc>, window_params = [{transform_indices = @transform_0, window_bounds = array<i64: 4, 64, 128>}, {pipeline_mode = #tpu.pipeline_mode<synchronous>, transform_indices = @transform_1, window_bounds = array<i64: 128, 384>}, {pipeline_mode = #tpu.pipeline_mode<synchronous>, transform_indices = @transform_2, window_bounds = array<i64: 1, 384>}, {pipeline_mode = #tpu.pipeline_mode<synchronous>, transform_indices = @transform_3, window_bounds = array<i64: 128, 128>}, {pipeline_mode = #tpu.pipeline_mode<synchronous>, transform_indices = @transform_4, window_bounds = array<i64: 1, 128>}, {pipeline_mode = #tpu.pipeline_mode<synchronous>, transform_indices = @transform_5, window_bounds = array<i64: 4, 64, 64>}, {transform_indices = @transform_6, window_bounds = array<i64: 4, 64, 64>}, {transform_indices = @transform_7, window_bounds = array<i64: 4, 64, 128>}]} {
    %c0 = arith.constant 0 : index
    %c0_0 = arith.constant 0 : index
    %0 = vector.load %arg2[%c0, %c0_0] : memref<128x384xbf16, #tpu.memory_space<vmem>>, vector<128x384xbf16>
    %c0_1 = arith.constant 0 : index
    %c0_2 = arith.constant 0 : index
    %1 = vector.load %arg4[%c0_1, %c0_2] : memref<128x128xbf16, #tpu.memory_space<vmem>>, vector<128x128xbf16>
    %c0_3 = arith.constant 0 : index
    %c0_4 = arith.constant 0 : index
    %2 = vector.load %arg3[%c0_3, %c0_4] : memref<1x384xf32, #tpu.memory_space<vmem>>, vector<1x384xf32>
    %c0_5 = arith.constant 0 : index
    %c0_6 = arith.constant 0 : index
    %3 = vector.load %arg5[%c0_5, %c0_6] : memref<1x128xf32, #tpu.memory_space<vmem>>, vector<1x128xf32>
    %c0_7 = arith.constant 0 : index
    %c0_8 = arith.constant 0 : index
    %c0_9 = arith.constant 0 : index
    %4 = vector.load %arg1[%c0_7, %c0_8, %c0_9] : memref<4x64x128xbf16, #tpu.memory_space<vmem>>, vector<1x64x128xbf16>
    %5 = vector.shape_cast %4 : vector<1x64x128xbf16> to vector<64x128xbf16>
    %cst = arith.constant dense<0.000000e+00> : vector<64x384xf32>
    %6 = tpu.matmul %5, %0, %cst {dimension_numbers = #tpu.dot_dimension_numbers<[1], [0], [0], [1], [0, 0, 1, 1], [], []>} : vector<64x128xbf16>, vector<128x384xbf16>, vector<64x384xf32> -> vector<64x384xf32>
    %7 = vector.broadcast %2 : vector<1x384xf32> to vector<64x384xf32>
    %8 = arith.addf %6, %7 : vector<64x384xf32>
    %c0_10 = arith.constant 0 : index
    %c0_11 = arith.constant 0 : index
    %c0_12 = arith.constant 0 : index
    %9 = vector.load %arg7[%c0_10, %c0_11, %c0_12] : memref<4x64x64xf32, #tpu.memory_space<vmem>>, vector<1x64x64xf32>
    %10 = vector.shape_cast %9 : vector<1x64x64xf32> to vector<64x64xf32>
    %11 = vector.extract_strided_slice %8 {offsets = [0, 0], sizes = [64, 32], strides = [1, 1]} : vector<64x384xf32> to vector<64x32xf32>
    %12 = arith.truncf %11 : vector<64x32xf32> to vector<64x32xbf16>
    %13 = vector.extract_strided_slice %8 {offsets = [0, 128], sizes = [64, 32], strides = [1, 1]} : vector<64x384xf32> to vector<64x32xf32>
    %14 = arith.truncf %13 : vector<64x32xf32> to vector<64x32xbf16>
    %15 = vector.extract_strided_slice %8 {offsets = [0, 256], sizes = [64, 32], strides = [1, 1]} : vector<64x384xf32> to vector<64x32xf32>
    %16 = arith.truncf %15 : vector<64x32xf32> to vector<64x32xbf16>
    %cst_13 = arith.constant dense<0.000000e+00> : vector<64x64xf32>
    %17 = tpu.matmul %12, %14, %cst_13 {dimension_numbers = #tpu.dot_dimension_numbers<[1], [1], [0], [0], [0, 0, 1, 0], [], []>} : vector<64x32xbf16>, vector<64x32xbf16>, vector<64x64xf32> -> vector<64x64xf32>
    %c0_14 = arith.constant 0 : index
    %c0_15 = arith.constant 0 : index
    %c0_16 = arith.constant 0 : index
    %18 = vector.load %arg6[%c0_14, %c0_15, %c0_16] : memref<4x64x64xf32, #tpu.memory_space<vmem>>, vector<1x64x64xf32>
    %19 = vector.shape_cast %18 : vector<1x64x64xf32> to vector<64x64xf32>
    %20 = arith.addf %17, %19 : vector<64x64xf32>
    %21 = arith.addf %20, %10 : vector<64x64xf32>
    %cst_17 = arith.constant dense<0xFF800000> : vector<64xf32>
    %22 = vector.multi_reduction <maximumf>, %21, %cst_17 [1] : vector<64x64xf32> to vector<64xf32>
    %23 = vector.shape_cast %22 : vector<64xf32> to vector<64x1xf32>
    %24 = vector.broadcast %23 : vector<64x1xf32> to vector<64x64xf32>
    %25 = arith.subf %21, %24 : vector<64x64xf32>
    %26 = math.exp %25 : vector<64x64xf32>
    %cst_18 = arith.constant dense<0.000000e+00> : vector<64xf32>
    %27 = vector.multi_reduction <add>, %26, %cst_18 [1] : vector<64x64xf32> to vector<64xf32>
    %28 = vector.shape_cast %27 : vector<64xf32> to vector<64x1xf32>
    %29 = tpu.reciprocal %28 {approx = true} : vector<64x1xf32> -> vector<64x1xf32>
    %30 = vector.broadcast %29 : vector<64x1xf32> to vector<64x64xf32>
    %31 = arith.mulf %26, %30 : vector<64x64xf32>
    %32 = arith.truncf %31 : vector<64x64xf32> to vector<64x64xbf16>
    %cst_19 = arith.constant dense<0.000000e+00> : vector<64x32xf32>
    %33 = tpu.matmul %32, %16, %cst_19 {dimension_numbers = #tpu.dot_dimension_numbers<[1], [0], [0], [1], [0, 0, 1, 1], [], []>} : vector<64x64xbf16>, vector<64x32xbf16>, vector<64x32xf32> -> vector<64x32xf32>
    %34 = vector.extract_strided_slice %8 {offsets = [0, 32], sizes = [64, 32], strides = [1, 1]} : vector<64x384xf32> to vector<64x32xf32>
    %35 = arith.truncf %34 : vector<64x32xf32> to vector<64x32xbf16>
    %36 = vector.extract_strided_slice %8 {offsets = [0, 160], sizes = [64, 32], strides = [1, 1]} : vector<64x384xf32> to vector<64x32xf32>
    %37 = arith.truncf %36 : vector<64x32xf32> to vector<64x32xbf16>
    %38 = vector.extract_strided_slice %8 {offsets = [0, 288], sizes = [64, 32], strides = [1, 1]} : vector<64x384xf32> to vector<64x32xf32>
    %39 = arith.truncf %38 : vector<64x32xf32> to vector<64x32xbf16>
    %cst_20 = arith.constant dense<0.000000e+00> : vector<64x64xf32>
    %40 = tpu.matmul %35, %37, %cst_20 {dimension_numbers = #tpu.dot_dimension_numbers<[1], [1], [0], [0], [0, 0, 1, 0], [], []>} : vector<64x32xbf16>, vector<64x32xbf16>, vector<64x64xf32> -> vector<64x64xf32>
    %c1 = arith.constant 1 : index
    %c0_21 = arith.constant 0 : index
    %c0_22 = arith.constant 0 : index
    %41 = vector.load %arg6[%c1, %c0_21, %c0_22] : memref<4x64x64xf32, #tpu.memory_space<vmem>>, vector<1x64x64xf32>
    %42 = vector.shape_cast %41 : vector<1x64x64xf32> to vector<64x64xf32>
    %43 = arith.addf %40, %42 : vector<64x64xf32>
    %44 = arith.addf %43, %10 : vector<64x64xf32>
    %cst_23 = arith.constant dense<0xFF800000> : vector<64xf32>
    %45 = vector.multi_reduction <maximumf>, %44, %cst_23 [1] : vector<64x64xf32> to vector<64xf32>
    %46 = vector.shape_cast %45 : vector<64xf32> to vector<64x1xf32>
    %47 = vector.broadcast %46 : vector<64x1xf32> to vector<64x64xf32>
    %48 = arith.subf %44, %47 : vector<64x64xf32>
    %49 = math.exp %48 : vector<64x64xf32>
    %cst_24 = arith.constant dense<0.000000e+00> : vector<64xf32>
    %50 = vector.multi_reduction <add>, %49, %cst_24 [1] : vector<64x64xf32> to vector<64xf32>
    %51 = vector.shape_cast %50 : vector<64xf32> to vector<64x1xf32>
    %52 = tpu.reciprocal %51 {approx = true} : vector<64x1xf32> -> vector<64x1xf32>
    %53 = vector.broadcast %52 : vector<64x1xf32> to vector<64x64xf32>
    %54 = arith.mulf %49, %53 : vector<64x64xf32>
    %55 = arith.truncf %54 : vector<64x64xf32> to vector<64x64xbf16>
    %cst_25 = arith.constant dense<0.000000e+00> : vector<64x32xf32>
    %56 = tpu.matmul %55, %39, %cst_25 {dimension_numbers = #tpu.dot_dimension_numbers<[1], [0], [0], [1], [0, 0, 1, 1], [], []>} : vector<64x64xbf16>, vector<64x32xbf16>, vector<64x32xf32> -> vector<64x32xf32>
    %57 = vector.extract_strided_slice %8 {offsets = [0, 64], sizes = [64, 32], strides = [1, 1]} : vector<64x384xf32> to vector<64x32xf32>
    %58 = arith.truncf %57 : vector<64x32xf32> to vector<64x32xbf16>
    %59 = vector.extract_strided_slice %8 {offsets = [0, 192], sizes = [64, 32], strides = [1, 1]} : vector<64x384xf32> to vector<64x32xf32>
    %60 = arith.truncf %59 : vector<64x32xf32> to vector<64x32xbf16>
    %61 = vector.extract_strided_slice %8 {offsets = [0, 320], sizes = [64, 32], strides = [1, 1]} : vector<64x384xf32> to vector<64x32xf32>
    %62 = arith.truncf %61 : vector<64x32xf32> to vector<64x32xbf16>
    %cst_26 = arith.constant dense<0.000000e+00> : vector<64x64xf32>
    %63 = tpu.matmul %58, %60, %cst_26 {dimension_numbers = #tpu.dot_dimension_numbers<[1], [1], [0], [0], [0, 0, 1, 0], [], []>} : vector<64x32xbf16>, vector<64x32xbf16>, vector<64x64xf32> -> vector<64x64xf32>
    %c2 = arith.constant 2 : index
    %c0_27 = arith.constant 0 : index
    %c0_28 = arith.constant 0 : index
    %64 = vector.load %arg6[%c2, %c0_27, %c0_28] : memref<4x64x64xf32, #tpu.memory_space<vmem>>, vector<1x64x64xf32>
    %65 = vector.shape_cast %64 : vector<1x64x64xf32> to vector<64x64xf32>
    %66 = arith.addf %63, %65 : vector<64x64xf32>
    %67 = arith.addf %66, %10 : vector<64x64xf32>
    %cst_29 = arith.constant dense<0xFF800000> : vector<64xf32>
    %68 = vector.multi_reduction <maximumf>, %67, %cst_29 [1] : vector<64x64xf32> to vector<64xf32>
    %69 = vector.shape_cast %68 : vector<64xf32> to vector<64x1xf32>
    %70 = vector.broadcast %69 : vector<64x1xf32> to vector<64x64xf32>
    %71 = arith.subf %67, %70 : vector<64x64xf32>
    %72 = math.exp %71 : vector<64x64xf32>
    %cst_30 = arith.constant dense<0.000000e+00> : vector<64xf32>
    %73 = vector.multi_reduction <add>, %72, %cst_30 [1] : vector<64x64xf32> to vector<64xf32>
    %74 = vector.shape_cast %73 : vector<64xf32> to vector<64x1xf32>
    %75 = tpu.reciprocal %74 {approx = true} : vector<64x1xf32> -> vector<64x1xf32>
    %76 = vector.broadcast %75 : vector<64x1xf32> to vector<64x64xf32>
    %77 = arith.mulf %72, %76 : vector<64x64xf32>
    %78 = arith.truncf %77 : vector<64x64xf32> to vector<64x64xbf16>
    %cst_31 = arith.constant dense<0.000000e+00> : vector<64x32xf32>
    %79 = tpu.matmul %78, %62, %cst_31 {dimension_numbers = #tpu.dot_dimension_numbers<[1], [0], [0], [1], [0, 0, 1, 1], [], []>} : vector<64x64xbf16>, vector<64x32xbf16>, vector<64x32xf32> -> vector<64x32xf32>
    %80 = vector.extract_strided_slice %8 {offsets = [0, 96], sizes = [64, 32], strides = [1, 1]} : vector<64x384xf32> to vector<64x32xf32>
    %81 = arith.truncf %80 : vector<64x32xf32> to vector<64x32xbf16>
    %82 = vector.extract_strided_slice %8 {offsets = [0, 224], sizes = [64, 32], strides = [1, 1]} : vector<64x384xf32> to vector<64x32xf32>
    %83 = arith.truncf %82 : vector<64x32xf32> to vector<64x32xbf16>
    %84 = vector.extract_strided_slice %8 {offsets = [0, 352], sizes = [64, 32], strides = [1, 1]} : vector<64x384xf32> to vector<64x32xf32>
    %85 = arith.truncf %84 : vector<64x32xf32> to vector<64x32xbf16>
    %cst_32 = arith.constant dense<0.000000e+00> : vector<64x64xf32>
    %86 = tpu.matmul %81, %83, %cst_32 {dimension_numbers = #tpu.dot_dimension_numbers<[1], [1], [0], [0], [0, 0, 1, 0], [], []>} : vector<64x32xbf16>, vector<64x32xbf16>, vector<64x64xf32> -> vector<64x64xf32>
    %c3 = arith.constant 3 : index
    %c0_33 = arith.constant 0 : index
    %c0_34 = arith.constant 0 : index
    %87 = vector.load %arg6[%c3, %c0_33, %c0_34] : memref<4x64x64xf32, #tpu.memory_space<vmem>>, vector<1x64x64xf32>
    %88 = vector.shape_cast %87 : vector<1x64x64xf32> to vector<64x64xf32>
    %89 = arith.addf %86, %88 : vector<64x64xf32>
    %90 = arith.addf %89, %10 : vector<64x64xf32>
    %cst_35 = arith.constant dense<0xFF800000> : vector<64xf32>
    %91 = vector.multi_reduction <maximumf>, %90, %cst_35 [1] : vector<64x64xf32> to vector<64xf32>
    %92 = vector.shape_cast %91 : vector<64xf32> to vector<64x1xf32>
    %93 = vector.broadcast %92 : vector<64x1xf32> to vector<64x64xf32>
    %94 = arith.subf %90, %93 : vector<64x64xf32>
    %95 = math.exp %94 : vector<64x64xf32>
    %cst_36 = arith.constant dense<0.000000e+00> : vector<64xf32>
    %96 = vector.multi_reduction <add>, %95, %cst_36 [1] : vector<64x64xf32> to vector<64xf32>
    %97 = vector.shape_cast %96 : vector<64xf32> to vector<64x1xf32>
    %98 = tpu.reciprocal %97 {approx = true} : vector<64x1xf32> -> vector<64x1xf32>
    %99 = vector.broadcast %98 : vector<64x1xf32> to vector<64x64xf32>
    %100 = arith.mulf %95, %99 : vector<64x64xf32>
    %101 = arith.truncf %100 : vector<64x64xf32> to vector<64x64xbf16>
    %cst_37 = arith.constant dense<0.000000e+00> : vector<64x32xf32>
    %102 = tpu.matmul %101, %85, %cst_37 {dimension_numbers = #tpu.dot_dimension_numbers<[1], [0], [0], [1], [0, 0, 1, 1], [], []>} : vector<64x64xbf16>, vector<64x32xbf16>, vector<64x32xf32> -> vector<64x32xf32>
    %103 = tpu.concatenate %33, %56, %79, %102 in 1 : vector<64x32xf32>, vector<64x32xf32>, vector<64x32xf32>, vector<64x32xf32> -> vector<64x128xf32>
    %104 = arith.truncf %103 : vector<64x128xf32> to vector<64x128xbf16>
    %cst_38 = arith.constant dense<0.000000e+00> : vector<64x128xf32>
    %105 = tpu.matmul %104, %1, %cst_38 {dimension_numbers = #tpu.dot_dimension_numbers<[1], [0], [0], [1], [0, 0, 1, 1], [], []>} : vector<64x128xbf16>, vector<128x128xbf16>, vector<64x128xf32> -> vector<64x128xf32>
    %106 = vector.broadcast %3 : vector<1x128xf32> to vector<64x128xf32>
    %107 = arith.addf %105, %106 : vector<64x128xf32>
    %c0_39 = arith.constant 0 : index
    %c0_40 = arith.constant 0 : index
    %c0_41 = arith.constant 0 : index
    %108 = vector.load %arg8[%c0_39, %c0_40, %c0_41] : memref<4x64x128xf32, #tpu.memory_space<vmem>>, vector<1x64x128xf32>
    %109 = vector.shape_cast %108 : vector<1x64x128xf32> to vector<64x128xf32>
    %110 = vector.shape_cast %107 : vector<64x128xf32> to vector<1x64x128xf32>
    tpu.vector_store %arg8[%c0_39, %c0_40, %c0_41], %110 {strides = array<i32>} : memref<4x64x128xf32, #tpu.memory_space<vmem>>, vector<1x64x128xf32>,
    %c1_42 = arith.constant 1 : index
    %c0_43 = arith.constant 0 : index
    %c0_44 = arith.constant 0 : index
    %111 = vector.load %arg1[%c1_42, %c0_43, %c0_44] : memref<4x64x128xbf16, #tpu.memory_space<vmem>>, vector<1x64x128xbf16>
    %112 = vector.shape_cast %111 : vector<1x64x128xbf16> to vector<64x128xbf16>
    %cst_45 = arith.constant dense<0.000000e+00> : vector<64x384xf32>
    %113 = tpu.matmul %112, %0, %cst_45 {dimension_numbers = #tpu.dot_dimension_numbers<[1], [0], [0], [1], [0, 0, 1, 1], [], []>} : vector<64x128xbf16>, vector<128x384xbf16>, vector<64x384xf32> -> vector<64x384xf32>
    %114 = vector.broadcast %2 : vector<1x384xf32> to vector<64x384xf32>
    %115 = arith.addf %113, %114 : vector<64x384xf32>
    %c1_46 = arith.constant 1 : index
    %c0_47 = arith.constant 0 : index
    %c0_48 = arith.constant 0 : index
    %116 = vector.load %arg7[%c1_46, %c0_47, %c0_48] : memref<4x64x64xf32, #tpu.memory_space<vmem>>, vector<1x64x64xf32>
    %117 = vector.shape_cast %116 : vector<1x64x64xf32> to vector<64x64xf32>
    %118 = vector.extract_strided_slice %115 {offsets = [0, 0], sizes = [64, 32], strides = [1, 1]} : vector<64x384xf32> to vector<64x32xf32>
    %119 = arith.truncf %118 : vector<64x32xf32> to vector<64x32xbf16>
    %120 = vector.extract_strided_slice %115 {offsets = [0, 128], sizes = [64, 32], strides = [1, 1]} : vector<64x384xf32> to vector<64x32xf32>
    %121 = arith.truncf %120 : vector<64x32xf32> to vector<64x32xbf16>
    %122 = vector.extract_strided_slice %115 {offsets = [0, 256], sizes = [64, 32], strides = [1, 1]} : vector<64x384xf32> to vector<64x32xf32>
    %123 = arith.truncf %122 : vector<64x32xf32> to vector<64x32xbf16>
    %cst_49 = arith.constant dense<0.000000e+00> : vector<64x64xf32>
    %124 = tpu.matmul %119, %121, %cst_49 {dimension_numbers = #tpu.dot_dimension_numbers<[1], [1], [0], [0], [0, 0, 1, 0], [], []>} : vector<64x32xbf16>, vector<64x32xbf16>, vector<64x64xf32> -> vector<64x64xf32>
    %c0_50 = arith.constant 0 : index
    %c0_51 = arith.constant 0 : index
    %c0_52 = arith.constant 0 : index
    %125 = vector.load %arg6[%c0_50, %c0_51, %c0_52] : memref<4x64x64xf32, #tpu.memory_space<vmem>>, vector<1x64x64xf32>
    %126 = vector.shape_cast %125 : vector<1x64x64xf32> to vector<64x64xf32>
    %127 = arith.addf %124, %126 : vector<64x64xf32>
    %128 = arith.addf %127, %117 : vector<64x64xf32>
    %cst_53 = arith.constant dense<0xFF800000> : vector<64xf32>
    %129 = vector.multi_reduction <maximumf>, %128, %cst_53 [1] : vector<64x64xf32> to vector<64xf32>
    %130 = vector.shape_cast %129 : vector<64xf32> to vector<64x1xf32>
    %131 = vector.broadcast %130 : vector<64x1xf32> to vector<64x64xf32>
    %132 = arith.subf %128, %131 : vector<64x64xf32>
    %133 = math.exp %132 : vector<64x64xf32>
    %cst_54 = arith.constant dense<0.000000e+00> : vector<64xf32>
    %134 = vector.multi_reduction <add>, %133, %cst_54 [1] : vector<64x64xf32> to vector<64xf32>
    %135 = vector.shape_cast %134 : vector<64xf32> to vector<64x1xf32>
    %136 = tpu.reciprocal %135 {approx = true} : vector<64x1xf32> -> vector<64x1xf32>
    %137 = vector.broadcast %136 : vector<64x1xf32> to vector<64x64xf32>
    %138 = arith.mulf %133, %137 : vector<64x64xf32>
    %139 = arith.truncf %138 : vector<64x64xf32> to vector<64x64xbf16>
    %cst_55 = arith.constant dense<0.000000e+00> : vector<64x32xf32>
    %140 = tpu.matmul %139, %123, %cst_55 {dimension_numbers = #tpu.dot_dimension_numbers<[1], [0], [0], [1], [0, 0, 1, 1], [], []>} : vector<64x64xbf16>, vector<64x32xbf16>, vector<64x32xf32> -> vector<64x32xf32>
    %141 = vector.extract_strided_slice %115 {offsets = [0, 32], sizes = [64, 32], strides = [1, 1]} : vector<64x384xf32> to vector<64x32xf32>
    %142 = arith.truncf %141 : vector<64x32xf32> to vector<64x32xbf16>
    %143 = vector.extract_strided_slice %115 {offsets = [0, 160], sizes = [64, 32], strides = [1, 1]} : vector<64x384xf32> to vector<64x32xf32>
    %144 = arith.truncf %143 : vector<64x32xf32> to vector<64x32xbf16>
    %145 = vector.extract_strided_slice %115 {offsets = [0, 288], sizes = [64, 32], strides = [1, 1]} : vector<64x384xf32> to vector<64x32xf32>
    %146 = arith.truncf %145 : vector<64x32xf32> to vector<64x32xbf16>
    %cst_56 = arith.constant dense<0.000000e+00> : vector<64x64xf32>
    %147 = tpu.matmul %142, %144, %cst_56 {dimension_numbers = #tpu.dot_dimension_numbers<[1], [1], [0], [0], [0, 0, 1, 0], [], []>} : vector<64x32xbf16>, vector<64x32xbf16>, vector<64x64xf32> -> vector<64x64xf32>
    %c1_57 = arith.constant 1 : index
    %c0_58 = arith.constant 0 : index
    %c0_59 = arith.constant 0 : index
    %148 = vector.load %arg6[%c1_57, %c0_58, %c0_59] : memref<4x64x64xf32, #tpu.memory_space<vmem>>, vector<1x64x64xf32>
    %149 = vector.shape_cast %148 : vector<1x64x64xf32> to vector<64x64xf32>
    %150 = arith.addf %147, %149 : vector<64x64xf32>
    %151 = arith.addf %150, %117 : vector<64x64xf32>
    %cst_60 = arith.constant dense<0xFF800000> : vector<64xf32>
    %152 = vector.multi_reduction <maximumf>, %151, %cst_60 [1] : vector<64x64xf32> to vector<64xf32>
    %153 = vector.shape_cast %152 : vector<64xf32> to vector<64x1xf32>
    %154 = vector.broadcast %153 : vector<64x1xf32> to vector<64x64xf32>
    %155 = arith.subf %151, %154 : vector<64x64xf32>
    %156 = math.exp %155 : vector<64x64xf32>
    %cst_61 = arith.constant dense<0.000000e+00> : vector<64xf32>
    %157 = vector.multi_reduction <add>, %156, %cst_61 [1] : vector<64x64xf32> to vector<64xf32>
    %158 = vector.shape_cast %157 : vector<64xf32> to vector<64x1xf32>
    %159 = tpu.reciprocal %158 {approx = true} : vector<64x1xf32> -> vector<64x1xf32>
    %160 = vector.broadcast %159 : vector<64x1xf32> to vector<64x64xf32>
    %161 = arith.mulf %156, %160 : vector<64x64xf32>
    %162 = arith.truncf %161 : vector<64x64xf32> to vector<64x64xbf16>
    %cst_62 = arith.constant dense<0.000000e+00> : vector<64x32xf32>
    %163 = tpu.matmul %162, %146, %cst_62 {dimension_numbers = #tpu.dot_dimension_numbers<[1], [0], [0], [1], [0, 0, 1, 1], [], []>} : vector<64x64xbf16>, vector<64x32xbf16>, vector<64x32xf32> -> vector<64x32xf32>
    %164 = vector.extract_strided_slice %115 {offsets = [0, 64], sizes = [64, 32], strides = [1, 1]} : vector<64x384xf32> to vector<64x32xf32>
    %165 = arith.truncf %164 : vector<64x32xf32> to vector<64x32xbf16>
    %166 = vector.extract_strided_slice %115 {offsets = [0, 192], sizes = [64, 32], strides = [1, 1]} : vector<64x384xf32> to vector<64x32xf32>
    %167 = arith.truncf %166 : vector<64x32xf32> to vector<64x32xbf16>
    %168 = vector.extract_strided_slice %115 {offsets = [0, 320], sizes = [64, 32], strides = [1, 1]} : vector<64x384xf32> to vector<64x32xf32>
    %169 = arith.truncf %168 : vector<64x32xf32> to vector<64x32xbf16>
    %cst_63 = arith.constant dense<0.000000e+00> : vector<64x64xf32>
    %170 = tpu.matmul %165, %167, %cst_63 {dimension_numbers = #tpu.dot_dimension_numbers<[1], [1], [0], [0], [0, 0, 1, 0], [], []>} : vector<64x32xbf16>, vector<64x32xbf16>, vector<64x64xf32> -> vector<64x64xf32>
    %c2_64 = arith.constant 2 : index
    %c0_65 = arith.constant 0 : index
    %c0_66 = arith.constant 0 : index
    %171 = vector.load %arg6[%c2_64, %c0_65, %c0_66] : memref<4x64x64xf32, #tpu.memory_space<vmem>>, vector<1x64x64xf32>
    %172 = vector.shape_cast %171 : vector<1x64x64xf32> to vector<64x64xf32>
    %173 = arith.addf %170, %172 : vector<64x64xf32>
    %174 = arith.addf %173, %117 : vector<64x64xf32>
    %cst_67 = arith.constant dense<0xFF800000> : vector<64xf32>
    %175 = vector.multi_reduction <maximumf>, %174, %cst_67 [1] : vector<64x64xf32> to vector<64xf32>
    %176 = vector.shape_cast %175 : vector<64xf32> to vector<64x1xf32>
    %177 = vector.broadcast %176 : vector<64x1xf32> to vector<64x64xf32>
    %178 = arith.subf %174, %177 : vector<64x64xf32>
    %179 = math.exp %178 : vector<64x64xf32>
    %cst_68 = arith.constant dense<0.000000e+00> : vector<64xf32>
    %180 = vector.multi_reduction <add>, %179, %cst_68 [1] : vector<64x64xf32> to vector<64xf32>
    %181 = vector.shape_cast %180 : vector<64xf32> to vector<64x1xf32>
    %182 = tpu.reciprocal %181 {approx = true} : vector<64x1xf32> -> vector<64x1xf32>
    %183 = vector.broadcast %182 : vector<64x1xf32> to vector<64x64xf32>
    %184 = arith.mulf %179, %183 : vector<64x64xf32>
    %185 = arith.truncf %184 : vector<64x64xf32> to vector<64x64xbf16>
    %cst_69 = arith.constant dense<0.000000e+00> : vector<64x32xf32>
    %186 = tpu.matmul %185, %169, %cst_69 {dimension_numbers = #tpu.dot_dimension_numbers<[1], [0], [0], [1], [0, 0, 1, 1], [], []>} : vector<64x64xbf16>, vector<64x32xbf16>, vector<64x32xf32> -> vector<64x32xf32>
    %187 = vector.extract_strided_slice %115 {offsets = [0, 96], sizes = [64, 32], strides = [1, 1]} : vector<64x384xf32> to vector<64x32xf32>
    %188 = arith.truncf %187 : vector<64x32xf32> to vector<64x32xbf16>
    %189 = vector.extract_strided_slice %115 {offsets = [0, 224], sizes = [64, 32], strides = [1, 1]} : vector<64x384xf32> to vector<64x32xf32>
    %190 = arith.truncf %189 : vector<64x32xf32> to vector<64x32xbf16>
    %191 = vector.extract_strided_slice %115 {offsets = [0, 352], sizes = [64, 32], strides = [1, 1]} : vector<64x384xf32> to vector<64x32xf32>
    %192 = arith.truncf %191 : vector<64x32xf32> to vector<64x32xbf16>
    %cst_70 = arith.constant dense<0.000000e+00> : vector<64x64xf32>
    %193 = tpu.matmul %188, %190, %cst_70 {dimension_numbers = #tpu.dot_dimension_numbers<[1], [1], [0], [0], [0, 0, 1, 0], [], []>} : vector<64x32xbf16>, vector<64x32xbf16>, vector<64x64xf32> -> vector<64x64xf32>
    %c3_71 = arith.constant 3 : index
    %c0_72 = arith.constant 0 : index
    %c0_73 = arith.constant 0 : index
    %194 = vector.load %arg6[%c3_71, %c0_72, %c0_73] : memref<4x64x64xf32, #tpu.memory_space<vmem>>, vector<1x64x64xf32>
    %195 = vector.shape_cast %194 : vector<1x64x64xf32> to vector<64x64xf32>
    %196 = arith.addf %193, %195 : vector<64x64xf32>
    %197 = arith.addf %196, %117 : vector<64x64xf32>
    %cst_74 = arith.constant dense<0xFF800000> : vector<64xf32>
    %198 = vector.multi_reduction <maximumf>, %197, %cst_74 [1] : vector<64x64xf32> to vector<64xf32>
    %199 = vector.shape_cast %198 : vector<64xf32> to vector<64x1xf32>
    %200 = vector.broadcast %199 : vector<64x1xf32> to vector<64x64xf32>
    %201 = arith.subf %197, %200 : vector<64x64xf32>
    %202 = math.exp %201 : vector<64x64xf32>
    %cst_75 = arith.constant dense<0.000000e+00> : vector<64xf32>
    %203 = vector.multi_reduction <add>, %202, %cst_75 [1] : vector<64x64xf32> to vector<64xf32>
    %204 = vector.shape_cast %203 : vector<64xf32> to vector<64x1xf32>
    %205 = tpu.reciprocal %204 {approx = true} : vector<64x1xf32> -> vector<64x1xf32>
    %206 = vector.broadcast %205 : vector<64x1xf32> to vector<64x64xf32>
    %207 = arith.mulf %202, %206 : vector<64x64xf32>
    %208 = arith.truncf %207 : vector<64x64xf32> to vector<64x64xbf16>
    %cst_76 = arith.constant dense<0.000000e+00> : vector<64x32xf32>
    %209 = tpu.matmul %208, %192, %cst_76 {dimension_numbers = #tpu.dot_dimension_numbers<[1], [0], [0], [1], [0, 0, 1, 1], [], []>} : vector<64x64xbf16>, vector<64x32xbf16>, vector<64x32xf32> -> vector<64x32xf32>
    %210 = tpu.concatenate %140, %163, %186, %209 in 1 : vector<64x32xf32>, vector<64x32xf32>, vector<64x32xf32>, vector<64x32xf32> -> vector<64x128xf32>
    %211 = arith.truncf %210 : vector<64x128xf32> to vector<64x128xbf16>
    %cst_77 = arith.constant dense<0.000000e+00> : vector<64x128xf32>
    %212 = tpu.matmul %211, %1, %cst_77 {dimension_numbers = #tpu.dot_dimension_numbers<[1], [0], [0], [1], [0, 0, 1, 1], [], []>} : vector<64x128xbf16>, vector<128x128xbf16>, vector<64x128xf32> -> vector<64x128xf32>
    %213 = vector.broadcast %3 : vector<1x128xf32> to vector<64x128xf32>
    %214 = arith.addf %212, %213 : vector<64x128xf32>
    %c1_78 = arith.constant 1 : index
    %c0_79 = arith.constant 0 : index
    %c0_80 = arith.constant 0 : index
    %215 = vector.load %arg8[%c1_78, %c0_79, %c0_80] : memref<4x64x128xf32, #tpu.memory_space<vmem>>, vector<1x64x128xf32>
    %216 = vector.shape_cast %215 : vector<1x64x128xf32> to vector<64x128xf32>
    %217 = vector.shape_cast %214 : vector<64x128xf32> to vector<1x64x128xf32>
    tpu.vector_store %arg8[%c1_78, %c0_79, %c0_80], %217 {strides = array<i32>} : memref<4x64x128xf32, #tpu.memory_space<vmem>>, vector<1x64x128xf32>,
    %c2_81 = arith.constant 2 : index
    %c0_82 = arith.constant 0 : index
    %c0_83 = arith.constant 0 : index
    %218 = vector.load %arg1[%c2_81, %c0_82, %c0_83] : memref<4x64x128xbf16, #tpu.memory_space<vmem>>, vector<1x64x128xbf16>
    %219 = vector.shape_cast %218 : vector<1x64x128xbf16> to vector<64x128xbf16>
    %cst_84 = arith.constant dense<0.000000e+00> : vector<64x384xf32>
    %220 = tpu.matmul %219, %0, %cst_84 {dimension_numbers = #tpu.dot_dimension_numbers<[1], [0], [0], [1], [0, 0, 1, 1], [], []>} : vector<64x128xbf16>, vector<128x384xbf16>, vector<64x384xf32> -> vector<64x384xf32>
    %221 = vector.broadcast %2 : vector<1x384xf32> to vector<64x384xf32>
    %222 = arith.addf %220, %221 : vector<64x384xf32>
    %c2_85 = arith.constant 2 : index
    %c0_86 = arith.constant 0 : index
    %c0_87 = arith.constant 0 : index
    %223 = vector.load %arg7[%c2_85, %c0_86, %c0_87] : memref<4x64x64xf32, #tpu.memory_space<vmem>>, vector<1x64x64xf32>
    %224 = vector.shape_cast %223 : vector<1x64x64xf32> to vector<64x64xf32>
    %225 = vector.extract_strided_slice %222 {offsets = [0, 0], sizes = [64, 32], strides = [1, 1]} : vector<64x384xf32> to vector<64x32xf32>
    %226 = arith.truncf %225 : vector<64x32xf32> to vector<64x32xbf16>
    %227 = vector.extract_strided_slice %222 {offsets = [0, 128], sizes = [64, 32], strides = [1, 1]} : vector<64x384xf32> to vector<64x32xf32>
    %228 = arith.truncf %227 : vector<64x32xf32> to vector<64x32xbf16>
    %229 = vector.extract_strided_slice %222 {offsets = [0, 256], sizes = [64, 32], strides = [1, 1]} : vector<64x384xf32> to vector<64x32xf32>
    %230 = arith.truncf %229 : vector<64x32xf32> to vector<64x32xbf16>
    %cst_88 = arith.constant dense<0.000000e+00> : vector<64x64xf32>
    %231 = tpu.matmul %226, %228, %cst_88 {dimension_numbers = #tpu.dot_dimension_numbers<[1], [1], [0], [0], [0, 0, 1, 0], [], []>} : vector<64x32xbf16>, vector<64x32xbf16>, vector<64x64xf32> -> vector<64x64xf32>
    %c0_89 = arith.constant 0 : index
    %c0_90 = arith.constant 0 : index
    %c0_91 = arith.constant 0 : index
    %232 = vector.load %arg6[%c0_89, %c0_90, %c0_91] : memref<4x64x64xf32, #tpu.memory_space<vmem>>, vector<1x64x64xf32>
    %233 = vector.shape_cast %232 : vector<1x64x64xf32> to vector<64x64xf32>
    %234 = arith.addf %231, %233 : vector<64x64xf32>
    %235 = arith.addf %234, %224 : vector<64x64xf32>
    %cst_92 = arith.constant dense<0xFF800000> : vector<64xf32>
    %236 = vector.multi_reduction <maximumf>, %235, %cst_92 [1] : vector<64x64xf32> to vector<64xf32>
    %237 = vector.shape_cast %236 : vector<64xf32> to vector<64x1xf32>
    %238 = vector.broadcast %237 : vector<64x1xf32> to vector<64x64xf32>
    %239 = arith.subf %235, %238 : vector<64x64xf32>
    %240 = math.exp %239 : vector<64x64xf32>
    %cst_93 = arith.constant dense<0.000000e+00> : vector<64xf32>
    %241 = vector.multi_reduction <add>, %240, %cst_93 [1] : vector<64x64xf32> to vector<64xf32>
    %242 = vector.shape_cast %241 : vector<64xf32> to vector<64x1xf32>
    %243 = tpu.reciprocal %242 {approx = true} : vector<64x1xf32> -> vector<64x1xf32>
    %244 = vector.broadcast %243 : vector<64x1xf32> to vector<64x64xf32>
    %245 = arith.mulf %240, %244 : vector<64x64xf32>
    %246 = arith.truncf %245 : vector<64x64xf32> to vector<64x64xbf16>
    %cst_94 = arith.constant dense<0.000000e+00> : vector<64x32xf32>
    %247 = tpu.matmul %246, %230, %cst_94 {dimension_numbers = #tpu.dot_dimension_numbers<[1], [0], [0], [1], [0, 0, 1, 1], [], []>} : vector<64x64xbf16>, vector<64x32xbf16>, vector<64x32xf32> -> vector<64x32xf32>
    %248 = vector.extract_strided_slice %222 {offsets = [0, 32], sizes = [64, 32], strides = [1, 1]} : vector<64x384xf32> to vector<64x32xf32>
    %249 = arith.truncf %248 : vector<64x32xf32> to vector<64x32xbf16>
    %250 = vector.extract_strided_slice %222 {offsets = [0, 160], sizes = [64, 32], strides = [1, 1]} : vector<64x384xf32> to vector<64x32xf32>
    %251 = arith.truncf %250 : vector<64x32xf32> to vector<64x32xbf16>
    %252 = vector.extract_strided_slice %222 {offsets = [0, 288], sizes = [64, 32], strides = [1, 1]} : vector<64x384xf32> to vector<64x32xf32>
    %253 = arith.truncf %252 : vector<64x32xf32> to vector<64x32xbf16>
    %cst_95 = arith.constant dense<0.000000e+00> : vector<64x64xf32>
    %254 = tpu.matmul %249, %251, %cst_95 {dimension_numbers = #tpu.dot_dimension_numbers<[1], [1], [0], [0], [0, 0, 1, 0], [], []>} : vector<64x32xbf16>, vector<64x32xbf16>, vector<64x64xf32> -> vector<64x64xf32>
    %c1_96 = arith.constant 1 : index
    %c0_97 = arith.constant 0 : index
    %c0_98 = arith.constant 0 : index
    %255 = vector.load %arg6[%c1_96, %c0_97, %c0_98] : memref<4x64x64xf32, #tpu.memory_space<vmem>>, vector<1x64x64xf32>
    %256 = vector.shape_cast %255 : vector<1x64x64xf32> to vector<64x64xf32>
    %257 = arith.addf %254, %256 : vector<64x64xf32>
    %258 = arith.addf %257, %224 : vector<64x64xf32>
    %cst_99 = arith.constant dense<0xFF800000> : vector<64xf32>
    %259 = vector.multi_reduction <maximumf>, %258, %cst_99 [1] : vector<64x64xf32> to vector<64xf32>
    %260 = vector.shape_cast %259 : vector<64xf32> to vector<64x1xf32>
    %261 = vector.broadcast %260 : vector<64x1xf32> to vector<64x64xf32>
    %262 = arith.subf %258, %261 : vector<64x64xf32>
    %263 = math.exp %262 : vector<64x64xf32>
    %cst_100 = arith.constant dense<0.000000e+00> : vector<64xf32>
    %264 = vector.multi_reduction <add>, %263, %cst_100 [1] : vector<64x64xf32> to vector<64xf32>
    %265 = vector.shape_cast %264 : vector<64xf32> to vector<64x1xf32>
    %266 = tpu.reciprocal %265 {approx = true} : vector<64x1xf32> -> vector<64x1xf32>
    %267 = vector.broadcast %266 : vector<64x1xf32> to vector<64x64xf32>
    %268 = arith.mulf %263, %267 : vector<64x64xf32>
    %269 = arith.truncf %268 : vector<64x64xf32> to vector<64x64xbf16>
    %cst_101 = arith.constant dense<0.000000e+00> : vector<64x32xf32>
    %270 = tpu.matmul %269, %253, %cst_101 {dimension_numbers = #tpu.dot_dimension_numbers<[1], [0], [0], [1], [0, 0, 1, 1], [], []>} : vector<64x64xbf16>, vector<64x32xbf16>, vector<64x32xf32> -> vector<64x32xf32>
    %271 = vector.extract_strided_slice %222 {offsets = [0, 64], sizes = [64, 32], strides = [1, 1]} : vector<64x384xf32> to vector<64x32xf32>
    %272 = arith.truncf %271 : vector<64x32xf32> to vector<64x32xbf16>
    %273 = vector.extract_strided_slice %222 {offsets = [0, 192], sizes = [64, 32], strides = [1, 1]} : vector<64x384xf32> to vector<64x32xf32>
    %274 = arith.truncf %273 : vector<64x32xf32> to vector<64x32xbf16>
    %275 = vector.extract_strided_slice %222 {offsets = [0, 320], sizes = [64, 32], strides = [1, 1]} : vector<64x384xf32> to vector<64x32xf32>
    %276 = arith.truncf %275 : vector<64x32xf32> to vector<64x32xbf16>
    %cst_102 = arith.constant dense<0.000000e+00> : vector<64x64xf32>
    %277 = tpu.matmul %272, %274, %cst_102 {dimension_numbers = #tpu.dot_dimension_numbers<[1], [1], [0], [0], [0, 0, 1, 0], [], []>} : vector<64x32xbf16>, vector<64x32xbf16>, vector<64x64xf32> -> vector<64x64xf32>
    %c2_103 = arith.constant 2 : index
    %c0_104 = arith.constant 0 : index
    %c0_105 = arith.constant 0 : index
    %278 = vector.load %arg6[%c2_103, %c0_104, %c0_105] : memref<4x64x64xf32, #tpu.memory_space<vmem>>, vector<1x64x64xf32>
    %279 = vector.shape_cast %278 : vector<1x64x64xf32> to vector<64x64xf32>
    %280 = arith.addf %277, %279 : vector<64x64xf32>
    %281 = arith.addf %280, %224 : vector<64x64xf32>
    %cst_106 = arith.constant dense<0xFF800000> : vector<64xf32>
    %282 = vector.multi_reduction <maximumf>, %281, %cst_106 [1] : vector<64x64xf32> to vector<64xf32>
    %283 = vector.shape_cast %282 : vector<64xf32> to vector<64x1xf32>
    %284 = vector.broadcast %283 : vector<64x1xf32> to vector<64x64xf32>
    %285 = arith.subf %281, %284 : vector<64x64xf32>
    %286 = math.exp %285 : vector<64x64xf32>
    %cst_107 = arith.constant dense<0.000000e+00> : vector<64xf32>
    %287 = vector.multi_reduction <add>, %286, %cst_107 [1] : vector<64x64xf32> to vector<64xf32>
    %288 = vector.shape_cast %287 : vector<64xf32> to vector<64x1xf32>
    %289 = tpu.reciprocal %288 {approx = true} : vector<64x1xf32> -> vector<64x1xf32>
    %290 = vector.broadcast %289 : vector<64x1xf32> to vector<64x64xf32>
    %291 = arith.mulf %286, %290 : vector<64x64xf32>
    %292 = arith.truncf %291 : vector<64x64xf32> to vector<64x64xbf16>
    %cst_108 = arith.constant dense<0.000000e+00> : vector<64x32xf32>
    %293 = tpu.matmul %292, %276, %cst_108 {dimension_numbers = #tpu.dot_dimension_numbers<[1], [0], [0], [1], [0, 0, 1, 1], [], []>} : vector<64x64xbf16>, vector<64x32xbf16>, vector<64x32xf32> -> vector<64x32xf32>
    %294 = vector.extract_strided_slice %222 {offsets = [0, 96], sizes = [64, 32], strides = [1, 1]} : vector<64x384xf32> to vector<64x32xf32>
    %295 = arith.truncf %294 : vector<64x32xf32> to vector<64x32xbf16>
    %296 = vector.extract_strided_slice %222 {offsets = [0, 224], sizes = [64, 32], strides = [1, 1]} : vector<64x384xf32> to vector<64x32xf32>
    %297 = arith.truncf %296 : vector<64x32xf32> to vector<64x32xbf16>
    %298 = vector.extract_strided_slice %222 {offsets = [0, 352], sizes = [64, 32], strides = [1, 1]} : vector<64x384xf32> to vector<64x32xf32>
    %299 = arith.truncf %298 : vector<64x32xf32> to vector<64x32xbf16>
    %cst_109 = arith.constant dense<0.000000e+00> : vector<64x64xf32>
    %300 = tpu.matmul %295, %297, %cst_109 {dimension_numbers = #tpu.dot_dimension_numbers<[1], [1], [0], [0], [0, 0, 1, 0], [], []>} : vector<64x32xbf16>, vector<64x32xbf16>, vector<64x64xf32> -> vector<64x64xf32>
    %c3_110 = arith.constant 3 : index
    %c0_111 = arith.constant 0 : index
    %c0_112 = arith.constant 0 : index
    %301 = vector.load %arg6[%c3_110, %c0_111, %c0_112] : memref<4x64x64xf32, #tpu.memory_space<vmem>>, vector<1x64x64xf32>
    %302 = vector.shape_cast %301 : vector<1x64x64xf32> to vector<64x64xf32>
    %303 = arith.addf %300, %302 : vector<64x64xf32>
    %304 = arith.addf %303, %224 : vector<64x64xf32>
    %cst_113 = arith.constant dense<0xFF800000> : vector<64xf32>
    %305 = vector.multi_reduction <maximumf>, %304, %cst_113 [1] : vector<64x64xf32> to vector<64xf32>
    %306 = vector.shape_cast %305 : vector<64xf32> to vector<64x1xf32>
    %307 = vector.broadcast %306 : vector<64x1xf32> to vector<64x64xf32>
    %308 = arith.subf %304, %307 : vector<64x64xf32>
    %309 = math.exp %308 : vector<64x64xf32>
    %cst_114 = arith.constant dense<0.000000e+00> : vector<64xf32>
    %310 = vector.multi_reduction <add>, %309, %cst_114 [1] : vector<64x64xf32> to vector<64xf32>
    %311 = vector.shape_cast %310 : vector<64xf32> to vector<64x1xf32>
    %312 = tpu.reciprocal %311 {approx = true} : vector<64x1xf32> -> vector<64x1xf32>
    %313 = vector.broadcast %312 : vector<64x1xf32> to vector<64x64xf32>
    %314 = arith.mulf %309, %313 : vector<64x64xf32>
    %315 = arith.truncf %314 : vector<64x64xf32> to vector<64x64xbf16>
    %cst_115 = arith.constant dense<0.000000e+00> : vector<64x32xf32>
    %316 = tpu.matmul %315, %299, %cst_115 {dimension_numbers = #tpu.dot_dimension_numbers<[1], [0], [0], [1], [0, 0, 1, 1], [], []>} : vector<64x64xbf16>, vector<64x32xbf16>, vector<64x32xf32> -> vector<64x32xf32>
    %317 = tpu.concatenate %247, %270, %293, %316 in 1 : vector<64x32xf32>, vector<64x32xf32>, vector<64x32xf32>, vector<64x32xf32> -> vector<64x128xf32>
    %318 = arith.truncf %317 : vector<64x128xf32> to vector<64x128xbf16>
    %cst_116 = arith.constant dense<0.000000e+00> : vector<64x128xf32>
    %319 = tpu.matmul %318, %1, %cst_116 {dimension_numbers = #tpu.dot_dimension_numbers<[1], [0], [0], [1], [0, 0, 1, 1], [], []>} : vector<64x128xbf16>, vector<128x128xbf16>, vector<64x128xf32> -> vector<64x128xf32>
    %320 = vector.broadcast %3 : vector<1x128xf32> to vector<64x128xf32>
    %321 = arith.addf %319, %320 : vector<64x128xf32>
    %c2_117 = arith.constant 2 : index
    %c0_118 = arith.constant 0 : index
    %c0_119 = arith.constant 0 : index
    %322 = vector.load %arg8[%c2_117, %c0_118, %c0_119] : memref<4x64x128xf32, #tpu.memory_space<vmem>>, vector<1x64x128xf32>
    %323 = vector.shape_cast %322 : vector<1x64x128xf32> to vector<64x128xf32>
    %324 = vector.shape_cast %321 : vector<64x128xf32> to vector<1x64x128xf32>
    tpu.vector_store %arg8[%c2_117, %c0_118, %c0_119], %324 {strides = array<i32>} : memref<4x64x128xf32, #tpu.memory_space<vmem>>, vector<1x64x128xf32>,
    %c3_120 = arith.constant 3 : index
    %c0_121 = arith.constant 0 : index
    %c0_122 = arith.constant 0 : index
    %325 = vector.load %arg1[%c3_120, %c0_121, %c0_122] : memref<4x64x128xbf16, #tpu.memory_space<vmem>>, vector<1x64x128xbf16>
    %326 = vector.shape_cast %325 : vector<1x64x128xbf16> to vector<64x128xbf16>
    %cst_123 = arith.constant dense<0.000000e+00> : vector<64x384xf32>
    %327 = tpu.matmul %326, %0, %cst_123 {dimension_numbers = #tpu.dot_dimension_numbers<[1], [0], [0], [1], [0, 0, 1, 1], [], []>} : vector<64x128xbf16>, vector<128x384xbf16>, vector<64x384xf32> -> vector<64x384xf32>
    %328 = vector.broadcast %2 : vector<1x384xf32> to vector<64x384xf32>
    %329 = arith.addf %327, %328 : vector<64x384xf32>
    %c3_124 = arith.constant 3 : index
    %c0_125 = arith.constant 0 : index
    %c0_126 = arith.constant 0 : index
    %330 = vector.load %arg7[%c3_124, %c0_125, %c0_126] : memref<4x64x64xf32, #tpu.memory_space<vmem>>, vector<1x64x64xf32>
    %331 = vector.shape_cast %330 : vector<1x64x64xf32> to vector<64x64xf32>
    %332 = vector.extract_strided_slice %329 {offsets = [0, 0], sizes = [64, 32], strides = [1, 1]} : vector<64x384xf32> to vector<64x32xf32>
    %333 = arith.truncf %332 : vector<64x32xf32> to vector<64x32xbf16>
    %334 = vector.extract_strided_slice %329 {offsets = [0, 128], sizes = [64, 32], strides = [1, 1]} : vector<64x384xf32> to vector<64x32xf32>
    %335 = arith.truncf %334 : vector<64x32xf32> to vector<64x32xbf16>
    %336 = vector.extract_strided_slice %329 {offsets = [0, 256], sizes = [64, 32], strides = [1, 1]} : vector<64x384xf32> to vector<64x32xf32>
    %337 = arith.truncf %336 : vector<64x32xf32> to vector<64x32xbf16>
    %cst_127 = arith.constant dense<0.000000e+00> : vector<64x64xf32>
    %338 = tpu.matmul %333, %335, %cst_127 {dimension_numbers = #tpu.dot_dimension_numbers<[1], [1], [0], [0], [0, 0, 1, 0], [], []>} : vector<64x32xbf16>, vector<64x32xbf16>, vector<64x64xf32> -> vector<64x64xf32>
    %c0_128 = arith.constant 0 : index
    %c0_129 = arith.constant 0 : index
    %c0_130 = arith.constant 0 : index
    %339 = vector.load %arg6[%c0_128, %c0_129, %c0_130] : memref<4x64x64xf32, #tpu.memory_space<vmem>>, vector<1x64x64xf32>
    %340 = vector.shape_cast %339 : vector<1x64x64xf32> to vector<64x64xf32>
    %341 = arith.addf %338, %340 : vector<64x64xf32>
    %342 = arith.addf %341, %331 : vector<64x64xf32>
    %cst_131 = arith.constant dense<0xFF800000> : vector<64xf32>
    %343 = vector.multi_reduction <maximumf>, %342, %cst_131 [1] : vector<64x64xf32> to vector<64xf32>
    %344 = vector.shape_cast %343 : vector<64xf32> to vector<64x1xf32>
    %345 = vector.broadcast %344 : vector<64x1xf32> to vector<64x64xf32>
    %346 = arith.subf %342, %345 : vector<64x64xf32>
    %347 = math.exp %346 : vector<64x64xf32>
    %cst_132 = arith.constant dense<0.000000e+00> : vector<64xf32>
    %348 = vector.multi_reduction <add>, %347, %cst_132 [1] : vector<64x64xf32> to vector<64xf32>
    %349 = vector.shape_cast %348 : vector<64xf32> to vector<64x1xf32>
    %350 = tpu.reciprocal %349 {approx = true} : vector<64x1xf32> -> vector<64x1xf32>
    %351 = vector.broadcast %350 : vector<64x1xf32> to vector<64x64xf32>
    %352 = arith.mulf %347, %351 : vector<64x64xf32>
    %353 = arith.truncf %352 : vector<64x64xf32> to vector<64x64xbf16>
    %cst_133 = arith.constant dense<0.000000e+00> : vector<64x32xf32>
    %354 = tpu.matmul %353, %337, %cst_133 {dimension_numbers = #tpu.dot_dimension_numbers<[1], [0], [0], [1], [0, 0, 1, 1], [], []>} : vector<64x64xbf16>, vector<64x32xbf16>, vector<64x32xf32> -> vector<64x32xf32>
    %355 = vector.extract_strided_slice %329 {offsets = [0, 32], sizes = [64, 32], strides = [1, 1]} : vector<64x384xf32> to vector<64x32xf32>
    %356 = arith.truncf %355 : vector<64x32xf32> to vector<64x32xbf16>
    %357 = vector.extract_strided_slice %329 {offsets = [0, 160], sizes = [64, 32], strides = [1, 1]} : vector<64x384xf32> to vector<64x32xf32>
    %358 = arith.truncf %357 : vector<64x32xf32> to vector<64x32xbf16>
    %359 = vector.extract_strided_slice %329 {offsets = [0, 288], sizes = [64, 32], strides = [1, 1]} : vector<64x384xf32> to vector<64x32xf32>
    %360 = arith.truncf %359 : vector<64x32xf32> to vector<64x32xbf16>
    %cst_134 = arith.constant dense<0.000000e+00> : vector<64x64xf32>
    %361 = tpu.matmul %356, %358, %cst_134 {dimension_numbers = #tpu.dot_dimension_numbers<[1], [1], [0], [0], [0, 0, 1, 0], [], []>} : vector<64x32xbf16>, vector<64x32xbf16>, vector<64x64xf32> -> vector<64x64xf32>
    %c1_135 = arith.constant 1 : index
    %c0_136 = arith.constant 0 : index
    %c0_137 = arith.constant 0 : index
    %362 = vector.load %arg6[%c1_135, %c0_136, %c0_137] : memref<4x64x64xf32, #tpu.memory_space<vmem>>, vector<1x64x64xf32>
    %363 = vector.shape_cast %362 : vector<1x64x64xf32> to vector<64x64xf32>
    %364 = arith.addf %361, %363 : vector<64x64xf32>
    %365 = arith.addf %364, %331 : vector<64x64xf32>
    %cst_138 = arith.constant dense<0xFF800000> : vector<64xf32>
    %366 = vector.multi_reduction <maximumf>, %365, %cst_138 [1] : vector<64x64xf32> to vector<64xf32>
    %367 = vector.shape_cast %366 : vector<64xf32> to vector<64x1xf32>
    %368 = vector.broadcast %367 : vector<64x1xf32> to vector<64x64xf32>
    %369 = arith.subf %365, %368 : vector<64x64xf32>
    %370 = math.exp %369 : vector<64x64xf32>
    %cst_139 = arith.constant dense<0.000000e+00> : vector<64xf32>
    %371 = vector.multi_reduction <add>, %370, %cst_139 [1] : vector<64x64xf32> to vector<64xf32>
    %372 = vector.shape_cast %371 : vector<64xf32> to vector<64x1xf32>
    %373 = tpu.reciprocal %372 {approx = true} : vector<64x1xf32> -> vector<64x1xf32>
    %374 = vector.broadcast %373 : vector<64x1xf32> to vector<64x64xf32>
    %375 = arith.mulf %370, %374 : vector<64x64xf32>
    %376 = arith.truncf %375 : vector<64x64xf32> to vector<64x64xbf16>
    %cst_140 = arith.constant dense<0.000000e+00> : vector<64x32xf32>
    %377 = tpu.matmul %376, %360, %cst_140 {dimension_numbers = #tpu.dot_dimension_numbers<[1], [0], [0], [1], [0, 0, 1, 1], [], []>} : vector<64x64xbf16>, vector<64x32xbf16>, vector<64x32xf32> -> vector<64x32xf32>
    %378 = vector.extract_strided_slice %329 {offsets = [0, 64], sizes = [64, 32], strides = [1, 1]} : vector<64x384xf32> to vector<64x32xf32>
    %379 = arith.truncf %378 : vector<64x32xf32> to vector<64x32xbf16>
    %380 = vector.extract_strided_slice %329 {offsets = [0, 192], sizes = [64, 32], strides = [1, 1]} : vector<64x384xf32> to vector<64x32xf32>
    %381 = arith.truncf %380 : vector<64x32xf32> to vector<64x32xbf16>
    %382 = vector.extract_strided_slice %329 {offsets = [0, 320], sizes = [64, 32], strides = [1, 1]} : vector<64x384xf32> to vector<64x32xf32>
    %383 = arith.truncf %382 : vector<64x32xf32> to vector<64x32xbf16>
    %cst_141 = arith.constant dense<0.000000e+00> : vector<64x64xf32>
    %384 = tpu.matmul %379, %381, %cst_141 {dimension_numbers = #tpu.dot_dimension_numbers<[1], [1], [0], [0], [0, 0, 1, 0], [], []>} : vector<64x32xbf16>, vector<64x32xbf16>, vector<64x64xf32> -> vector<64x64xf32>
    %c2_142 = arith.constant 2 : index
    %c0_143 = arith.constant 0 : index
    %c0_144 = arith.constant 0 : index
    %385 = vector.load %arg6[%c2_142, %c0_143, %c0_144] : memref<4x64x64xf32, #tpu.memory_space<vmem>>, vector<1x64x64xf32>
    %386 = vector.shape_cast %385 : vector<1x64x64xf32> to vector<64x64xf32>
    %387 = arith.addf %384, %386 : vector<64x64xf32>
    %388 = arith.addf %387, %331 : vector<64x64xf32>
    %cst_145 = arith.constant dense<0xFF800000> : vector<64xf32>
    %389 = vector.multi_reduction <maximumf>, %388, %cst_145 [1] : vector<64x64xf32> to vector<64xf32>
    %390 = vector.shape_cast %389 : vector<64xf32> to vector<64x1xf32>
    %391 = vector.broadcast %390 : vector<64x1xf32> to vector<64x64xf32>
    %392 = arith.subf %388, %391 : vector<64x64xf32>
    %393 = math.exp %392 : vector<64x64xf32>
    %cst_146 = arith.constant dense<0.000000e+00> : vector<64xf32>
    %394 = vector.multi_reduction <add>, %393, %cst_146 [1] : vector<64x64xf32> to vector<64xf32>
    %395 = vector.shape_cast %394 : vector<64xf32> to vector<64x1xf32>
    %396 = tpu.reciprocal %395 {approx = true} : vector<64x1xf32> -> vector<64x1xf32>
    %397 = vector.broadcast %396 : vector<64x1xf32> to vector<64x64xf32>
    %398 = arith.mulf %393, %397 : vector<64x64xf32>
    %399 = arith.truncf %398 : vector<64x64xf32> to vector<64x64xbf16>
    %cst_147 = arith.constant dense<0.000000e+00> : vector<64x32xf32>
    %400 = tpu.matmul %399, %383, %cst_147 {dimension_numbers = #tpu.dot_dimension_numbers<[1], [0], [0], [1], [0, 0, 1, 1], [], []>} : vector<64x64xbf16>, vector<64x32xbf16>, vector<64x32xf32> -> vector<64x32xf32>
    %401 = vector.extract_strided_slice %329 {offsets = [0, 96], sizes = [64, 32], strides = [1, 1]} : vector<64x384xf32> to vector<64x32xf32>
    %402 = arith.truncf %401 : vector<64x32xf32> to vector<64x32xbf16>
    %403 = vector.extract_strided_slice %329 {offsets = [0, 224], sizes = [64, 32], strides = [1, 1]} : vector<64x384xf32> to vector<64x32xf32>
    %404 = arith.truncf %403 : vector<64x32xf32> to vector<64x32xbf16>
    %405 = vector.extract_strided_slice %329 {offsets = [0, 352], sizes = [64, 32], strides = [1, 1]} : vector<64x384xf32> to vector<64x32xf32>
    %406 = arith.truncf %405 : vector<64x32xf32> to vector<64x32xbf16>
    %cst_148 = arith.constant dense<0.000000e+00> : vector<64x64xf32>
    %407 = tpu.matmul %402, %404, %cst_148 {dimension_numbers = #tpu.dot_dimension_numbers<[1], [1], [0], [0], [0, 0, 1, 0], [], []>} : vector<64x32xbf16>, vector<64x32xbf16>, vector<64x64xf32> -> vector<64x64xf32>
    %c3_149 = arith.constant 3 : index
    %c0_150 = arith.constant 0 : index
    %c0_151 = arith.constant 0 : index
    %408 = vector.load %arg6[%c3_149, %c0_150, %c0_151] : memref<4x64x64xf32, #tpu.memory_space<vmem>>, vector<1x64x64xf32>
    %409 = vector.shape_cast %408 : vector<1x64x64xf32> to vector<64x64xf32>
    %410 = arith.addf %407, %409 : vector<64x64xf32>
    %411 = arith.addf %410, %331 : vector<64x64xf32>
    %cst_152 = arith.constant dense<0xFF800000> : vector<64xf32>
    %412 = vector.multi_reduction <maximumf>, %411, %cst_152 [1] : vector<64x64xf32> to vector<64xf32>
    %413 = vector.shape_cast %412 : vector<64xf32> to vector<64x1xf32>
    %414 = vector.broadcast %413 : vector<64x1xf32> to vector<64x64xf32>
    %415 = arith.subf %411, %414 : vector<64x64xf32>
    %416 = math.exp %415 : vector<64x64xf32>
    %cst_153 = arith.constant dense<0.000000e+00> : vector<64xf32>
    %417 = vector.multi_reduction <add>, %416, %cst_153 [1] : vector<64x64xf32> to vector<64xf32>
    %418 = vector.shape_cast %417 : vector<64xf32> to vector<64x1xf32>
    %419 = tpu.reciprocal %418 {approx = true} : vector<64x1xf32> -> vector<64x1xf32>
    %420 = vector.broadcast %419 : vector<64x1xf32> to vector<64x64xf32>
    %421 = arith.mulf %416, %420 : vector<64x64xf32>
    %422 = arith.truncf %421 : vector<64x64xf32> to vector<64x64xbf16>
    %cst_154 = arith.constant dense<0.000000e+00> : vector<64x32xf32>
    %423 = tpu.matmul %422, %406, %cst_154 {dimension_numbers = #tpu.dot_dimension_numbers<[1], [0], [0], [1], [0, 0, 1, 1], [], []>} : vector<64x64xbf16>, vector<64x32xbf16>, vector<64x32xf32> -> vector<64x32xf32>
    %424 = tpu.concatenate %354, %377, %400, %423 in 1 : vector<64x32xf32>, vector<64x32xf32>, vector<64x32xf32>, vector<64x32xf32> -> vector<64x128xf32>
    %425 = arith.truncf %424 : vector<64x128xf32> to vector<64x128xbf16>
    %cst_155 = arith.constant dense<0.000000e+00> : vector<64x128xf32>
    %426 = tpu.matmul %425, %1, %cst_155 {dimension_numbers = #tpu.dot_dimension_numbers<[1], [0], [0], [1], [0, 0, 1, 1], [], []>} : vector<64x128xbf16>, vector<128x128xbf16>, vector<64x128xf32> -> vector<64x128xf32>
    %427 = vector.broadcast %3 : vector<1x128xf32> to vector<64x128xf32>
    %428 = arith.addf %426, %427 : vector<64x128xf32>
    %c3_156 = arith.constant 3 : index
    %c0_157 = arith.constant 0 : index
    %c0_158 = arith.constant 0 : index
    %429 = vector.load %arg8[%c3_156, %c0_157, %c0_158] : memref<4x64x128xf32, #tpu.memory_space<vmem>>, vector<1x64x128xf32>
    %430 = vector.shape_cast %429 : vector<1x64x128xf32> to vector<64x128xf32>
    %431 = vector.shape_cast %428 : vector<64x128xf32> to vector<1x64x128xf32>
    tpu.vector_store %arg8[%c3_156, %c0_157, %c0_158], %431 {strides = array<i32>} : memref<4x64x128xf32, #tpu.memory_space<vmem>>, vector<1x64x128xf32>,
    return
  }
  func.func @transform_0(%arg0: i32) -> (i32, i32, i32) {
    %c0_i32 = arith.constant 0 : i32
    %c0_i32_0 = arith.constant 0 : i32
    %c0_i32_1 = arith.constant 0 : i32
    return %arg0, %c0_i32, %c0_i32_0 : i32, i32, i32
  }
  func.func @transform_1(%arg0: i32) -> (i32, i32) {
    %c0_i32 = arith.constant 0 : i32
    %c0_i32_0 = arith.constant 0 : i32
    %c0_i32_1 = arith.constant 0 : i32
    return %c0_i32, %c0_i32_0 : i32, i32
  }
  func.func @transform_2(%arg0: i32) -> (i32, i32) {
    %c0_i32 = arith.constant 0 : i32
    %c0_i32_0 = arith.constant 0 : i32
    %c0_i32_1 = arith.constant 0 : i32
    return %c0_i32, %c0_i32_0 : i32, i32
  }
  func.func @transform_3(%arg0: i32) -> (i32, i32) {
    %c0_i32 = arith.constant 0 : i32
    %c0_i32_0 = arith.constant 0 : i32
    %c0_i32_1 = arith.constant 0 : i32
    return %c0_i32, %c0_i32_0 : i32, i32
  }
  func.func @transform_4(%arg0: i32) -> (i32, i32) {
    %c0_i32 = arith.constant 0 : i32
    %c0_i32_0 = arith.constant 0 : i32
    %c0_i32_1 = arith.constant 0 : i32
    return %c0_i32, %c0_i32_0 : i32, i32
  }
  func.func @transform_5(%arg0: i32) -> (i32, i32, i32) {
    %c0_i32 = arith.constant 0 : i32
    %c0_i32_0 = arith.constant 0 : i32
    %c0_i32_1 = arith.constant 0 : i32
    %c0_i32_2 = arith.constant 0 : i32
    return %c0_i32, %c0_i32_0, %c0_i32_1 : i32, i32, i32
  }
  func.func @transform_6(%arg0: i32) -> (i32, i32, i32) {
    %c1_i32 = arith.constant 1 : i32
    %c0_i32 = arith.constant 0 : i32
    %0 = arith.cmpi eq, %c1_i32, %c0_i32 : i32
    %c1_i32_0 = arith.constant 1 : i32
    %1 = arith.select %0, %c1_i32_0, %c1_i32 : i32
    %2 = arith.remsi %arg0, %1 : i32
    %c0_i32_1 = arith.constant 0 : i32
    %3 = arith.cmpi ne, %2, %c0_i32_1 : i32
    %c0_i32_2 = arith.constant 0 : i32
    %4 = arith.cmpi slt, %2, %c0_i32_2 : i32
    %c0_i32_3 = arith.constant 0 : i32
    %5 = arith.cmpi slt, %1, %c0_i32_3 : i32
    %6 = arith.xori %4, %5 : i1
    %7 = arith.andi %6, %3 : i1
    %8 = arith.addi %2, %1 : i32
    %9 = arith.select %7, %8, %2 : i32
    %c0_i32_4 = arith.constant 0 : i32
    %c0_i32_5 = arith.constant 0 : i32
    %c0_i32_6 = arith.constant 0 : i32
    return %9, %c0_i32_4, %c0_i32_5 : i32, i32, i32
  }
  func.func @transform_7(%arg0: i32) -> (i32, i32, i32) {
    %c0_i32 = arith.constant 0 : i32
    %c0_i32_0 = arith.constant 0 : i32
    %c0_i32_1 = arith.constant 0 : i32
    return %arg0, %c0_i32, %c0_i32_0 : i32, i32, i32
  }
}

</mosaic_0001>

<llo_original>
// kernel: tpu_custom_call.1
$region0: #{tpu_custom_call.1}
  #allocation0 [shape = 'u32[]', space=smem, size = 0x4, offset = 0x4, fixed_abs, tag = 'smem constant byte address 0x4 - core index']
  #allocation1 [shape = 'u32[144,128]{1,0:T(1,128)}', space=vmem, size = 0x12000, scoped, tag = 'internal scratch']
  %s0 = inlined_call_operand.hbm [shape: bf16[8,64,128], index: 0, kind: input, shape index: {}]
  %s1 = inlined_call_operand.hbm [shape: bf16[128,384], index: 1, kind: input, shape index: {}]
  %s2 = inlined_call_operand.vmem [shape: f32[1,384], index: 2, kind: input, shape index: {}]
  %s3 = inlined_call_operand.hbm [shape: bf16[128,128], index: 3, kind: input, shape index: {}]
  %s4 = inlined_call_operand.vmem [shape: f32[1,128], index: 4, kind: input, shape index: {}]
  %s5 = inlined_call_operand.hbm [shape: f32[4,64,64], index: 5, kind: input, shape index: {}]
  %s6 = inlined_call_operand.hbm [shape: f32[4,64,64], index: 6, kind: input, shape index: {}]
  %s7 = inlined_call_operand.hbm [shape: f32[8,64,128], index: 7, kind: output, shape index: {}]
  %s8 = sld [smem:[#allocation0]]
  $region81: #{tpu_custom_call.1} parent=0
    _
  %s10 = ssub.s32 1, %s8
  %s11 = scalar_select 0, %s10, %s8
  $region1: #{tpu_custom_call.1} parent=0
    #allocation2 [shape = 'u8[131072]{0}', space=vmem, size = 0x20000, scoped, tag = 'input window, operand 0']
    #allocation3 [shape = 's32[2]{0}', space=sflag, size = 0x8, scoped, tag = 'scoped memory for tpu_custom_call.1']
    #allocation4 [shape = 's32[2]{0}', space=sflag, size = 0x8, scoped, tag = 'scoped memory for tpu_custom_call.1']
    #allocation5 [shape = 'u8[98304]{0}', space=vmem, size = 0x18000, scoped, tag = 'input window, operand 1, single buffered']
    #allocation6 [shape = 's32[1]{0}', space=sflag, size = 0x4, scoped, tag = 'scoped memory for tpu_custom_call.1']
    #allocation7 [shape = 'u8[32768]{0}', space=vmem, size = 0x8000, scoped, tag = 'input window, operand 3, single buffered']
    #allocation8 [shape = 'u8[131072]{0}', space=vmem, size = 0x20000, scoped, tag = 'input window, operand 5, single buffered']
    #allocation9 [shape = 's32[1]{0}', space=sflag, size = 0x4, scoped, tag = 'scoped memory for tpu_custom_call.1']
    #allocation10 [shape = 'u8[131072]{0}', space=vmem, size = 0x20000, scoped, tag = 'input window, operand 6, single buffered']
    #allocation11 [shape = 'u8[262144]{0}', space=vmem, size = 0x40000, scoped, tag = 'output window, operand 0']
    %12 = vsyncpa [#allocation3], 0
    %s13 = scalar_lea.sflag [#allocation3], 1
    %14 = vsyncpa %s13, 0
    %15 = vsyncpa [#allocation6], 0
    %16 = vsyncpa [#allocation9], 0
    %17 = vsyncpa [#allocation4], 0
    %s18 = scalar_lea.sflag [#allocation4], 1
    %19 = vsyncpa %s18, 0
    loop: start=0, step=1, limit=4
    $region2: #{tpu_custom_call.1} parent=1 // loop_pre_header
      _
    $region3: #{tpu_custom_call.1} parent=1 // loop_header
      %s21 = sphi 0, %s25
      %p22 = scmp.ge.s32.totalorder %s21, 4
      %s31 = sphi 0, %s33
      %s34 = sphi 0, %s31
      %s35 = sphi 0, %s34
      %s51 = sphi 0, %s35
      %s55 = sphi 0, %s55
      %s57 = sphi 0, %s55
      %s58 = sphi 0, %s57
      %s72 = sphi 0, %s58
      %s76 = sphi 0, %s76
      %s78 = sphi 0, %s76
      %s79 = sphi 0, %s78
      %s93 = sphi 0, %s79
      %s97 = sphi 0, %s97
      %s99 = sphi 0, %s97
      %s100 = sphi 0, %s99
      %s114 = sphi 0, %s100
      %s118 = sphi 0, %s118
      %s120 = sphi 0, %s118
      %s121 = sphi 0, %s120
      %s135 = sphi 0, %s121
      %s139 = sphi 0, %s139
      %s141 = sphi 0, %s139
      %s142 = sphi 0, %s141
      %s156 = sphi 0, %s142
      %s160 = sphi 0, %s160
      %s162 = sphi 0, %s160
      %s163 = sphi 0, %s162
      %s177 = sphi 0, %s163
      %s183 = sphi 0, %s185
      %s186 = sphi 0, %s183
      %s187 = sphi 0, %s186
      %s203 = sphi 0, %s187
    $region4: #{tpu_custom_call.1} parent=1 // loop_header_branch
      %24 = sbr.rel (%p22) target = $region8
    $region5: #{tpu_custom_call.1} parent=1 // loop_body
      %s26 = ssub.s32 %s21, 1
      %s27 = ssub.s32 %s21, 2
      %s28 = sadd.s32 %s21, 1
      %s29 = ssub.s32 %s21, %s28
      %p30 = scmp.eq.s32.totalorder %s29, 0
      %s32 = sadd.s32 %s31, 1
      %s33 = scalar_select %p30, %s31, %s32
      %p36 = pneg %p30
      %p37 = scmp.eq.s32.totalorder %s21, 1
      %p38 = por %p36, %p37
      %p39 = scmp.ne.s32.totalorder %s31, %s34
      %p40 = scmp.eq.s32.totalorder %s21, 0
      %p41 = por %p39, %p40
      %p42 = scmp.ne.s32.totalorder %s31, %s34
      %p43 = scmp.eq.s32.totalorder %s26, 1
      %p44 = por %p42, %p43
      %p45 = scmp.ne.s32.totalorder %s34, %s35
      %p46 = scmp.eq.s32.totalorder %s26, 0
      %p47 = por %p45, %p46
      %p48 = scmp.ne.s32.totalorder %s34, %s35
      %p49 = scmp.eq.s32.totalorder %s27, 1
      %p50 = por %p48, %p49
      %p52 = scmp.ne.s32.totalorder %s35, %s51
      %p53 = scmp.eq.s32.totalorder %s27, 0
      %p54 = por %p52, %p53
      %s56 = sadd.s32 %s55, 1
      %p59 = scmp.eq.s32.totalorder %s21, 1
      %p60 = scmp.ne.s32.totalorder %s55, %s57
      %p61 = scmp.eq.s32.totalorder %s21, 0
      %p62 = por %p60, %p61
      %p63 = scmp.ne.s32.totalorder %s55, %s57
      %p64 = scmp.eq.s32.totalorder %s26, 1
      %p65 = por %p63, %p64
      %p66 = scmp.ne.s32.totalorder %s57, %s58
      %p67 = scmp.eq.s32.totalorder %s26, 0
      %p68 = por %p66, %p67
      %p69 = scmp.ne.s32.totalorder %s57, %s58
      %p70 = scmp.eq.s32.totalorder %s27, 1
      %p71 = por %p69, %p70
      %p73 = scmp.ne.s32.totalorder %s58, %s72
      %p74 = scmp.eq.s32.totalorder %s27, 0
      %p75 = por %p73, %p74
      %s77 = sadd.s32 %s76, 1
      %p80 = scmp.eq.s32.totalorder %s21, 1
      %p81 = scmp.ne.s32.totalorder %s76, %s78
      %p82 = scmp.eq.s32.totalorder %s21, 0
      %p83 = por %p81, %p82
      %p84 = scmp.ne.s32.totalorder %s76, %s78
      %p85 = scmp.eq.s32.totalorder %s26, 1
      %p86 = por %p84, %p85
      %p87 = scmp.ne.s32.totalorder %s78, %s79
      %p88 = scmp.eq.s32.totalorder %s26, 0
      %p89 = por %p87, %p88
      %p90 = scmp.ne.s32.totalorder %s78, %s79
      %p91 = scmp.eq.s32.totalorder %s27, 1
      %p92 = por %p90, %p91
      %p94 = scmp.ne.s32.totalorder %s79, %s93
      %p95 = scmp.eq.s32.totalorder %s27, 0
      %p96 = por %p94, %p95
      %s98 = sadd.s32 %s97, 1
      %p101 = scmp.eq.s32.totalorder %s21, 1
      %p102 = scmp.ne.s32.totalorder %s97, %s99
      %p103 = scmp.eq.s32.totalorder %s21, 0
      %p104 = por %p102, %p103
      %p105 = scmp.ne.s32.totalorder %s97, %s99
      %p106 = scmp.eq.s32.totalorder %s26, 1
      %p107 = por %p105, %p106
      %p108 = scmp.ne.s32.totalorder %s99, %s100
      %p109 = scmp.eq.s32.totalorder %s26, 0
      %p110 = por %p108, %p109
      %p111 = scmp.ne.s32.totalorder %s99, %s100
      %p112 = scmp.eq.s32.totalorder %s27, 1
      %p113 = por %p111, %p112
      %p115 = scmp.ne.s32.totalorder %s100, %s114
      %p116 = scmp.eq.s32.totalorder %s27, 0
      %p117 = por %p115, %p116
      %s119 = sadd.s32 %s118, 1
      %p122 = scmp.eq.s32.totalorder %s21, 1
      %p123 = scmp.ne.s32.totalorder %s118, %s120
      %p124 = scmp.eq.s32.totalorder %s21, 0
      %p125 = por %p123, %p124
      %p126 = scmp.ne.s32.totalorder %s118, %s120
      %p127 = scmp.eq.s32.totalorder %s26, 1
      %p128 = por %p126, %p127
      %p129 = scmp.ne.s32.totalorder %s120, %s121
      %p130 = scmp.eq.s32.totalorder %s26, 0
      %p131 = por %p129, %p130
      %p132 = scmp.ne.s32.totalorder %s120, %s121
      %p133 = scmp.eq.s32.totalorder %s27, 1
      %p134 = por %p132, %p133
      %p136 = scmp.ne.s32.totalorder %s121, %s135
      %p137 = scmp.eq.s32.totalorder %s27, 0
      %p138 = por %p136, %p137
      %s140 = sadd.s32 %s139, 1
      %p143 = scmp.eq.s32.totalorder %s21, 1
      %p144 = scmp.ne.s32.totalorder %s139, %s141
      %p145 = scmp.eq.s32.totalorder %s21, 0
      %p146 = por %p144, %p145
      %p147 = scmp.ne.s32.totalorder %s139, %s141
      %p148 = scmp.eq.s32.totalorder %s26, 1
      %p149 = por %p147, %p148
      %p150 = scmp.ne.s32.totalorder %s141, %s142
      %p151 = scmp.eq.s32.totalorder %s26, 0
      %p152 = por %p150, %p151
      %p153 = scmp.ne.s32.totalorder %s141, %s142
      %p154 = scmp.eq.s32.totalorder %s27, 1
      %p155 = por %p153, %p154
      %p157 = scmp.ne.s32.totalorder %s142, %s156
      %p158 = scmp.eq.s32.totalorder %s27, 0
      %p159 = por %p157, %p158
      %s161 = sadd.s32 %s160, 1
      %p164 = scmp.eq.s32.totalorder %s21, 1
      %p165 = scmp.ne.s32.totalorder %s160, %s162
      %p166 = scmp.eq.s32.totalorder %s21, 0
      %p167 = por %p165, %p166
      %p168 = scmp.ne.s32.totalorder %s160, %s162
      %p169 = scmp.eq.s32.totalorder %s26, 1
      %p170 = por %p168, %p169
      %p171 = scmp.ne.s32.totalorder %s162, %s163
      %p172 = scmp.eq.s32.totalorder %s26, 0
      %p173 = por %p171, %p172
      %p174 = scmp.ne.s32.totalorder %s162, %s163
      %p175 = scmp.eq.s32.totalorder %s27, 1
      %p176 = por %p174, %p175
      %p178 = scmp.ne.s32.totalorder %s163, %s177
      %p179 = scmp.eq.s32.totalorder %s27, 0
      %p180 = por %p178, %p179
      %s181 = ssub.s32 %s21, %s28
      %p182 = scmp.eq.s32.totalorder %s181, 0
      %s184 = sadd.s32 %s183, 1
      %s185 = scalar_select %p182, %s183, %s184
      %p188 = pneg %p182
      %p189 = scmp.eq.s32.totalorder %s21, 1
      %p190 = por %p188, %p189
      %p191 = scmp.ne.s32.totalorder %s183, %s186
      %p192 = scmp.eq.s32.totalorder %s21, 0
      %p193 = por %p191, %p192
      %p194 = scmp.ne.s32.totalorder %s183, %s186
      %p195 = scmp.eq.s32.totalorder %s26, 1
      %p196 = por %p194, %p195
      %p197 = scmp.ne.s32.totalorder %s186, %s187
      %p198 = scmp.eq.s32.totalorder %s26, 0
      %p199 = por %p197, %p198
      %p200 = scmp.ne.s32.totalorder %s186, %s187
      %p201 = scmp.eq.s32.totalorder %s27, 1
      %p202 = por %p200, %p201
      %p204 = scmp.ne.s32.totalorder %s187, %s203
      %p205 = scmp.eq.s32.totalorder %s27, 0
      %p206 = por %p204, %p205
      %p207 = scmp.le.s32.totalorder 1, %s21
      %p208 = scmp.lt.s32.totalorder %s21, 3
      %p209 = pnand %p207, %p208
      %p210 = pneg %p209
      // Predicated region
      $region9: #{tpu_custom_call.1} parent=5 // pred_check
        _
      $region10: #{tpu_custom_call.1} parent=5 // pred_check_branch
        %212 = sbr.rel (%p209) target = $region12
      $region11: #{tpu_custom_call.1} parent=5 // pred_region
        %s213 = ssub.s32 %s21, 1
        // Predicated region
        $region13: #{tpu_custom_call.1} parent=11 // pred_check
          %p214 = pneg %p68
        $region14: #{tpu_custom_call.1} parent=11 // pred_check_branch
          %216 = sbr.rel (%p214) target = $region16
        $region15: #{tpu_custom_call.1} parent=11 // pred_region
          %s218 = ssub.s32 3072, 3072
          %219 = vsyncadd [#allocation6], %s218
          %s220 = sshll.u32 [#allocation5], 4
          %s221 = int_to_ptr.vmem [resolvable:$true] %s220
          %226 = dma.hbm_to_vmem [thread:$0]  %s1, 3072, %s221, [#allocation6], 192, 192, 12
        $region16: #{tpu_custom_call.1} parent=11 // pred_fallthru
          _
        // Predicated region
        $region17: #{tpu_custom_call.1} parent=11 // pred_check
          %p227 = pneg %p89
        $region18: #{tpu_custom_call.1} parent=11 // pred_check_branch
          %229 = sbr.rel (%p227) target = $region20
        $region19: #{tpu_custom_call.1} parent=11 // pred_region
          _
        $region20: #{tpu_custom_call.1} parent=11 // pred_fallthru
          _
        // Predicated region
        $region21: #{tpu_custom_call.1} parent=11 // pred_check
          %p230 = pneg %p110
        $region22: #{tpu_custom_call.1} parent=11 // pred_check_branch
          %232 = sbr.rel (%p230) target = $region24
        $region23: #{tpu_custom_call.1} parent=11 // pred_region
          %s234 = ssub.s32 1024, 1024
          %235 = vsyncadd [#allocation6], %s234
          %s236 = sshll.u32 [#allocation7], 4
          %s237 = int_to_ptr.vmem [resolvable:$true] %s236
          %242 = dma.hbm_to_vmem [thread:$0]  %s3, 1024, %s237, [#allocation6], 64, 64, 4
        $region24: #{tpu_custom_call.1} parent=11 // pred_fallthru
          _
        // Predicated region
        $region25: #{tpu_custom_call.1} parent=11 // pred_check
          %p243 = pneg %p131
        $region26: #{tpu_custom_call.1} parent=11 // pred_check_branch
          %245 = sbr.rel (%p243) target = $region28
        $region27: #{tpu_custom_call.1} parent=11 // pred_region
          _
        $region28: #{tpu_custom_call.1} parent=11 // pred_fallthru
          _
        // Predicated region
        $region29: #{tpu_custom_call.1} parent=11 // pred_check
          %p246 = pneg %p152
        $region30: #{tpu_custom_call.1} parent=11 // pred_check_branch
          %248 = sbr.rel (%p246) target = $region32
        $region31: #{tpu_custom_call.1} parent=11 // pred_region
          %s250 = ssub.s32 4096, 4096
          %251 = vsyncadd [#allocation9], %s250
          %s252 = sshll.u32 [#allocation8], 4
          %s253 = int_to_ptr.vmem [resolvable:$true] %s252
          %258 = dma.hbm_to_vmem [thread:$0]  %s5, 4096, %s253, [#allocation9], 128, 128, 8
        $region32: #{tpu_custom_call.1} parent=11 // pred_fallthru
          _
        // Predicated region
        $region33: #{tpu_custom_call.1} parent=11 // pred_check
          %p259 = pneg %p173
        $region34: #{tpu_custom_call.1} parent=11 // pred_check_branch
          %261 = sbr.rel (%p259) target = $region36
        $region35: #{tpu_custom_call.1} parent=11 // pred_region
          %s263 = ssub.s32 4096, 4096
          %264 = vsyncadd [#allocation9], %s263
          %s265 = sshll.u32 [#allocation10], 4
          %s266 = int_to_ptr.vmem [resolvable:$true] %s265
          %271 = dma.hbm_to_vmem [thread:$0]  %s6, 4096, %s266, [#allocation9], 128, 128, 8
        $region36: #{tpu_custom_call.1} parent=11 // pred_fallthru
          _
      $region12: #{tpu_custom_call.1} parent=5 // pred_fallthru
        _
      %p272 = scmp.lt.s32.totalorder %s21, 2
      // Predicated region
      $region37: #{tpu_custom_call.1} parent=5 // pred_check
        %p273 = pneg %p272
      $region38: #{tpu_custom_call.1} parent=5 // pred_check_branch
        %275 = sbr.rel (%p273) target = $region40
      $region39: #{tpu_custom_call.1} parent=5 // pred_region
        // Predicated region
        $region41: #{tpu_custom_call.1} parent=39 // pred_check
          %p276 = pneg %p41
        $region42: #{tpu_custom_call.1} parent=39 // pred_check_branch
          %278 = sbr.rel (%p276) target = $region44
        $region43: #{tpu_custom_call.1} parent=39 // pred_region
          %s279 = sand.u32 %s31, 1
          %s280 = scalar_lea.sflag [#allocation3], %s279
          %s281 = sand.u32 %s31, 1
          %s282 = smul.addr %s281, 128
          %s283 = scalar_lea.vmem [#allocation2], %s282
          %s284 = smul.u32 4, %s21
          %s286 = ssub.s32 2048, 2048
          %287 = vsyncadd %s280, %s286
          %s288 = smul.addr %s284, 8
          %s289 = smul.addr %s288, 64
          %s290 = scalar_lea.hbm %s0, %s289
          %s291 = sshll.u32 %s283, 4
          %s292 = int_to_ptr.vmem [resolvable:$true] %s291
          %297 = dma.hbm_to_vmem [thread:$0]  %s290, 2048, %s292, %s280, 64, 64, 4
        $region44: #{tpu_custom_call.1} parent=39 // pred_fallthru
          _
      $region40: #{tpu_custom_call.1} parent=5 // pred_fallthru
        _
      %p298 = scmp.le.s32.totalorder 1, %s21
      %p299 = scmp.lt.s32.totalorder %s21, 3
      %p300 = pnand %p298, %p299
      %p301 = pneg %p300
      // Predicated region
      $region45: #{tpu_custom_call.1} parent=5 // pred_check
        _
      $region46: #{tpu_custom_call.1} parent=5 // pred_check_branch
        %303 = sbr.rel (%p300) target = $region48
      $region47: #{tpu_custom_call.1} parent=5 // pred_region
        %s304 = ssub.s32 %s21, 1
        %s305 = sand.u32 %s34, 1
        %s306 = scalar_lea.sflag [#allocation3], %s305
        %s307 = sand.u32 %s34, 1
        %s308 = smul.addr %s307, 128
        %s309 = scalar_lea.vmem [#allocation2], %s308
        // Predicated region
        $region49: #{tpu_custom_call.1} parent=47 // pred_check
          %p310 = pneg %p47
        $region50: #{tpu_custom_call.1} parent=47 // pred_check_branch
          %312 = sbr.rel (%p310) target = $region52
        $region51: #{tpu_custom_call.1} parent=47 // pred_region
          %313 = dma.done %s306, 2048
        $region52: #{tpu_custom_call.1} parent=47 // pred_fallthru
          _
        // Predicated region
        $region53: #{tpu_custom_call.1} parent=47 // pred_check
          %p314 = pneg %p68
        $region54: #{tpu_custom_call.1} parent=47 // pred_check_branch
          %316 = sbr.rel (%p314) target = $region56
        $region55: #{tpu_custom_call.1} parent=47 // pred_region
          %317 = dma.done [#allocation6], 3072
        $region56: #{tpu_custom_call.1} parent=47 // pred_fallthru
          _
        // Predicated region
        $region57: #{tpu_custom_call.1} parent=47 // pred_check
          %p318 = pneg %p110
        $region58: #{tpu_custom_call.1} parent=47 // pred_check_branch
          %320 = sbr.rel (%p318) target = $region60
        $region59: #{tpu_custom_call.1} parent=47 // pred_region
          %321 = dma.done [#allocation6], 1024
        $region60: #{tpu_custom_call.1} parent=47 // pred_fallthru
          _
        // Predicated region
        $region61: #{tpu_custom_call.1} parent=47 // pred_check
          %p322 = pneg %p152
        $region62: #{tpu_custom_call.1} parent=47 // pred_check_branch
          %324 = sbr.rel (%p322) target = $region64
        $region63: #{tpu_custom_call.1} parent=47 // pred_region
          %325 = dma.done [#allocation9], 4096
        $region64: #{tpu_custom_call.1} parent=47 // pred_fallthru
          _
        // Predicated region
        $region65: #{tpu_custom_call.1} parent=47 // pred_check
          %p326 = pneg %p173
        $region66: #{tpu_custom_call.1} parent=47 // pred_check_branch
          %328 = sbr.rel (%p326) target = $region68
        $region67: #{tpu_custom_call.1} parent=47 // pred_region
          %329 = dma.done [#allocation9], 4096
        $region68: #{tpu_custom_call.1} parent=47 // pred_fallthru
          _
        %s330 = sand.u32 %s34, 1
        %s331 = scalar_lea.sflag [#allocation3], %s330
        %s332 = sand.u32 %s34, 1
        %s333 = smul.addr %s332, 128
        %s334 = scalar_lea.vmem [#allocation2], %s333
        %p335 = pneg %p47
        %p336 = pneg %p44
        %p337 = pneg %p68
        %p338 = pneg %p65
        %p339 = pneg %p89
        %p340 = pneg %p86
        %p341 = pneg %p110
        %p342 = pneg %p107
        %p343 = pneg %p131
        %p344 = pneg %p128
        %p345 = pneg %p152
        %p346 = pneg %p149
        %p347 = pneg %p173
        %p348 = pneg %p170
        %p349 = pneg %p199
        %p350 = pneg %p196
        %s351 = sand.u32 %s186, 1
        %s352 = scalar_lea.sflag [#allocation4], %s351
        %s353 = sand.u32 %s186, 1
        %s354 = smul.addr %s353, 256
        %s355 = scalar_lea.vmem [#allocation11], %s354
        %s356 = smul.u32 4, %s26
        %s357 = smul.u32 4, %s26
        %v359 = vld [vmem:[#allocation5] sm:$0xff]
        %v360 = vld [vmem:[#allocation5 + $0x8] sm:$0xf]
        %v361 = vld [vmem:[#allocation5 + $0xc] sm:$0xff]
        %v362 = vld [vmem:[#allocation5 + $0x14] sm:$0xf]
        %v363 = vld [vmem:[#allocation5 + $0x18] sm:$0xff]
        %v364 = vld [vmem:[#allocation5 + $0x20] sm:$0xf]
        %v365 = vld [vmem:[#allocation5 + $0x24] sm:$0xff]
        %v366 = vld [vmem:[#allocation5 + $0x2c] sm:$0xf]
        %v367 = vld [vmem:[#allocation5 + $0x30] sm:$0xff]
        %v368 = vld [vmem:[#allocation5 + $0x38] sm:$0xf]
        %v369 = vld [vmem:[#allocation5 + $0x3c] sm:$0xff]
        %v370 = vld [vmem:[#allocation5 + $0x44] sm:$0xf]
        %v371 = vld [vmem:[#allocation5 + $0x48] sm:$0xff]
        %v372 = vld [vmem:[#allocation5 + $0x50] sm:$0xf]
        %v373 = vld [vmem:[#allocation5 + $0x54] sm:$0xff]
        %v374 = vld [vmem:[#allocation5 + $0x5c] sm:$0xf]
        %v375 = vld [vmem:[#allocation5 + $0x60] sm:$0xff]
        %v376 = vld [vmem:[#allocation5 + $0x68] sm:$0xf]
        %v377 = vld [vmem:[#allocation5 + $0x6c] sm:$0xff]
        %v378 = vld [vmem:[#allocation5 + $0x74] sm:$0xf]
        %v379 = vld [vmem:[#allocation5 + $0x78] sm:$0xff]
        %v380 = vld [vmem:[#allocation5 + $0x80] sm:$0xf]
        %v381 = vld [vmem:[#allocation5 + $0x84] sm:$0xff]
        %v382 = vld [vmem:[#allocation5 + $0x8c] sm:$0xf]
        %v383 = vld [vmem:[#allocation5 + $0x90] sm:$0xff]
        %v384 = vld [vmem:[#allocation5 + $0x98] sm:$0xf]
        %v385 = vld [vmem:[#allocation5 + $0x9c] sm:$0xff]
        %v386 = vld [vmem:[#allocation5 + $0xa4] sm:$0xf]
        %v387 = vld [vmem:[#allocation5 + $0xa8] sm:$0xff]
        %v388 = vld [vmem:[#allocation5 + $0xb0] sm:$0xf]
        %v389 = vld [vmem:[#allocation5 + $0xb4] sm:$0xff]
        %v390 = vld [vmem:[#allocation5 + $0xbc] sm:$0xf]
        %v391 = vld [vmem:[#allocation7] sm:$0xf]
        %v392 = vld [vmem:[#allocation7 + $0x4] sm:$0xf]
        %v393 = vld [vmem:[#allocation7 + $0x8] sm:$0xf]
        %v394 = vld [vmem:[#allocation7 + $0xc] sm:$0xf]
        %v395 = vld [vmem:[#allocation7 + $0x10] sm:$0xf]
        %v396 = vld [vmem:[#allocation7 + $0x14] sm:$0xf]
        %v397 = vld [vmem:[#allocation7 + $0x18] sm:$0xf]
        %v398 = vld [vmem:[#allocation7 + $0x1c] sm:$0xf]
        %v399 = vld [vmem:[#allocation7 + $0x20] sm:$0xf]
        %v400 = vld [vmem:[#allocation7 + $0x24] sm:$0xf]
        %v401 = vld [vmem:[#allocation7 + $0x28] sm:$0xf]
        %v402 = vld [vmem:[#allocation7 + $0x2c] sm:$0xf]
        %v403 = vld [vmem:[#allocation7 + $0x30] sm:$0xf]
        %v404 = vld [vmem:[#allocation7 + $0x34] sm:$0xf]
        %v405 = vld [vmem:[#allocation7 + $0x38] sm:$0xf]
        %v406 = vld [vmem:[#allocation7 + $0x3c] sm:$0xf]
        %v407 = vld [vmem:[%s2] sm:$0x7]
        %v408 = vld [vmem:[%s4] sm:$0x1]
        %v409 = vld [vmem:[%s309] sm:$0xf]
        %v410 = vld [vmem:[%s309 + $0x4] sm:$0xf]
        %v411 = vld [vmem:[%s309 + $0x8] sm:$0xf]
        %v412 = vld [vmem:[%s309 + $0xc] sm:$0xf]
        %v413 = vld [vmem:[%s309 + $0x10] sm:$0xf]
        %v414 = vld [vmem:[%s309 + $0x14] sm:$0xf]
        %v415 = vld [vmem:[%s309 + $0x18] sm:$0xf]
        %v416 = vld [vmem:[%s309 + $0x1c] sm:$0xf]
        %v418 = vlaneseq
        %v419 = vshrl.u32 %v418, 7
        %v420 = vsub.s32 0, %v419
        %v421 = vrot.slane %v407, %v420
        %v422 = vlaneseq
        %v423 = vshrl.u32 %v422, 7
        %v424 = vsub.s32 1, %v423
        %v425 = vrot.slane %v407, %v424
        %v426 = vlaneseq
        %v427 = vshrl.u32 %v426, 7
        %v428 = vsub.s32 2, %v427
        %v429 = vrot.slane %v407, %v428
        %v441 = vunpack.c.l.b16 %v409
        %v442 = vunpack.c.l.b16 %v410
        %v443 = vunpack.c.l.b16 %v411
        %v444 = vunpack.c.l.b16 %v412
        %v445 = vunpack.c.l.b16 %v413
        %v446 = vunpack.c.l.b16 %v414
        %v447 = vunpack.c.l.b16 %v415
        %v448 = vunpack.c.l.b16 %v416
        %v449 = vpack.c.b16 %v442, %v441
        %v450 = vpack.c.b16 %v444, %v443
        %v451 = vpack.c.b16 %v446, %v445
        %v452 = vpack.c.b16 %v448, %v447
        %v489 = vunpack.c.l.b16 %v359
        %v490 = vunpack.c.h.b16 %v359
        %v491 = vunpack.c.l.b16 %v360
        %v492 = vunpack.c.l.b16 %v361
        %v493 = vunpack.c.h.b16 %v361
        %v494 = vunpack.c.l.b16 %v362
        %v495 = vunpack.c.l.b16 %v363
        %v496 = vunpack.c.h.b16 %v363
        %v497 = vunpack.c.l.b16 %v364
        %v498 = vunpack.c.l.b16 %v365
        %v499 = vunpack.c.h.b16 %v365
        %v500 = vunpack.c.l.b16 %v366
        %v501 = vunpack.c.l.b16 %v367
        %v502 = vunpack.c.h.b16 %v367
        %v503 = vunpack.c.l.b16 %v368
        %v504 = vunpack.c.l.b16 %v369
        %v505 = vunpack.c.h.b16 %v369
        %v506 = vunpack.c.l.b16 %v370
        %v507 = vunpack.c.l.b16 %v371
        %v508 = vunpack.c.h.b16 %v371
        %v509 = vunpack.c.l.b16 %v372
        %v510 = vunpack.c.l.b16 %v373
        %v511 = vunpack.c.h.b16 %v373
        %v512 = vunpack.c.l.b16 %v374
        %v513 = vunpack.c.l.b16 %v375
        %v514 = vunpack.c.h.b16 %v375
        %v515 = vunpack.c.l.b16 %v376
        %v516 = vunpack.c.l.b16 %v377
        %v517 = vunpack.c.h.b16 %v377
        %v518 = vunpack.c.l.b16 %v378
        %v519 = vunpack.c.l.b16 %v379
        %v520 = vunpack.c.h.b16 %v379
        %v521 = vunpack.c.l.b16 %v380
        %v522 = vunpack.c.l.b16 %v381
        %v523 = vunpack.c.h.b16 %v381
        %v524 = vunpack.c.l.b16 %v382
        %v525 = vunpack.c.l.b16 %v383
        %v526 = vunpack.c.h.b16 %v383
        %v527 = vunpack.c.l.b16 %v384
        %v528 = vunpack.c.l.b16 %v385
        %v529 = vunpack.c.h.b16 %v385
        %v530 = vunpack.c.l.b16 %v386
        %v531 = vunpack.c.l.b16 %v387
        %v532 = vunpack.c.h.b16 %v387
        %v533 = vunpack.c.l.b16 %v388
        %v534 = vunpack.c.l.b16 %v389
        %v535 = vunpack.c.h.b16 %v389
        %v536 = vunpack.c.l.b16 %v390
        %v537 = vpack.c.b16 %v492, %v489
        %v538 = vpack.c.b16 %v493, %v490
        %v539 = vpack.c.b16 %v494, %v491
        %v540 = vpack.c.b16 %v498, %v495
        %v541 = vpack.c.b16 %v499, %v496
        %v542 = vpack.c.b16 %v500, %v497
        %v543 = vpack.c.b16 %v504, %v501
        %v544 = vpack.c.b16 %v505, %v502
        %v545 = vpack.c.b16 %v506, %v503
        %v546 = vpack.c.b16 %v510, %v507
        %v547 = vpack.c.b16 %v511, %v508
        %v548 = vpack.c.b16 %v512, %v509
        %v549 = vpack.c.b16 %v516, %v513
        %v550 = vpack.c.b16 %v517, %v514
        %v551 = vpack.c.b16 %v518, %v515
        %v552 = vpack.c.b16 %v522, %v519
        %v553 = vpack.c.b16 %v523, %v520
        %v554 = vpack.c.b16 %v524, %v521
        %v555 = vpack.c.b16 %v528, %v525
        %v556 = vpack.c.b16 %v529, %v526
        %v557 = vpack.c.b16 %v530, %v527
        %v558 = vpack.c.b16 %v534, %v531
        %v559 = vpack.c.b16 %v535, %v532
        %v560 = vpack.c.b16 %v536, %v533
        %585 = vmatprep.subr.bf16.mxu0 %v538
        %586 = vmatpush1.bf16.msra.mxu0 %v537
        %587 = vmatprep.subr.bf16.mxu0 %v541
        %588 = vmatpush1.bf16.msra.mxu0 %v540
        %589 = vmatprep.subr.bf16.mxu0 %v544
        %590 = vmatpush1.bf16.msra.mxu0 %v543
        %591 = vmatprep.subr.bf16.mxu0 %v547
        %592 = vmatpush1.bf16.msra.mxu0 %v546
        %593 = vmatprep.subr.bf16.mxu0 %v550
        %594 = vmatpush1.bf16.msra.mxu0 %v549
        %595 = vmatprep.subr.bf16.mxu0 %v553
        %596 = vmatpush1.bf16.msra.mxu0 %v552
        %597 = vmatprep.subr.bf16.mxu0 %v556
        %598 = vmatpush1.bf16.msra.mxu0 %v555
        %599 = vmatprep.subr.bf16.mxu0 %v559
        %600 = vmatpush1.bf16.msra.mxu0 %v558
        %601 = vmatprep.subr.bf16.mxu0 0
        %602 = vmatpush1.bf16.msra.mxu0 0
        %603 = vmatprep.subr.bf16.mxu0 0
        %604 = vmatpush1.bf16.msra.mxu0 0
        %605 = vmatprep.subr.bf16.mxu0 0
        %606 = vmatpush1.bf16.msra.mxu0 0
        %607 = vmatprep.subr.bf16.mxu0 0
        %608 = vmatpush1.bf16.msra.mxu0 0
        %609 = vmatprep.subr.bf16.mxu0 0
        %610 = vmatpush1.bf16.msra.mxu0 0
        %611 = vmatprep.subr.bf16.mxu0 0
        %612 = vmatpush1.bf16.msra.mxu0 0
        %613 = vmatprep.subr.bf16.mxu0 0
        %614 = vmatpush1.bf16.msra.mxu0 0
        %615 = vmatprep.subr.bf16.mxu0 0
        %616 = vmatpush1.bf16.msra.mxu0 0
        %617 = vmatprep.mubr.bf16.mxu0 0
        %618 = vmatmul.mubr.bf16.gmra.mrb[0].mxu0 %v449
        %v619 = vpop.f32.mrb[0].mxu0
        %v620 = vadd.f32 %v421, %v619
        %v621 = vpop.f32.mrb[0].mxu0
        %v622 = vadd.f32 %v425, %v621
        %v623 = vpop.f32.mrb[0].mxu0
        %v624 = vadd.f32 %v421, %v623
        %v625 = vpop.f32.mrb[0].mxu0
        %v626 = vadd.f32 %v425, %v625
        %627 = vmatprep.mubr.bf16.mxu0 0
        %628 = vmatmul.mubr.bf16.gmra.mrb[0].mxu0 %v450
        %v629 = vpop.f32.mrb[0].mxu0
        %v630 = vadd.f32 %v421, %v629
        %v631 = vpop.f32.mrb[0].mxu0
        %v632 = vadd.f32 %v425, %v631
        %v633 = vpop.f32.mrb[0].mxu0
        %v634 = vadd.f32 %v421, %v633
        %v635 = vpop.f32.mrb[0].mxu0
        %v636 = vadd.f32 %v425, %v635
        %637 = vmatprep.mubr.bf16.mxu0 0
        %638 = vmatmul.mubr.bf16.gmra.mrb[0].mxu0 %v451
        %v639 = vpop.f32.mrb[0].mxu0
        %v640 = vadd.f32 %v421, %v639
        %v641 = vpop.f32.mrb[0].mxu0
        %v642 = vadd.f32 %v425, %v641
        %v643 = vpop.f32.mrb[0].mxu0
        %v644 = vadd.f32 %v421, %v643
        %v645 = vpop.f32.mrb[0].mxu0
        %v646 = vadd.f32 %v425, %v645
        %647 = vmatprep.mubr.bf16.mxu0 0
        %648 = vmatmul.mubr.bf16.gmra.mrb[0].mxu0 %v452
        %v649 = vpop.f32.mrb[0].mxu0
        %v650 = vadd.f32 %v421, %v649
        %v651 = vpop.f32.mrb[0].mxu0
        %v652 = vadd.f32 %v425, %v651
        %v653 = vpop.f32.mrb[0].mxu0
        %v654 = vadd.f32 %v421, %v653
        %v655 = vpop.f32.mrb[0].mxu0
        %v656 = vadd.f32 %v425, %v655
        %657 = vdwg.mxu0
        %658 = vmatprep.subr.bf16.mxu0 0
        %659 = vmatpush1.bf16.msra.mxu0 %v539
        %660 = vmatprep.subr.bf16.mxu0 0
        %661 = vmatpush1.bf16.msra.mxu0 %v542
        %662 = vmatprep.subr.bf16.mxu0 0
        %663 = vmatpush1.bf16.msra.mxu0 %v545
        %664 = vmatprep.subr.bf16.mxu0 0
        %665 = vmatpush1.bf16.msra.mxu0 %v548
        %666 = vmatprep.subr.bf16.mxu0 0
        %667 = vmatpush1.bf16.msra.mxu0 %v551
        %668 = vmatprep.subr.bf16.mxu0 0
        %669 = vmatpush1.bf16.msra.mxu0 %v554
        %670 = vmatprep.subr.bf16.mxu0 0
        %671 = vmatpush1.bf16.msra.mxu0 %v557
        %672 = vmatprep.subr.bf16.mxu0 0
        %673 = vmatpush1.bf16.msra.mxu0 %v560
        %674 = vmatprep.subr.bf16.mxu0 0
        %675 = vmatpush1.bf16.msra.mxu0 0
        %676 = vmatprep.subr.bf16.mxu0 0
        %677 = vmatpush1.bf16.msra.mxu0 0
        %678 = vmatprep.subr.bf16.mxu0 0
        %679 = vmatpush1.bf16.msra.mxu0 0
        %680 = vmatprep.subr.bf16.mxu0 0
        %681 = vmatpush1.bf16.msra.mxu0 0
        %682 = vmatprep.subr.bf16.mxu0 0
        %683 = vmatpush1.bf16.msra.mxu0 0
        %684 = vmatprep.subr.bf16.mxu0 0
        %685 = vmatpush1.bf16.msra.mxu0 0
        %686 = vmatprep.subr.bf16.mxu0 0
        %687 = vmatpush1.bf16.msra.mxu0 0
        %688 = vmatprep.subr.bf16.mxu0 0
        %689 = vmatpush1.bf16.msra.mxu0 0
        %690 = vmatprep.mubr.bf16.mxu0 0
        %691 = vmatmul.mubr.bf16.gmra.mrb[0].mxu0 %v449
        %v692 = vpop.f32.mrb[0].mxu0
        %v693 = vadd.f32 %v429, %v692
        %v694 = vpop.f32.mrb[0].mxu0
        %v695 = vpop.f32.mrb[0].mxu0
        %v696 = vadd.f32 %v429, %v695
        %v697 = vpop.f32.mrb[0].mxu0
        %698 = vmatprep.mubr.bf16.mxu0 0
        %699 = vmatmul.mubr.bf16.gmra.mrb[0].mxu0 %v450
        %v700 = vpop.f32.mrb[0].mxu0
        %v701 = vadd.f32 %v429, %v700
        %v702 = vpop.f32.mrb[0].mxu0
        %v703 = vpop.f32.mrb[0].mxu0
        %v704 = vadd.f32 %v429, %v703
        %v705 = vpop.f32.mrb[0].mxu0
        %706 = vmatprep.mubr.bf16.mxu0 0
        %707 = vmatmul.mubr.bf16.gmra.mrb[0].mxu0 %v451
        %v708 = vpop.f32.mrb[0].mxu0
        %v709 = vadd.f32 %v429, %v708
        %v710 = vpop.f32.mrb[0].mxu0
        %v711 = vpop.f32.mrb[0].mxu0
        %v712 = vadd.f32 %v429, %v711
        %v713 = vpop.f32.mrb[0].mxu0
        %714 = vmatprep.mubr.bf16.mxu0 0
        %715 = vmatmul.mubr.bf16.gmra.mrb[0].mxu0 %v452
        %v716 = vpop.f32.mrb[0].mxu0
        %v717 = vadd.f32 %v429, %v716
        %v718 = vpop.f32.mrb[0].mxu0
        %v719 = vpop.f32.mrb[0].mxu0
        %v720 = vadd.f32 %v429, %v719
        %v721 = vpop.f32.mrb[0].mxu0
        %722 = vdwg.mxu0
        %v723 = vld [vmem:[#allocation10] sm:$0xff]
        %v724 = vld [vmem:[#allocation10 + $0x8] sm:$0xff]
        %v725 = vld [vmem:[#allocation10 + $0x10] sm:$0xff]
        %v726 = vld [vmem:[#allocation10 + $0x18] sm:$0xff]
        %v727 = vld [vmem:[#allocation10 + $0x20] sm:$0xff]
        %v728 = vld [vmem:[#allocation10 + $0x28] sm:$0xff]
        %v729 = vld [vmem:[#allocation10 + $0x30] sm:$0xff]
        %v730 = vld [vmem:[#allocation10 + $0x38] sm:$0xff]
        %v731 = vpack.c.bf16 %v624, %v620
        %v732 = vpack.c.bf16 %v634, %v630
        %v733 = vpack.c.bf16 %v644, %v640
        %v734 = vpack.c.bf16 %v654, %v650
        %v735 = vpack.c.bf16 %v626, %v622
        %v736 = vpack.c.bf16 %v636, %v632
        %v737 = vpack.c.bf16 %v646, %v642
        %v738 = vpack.c.bf16 %v656, %v652
        %v739 = vpack.c.bf16 %v696, %v693
        %v740 = vpack.c.bf16 %v704, %v701
        %v741 = vpack.c.bf16 %v712, %v709
        %v742 = vpack.c.bf16 %v720, %v717
        %v743 = vld [vmem:[#allocation8] sm:$0xff]
        %v744 = vld [vmem:[#allocation8 + $0x8] sm:$0xff]
        %v745 = vld [vmem:[#allocation8 + $0x10] sm:$0xff]
        %v746 = vld [vmem:[#allocation8 + $0x18] sm:$0xff]
        %v747 = vld [vmem:[#allocation8 + $0x20] sm:$0xff]
        %v748 = vld [vmem:[#allocation8 + $0x28] sm:$0xff]
        %v749 = vld [vmem:[#allocation8 + $0x30] sm:$0xff]
        %v750 = vld [vmem:[#allocation8 + $0x38] sm:$0xff]
        %vm751 = vcmask 261120
        %v753 = vsel %vm751, %v731, 0
        %v756 = vsel %vm751, %v732, 0
        %v759 = vsel %vm751, %v733, 0
        %v762 = vsel %vm751, %v734, 0
        %v765 = vsel %vm751, %v735, 0
        %v768 = vsel %vm751, %v736, 0
        %v771 = vsel %vm751, %v737, 0
        %v774 = vsel %vm751, %v738, 0
        %776 = vmatprep.subr.bf16.mxu0 0
        %777 = vmatpush1.bf16.xpose.msra.mxu0 %v765
        %778 = vmatprep.subr.bf16.mxu0 0
        %779 = vmatpush1.bf16.xpose.msra.mxu0 %v768
        %780 = vmatprep.subr.bf16.mxu0 0
        %781 = vmatpush1.bf16.xpose.msra.mxu0 %v771
        %782 = vmatprep.subr.bf16.mxu0 0
        %783 = vmatpush1.bf16.xpose.msra.mxu0 %v774
        %784 = vmatprep.subr.bf16.mxu0 0
        %785 = vmatpush1.bf16.xpose.msra.mxu0 0
        %786 = vmatprep.subr.bf16.mxu0 0
        %787 = vmatpush1.bf16.xpose.msra.mxu0 0
        %788 = vmatprep.subr.bf16.mxu0 0
        %789 = vmatpush1.bf16.xpose.msra.mxu0 0
        %790 = vmatprep.subr.bf16.mxu0 0
        %791 = vmatpush1.bf16.xpose.msra.mxu0 0
        %792 = vmatprep.subr.bf16.mxu0 0
        %793 = vmatpush1.bf16.xpose.msra.mxu0 0
        %794 = vmatprep.subr.bf16.mxu0 0
        %795 = vmatpush1.bf16.xpose.msra.mxu0 0
        %796 = vmatprep.subr.bf16.mxu0 0
        %797 = vmatpush1.bf16.xpose.msra.mxu0 0
        %798 = vmatprep.subr.bf16.mxu0 0
        %799 = vmatpush1.bf16.xpose.msra.mxu0 0
        %800 = vmatprep.subr.bf16.mxu0 0
        %801 = vmatpush1.bf16.xpose.msra.mxu0 0
        %802 = vmatprep.subr.bf16.mxu0 0
        %803 = vmatpush1.bf16.xpose.msra.mxu0 0
        %804 = vmatprep.subr.bf16.mxu0 0
        %805 = vmatpush1.bf16.xpose.msra.mxu0 0
        %806 = vmatprep.subr.bf16.mxu0 0
        %807 = vmatpush1.bf16.xpose.msra.mxu0 0
        %808 = vmatprep.mubr.bf16.mxu0 0
        %809 = vmatmul.mubr.bf16.gmra.mrb[0].mxu0 %v753
        %v810 = vpop.f32.mrb[0].mxu0
        %v811 = vadd.f32 %v743, %v810
        %v812 = vpop.f32.mrb[0].mxu0
        %v813 = vpop.f32.mrb[0].mxu0
        %v814 = vadd.f32 %v744, %v813
        %v815 = vpop.f32.mrb[0].mxu0
        %816 = vmatprep.mubr.bf16.mxu0 0
        %817 = vmatmul.mubr.bf16.gmra.mrb[0].mxu0 %v756
        %v818 = vpop.f32.mrb[0].mxu0
        %v819 = vadd.f32 %v745, %v818
        %v820 = vpop.f32.mrb[0].mxu0
        %v821 = vpop.f32.mrb[0].mxu0
        %v822 = vadd.f32 %v746, %v821
        %v823 = vpop.f32.mrb[0].mxu0
        %824 = vmatprep.mubr.bf16.mxu0 0
        %825 = vmatmul.mubr.bf16.gmra.mrb[0].mxu0 %v759
        %v826 = vpop.f32.mrb[0].mxu0
        %v827 = vadd.f32 %v747, %v826
        %v828 = vpop.f32.mrb[0].mxu0
        %v829 = vpop.f32.mrb[0].mxu0
        %v830 = vadd.f32 %v748, %v829
        %v831 = vpop.f32.mrb[0].mxu0
        %832 = vmatprep.mubr.bf16.mxu0 0
        %833 = vmatmul.mubr.bf16.gmra.mrb[0].mxu0 %v762
        %v834 = vpop.f32.mrb[0].mxu0
        %v835 = vadd.f32 %v749, %v834
        %v836 = vpop.f32.mrb[0].mxu0
        %v837 = vpop.f32.mrb[0].mxu0
        %v838 = vadd.f32 %v750, %v837
        %v839 = vpop.f32.mrb[0].mxu0
        %840 = vdwg.mxu0
        %v841 = vadd.f32 %v811, %v723
        %v842 = vadd.f32 %v814, %v724
        %v843 = vadd.f32 %v819, %v725
        %v844 = vadd.f32 %v822, %v726
        %v845 = vadd.f32 %v827, %v727
        %v846 = vadd.f32 %v830, %v728
        %v847 = vadd.f32 %v835, %v729
        %v848 = vadd.f32 %v838, %v730
        %vm849 = vcmask 523264
        %v850 = vsel %vm849, %v841, -inf
        %851 = vmax.xlane.f32.xlu0 %v850
        %v852 = vpop.xlane.xlu0 %851
        %v853 = vsel %vm849, %v842, -inf
        %854 = vmax.xlane.f32.xlu0 %v853
        %v855 = vpop.xlane.xlu0 %854
        %v856 = vsel %vm849, %v843, -inf
        %857 = vmax.xlane.f32.xlu0 %v856
        %v858 = vpop.xlane.xlu0 %857
        %v859 = vsel %vm849, %v844, -inf
        %860 = vmax.xlane.f32.xlu0 %v859
        %v861 = vpop.xlane.xlu0 %860
        %v862 = vsel %vm849, %v845, -inf
        %863 = vmax.xlane.f32.xlu0 %v862
        %v864 = vpop.xlane.xlu0 %863
        %v865 = vsel %vm849, %v846, -inf
        %866 = vmax.xlane.f32.xlu0 %v865
        %v867 = vpop.xlane.xlu0 %866
        %v868 = vsel %vm849, %v847, -inf
        %869 = vmax.xlane.f32.xlu0 %v868
        %v870 = vpop.xlane.xlu0 %869
        %v871 = vsel %vm849, %v848, -inf
        %872 = vmax.xlane.f32.xlu0 %v871
        %v873 = vpop.xlane.xlu0 %872
        %v874 = vsub.f32 %v841, %v852
        %v875 = vsub.f32 %v842, %v855
        %v876 = vsub.f32 %v843, %v858
        %v877 = vsub.f32 %v844, %v861
        %v878 = vsub.f32 %v845, %v864
        %v879 = vsub.f32 %v846, %v867
        %v880 = vsub.f32 %v847, %v870
        %v881 = vsub.f32 %v848, %v873
        %v882 = vmul.f32 %v874, 1.442695
        %v883 = vpow.pop %v882
        %v884 = vmul.f32 %v875, 1.442695
        %v885 = vpow.pop %v884
        %v886 = vmul.f32 %v876, 1.442695
        %v887 = vpow.pop %v886
        %v888 = vmul.f32 %v877, 1.442695
        %v889 = vpow.pop %v888
        %v890 = vmul.f32 %v878, 1.442695
        %v891 = vpow.pop %v890
        %v892 = vmul.f32 %v879, 1.442695
        %v893 = vpow.pop %v892
        %v894 = vmul.f32 %v880, 1.442695
        %v895 = vpow.pop %v894
        %v896 = vmul.f32 %v881, 1.442695
        %v897 = vpow.pop %v896
        %v898 = vsel %vm849, %v883, 0.0
        %899 = vadd.xlane.f32.xlu0 %v898
        %v900 = vpop.xlane.xlu0 %899
        %v901 = vsel %vm849, %v885, 0.0
        %902 = vadd.xlane.f32.xlu0 %v901
        %v903 = vpop.xlane.xlu0 %902
        %v904 = vsel %vm849, %v887, 0.0
        %905 = vadd.xlane.f32.xlu0 %v904
        %v906 = vpop.xlane.xlu0 %905
        %v907 = vsel %vm849, %v889, 0.0
        %908 = vadd.xlane.f32.xlu0 %v907
        %v909 = vpop.xlane.xlu0 %908
        %v910 = vsel %vm849, %v891, 0.0
        %911 = vadd.xlane.f32.xlu0 %v910
        %v912 = vpop.xlane.xlu0 %911
        %v913 = vsel %vm849, %v893, 0.0
        %914 = vadd.xlane.f32.xlu0 %v913
        %v915 = vpop.xlane.xlu0 %914
        %v916 = vsel %vm849, %v895, 0.0
        %917 = vadd.xlane.f32.xlu0 %v916
        %v918 = vpop.xlane.xlu0 %917
        %v919 = vsel %vm849, %v897, 0.0
        %920 = vadd.xlane.f32.xlu0 %v919
        %v921 = vpop.xlane.xlu0 %920
        %v922 = vrcp.pop %v900
        %v923 = vrcp.pop %v903
        %v924 = vrcp.pop %v906
        %v925 = vrcp.pop %v909
        %v926 = vrcp.pop %v912
        %v927 = vrcp.pop %v915
        %v928 = vrcp.pop %v918
        %v929 = vrcp.pop %v921
        %v930 = vmul.f32 %v883, %v922
        %v931 = vmul.f32 %v885, %v923
        %v932 = vmul.f32 %v887, %v924
        %v933 = vmul.f32 %v889, %v925
        %v934 = vmul.f32 %v891, %v926
        %v935 = vmul.f32 %v893, %v927
        %v936 = vmul.f32 %v895, %v928
        %v937 = vmul.f32 %v897, %v929
        %v938 = vpack.c.bf16 %v931, %v930
        %v939 = vpack.c.bf16 %v933, %v932
        %v940 = vpack.c.bf16 %v935, %v934
        %v941 = vpack.c.bf16 %v937, %v936
        %v943 = vsel %vm849, %v938, 0
        %v946 = vsel %vm849, %v939, 0
        %v949 = vsel %vm849, %v940, 0
        %v952 = vsel %vm849, %v941, 0
        %954 = vmatprep.subr.bf16.mxu0 0
        %955 = vmatpush1.bf16.msra.mxu0 %v739
        %956 = vmatprep.subr.bf16.mxu0 0
        %957 = vmatpush1.bf16.msra.mxu0 %v740
        %958 = vmatprep.subr.bf16.mxu0 0
        %959 = vmatpush1.bf16.msra.mxu0 %v741
        %960 = vmatprep.subr.bf16.mxu0 0
        %961 = vmatpush1.bf16.msra.mxu0 %v742
        %962 = vmatprep.subr.bf16.mxu0 0
        %963 = vmatpush1.bf16.msra.mxu0 0
        %964 = vmatprep.subr.bf16.mxu0 0
        %965 = vmatpush1.bf16.msra.mxu0 0
        %966 = vmatprep.subr.bf16.mxu0 0
        %967 = vmatpush1.bf16.msra.mxu0 0
        %968 = vmatprep.subr.bf16.mxu0 0
        %969 = vmatpush1.bf16.msra.mxu0 0
        %970 = vmatprep.subr.bf16.mxu0 0
        %971 = vmatpush1.bf16.msra.mxu0 0
        %972 = vmatprep.subr.bf16.mxu0 0
        %973 = vmatpush1.bf16.msra.mxu0 0
        %974 = vmatprep.subr.bf16.mxu0 0
        %975 = vmatpush1.bf16.msra.mxu0 0
        %976 = vmatprep.subr.bf16.mxu0 0
        %977 = vmatpush1.bf16.msra.mxu0 0
        %978 = vmatprep.subr.bf16.mxu0 0
        %979 = vmatpush1.bf16.msra.mxu0 0
        %980 = vmatprep.subr.bf16.mxu0 0
        %981 = vmatpush1.bf16.msra.mxu0 0
        %982 = vmatprep.subr.bf16.mxu0 0
        %983 = vmatpush1.bf16.msra.mxu0 0
        %984 = vmatprep.subr.bf16.mxu0 0
        %985 = vmatpush1.bf16.msra.mxu0 0
        %986 = vmatprep.mubr.bf16.mxu0 0
        %987 = vmatmul.mubr.bf16.gmra.mrb[0].mxu0 %v943
        %v988 = vpop.f32.mrb[0].mxu0
        %v989 = vadd.f32 0.0, %v988
        %v990 = vpop.f32.mrb[0].mxu0
        %v991 = vpop.f32.mrb[0].mxu0
        %v992 = vadd.f32 0.0, %v991
        %v993 = vpop.f32.mrb[0].mxu0
        %994 = vmatprep.mubr.bf16.mxu0 0
        %995 = vmatmul.mubr.bf16.gmra.mrb[0].mxu0 %v946
        %v996 = vpop.f32.mrb[0].mxu0
        %v997 = vadd.f32 0.0, %v996
        %v998 = vpop.f32.mrb[0].mxu0
        %v999 = vpop.f32.mrb[0].mxu0
        %v1000 = vadd.f32 0.0, %v999
        %v1001 = vpop.f32.mrb[0].mxu0
        %1002 = vmatprep.mubr.bf16.mxu0 0
        %1003 = vmatmul.mubr.bf16.gmra.mrb[0].mxu0 %v949
        %v1004 = vpop.f32.mrb[0].mxu0
        %v1005 = vadd.f32 0.0, %v1004
        %v1006 = vpop.f32.mrb[0].mxu0
        %v1007 = vpop.f32.mrb[0].mxu0
        %v1008 = vadd.f32 0.0, %v1007
        %v1009 = vpop.f32.mrb[0].mxu0
        %1010 = vmatprep.mubr.bf16.mxu0 0
        %1011 = vmatmul.mubr.bf16.gmra.mrb[0].mxu0 %v952
        %v1012 = vpop.f32.mrb[0].mxu0
        %v1013 = vadd.f32 0.0, %v1012
        %v1014 = vpop.f32.mrb[0].mxu0
        %v1015 = vpop.f32.mrb[0].mxu0
        %v1016 = vadd.f32 0.0, %v1015
        %v1017 = vpop.f32.mrb[0].mxu0
        %1018 = vdwg.mxu0
        %s1019 = scalar_lea.vmem [#allocation8], 64
        %v1020 = vld [vmem:[%s1019] sm:$0xff]
        %v1021 = vld [vmem:[%s1019 + $0x8] sm:$0xff]
        %v1022 = vld [vmem:[%s1019 + $0x10] sm:$0xff]
        %v1023 = vld [vmem:[%s1019 + $0x18] sm:$0xff]
        %v1024 = vld [vmem:[%s1019 + $0x20] sm:$0xff]
        %v1025 = vld [vmem:[%s1019 + $0x28] sm:$0xff]
        %v1026 = vld [vmem:[%s1019 + $0x30] sm:$0xff]
        %v1027 = vld [vmem:[%s1019 + $0x38] sm:$0xff]
        %1032 = vrot.lane.b32.xlu0 %v731, 96
        %v1033 = vpop.permute.xlu0 %1032
        %1034 = vrot.lane.b32.xlu0 %v732, 96
        %v1035 = vpop.permute.xlu0 %1034
        %1036 = vrot.lane.b32.xlu0 %v733, 96
        %v1037 = vpop.permute.xlu0 %1036
        %1038 = vrot.lane.b32.xlu0 %v734, 96
        %v1039 = vpop.permute.xlu0 %1038
        %1044 = vrot.lane.b32.xlu0 %v735, 96
        %v1045 = vpop.permute.xlu0 %1044
        %1046 = vrot.lane.b32.xlu0 %v736, 96
        %v1047 = vpop.permute.xlu0 %1046
        %1048 = vrot.lane.b32.xlu0 %v737, 96
        %v1049 = vpop.permute.xlu0 %1048
        %1050 = vrot.lane.b32.xlu0 %v738, 96
        %v1051 = vpop.permute.xlu0 %1050
        %v1053 = vsel %vm751, %v1033, 0
        %v1056 = vsel %vm751, %v1035, 0
        %v1059 = vsel %vm751, %v1037, 0
        %v1062 = vsel %vm751, %v1039, 0
        %v1065 = vsel %vm751, %v1045, 0
        %v1068 = vsel %vm751, %v1047, 0
        %v1071 = vsel %vm751, %v1049, 0
        %v1074 = vsel %vm751, %v1051, 0
        %1076 = vmatprep.subr.bf16.mxu0 0
        %1077 = vmatpush1.bf16.xpose.msra.mxu0 %v1065
        %1078 = vmatprep.subr.bf16.mxu0 0
        %1079 = vmatpush1.bf16.xpose.msra.mxu0 %v1068
        %1080 = vmatprep.subr.bf16.mxu0 0
        %1081 = vmatpush1.bf16.xpose.msra.mxu0 %v1071
        %1082 = vmatprep.subr.bf16.mxu0 0
        %1083 = vmatpush1.bf16.xpose.msra.mxu0 %v1074
        %1084 = vmatprep.subr.bf16.mxu0 0
        %1085 = vmatpush1.bf16.xpose.msra.mxu0 0
        %1086 = vmatprep.subr.bf16.mxu0 0
        %1087 = vmatpush1.bf16.xpose.msra.mxu0 0
        %1088 = vmatprep.subr.bf16.mxu0 0
        %1089 = vmatpush1.bf16.xpose.msra.mxu0 0
        %1090 = vmatprep.subr.bf16.mxu0 0
        %1091 = vmatpush1.bf16.xpose.msra.mxu0 0
        %1092 = vmatprep.subr.bf16.mxu0 0
        %1093 = vmatpush1.bf16.xpose.msra.mxu0 0
        %1094 = vmatprep.subr.bf16.mxu0 0
        %1095 = vmatpush1.bf16.xpose.msra.mxu0 0
        %1096 = vmatprep.subr.bf16.mxu0 0
        %1097 = vmatpush1.bf16.xpose.msra.mxu0 0
        %1098 = vmatprep.subr.bf16.mxu0 0
        %1099 = vmatpush1.bf16.xpose.msra.mxu0 0
        %1100 = vmatprep.subr.bf16.mxu0 0
        %1101 = vmatpush1.bf16.xpose.msra.mxu0 0
        %1102 = vmatprep.subr.bf16.mxu0 0
        %1103 = vmatpush1.bf16.xpose.msra.mxu0 0
        %1104 = vmatprep.subr.bf16.mxu0 0
        %1105 = vmatpush1.bf16.xpose.msra.mxu0 0
        %1106 = vmatprep.subr.bf16.mxu0 0
        %1107 = vmatpush1.bf16.xpose.msra.mxu0 0
        %1108 = vmatprep.mubr.bf16.mxu0 0
        %1109 = vmatmul.mubr.bf16.gmra.mrb[0].mxu0 %v1053
        %v1110 = vpop.f32.mrb[0].mxu0
        %v1111 = vadd.f32 %v1020, %v1110
        %v1112 = vpop.f32.mrb[0].mxu0
        %v1113 = vpop.f32.mrb[0].mxu0
        %v1114 = vadd.f32 %v1021, %v1113
        %v1115 = vpop.f32.mrb[0].mxu0
        %1116 = vmatprep.mubr.bf16.mxu0 0
        %1117 = vmatmul.mubr.bf16.gmra.mrb[0].mxu0 %v1056
        %v1118 = vpop.f32.mrb[0].mxu0
        %v1119 = vadd.f32 %v1022, %v1118
        %v1120 = vpop.f32.mrb[0].mxu0
        %v1121 = vpop.f32.mrb[0].mxu0
        %v1122 = vadd.f32 %v1023, %v1121
        %v1123 = vpop.f32.mrb[0].mxu0
        %1124 = vmatprep.mubr.bf16.mxu0 0
        %1125 = vmatmul.mubr.bf16.gmra.mrb[0].mxu0 %v1059
        %v1126 = vpop.f32.mrb[0].mxu0
        %v1127 = vadd.f32 %v1024, %v1126
        %v1128 = vpop.f32.mrb[0].mxu0
        %v1129 = vpop.f32.mrb[0].mxu0
        %v1130 = vadd.f32 %v1025, %v1129
        %v1131 = vpop.f32.mrb[0].mxu0
        %1132 = vmatprep.mubr.bf16.mxu0 0
        %1133 = vmatmul.mubr.bf16.gmra.mrb[0].mxu0 %v1062
        %v1134 = vpop.f32.mrb[0].mxu0
        %v1135 = vadd.f32 %v1026, %v1134
        %v1136 = vpop.f32.mrb[0].mxu0
        %v1137 = vpop.f32.mrb[0].mxu0
        %v1138 = vadd.f32 %v1027, %v1137
        %v1139 = vpop.f32.mrb[0].mxu0
        %1140 = vdwg.mxu0
        %v1141 = vadd.f32 %v1111, %v723
        %v1142 = vadd.f32 %v1114, %v724
        %v1143 = vadd.f32 %v1119, %v725
        %v1144 = vadd.f32 %v1122, %v726
        %v1145 = vadd.f32 %v1127, %v727
        %v1146 = vadd.f32 %v1130, %v728
        %v1147 = vadd.f32 %v1135, %v729
        %v1148 = vadd.f32 %v1138, %v730
        %v1149 = vsel %vm849, %v1141, -inf
        %1150 = vmax.xlane.f32.xlu0 %v1149
        %v1151 = vpop.xlane.xlu0 %1150
        %v1152 = vsel %vm849, %v1142, -inf
        %1153 = vmax.xlane.f32.xlu0 %v1152
        %v1154 = vpop.xlane.xlu0 %1153
        %v1155 = vsel %vm849, %v1143, -inf
        %1156 = vmax.xlane.f32.xlu0 %v1155
        %v1157 = vpop.xlane.xlu0 %1156
        %v1158 = vsel %vm849, %v1144, -inf
        %1159 = vmax.xlane.f32.xlu0 %v1158
        %v1160 = vpop.xlane.xlu0 %1159
        %v1161 = vsel %vm849, %v1145, -inf
        %1162 = vmax.xlane.f32.xlu0 %v1161
        %v1163 = vpop.xlane.xlu0 %1162
        %v1164 = vsel %vm849, %v1146, -inf
        %1165 = vmax.xlane.f32.xlu0 %v1164
        %v1166 = vpop.xlane.xlu0 %1165
        %v1167 = vsel %vm849, %v1147, -inf
        %1168 = vmax.xlane.f32.xlu0 %v1167
        %v1169 = vpop.xlane.xlu0 %1168
        %v1170 = vsel %vm849, %v1148, -inf
        %1171 = vmax.xlane.f32.xlu0 %v1170
        %v1172 = vpop.xlane.xlu0 %1171
        %v1173 = vsub.f32 %v1141, %v1151
        %v1174 = vsub.f32 %v1142, %v1154
        %v1175 = vsub.f32 %v1143, %v1157
        %v1176 = vsub.f32 %v1144, %v1160
        %v1177 = vsub.f32 %v1145, %v1163
        %v1178 = vsub.f32 %v1146, %v1166
        %v1179 = vsub.f32 %v1147, %v1169
        %v1180 = vsub.f32 %v1148, %v1172
        %v1181 = vmul.f32 %v1173, 1.442695
        %v1182 = vpow.pop %v1181
        %v1183 = vmul.f32 %v1174, 1.442695
        %v1184 = vpow.pop %v1183
        %v1185 = vmul.f32 %v1175, 1.442695
        %v1186 = vpow.pop %v1185
        %v1187 = vmul.f32 %v1176, 1.442695
        %v1188 = vpow.pop %v1187
        %v1189 = vmul.f32 %v1177, 1.442695
        %v1190 = vpow.pop %v1189
        %v1191 = vmul.f32 %v1178, 1.442695
        %v1192 = vpow.pop %v1191
        %v1193 = vmul.f32 %v1179, 1.442695
        %v1194 = vpow.pop %v1193
        %v1195 = vmul.f32 %v1180, 1.442695
        %v1196 = vpow.pop %v1195
        %v1197 = vsel %vm849, %v1182, 0.0
        %1198 = vadd.xlane.f32.xlu0 %v1197
        %v1199 = vpop.xlane.xlu0 %1198
        %v1200 = vsel %vm849, %v1184, 0.0
        %1201 = vadd.xlane.f32.xlu0 %v1200
        %v1202 = vpop.xlane.xlu0 %1201
        %v1203 = vsel %vm849, %v1186, 0.0
        %1204 = vadd.xlane.f32.xlu0 %v1203
        %v1205 = vpop.xlane.xlu0 %1204
        %v1206 = vsel %vm849, %v1188, 0.0
        %1207 = vadd.xlane.f32.xlu0 %v1206
        %v1208 = vpop.xlane.xlu0 %1207
        %v1209 = vsel %vm849, %v1190, 0.0
        %1210 = vadd.xlane.f32.xlu0 %v1209
        %v1211 = vpop.xlane.xlu0 %1210
        %v1212 = vsel %vm849, %v1192, 0.0
        %1213 = vadd.xlane.f32.xlu0 %v1212
        %v1214 = vpop.xlane.xlu0 %1213
        %v1215 = vsel %vm849, %v1194, 0.0
        %1216 = vadd.xlane.f32.xlu0 %v1215
        %v1217 = vpop.xlane.xlu0 %1216
        %v1218 = vsel %vm849, %v1196, 0.0
        %1219 = vadd.xlane.f32.xlu0 %v1218
        %v1220 = vpop.xlane.xlu0 %1219
        %v1221 = vrcp.pop %v1199
        %v1222 = vrcp.pop %v1202
        %v1223 = vrcp.pop %v1205
        %v1224 = vrcp.pop %v1208
        %v1225 = vrcp.pop %v1211
        %v1226 = vrcp.pop %v1214
        %v1227 = vrcp.pop %v1217
        %v1228 = vrcp.pop %v1220
        %v1229 = vmul.f32 %v1182, %v1221
        %v1230 = vmul.f32 %v1184, %v1222
        %v1231 = vmul.f32 %v1186, %v1223
        %v1232 = vmul.f32 %v1188, %v1224
        %v1233 = vmul.f32 %v1190, %v1225
        %v1234 = vmul.f32 %v1192, %v1226
        %v1235 = vmul.f32 %v1194, %v1227
        %v1236 = vmul.f32 %v1196, %v1228
        %v1237 = vpack.c.bf16 %v1230, %v1229
        %v1238 = vpack.c.bf16 %v1232, %v1231
        %v1239 = vpack.c.bf16 %v1234, %v1233
        %v1240 = vpack.c.bf16 %v1236, %v1235
        %1245 = vrot.lane.b32.xlu0 %v739, 96
        %v1246 = vpop.permute.xlu0 %1245
        %1247 = vrot.lane.b32.xlu0 %v740, 96
        %v1248 = vpop.permute.xlu0 %1247
        %1249 = vrot.lane.b32.xlu0 %v741, 96
        %v1250 = vpop.permute.xlu0 %1249
        %1251 = vrot.lane.b32.xlu0 %v742, 96
        %v1252 = vpop.permute.xlu0 %1251
        %v1258 = vsel %vm849, %v1237, 0
        %v1261 = vsel %vm849, %v1238, 0
        %v1264 = vsel %vm849, %v1239, 0
        %v1267 = vsel %vm849, %v1240, 0
        %1269 = vmatprep.subr.bf16.mxu0 0
        %1270 = vmatpush1.bf16.msra.mxu0 %v1246
        %1271 = vmatprep.subr.bf16.mxu0 0
        %1272 = vmatpush1.bf16.msra.mxu0 %v1248
        %1273 = vmatprep.subr.bf16.mxu0 0
        %1274 = vmatpush1.bf16.msra.mxu0 %v1250
        %1275 = vmatprep.subr.bf16.mxu0 0
        %1276 = vmatpush1.bf16.msra.mxu0 %v1252
        %1277 = vmatprep.subr.bf16.mxu0 0
        %1278 = vmatpush1.bf16.msra.mxu0 0
        %1279 = vmatprep.subr.bf16.mxu0 0
        %1280 = vmatpush1.bf16.msra.mxu0 0
        %1281 = vmatprep.subr.bf16.mxu0 0
        %1282 = vmatpush1.bf16.msra.mxu0 0
        %1283 = vmatprep.subr.bf16.mxu0 0
        %1284 = vmatpush1.bf16.msra.mxu0 0
        %1285 = vmatprep.subr.bf16.mxu0 0
        %1286 = vmatpush1.bf16.msra.mxu0 0
        %1287 = vmatprep.subr.bf16.mxu0 0
        %1288 = vmatpush1.bf16.msra.mxu0 0
        %1289 = vmatprep.subr.bf16.mxu0 0
        %1290 = vmatpush1.bf16.msra.mxu0 0
        %1291 = vmatprep.subr.bf16.mxu0 0
        %1292 = vmatpush1.bf16.msra.mxu0 0
        %1293 = vmatprep.subr.bf16.mxu0 0
        %1294 = vmatpush1.bf16.msra.mxu0 0
        %1295 = vmatprep.subr.bf16.mxu0 0
        %1296 = vmatpush1.bf16.msra.mxu0 0
        %1297 = vmatprep.subr.bf16.mxu0 0
        %1298 = vmatpush1.bf16.msra.mxu0 0
        %1299 = vmatprep.subr.bf16.mxu0 0
        %1300 = vmatpush1.bf16.msra.mxu0 0
        %1301 = vmatprep.mubr.bf16.mxu0 0
        %1302 = vmatmul.mubr.bf16.gmra.mrb[0].mxu0 %v1258
        %v1303 = vpop.f32.mrb[0].mxu0
        %v1304 = vadd.f32 0.0, %v1303
        %v1305 = vpop.f32.mrb[0].mxu0
        %v1306 = vpop.f32.mrb[0].mxu0
        %v1307 = vadd.f32 0.0, %v1306
        %v1308 = vpop.f32.mrb[0].mxu0
        %1309 = vmatprep.mubr.bf16.mxu0 0
        %1310 = vmatmul.mubr.bf16.gmra.mrb[0].mxu0 %v1261
        %v1311 = vpop.f32.mrb[0].mxu0
        %v1312 = vadd.f32 0.0, %v1311
        %v1313 = vpop.f32.mrb[0].mxu0
        %v1314 = vpop.f32.mrb[0].mxu0
        %v1315 = vadd.f32 0.0, %v1314
        %v1316 = vpop.f32.mrb[0].mxu0
        %1317 = vmatprep.mubr.bf16.mxu0 0
        %1318 = vmatmul.mubr.bf16.gmra.mrb[0].mxu0 %v1264
        %v1319 = vpop.f32.mrb[0].mxu0
        %v1320 = vadd.f32 0.0, %v1319
        %v1321 = vpop.f32.mrb[0].mxu0
        %v1322 = vpop.f32.mrb[0].mxu0
        %v1323 = vadd.f32 0.0, %v1322
        %v1324 = vpop.f32.mrb[0].mxu0
        %1325 = vmatprep.mubr.bf16.mxu0 0
        %1326 = vmatmul.mubr.bf16.gmra.mrb[0].mxu0 %v1267
        %v1327 = vpop.f32.mrb[0].mxu0
        %v1328 = vadd.f32 0.0, %v1327
        %v1329 = vpop.f32.mrb[0].mxu0
        %v1330 = vpop.f32.mrb[0].mxu0
        %v1331 = vadd.f32 0.0, %v1330
        %v1332 = vpop.f32.mrb[0].mxu0
        %1333 = vdwg.mxu0
        %s1334 = scalar_lea.vmem [#allocation8], 128
        %v1335 = vld [vmem:[%s1334] sm:$0xff]
        %v1336 = vld [vmem:[%s1334 + $0x8] sm:$0xff]
        %v1337 = vld [vmem:[%s1334 + $0x10] sm:$0xff]
        %v1338 = vld [vmem:[%s1334 + $0x18] sm:$0xff]
        %v1339 = vld [vmem:[%s1334 + $0x20] sm:$0xff]
        %v1340 = vld [vmem:[%s1334 + $0x28] sm:$0xff]
        %v1341 = vld [vmem:[%s1334 + $0x30] sm:$0xff]
        %v1342 = vld [vmem:[%s1334 + $0x38] sm:$0xff]
        %1343 = vrot.lane.b32.xlu0 %v731, 64
        %v1344 = vpop.permute.xlu0 %1343
        %1345 = vrot.lane.b32.xlu0 %v732, 64
        %v1346 = vpop.permute.xlu0 %1345
        %1347 = vrot.lane.b32.xlu0 %v733, 64
        %v1348 = vpop.permute.xlu0 %1347
        %1349 = vrot.lane.b32.xlu0 %v734, 64
        %v1350 = vpop.permute.xlu0 %1349
        %1351 = vrot.lane.b32.xlu0 %v735, 64
        %v1352 = vpop.permute.xlu0 %1351
        %1353 = vrot.lane.b32.xlu0 %v736, 64
        %v1354 = vpop.permute.xlu0 %1353
        %1355 = vrot.lane.b32.xlu0 %v737, 64
        %v1356 = vpop.permute.xlu0 %1355
        %1357 = vrot.lane.b32.xlu0 %v738, 64
        %v1358 = vpop.permute.xlu0 %1357
        %v1360 = vsel %vm751, %v1344, 0
        %v1363 = vsel %vm751, %v1346, 0
        %v1366 = vsel %vm751, %v1348, 0
        %v1369 = vsel %vm751, %v1350, 0
        %v1372 = vsel %vm751, %v1352, 0
        %v1375 = vsel %vm751, %v1354, 0
        %v1378 = vsel %vm751, %v1356, 0
        %v1381 = vsel %vm751, %v1358, 0
        %1383 = vmatprep.subr.bf16.mxu0 0
        %1384 = vmatpush1.bf16.xpose.msra.mxu0 %v1372
        %1385 = vmatprep.subr.bf16.mxu0 0
        %1386 = vmatpush1.bf16.xpose.msra.mxu0 %v1375
        %1387 = vmatprep.subr.bf16.mxu0 0
        %1388 = vmatpush1.bf16.xpose.msra.mxu0 %v1378
        %1389 = vmatprep.subr.bf16.mxu0 0
        %1390 = vmatpush1.bf16.xpose.msra.mxu0 %v1381
        %1391 = vmatprep.subr.bf16.mxu0 0
        %1392 = vmatpush1.bf16.xpose.msra.mxu0 0
        %1393 = vmatprep.subr.bf16.mxu0 0
        %1394 = vmatpush1.bf16.xpose.msra.mxu0 0
        %1395 = vmatprep.subr.bf16.mxu0 0
        %1396 = vmatpush1.bf16.xpose.msra.mxu0 0
        %1397 = vmatprep.subr.bf16.mxu0 0
        %1398 = vmatpush1.bf16.xpose.msra.mxu0 0
        %1399 = vmatprep.subr.bf16.mxu0 0
        %1400 = vmatpush1.bf16.xpose.msra.mxu0 0
        %1401 = vmatprep.subr.bf16.mxu0 0
        %1402 = vmatpush1.bf16.xpose.msra.mxu0 0
        %1403 = vmatprep.subr.bf16.mxu0 0
        %1404 = vmatpush1.bf16.xpose.msra.mxu0 0
        %1405 = vmatprep.subr.bf16.mxu0 0
        %1406 = vmatpush1.bf16.xpose.msra.mxu0 0
        %1407 = vmatprep.subr.bf16.mxu0 0
        %1408 = vmatpush1.bf16.xpose.msra.mxu0 0
        %1409 = vmatprep.subr.bf16.mxu0 0
        %1410 = vmatpush1.bf16.xpose.msra.mxu0 0
        %1411 = vmatprep.subr.bf16.mxu0 0
        %1412 = vmatpush1.bf16.xpose.msra.mxu0 0
        %1413 = vmatprep.subr.bf16.mxu0 0
        %1414 = vmatpush1.bf16.xpose.msra.mxu0 0
        %1415 = vmatprep.mubr.bf16.mxu0 0
        %1416 = vmatmul.mubr.bf16.gmra.mrb[0].mxu0 %v1360
        %v1417 = vpop.f32.mrb[0].mxu0
        %v1418 = vadd.f32 %v1335, %v1417
        %v1419 = vpop.f32.mrb[0].mxu0
        %v1420 = vpop.f32.mrb[0].mxu0
        %v1421 = vadd.f32 %v1336, %v1420
        %v1422 = vpop.f32.mrb[0].mxu0
        %1423 = vmatprep.mubr.bf16.mxu0 0
        %1424 = vmatmul.mubr.bf16.gmra.mrb[0].mxu0 %v1363
        %v1425 = vpop.f32.mrb[0].mxu0
        %v1426 = vadd.f32 %v1337, %v1425
        %v1427 = vpop.f32.mrb[0].mxu0
        %v1428 = vpop.f32.mrb[0].mxu0
        %v1429 = vadd.f32 %v1338, %v1428
        %v1430 = vpop.f32.mrb[0].mxu0
        %1431 = vmatprep.mubr.bf16.mxu0 0
        %1432 = vmatmul.mubr.bf16.gmra.mrb[0].mxu0 %v1366
        %v1433 = vpop.f32.mrb[0].mxu0
        %v1434 = vadd.f32 %v1339, %v1433
        %v1435 = vpop.f32.mrb[0].mxu0
        %v1436 = vpop.f32.mrb[0].mxu0
        %v1437 = vadd.f32 %v1340, %v1436
        %v1438 = vpop.f32.mrb[0].mxu0
        %1439 = vmatprep.mubr.bf16.mxu0 0
        %1440 = vmatmul.mubr.bf16.gmra.mrb[0].mxu0 %v1369
        %v1441 = vpop.f32.mrb[0].mxu0
        %v1442 = vadd.f32 %v1341, %v1441
        %v1443 = vpop.f32.mrb[0].mxu0
        %v1444 = vpop.f32.mrb[0].mxu0
        %v1445 = vadd.f32 %v1342, %v1444
        %v1446 = vpop.f32.mrb[0].mxu0
        %1447 = vdwg.mxu0
        %v1448 = vadd.f32 %v1418, %v723
        %v1449 = vadd.f32 %v1421, %v724
        %v1450 = vadd.f32 %v1426, %v725
        %v1451 = vadd.f32 %v1429, %v726
        %v1452 = vadd.f32 %v1434, %v727
        %v1453 = vadd.f32 %v1437, %v728
        %v1454 = vadd.f32 %v1442, %v729
        %v1455 = vadd.f32 %v1445, %v730
        %v1456 = vsel %vm849, %v1448, -inf
        %1457 = vmax.xlane.f32.xlu0 %v1456
        %v1458 = vpop.xlane.xlu0 %1457
        %v1459 = vsel %vm849, %v1449, -inf
        %1460 = vmax.xlane.f32.xlu0 %v1459
        %v1461 = vpop.xlane.xlu0 %1460
        %v1462 = vsel %vm849, %v1450, -inf
        %1463 = vmax.xlane.f32.xlu0 %v1462
        %v1464 = vpop.xlane.xlu0 %1463
        %v1465 = vsel %vm849, %v1451, -inf
        %1466 = vmax.xlane.f32.xlu0 %v1465
        %v1467 = vpop.xlane.xlu0 %1466
        %v1468 = vsel %vm849, %v1452, -inf
        %1469 = vmax.xlane.f32.xlu0 %v1468
        %v1470 = vpop.xlane.xlu0 %1469
        %v1471 = vsel %vm849, %v1453, -inf
        %1472 = vmax.xlane.f32.xlu0 %v1471
        %v1473 = vpop.xlane.xlu0 %1472
        %v1474 = vsel %vm849, %v1454, -inf
        %1475 = vmax.xlane.f32.xlu0 %v1474
        %v1476 = vpop.xlane.xlu0 %1475
        %v1477 = vsel %vm849, %v1455, -inf
        %1478 = vmax.xlane.f32.xlu0 %v1477
        %v1479 = vpop.xlane.xlu0 %1478
        %v1480 = vsub.f32 %v1448, %v1458
        %v1481 = vsub.f32 %v1449, %v1461
        %v1482 = vsub.f32 %v1450, %v1464
        %v1483 = vsub.f32 %v1451, %v1467
        %v1484 = vsub.f32 %v1452, %v1470
        %v1485 = vsub.f32 %v1453, %v1473
        %v1486 = vsub.f32 %v1454, %v1476
        %v1487 = vsub.f32 %v1455, %v1479
        %v1488 = vmul.f32 %v1480, 1.442695
        %v1489 = vpow.pop %v1488
        %v1490 = vmul.f32 %v1481, 1.442695
        %v1491 = vpow.pop %v1490
        %v1492 = vmul.f32 %v1482, 1.442695
        %v1493 = vpow.pop %v1492
        %v1494 = vmul.f32 %v1483, 1.442695
        %v1495 = vpow.pop %v1494
        %v1496 = vmul.f32 %v1484, 1.442695
        %v1497 = vpow.pop %v1496
        %v1498 = vmul.f32 %v1485, 1.442695
        %v1499 = vpow.pop %v1498
        %v1500 = vmul.f32 %v1486, 1.442695
        %v1501 = vpow.pop %v1500
        %v1502 = vmul.f32 %v1487, 1.442695
        %v1503 = vpow.pop %v1502
        %v1504 = vsel %vm849, %v1489, 0.0
        %1505 = vadd.xlane.f32.xlu0 %v1504
        %v1506 = vpop.xlane.xlu0 %1505
        %v1507 = vsel %vm849, %v1491, 0.0
        %1508 = vadd.xlane.f32.xlu0 %v1507
        %v1509 = vpop.xlane.xlu0 %1508
        %v1510 = vsel %vm849, %v1493, 0.0
        %1511 = vadd.xlane.f32.xlu0 %v1510
        %v1512 = vpop.xlane.xlu0 %1511
        %v1513 = vsel %vm849, %v1495, 0.0
        %1514 = vadd.xlane.f32.xlu0 %v1513
        %v1515 = vpop.xlane.xlu0 %1514
        %v1516 = vsel %vm849, %v1497, 0.0
        %1517 = vadd.xlane.f32.xlu0 %v1516
        %v1518 = vpop.xlane.xlu0 %1517
        %v1519 = vsel %vm849, %v1499, 0.0
        %1520 = vadd.xlane.f32.xlu0 %v1519
        %v1521 = vpop.xlane.xlu0 %1520
        %v1522 = vsel %vm849, %v1501, 0.0
        %1523 = vadd.xlane.f32.xlu0 %v1522
        %v1524 = vpop.xlane.xlu0 %1523
        %v1525 = vsel %vm849, %v1503, 0.0
        %1526 = vadd.xlane.f32.xlu0 %v1525
        %v1527 = vpop.xlane.xlu0 %1526
        %v1528 = vrcp.pop %v1506
        %v1529 = vrcp.pop %v1509
        %v1530 = vrcp.pop %v1512
        %v1531 = vrcp.pop %v1515
        %v1532 = vrcp.pop %v1518
        %v1533 = vrcp.pop %v1521
        %v1534 = vrcp.pop %v1524
        %v1535 = vrcp.pop %v1527
        %v1536 = vmul.f32 %v1489, %v1528
        %v1537 = vmul.f32 %v1491, %v1529
        %v1538 = vmul.f32 %v1493, %v1530
        %v1539 = vmul.f32 %v1495, %v1531
        %v1540 = vmul.f32 %v1497, %v1532
        %v1541 = vmul.f32 %v1499, %v1533
        %v1542 = vmul.f32 %v1501, %v1534
        %v1543 = vmul.f32 %v1503, %v1535
        %v1544 = vpack.c.bf16 %v1537, %v1536
        %v1545 = vpack.c.bf16 %v1539, %v1538
        %v1546 = vpack.c.bf16 %v1541, %v1540
        %v1547 = vpack.c.bf16 %v1543, %v1542
        %1548 = vrot.lane.b32.xlu0 %v739, 64
        %v1549 = vpop.permute.xlu0 %1548
        %1550 = vrot.lane.b32.xlu0 %v740, 64
        %v1551 = vpop.permute.xlu0 %1550
        %1552 = vrot.lane.b32.xlu0 %v741, 64
        %v1553 = vpop.permute.xlu0 %1552
        %1554 = vrot.lane.b32.xlu0 %v742, 64
        %v1555 = vpop.permute.xlu0 %1554
        %v1561 = vsel %vm849, %v1544, 0
        %v1564 = vsel %vm849, %v1545, 0
        %v1567 = vsel %vm849, %v1546, 0
        %v1570 = vsel %vm849, %v1547, 0
        %1572 = vmatprep.subr.bf16.mxu0 0
        %1573 = vmatpush1.bf16.msra.mxu0 %v1549
        %1574 = vmatprep.subr.bf16.mxu0 0
        %1575 = vmatpush1.bf16.msra.mxu0 %v1551
        %1576 = vmatprep.subr.bf16.mxu0 0
        %1577 = vmatpush1.bf16.msra.mxu0 %v1553
        %1578 = vmatprep.subr.bf16.mxu0 0
        %1579 = vmatpush1.bf16.msra.mxu0 %v1555
        %1580 = vmatprep.subr.bf16.mxu0 0
        %1581 = vmatpush1.bf16.msra.mxu0 0
        %1582 = vmatprep.subr.bf16.mxu0 0
        %1583 = vmatpush1.bf16.msra.mxu0 0
        %1584 = vmatprep.subr.bf16.mxu0 0
        %1585 = vmatpush1.bf16.msra.mxu0 0
        %1586 = vmatprep.subr.bf16.mxu0 0
        %1587 = vmatpush1.bf16.msra.mxu0 0
        %1588 = vmatprep.subr.bf16.mxu0 0
        %1589 = vmatpush1.bf16.msra.mxu0 0
        %1590 = vmatprep.subr.bf16.mxu0 0
        %1591 = vmatpush1.bf16.msra.mxu0 0
        %1592 = vmatprep.subr.bf16.mxu0 0
        %1593 = vmatpush1.bf16.msra.mxu0 0
        %1594 = vmatprep.subr.bf16.mxu0 0
        %1595 = vmatpush1.bf16.msra.mxu0 0
        %1596 = vmatprep.subr.bf16.mxu0 0
        %1597 = vmatpush1.bf16.msra.mxu0 0
        %1598 = vmatprep.subr.bf16.mxu0 0
        %1599 = vmatpush1.bf16.msra.mxu0 0
        %1600 = vmatprep.subr.bf16.mxu0 0
        %1601 = vmatpush1.bf16.msra.mxu0 0
        %1602 = vmatprep.subr.bf16.mxu0 0
        %1603 = vmatpush1.bf16.msra.mxu0 0
        %1604 = vmatprep.mubr.bf16.mxu0 0
        %1605 = vmatmul.mubr.bf16.gmra.mrb[0].mxu0 %v1561
        %v1606 = vpop.f32.mrb[0].mxu0
        %v1607 = vadd.f32 0.0, %v1606
        %v1608 = vpop.f32.mrb[0].mxu0
        %v1609 = vpop.f32.mrb[0].mxu0
        %v1610 = vadd.f32 0.0, %v1609
        %v1611 = vpop.f32.mrb[0].mxu0
        %1612 = vmatprep.mubr.bf16.mxu0 0
        %1613 = vmatmul.mubr.bf16.gmra.mrb[0].mxu0 %v1564
        %v1614 = vpop.f32.mrb[0].mxu0
        %v1615 = vadd.f32 0.0, %v1614
        %v1616 = vpop.f32.mrb[0].mxu0
        %v1617 = vpop.f32.mrb[0].mxu0
        %v1618 = vadd.f32 0.0, %v1617
        %v1619 = vpop.f32.mrb[0].mxu0
        %1620 = vmatprep.mubr.bf16.mxu0 0
        %1621 = vmatmul.mubr.bf16.gmra.mrb[0].mxu0 %v1567
        %v1622 = vpop.f32.mrb[0].mxu0
        %v1623 = vadd.f32 0.0, %v1622
        %v1624 = vpop.f32.mrb[0].mxu0
        %v1625 = vpop.f32.mrb[0].mxu0
        %v1626 = vadd.f32 0.0, %v1625
        %v1627 = vpop.f32.mrb[0].mxu0
        %1628 = vmatprep.mubr.bf16.mxu0 0
        %1629 = vmatmul.mubr.bf16.gmra.mrb[0].mxu0 %v1570
        %v1630 = vpop.f32.mrb[0].mxu0
        %v1631 = vadd.f32 0.0, %v1630
        %v1632 = vpop.f32.mrb[0].mxu0
        %v1633 = vpop.f32.mrb[0].mxu0
        %v1634 = vadd.f32 0.0, %v1633
        %v1635 = vpop.f32.mrb[0].mxu0
        %1636 = vdwg.mxu0
        %s1637 = scalar_lea.vmem [#allocation8], 192
        %v1638 = vld [vmem:[%s1637] sm:$0xff]
        %v1639 = vld [vmem:[%s1637 + $0x8] sm:$0xff]
        %v1640 = vld [vmem:[%s1637 + $0x10] sm:$0xff]
        %v1641 = vld [vmem:[%s1637 + $0x18] sm:$0xff]
        %v1642 = vld [vmem:[%s1637 + $0x20] sm:$0xff]
        %v1643 = vld [vmem:[%s1637 + $0x28] sm:$0xff]
        %v1644 = vld [vmem:[%s1637 + $0x30] sm:$0xff]
        %v1645 = vld [vmem:[%s1637 + $0x38] sm:$0xff]
        %1646 = vrot.lane.b32.xlu0 %v731, 32
        %v1647 = vpop.permute.xlu0 %1646
        %1648 = vrot.lane.b32.xlu0 %v732, 32
        %v1649 = vpop.permute.xlu0 %1648
        %1650 = vrot.lane.b32.xlu0 %v733, 32
        %v1651 = vpop.permute.xlu0 %1650
        %1652 = vrot.lane.b32.xlu0 %v734, 32
        %v1653 = vpop.permute.xlu0 %1652
        %1654 = vrot.lane.b32.xlu0 %v735, 32
        %v1655 = vpop.permute.xlu0 %1654
        %1656 = vrot.lane.b32.xlu0 %v736, 32
        %v1657 = vpop.permute.xlu0 %1656
        %1658 = vrot.lane.b32.xlu0 %v737, 32
        %v1659 = vpop.permute.xlu0 %1658
        %1660 = vrot.lane.b32.xlu0 %v738, 32
        %v1661 = vpop.permute.xlu0 %1660
        %v1663 = vsel %vm751, %v1647, 0
        %v1666 = vsel %vm751, %v1649, 0
        %v1669 = vsel %vm751, %v1651, 0
        %v1672 = vsel %vm751, %v1653, 0
        %v1675 = vsel %vm751, %v1655, 0
        %v1678 = vsel %vm751, %v1657, 0
        %v1681 = vsel %vm751, %v1659, 0
        %v1684 = vsel %vm751, %v1661, 0
        %1686 = vmatprep.subr.bf16.mxu0 0
        %1687 = vmatpush1.bf16.xpose.msra.mxu0 %v1675
        %1688 = vmatprep.subr.bf16.mxu0 0
        %1689 = vmatpush1.bf16.xpose.msra.mxu0 %v1678
        %1690 = vmatprep.subr.bf16.mxu0 0
        %1691 = vmatpush1.bf16.xpose.msra.mxu0 %v1681
        %1692 = vmatprep.subr.bf16.mxu0 0
        %1693 = vmatpush1.bf16.xpose.msra.mxu0 %v1684
        %1694 = vmatprep.subr.bf16.mxu0 0
        %1695 = vmatpush1.bf16.xpose.msra.mxu0 0
        %1696 = vmatprep.subr.bf16.mxu0 0
        %1697 = vmatpush1.bf16.xpose.msra.mxu0 0
        %1698 = vmatprep.subr.bf16.mxu0 0
        %1699 = vmatpush1.bf16.xpose.msra.mxu0 0
        %1700 = vmatprep.subr.bf16.mxu0 0
        %1701 = vmatpush1.bf16.xpose.msra.mxu0 0
        %1702 = vmatprep.subr.bf16.mxu0 0
        %1703 = vmatpush1.bf16.xpose.msra.mxu0 0
        %1704 = vmatprep.subr.bf16.mxu0 0
        %1705 = vmatpush1.bf16.xpose.msra.mxu0 0
        %1706 = vmatprep.subr.bf16.mxu0 0
        %1707 = vmatpush1.bf16.xpose.msra.mxu0 0
        %1708 = vmatprep.subr.bf16.mxu0 0
        %1709 = vmatpush1.bf16.xpose.msra.mxu0 0
        %1710 = vmatprep.subr.bf16.mxu0 0
        %1711 = vmatpush1.bf16.xpose.msra.mxu0 0
        %1712 = vmatprep.subr.bf16.mxu0 0
        %1713 = vmatpush1.bf16.xpose.msra.mxu0 0
        %1714 = vmatprep.subr.bf16.mxu0 0
        %1715 = vmatpush1.bf16.xpose.msra.mxu0 0
        %1716 = vmatprep.subr.bf16.mxu0 0
        %1717 = vmatpush1.bf16.xpose.msra.mxu0 0
        %1718 = vmatprep.mubr.bf16.mxu0 0
        %1719 = vmatmul.mubr.bf16.gmra.mrb[0].mxu0 %v1663
        %v1720 = vpop.f32.mrb[0].mxu0
        %v1721 = vadd.f32 %v1638, %v1720
        %v1722 = vpop.f32.mrb[0].mxu0
        %v1723 = vpop.f32.mrb[0].mxu0
        %v1724 = vadd.f32 %v1639, %v1723
        %v1725 = vpop.f32.mrb[0].mxu0
        %1726 = vmatprep.mubr.bf16.mxu0 0
        %1727 = vmatmul.mubr.bf16.gmra.mrb[0].mxu0 %v1666
        %v1728 = vpop.f32.mrb[0].mxu0
        %v1729 = vadd.f32 %v1640, %v1728
        %v1730 = vpop.f32.mrb[0].mxu0
        %v1731 = vpop.f32.mrb[0].mxu0
        %v1732 = vadd.f32 %v1641, %v1731
        %v1733 = vpop.f32.mrb[0].mxu0
        %1734 = vmatprep.mubr.bf16.mxu0 0
        %1735 = vmatmul.mubr.bf16.gmra.mrb[0].mxu0 %v1669
        %v1736 = vpop.f32.mrb[0].mxu0
        %v1737 = vadd.f32 %v1642, %v1736
        %v1738 = vpop.f32.mrb[0].mxu0
        %v1739 = vpop.f32.mrb[0].mxu0
        %v1740 = vadd.f32 %v1643, %v1739
        %v1741 = vpop.f32.mrb[0].mxu0
        %1742 = vmatprep.mubr.bf16.mxu0 0
        %1743 = vmatmul.mubr.bf16.gmra.mrb[0].mxu0 %v1672
        %v1744 = vpop.f32.mrb[0].mxu0
        %v1745 = vadd.f32 %v1644, %v1744
        %v1746 = vpop.f32.mrb[0].mxu0
        %v1747 = vpop.f32.mrb[0].mxu0
        %v1748 = vadd.f32 %v1645, %v1747
        %v1749 = vpop.f32.mrb[0].mxu0
        %1750 = vdwg.mxu0
        %v1751 = vadd.f32 %v1721, %v723
        %v1752 = vadd.f32 %v1724, %v724
        %v1753 = vadd.f32 %v1729, %v725
        %v1754 = vadd.f32 %v1732, %v726
        %v1755 = vadd.f32 %v1737, %v727
        %v1756 = vadd.f32 %v1740, %v728
        %v1757 = vadd.f32 %v1745, %v729
        %v1758 = vadd.f32 %v1748, %v730
        %v1759 = vsel %vm849, %v1751, -inf
        %1760 = vmax.xlane.f32.xlu0 %v1759
        %v1761 = vpop.xlane.xlu0 %1760
        %v1762 = vsel %vm849, %v1752, -inf
        %1763 = vmax.xlane.f32.xlu0 %v1762
        %v1764 = vpop.xlane.xlu0 %1763
        %v1765 = vsel %vm849, %v1753, -inf
        %1766 = vmax.xlane.f32.xlu0 %v1765
        %v1767 = vpop.xlane.xlu0 %1766
        %v1768 = vsel %vm849, %v1754, -inf
        %1769 = vmax.xlane.f32.xlu0 %v1768
        %v1770 = vpop.xlane.xlu0 %1769
        %v1771 = vsel %vm849, %v1755, -inf
        %1772 = vmax.xlane.f32.xlu0 %v1771
        %v1773 = vpop.xlane.xlu0 %1772
        %v1774 = vsel %vm849, %v1756, -inf
        %1775 = vmax.xlane.f32.xlu0 %v1774
        %v1776 = vpop.xlane.xlu0 %1775
        %v1777 = vsel %vm849, %v1757, -inf
        %1778 = vmax.xlane.f32.xlu0 %v1777
        %v1779 = vpop.xlane.xlu0 %1778
        %v1780 = vsel %vm849, %v1758, -inf
        %1781 = vmax.xlane.f32.xlu0 %v1780
        %v1782 = vpop.xlane.xlu0 %1781
        %v1783 = vsub.f32 %v1751, %v1761
        %v1784 = vsub.f32 %v1752, %v1764
        %v1785 = vsub.f32 %v1753, %v1767
        %v1786 = vsub.f32 %v1754, %v1770
        %v1787 = vsub.f32 %v1755, %v1773
        %v1788 = vsub.f32 %v1756, %v1776
        %v1789 = vsub.f32 %v1757, %v1779
        %v1790 = vsub.f32 %v1758, %v1782
        %v1791 = vmul.f32 %v1783, 1.442695
        %v1792 = vpow.pop %v1791
        %v1793 = vmul.f32 %v1784, 1.442695
        %v1794 = vpow.pop %v1793
        %v1795 = vmul.f32 %v1785, 1.442695
        %v1796 = vpow.pop %v1795
        %v1797 = vmul.f32 %v1786, 1.442695
        %v1798 = vpow.pop %v1797
        %v1799 = vmul.f32 %v1787, 1.442695
        %v1800 = vpow.pop %v1799
        %v1801 = vmul.f32 %v1788, 1.442695
        %v1802 = vpow.pop %v1801
        %v1803 = vmul.f32 %v1789, 1.442695
        %v1804 = vpow.pop %v1803
        %v1805 = vmul.f32 %v1790, 1.442695
        %v1806 = vpow.pop %v1805
        %v1807 = vsel %vm849, %v1792, 0.0
        %1808 = vadd.xlane.f32.xlu0 %v1807
        %v1809 = vpop.xlane.xlu0 %1808
        %v1810 = vsel %vm849, %v1794, 0.0
        %1811 = vadd.xlane.f32.xlu0 %v1810
        %v1812 = vpop.xlane.xlu0 %1811
        %v1813 = vsel %vm849, %v1796, 0.0
        %1814 = vadd.xlane.f32.xlu0 %v1813
        %v1815 = vpop.xlane.xlu0 %1814
        %v1816 = vsel %vm849, %v1798, 0.0
        %1817 = vadd.xlane.f32.xlu0 %v1816
        %v1818 = vpop.xlane.xlu0 %1817
        %v1819 = vsel %vm849, %v1800, 0.0
        %1820 = vadd.xlane.f32.xlu0 %v1819
        %v1821 = vpop.xlane.xlu0 %1820
        %v1822 = vsel %vm849, %v1802, 0.0
        %1823 = vadd.xlane.f32.xlu0 %v1822
        %v1824 = vpop.xlane.xlu0 %1823
        %v1825 = vsel %vm849, %v1804, 0.0
        %1826 = vadd.xlane.f32.xlu0 %v1825
        %v1827 = vpop.xlane.xlu0 %1826
        %v1828 = vsel %vm849, %v1806, 0.0
        %1829 = vadd.xlane.f32.xlu0 %v1828
        %v1830 = vpop.xlane.xlu0 %1829
        %v1831 = vrcp.pop %v1809
        %v1832 = vrcp.pop %v1812
        %v1833 = vrcp.pop %v1815
        %v1834 = vrcp.pop %v1818
        %v1835 = vrcp.pop %v1821
        %v1836 = vrcp.pop %v1824
        %v1837 = vrcp.pop %v1827
        %v1838 = vrcp.pop %v1830
        %v1839 = vmul.f32 %v1792, %v1831
        %v1840 = vmul.f32 %v1794, %v1832
        %v1841 = vmul.f32 %v1796, %v1833
        %v1842 = vmul.f32 %v1798, %v1834
        %v1843 = vmul.f32 %v1800, %v1835
        %v1844 = vmul.f32 %v1802, %v1836
        %v1845 = vmul.f32 %v1804, %v1837
        %v1846 = vmul.f32 %v1806, %v1838
        %v1847 = vpack.c.bf16 %v1840, %v1839
        %v1848 = vpack.c.bf16 %v1842, %v1841
        %v1849 = vpack.c.bf16 %v1844, %v1843
        %v1850 = vpack.c.bf16 %v1846, %v1845
        %1851 = vrot.lane.b32.xlu0 %v739, 32
        %v1852 = vpop.permute.xlu0 %1851
        %1853 = vrot.lane.b32.xlu0 %v740, 32
        %v1854 = vpop.permute.xlu0 %1853
        %1855 = vrot.lane.b32.xlu0 %v741, 32
        %v1856 = vpop.permute.xlu0 %1855
        %1857 = vrot.lane.b32.xlu0 %v742, 32
        %v1858 = vpop.permute.xlu0 %1857
        %v1864 = vsel %vm849, %v1847, 0
        %v1867 = vsel %vm849, %v1848, 0
        %v1870 = vsel %vm849, %v1849, 0
        %v1873 = vsel %vm849, %v1850, 0
        %1875 = vmatprep.subr.bf16.mxu0 0
        %1876 = vmatpush1.bf16.msra.mxu0 %v1852
        %1877 = vmatprep.subr.bf16.mxu0 0
        %1878 = vmatpush1.bf16.msra.mxu0 %v1854
        %1879 = vmatprep.subr.bf16.mxu0 0
        %1880 = vmatpush1.bf16.msra.mxu0 %v1856
        %1881 = vmatprep.subr.bf16.mxu0 0
        %1882 = vmatpush1.bf16.msra.mxu0 %v1858
        %1883 = vmatprep.subr.bf16.mxu0 0
        %1884 = vmatpush1.bf16.msra.mxu0 0
        %1885 = vmatprep.subr.bf16.mxu0 0
        %1886 = vmatpush1.bf16.msra.mxu0 0
        %1887 = vmatprep.subr.bf16.mxu0 0
        %1888 = vmatpush1.bf16.msra.mxu0 0
        %1889 = vmatprep.subr.bf16.mxu0 0
        %1890 = vmatpush1.bf16.msra.mxu0 0
        %1891 = vmatprep.subr.bf16.mxu0 0
        %1892 = vmatpush1.bf16.msra.mxu0 0
        %1893 = vmatprep.subr.bf16.mxu0 0
        %1894 = vmatpush1.bf16.msra.mxu0 0
        %1895 = vmatprep.subr.bf16.mxu0 0
        %1896 = vmatpush1.bf16.msra.mxu0 0
        %1897 = vmatprep.subr.bf16.mxu0 0
        %1898 = vmatpush1.bf16.msra.mxu0 0
        %1899 = vmatprep.subr.bf16.mxu0 0
        %1900 = vmatpush1.bf16.msra.mxu0 0
        %1901 = vmatprep.subr.bf16.mxu0 0
        %1902 = vmatpush1.bf16.msra.mxu0 0
        %1903 = vmatprep.subr.bf16.mxu0 0
        %1904 = vmatpush1.bf16.msra.mxu0 0
        %1905 = vmatprep.subr.bf16.mxu0 0
        %1906 = vmatpush1.bf16.msra.mxu0 0
        %1907 = vmatprep.mubr.bf16.mxu0 0
        %1908 = vmatmul.mubr.bf16.gmra.mrb[0].mxu0 %v1864
        %v1909 = vpop.f32.mrb[0].mxu0
        %v1910 = vadd.f32 0.0, %v1909
        %v1911 = vpop.f32.mrb[0].mxu0
        %v1912 = vpop.f32.mrb[0].mxu0
        %v1913 = vadd.f32 0.0, %v1912
        %v1914 = vpop.f32.mrb[0].mxu0
        %1915 = vmatprep.mubr.bf16.mxu0 0
        %1916 = vmatmul.mubr.bf16.gmra.mrb[0].mxu0 %v1867
        %v1917 = vpop.f32.mrb[0].mxu0
        %v1918 = vadd.f32 0.0, %v1917
        %v1919 = vpop.f32.mrb[0].mxu0
        %v1920 = vpop.f32.mrb[0].mxu0
        %v1921 = vadd.f32 0.0, %v1920
        %v1922 = vpop.f32.mrb[0].mxu0
        %1923 = vmatprep.mubr.bf16.mxu0 0
        %1924 = vmatmul.mubr.bf16.gmra.mrb[0].mxu0 %v1870
        %v1925 = vpop.f32.mrb[0].mxu0
        %v1926 = vadd.f32 0.0, %v1925
        %v1927 = vpop.f32.mrb[0].mxu0
        %v1928 = vpop.f32.mrb[0].mxu0
        %v1929 = vadd.f32 0.0, %v1928
        %v1930 = vpop.f32.mrb[0].mxu0
        %1931 = vmatprep.mubr.bf16.mxu0 0
        %1932 = vmatmul.mubr.bf16.gmra.mrb[0].mxu0 %v1873
        %v1933 = vpop.f32.mrb[0].mxu0
        %v1934 = vadd.f32 0.0, %v1933
        %v1935 = vpop.f32.mrb[0].mxu0
        %v1936 = vpop.f32.mrb[0].mxu0
        %v1937 = vadd.f32 0.0, %v1936
        %v1938 = vpop.f32.mrb[0].mxu0
        %1939 = vdwg.mxu0
        %1948 = vrot.lane.b32.xlu0 %v1304, 32
        %v1949 = vpop.permute.xlu0 %1948
        %1950 = vrot.lane.b32.xlu0 %v1307, 32
        %v1951 = vpop.permute.xlu0 %1950
        %1952 = vrot.lane.b32.xlu0 %v1312, 32
        %v1953 = vpop.permute.xlu0 %1952
        %1954 = vrot.lane.b32.xlu0 %v1315, 32
        %v1955 = vpop.permute.xlu0 %1954
        %1956 = vrot.lane.b32.xlu0 %v1320, 32
        %v1957 = vpop.permute.xlu0 %1956
        %1958 = vrot.lane.b32.xlu0 %v1323, 32
        %v1959 = vpop.permute.xlu0 %1958
        %1960 = vrot.lane.b32.xlu0 %v1328, 32
        %v1961 = vpop.permute.xlu0 %1960
        %1962 = vrot.lane.b32.xlu0 %v1331, 32
        %v1963 = vpop.permute.xlu0 %1962
        %1980 = vrot.lane.b32.xlu0 %v1607, 64
        %v1981 = vpop.permute.xlu0 %1980
        %1982 = vrot.lane.b32.xlu0 %v1610, 64
        %v1983 = vpop.permute.xlu0 %1982
        %1984 = vrot.lane.b32.xlu0 %v1615, 64
        %v1985 = vpop.permute.xlu0 %1984
        %1986 = vrot.lane.b32.xlu0 %v1618, 64
        %v1987 = vpop.permute.xlu0 %1986
        %1988 = vrot.lane.b32.xlu0 %v1623, 64
        %v1989 = vpop.permute.xlu0 %1988
        %1990 = vrot.lane.b32.xlu0 %v1626, 64
        %v1991 = vpop.permute.xlu0 %1990
        %1992 = vrot.lane.b32.xlu0 %v1631, 64
        %v1993 = vpop.permute.xlu0 %1992
        %1994 = vrot.lane.b32.xlu0 %v1634, 64
        %v1995 = vpop.permute.xlu0 %1994
        %2012 = vrot.lane.b32.xlu0 %v1910, 96
        %v2013 = vpop.permute.xlu0 %2012
        %2014 = vrot.lane.b32.xlu0 %v1913, 96
        %v2015 = vpop.permute.xlu0 %2014
        %2016 = vrot.lane.b32.xlu0 %v1918, 96
        %v2017 = vpop.permute.xlu0 %2016
        %2018 = vrot.lane.b32.xlu0 %v1921, 96
        %v2019 = vpop.permute.xlu0 %2018
        %2020 = vrot.lane.b32.xlu0 %v1926, 96
        %v2021 = vpop.permute.xlu0 %2020
        %2022 = vrot.lane.b32.xlu0 %v1929, 96
        %v2023 = vpop.permute.xlu0 %2022
        %2024 = vrot.lane.b32.xlu0 %v1934, 96
        %v2025 = vpop.permute.xlu0 %2024
        %2026 = vrot.lane.b32.xlu0 %v1937, 96
        %v2027 = vpop.permute.xlu0 %2026
        %v2036 = vsel %vm751, %v989, %v1949
        %v2037 = vsel %vm751, %v992, %v1951
        %v2038 = vsel %vm751, %v997, %v1953
        %v2039 = vsel %vm751, %v1000, %v1955
        %v2040 = vsel %vm751, %v1005, %v1957
        %v2041 = vsel %vm751, %v1008, %v1959
        %v2042 = vsel %vm751, %v1013, %v1961
        %v2043 = vsel %vm751, %v1016, %v1963
        %v2044 = vsel %vm849, %v2036, %v1981
        %v2045 = vsel %vm849, %v2037, %v1983
        %v2046 = vsel %vm849, %v2038, %v1985
        %v2047 = vsel %vm849, %v2039, %v1987
        %v2048 = vsel %vm849, %v2040, %v1989
        %v2049 = vsel %vm849, %v2041, %v1991
        %v2050 = vsel %vm849, %v2042, %v1993
        %v2051 = vsel %vm849, %v2043, %v1995
        %vm2052 = vcmask 785408
        %v2053 = vsel %vm2052, %v2044, %v2013
        %v2054 = vsel %vm2052, %v2045, %v2015
        %v2055 = vsel %vm2052, %v2046, %v2017
        %v2056 = vsel %vm2052, %v2047, %v2019
        %v2057 = vsel %vm2052, %v2048, %v2021
        %v2058 = vsel %vm2052, %v2049, %v2023
        %v2059 = vsel %vm2052, %v2050, %v2025
        %v2060 = vsel %vm2052, %v2051, %v2027
        %v2061 = vpack.c.bf16 %v2054, %v2053
        %v2062 = vpack.c.bf16 %v2056, %v2055
        %v2063 = vpack.c.bf16 %v2058, %v2057
        %v2064 = vpack.c.bf16 %v2060, %v2059
        %v2066 = vlaneseq
        %v2067 = vshrl.u32 %v2066, 7
        %v2068 = vsub.s32 0, %v2067
        %v2069 = vrot.slane %v408, %v2068
        %v2087 = vunpack.c.l.b16 %v391
        %v2088 = vunpack.c.l.b16 %v392
        %v2089 = vunpack.c.l.b16 %v393
        %v2090 = vunpack.c.l.b16 %v394
        %v2091 = vunpack.c.l.b16 %v395
        %v2092 = vunpack.c.l.b16 %v396
        %v2093 = vunpack.c.l.b16 %v397
        %v2094 = vunpack.c.l.b16 %v398
        %v2095 = vunpack.c.l.b16 %v399
        %v2096 = vunpack.c.l.b16 %v400
        %v2097 = vunpack.c.l.b16 %v401
        %v2098 = vunpack.c.l.b16 %v402
        %v2099 = vunpack.c.l.b16 %v403
        %v2100 = vunpack.c.l.b16 %v404
        %v2101 = vunpack.c.l.b16 %v405
        %v2102 = vunpack.c.l.b16 %v406
        %v2103 = vpack.c.b16 %v2088, %v2087
        %v2104 = vpack.c.b16 %v2090, %v2089
        %v2105 = vpack.c.b16 %v2092, %v2091
        %v2106 = vpack.c.b16 %v2094, %v2093
        %v2107 = vpack.c.b16 %v2096, %v2095
        %v2108 = vpack.c.b16 %v2098, %v2097
        %v2109 = vpack.c.b16 %v2100, %v2099
        %v2110 = vpack.c.b16 %v2102, %v2101
        %2119 = vmatprep.subr.bf16.mxu0 0
        %2120 = vmatpush1.bf16.msra.mxu0 %v2103
        %2121 = vmatprep.subr.bf16.mxu0 0
        %2122 = vmatpush1.bf16.msra.mxu0 %v2104
        %2123 = vmatprep.subr.bf16.mxu0 0
        %2124 = vmatpush1.bf16.msra.mxu0 %v2105
        %2125 = vmatprep.subr.bf16.mxu0 0
        %2126 = vmatpush1.bf16.msra.mxu0 %v2106
        %2127 = vmatprep.subr.bf16.mxu0 0
        %2128 = vmatpush1.bf16.msra.mxu0 %v2107
        %2129 = vmatprep.subr.bf16.mxu0 0
        %2130 = vmatpush1.bf16.msra.mxu0 %v2108
        %2131 = vmatprep.subr.bf16.mxu0 0
        %2132 = vmatpush1.bf16.msra.mxu0 %v2109
        %2133 = vmatprep.subr.bf16.mxu0 0
        %2134 = vmatpush1.bf16.msra.mxu0 %v2110
        %2135 = vmatprep.subr.bf16.mxu0 0
        %2136 = vmatpush1.bf16.msra.mxu0 0
        %2137 = vmatprep.subr.bf16.mxu0 0
        %2138 = vmatpush1.bf16.msra.mxu0 0
        %2139 = vmatprep.subr.bf16.mxu0 0
        %2140 = vmatpush1.bf16.msra.mxu0 0
        %2141 = vmatprep.subr.bf16.mxu0 0
        %2142 = vmatpush1.bf16.msra.mxu0 0
        %2143 = vmatprep.subr.bf16.mxu0 0
        %2144 = vmatpush1.bf16.msra.mxu0 0
        %2145 = vmatprep.subr.bf16.mxu0 0
        %2146 = vmatpush1.bf16.msra.mxu0 0
        %2147 = vmatprep.subr.bf16.mxu0 0
        %2148 = vmatpush1.bf16.msra.mxu0 0
        %2149 = vmatprep.subr.bf16.mxu0 0
        %2150 = vmatpush1.bf16.msra.mxu0 0
        %2151 = vmatprep.mubr.bf16.mxu0 0
        %2152 = vmatmul.mubr.bf16.gmra.mrb[0].mxu0 %v2061
        %v2153 = vpop.f32.mrb[0].mxu0
        %v2154 = vadd.f32 %v2069, %v2153
        %v2155 = vpop.f32.mrb[0].mxu0
        %v2156 = vpop.f32.mrb[0].mxu0
        %v2157 = vadd.f32 %v2069, %v2156
        %v2158 = vpop.f32.mrb[0].mxu0
        %2159 = vmatprep.mubr.bf16.mxu0 0
        %2160 = vmatmul.mubr.bf16.gmra.mrb[0].mxu0 %v2062
        %v2161 = vpop.f32.mrb[0].mxu0
        %v2162 = vadd.f32 %v2069, %v2161
        %v2163 = vpop.f32.mrb[0].mxu0
        %v2164 = vpop.f32.mrb[0].mxu0
        %v2165 = vadd.f32 %v2069, %v2164
        %v2166 = vpop.f32.mrb[0].mxu0
        %2167 = vmatprep.mubr.bf16.mxu0 0
        %2168 = vmatmul.mubr.bf16.gmra.mrb[0].mxu0 %v2063
        %v2169 = vpop.f32.mrb[0].mxu0
        %v2170 = vadd.f32 %v2069, %v2169
        %v2171 = vpop.f32.mrb[0].mxu0
        %v2172 = vpop.f32.mrb[0].mxu0
        %v2173 = vadd.f32 %v2069, %v2172
        %v2174 = vpop.f32.mrb[0].mxu0
        %2175 = vmatprep.mubr.bf16.mxu0 0
        %2176 = vmatmul.mubr.bf16.gmra.mrb[0].mxu0 %v2064
        %v2177 = vpop.f32.mrb[0].mxu0
        %v2178 = vadd.f32 %v2069, %v2177
        %v2179 = vpop.f32.mrb[0].mxu0
        %v2180 = vpop.f32.mrb[0].mxu0
        %v2181 = vadd.f32 %v2069, %v2180
        %v2182 = vpop.f32.mrb[0].mxu0
        %2183 = vdwg.mxu0
        %2184 = vst [vmem:[%s355] sm:$0xff] %v2154
        %2185 = vst [vmem:[%s355 + $0x8] sm:$0xff] %v2157
        %2186 = vst [vmem:[%s355 + $0x10] sm:$0xff] %v2162
        %2187 = vst [vmem:[%s355 + $0x18] sm:$0xff] %v2165
        %2188 = vst [vmem:[%s355 + $0x20] sm:$0xff] %v2170
        %2189 = vst [vmem:[%s355 + $0x28] sm:$0xff] %v2173
        %2190 = vst [vmem:[%s355 + $0x30] sm:$0xff] %v2178
        %2191 = vst [vmem:[%s355 + $0x38] sm:$0xff] %v2181
        %s2192 = scalar_lea.vmem %s309, 32 [#allocation2]
        %v2193 = vld [vmem:[%s2192] sm:$0xf]
        %v2194 = vld [vmem:[%s2192 + $0x4] sm:$0xf]
        %v2195 = vld [vmem:[%s2192 + $0x8] sm:$0xf]
        %v2196 = vld [vmem:[%s2192 + $0xc] sm:$0xf]
        %v2197 = vld [vmem:[%s2192 + $0x10] sm:$0xf]
        %v2198 = vld [vmem:[%s2192 + $0x14] sm:$0xf]
        %v2199 = vld [vmem:[%s2192 + $0x18] sm:$0xf]
        %v2200 = vld [vmem:[%s2192 + $0x1c] sm:$0xf]
        %v2209 = vunpack.c.l.b16 %v2193
        %v2210 = vunpack.c.l.b16 %v2194
        %v2211 = vunpack.c.l.b16 %v2195
        %v2212 = vunpack.c.l.b16 %v2196
        %v2213 = vunpack.c.l.b16 %v2197
        %v2214 = vunpack.c.l.b16 %v2198
        %v2215 = vunpack.c.l.b16 %v2199
        %v2216 = vunpack.c.l.b16 %v2200
        %v2217 = vpack.c.b16 %v2210, %v2209
        %v2218 = vpack.c.b16 %v2212, %v2211
        %v2219 = vpack.c.b16 %v2214, %v2213
        %v2220 = vpack.c.b16 %v2216, %v2215
        %2225 = vmatprep.subr.bf16.mxu0 %v538
        %2226 = vmatpush1.bf16.msra.mxu0 %v537
        %2227 = vmatprep.subr.bf16.mxu0 %v541
        %2228 = vmatpush1.bf16.msra.mxu0 %v540
        %2229 = vmatprep.subr.bf16.mxu0 %v544
        %2230 = vmatpush1.bf16.msra.mxu0 %v543
        %2231 = vmatprep.subr.bf16.mxu0 %v547
        %2232 = vmatpush1.bf16.msra.mxu0 %v546
        %2233 = vmatprep.subr.bf16.mxu0 %v550
        %2234 = vmatpush1.bf16.msra.mxu0 %v549
        %2235 = vmatprep.subr.bf16.mxu0 %v553
        %2236 = vmatpush1.bf16.msra.mxu0 %v552
        %2237 = vmatprep.subr.bf16.mxu0 %v556
        %2238 = vmatpush1.bf16.msra.mxu0 %v555
        %2239 = vmatprep.subr.bf16.mxu0 %v559
        %2240 = vmatpush1.bf16.msra.mxu0 %v558
        %2241 = vmatprep.subr.bf16.mxu0 0
        %2242 = vmatpush1.bf16.msra.mxu0 0
        %2243 = vmatprep.subr.bf16.mxu0 0
        %2244 = vmatpush1.bf16.msra.mxu0 0
        %2245 = vmatprep.subr.bf16.mxu0 0
        %2246 = vmatpush1.bf16.msra.mxu0 0
        %2247 = vmatprep.subr.bf16.mxu0 0
        %2248 = vmatpush1.bf16.msra.mxu0 0
        %2249 = vmatprep.subr.bf16.mxu0 0
        %2250 = vmatpush1.bf16.msra.mxu0 0
        %2251 = vmatprep.subr.bf16.mxu0 0
        %2252 = vmatpush1.bf16.msra.mxu0 0
        %2253 = vmatprep.subr.bf16.mxu0 0
        %2254 = vmatpush1.bf16.msra.mxu0 0
        %2255 = vmatprep.subr.bf16.mxu0 0
        %2256 = vmatpush1.bf16.msra.mxu0 0
        %2257 = vmatprep.mubr.bf16.mxu0 0
        %2258 = vmatmul.mubr.bf16.gmra.mrb[0].mxu0 %v2217
        %v2259 = vpop.f32.mrb[0].mxu0
        %v2260 = vadd.f32 %v421, %v2259
        %v2261 = vpop.f32.mrb[0].mxu0
        %v2262 = vadd.f32 %v425, %v2261
        %v2263 = vpop.f32.mrb[0].mxu0
        %v2264 = vadd.f32 %v421, %v2263
        %v2265 = vpop.f32.mrb[0].mxu0
        %v2266 = vadd.f32 %v425, %v2265
        %2267 = vmatprep.mubr.bf16.mxu0 0
        %2268 = vmatmul.mubr.bf16.gmra.mrb[0].mxu0 %v2218
        %v2269 = vpop.f32.mrb[0].mxu0
        %v2270 = vadd.f32 %v421, %v2269
        %v2271 = vpop.f32.mrb[0].mxu0
        %v2272 = vadd.f32 %v425, %v2271
        %v2273 = vpop.f32.mrb[0].mxu0
        %v2274 = vadd.f32 %v421, %v2273
        %v2275 = vpop.f32.mrb[0].mxu0
        %v2276 = vadd.f32 %v425, %v2275
        %2277 = vmatprep.mubr.bf16.mxu0 0
        %2278 = vmatmul.mubr.bf16.gmra.mrb[0].mxu0 %v2219
        %v2279 = vpop.f32.mrb[0].mxu0
        %v2280 = vadd.f32 %v421, %v2279
        %v2281 = vpop.f32.mrb[0].mxu0
        %v2282 = vadd.f32 %v425, %v2281
        %v2283 = vpop.f32.mrb[0].mxu0
        %v2284 = vadd.f32 %v421, %v2283
        %v2285 = vpop.f32.mrb[0].mxu0
        %v2286 = vadd.f32 %v425, %v2285
        %2287 = vmatprep.mubr.bf16.mxu0 0
        %2288 = vmatmul.mubr.bf16.gmra.mrb[0].mxu0 %v2220
        %v2289 = vpop.f32.mrb[0].mxu0
        %v2290 = vadd.f32 %v421, %v2289
        %v2291 = vpop.f32.mrb[0].mxu0
        %v2292 = vadd.f32 %v425, %v2291
        %v2293 = vpop.f32.mrb[0].mxu0
        %v2294 = vadd.f32 %v421, %v2293
        %v2295 = vpop.f32.mrb[0].mxu0
        %v2296 = vadd.f32 %v425, %v2295
        %2297 = vdwg.mxu0
        %2298 = vmatprep.subr.bf16.mxu0 0
        %2299 = vmatpush1.bf16.msra.mxu0 %v539
        %2300 = vmatprep.subr.bf16.mxu0 0
        %2301 = vmatpush1.bf16.msra.mxu0 %v542
        %2302 = vmatprep.subr.bf16.mxu0 0
        %2303 = vmatpush1.bf16.msra.mxu0 %v545
        %2304 = vmatprep.subr.bf16.mxu0 0
        %2305 = vmatpush1.bf16.msra.mxu0 %v548
        %2306 = vmatprep.subr.bf16.mxu0 0
        %2307 = vmatpush1.bf16.msra.mxu0 %v551
        %2308 = vmatprep.subr.bf16.mxu0 0
        %2309 = vmatpush1.bf16.msra.mxu0 %v554
        %2310 = vmatprep.subr.bf16.mxu0 0
        %2311 = vmatpush1.bf16.msra.mxu0 %v557
        %2312 = vmatprep.subr.bf16.mxu0 0
        %2313 = vmatpush1.bf16.msra.mxu0 %v560
        %2314 = vmatprep.subr.bf16.mxu0 0
        %2315 = vmatpush1.bf16.msra.mxu0 0
        %2316 = vmatprep.subr.bf16.mxu0 0
        %2317 = vmatpush1.bf16.msra.mxu0 0
        %2318 = vmatprep.subr.bf16.mxu0 0
        %2319 = vmatpush1.bf16.msra.mxu0 0
        %2320 = vmatprep.subr.bf16.mxu0 0
        %2321 = vmatpush1.bf16.msra.mxu0 0
        %2322 = vmatprep.subr.bf16.mxu0 0
        %2323 = vmatpush1.bf16.msra.mxu0 0
        %2324 = vmatprep.subr.bf16.mxu0 0
        %2325 = vmatpush1.bf16.msra.mxu0 0
        %2326 = vmatprep.subr.bf16.mxu0 0
        %2327 = vmatpush1.bf16.msra.mxu0 0
        %2328 = vmatprep.subr.bf16.mxu0 0
        %2329 = vmatpush1.bf16.msra.mxu0 0
        %2330 = vmatprep.mubr.bf16.mxu0 0
        %2331 = vmatmul.mubr.bf16.gmra.mrb[0].mxu0 %v2217
        %v2332 = vpop.f32.mrb[0].mxu0
        %v2333 = vadd.f32 %v429, %v2332
        %v2334 = vpop.f32.mrb[0].mxu0
        %v2335 = vpop.f32.mrb[0].mxu0
        %v2336 = vadd.f32 %v429, %v2335
        %v2337 = vpop.f32.mrb[0].mxu0
        %2338 = vmatprep.mubr.bf16.mxu0 0
        %2339 = vmatmul.mubr.bf16.gmra.mrb[0].mxu0 %v2218
        %v2340 = vpop.f32.mrb[0].mxu0
        %v2341 = vadd.f32 %v429, %v2340
        %v2342 = vpop.f32.mrb[0].mxu0
        %v2343 = vpop.f32.mrb[0].mxu0
        %v2344 = vadd.f32 %v429, %v2343
        %v2345 = vpop.f32.mrb[0].mxu0
        %2346 = vmatprep.mubr.bf16.mxu0 0
        %2347 = vmatmul.mubr.bf16.gmra.mrb[0].mxu0 %v2219
        %v2348 = vpop.f32.mrb[0].mxu0
        %v2349 = vadd.f32 %v429, %v2348
        %v2350 = vpop.f32.mrb[0].mxu0
        %v2351 = vpop.f32.mrb[0].mxu0
        %v2352 = vadd.f32 %v429, %v2351
        %v2353 = vpop.f32.mrb[0].mxu0
        %2354 = vmatprep.mubr.bf16.mxu0 0
        %2355 = vmatmul.mubr.bf16.gmra.mrb[0].mxu0 %v2220
        %v2356 = vpop.f32.mrb[0].mxu0
        %v2357 = vadd.f32 %v429, %v2356
        %v2358 = vpop.f32.mrb[0].mxu0
        %v2359 = vpop.f32.mrb[0].mxu0
        %v2360 = vadd.f32 %v429, %v2359
        %v2361 = vpop.f32.mrb[0].mxu0
        %2362 = vdwg.mxu0
        %s2363 = scalar_lea.vmem [#allocation10], 64
        %v2364 = vld [vmem:[%s2363] sm:$0xff]
        %v2365 = vld [vmem:[%s2363 + $0x8] sm:$0xff]
        %v2366 = vld [vmem:[%s2363 + $0x10] sm:$0xff]
        %v2367 = vld [vmem:[%s2363 + $0x18] sm:$0xff]
        %v2368 = vld [vmem:[%s2363 + $0x20] sm:$0xff]
        %v2369 = vld [vmem:[%s2363 + $0x28] sm:$0xff]
        %v2370 = vld [vmem:[%s2363 + $0x30] sm:$0xff]
        %v2371 = vld [vmem:[%s2363 + $0x38] sm:$0xff]
        %v2372 = vpack.c.bf16 %v2264, %v2260
        %v2373 = vpack.c.bf16 %v2274, %v2270
        %v2374 = vpack.c.bf16 %v2284, %v2280
        %v2375 = vpack.c.bf16 %v2294, %v2290
        %v2376 = vpack.c.bf16 %v2266, %v2262
        %v2377 = vpack.c.bf16 %v2276, %v2272
        %v2378 = vpack.c.bf16 %v2286, %v2282
        %v2379 = vpack.c.bf16 %v2296, %v2292
        %v2380 = vpack.c.bf16 %v2336, %v2333
        %v2381 = vpack.c.bf16 %v2344, %v2341
        %v2382 = vpack.c.bf16 %v2352, %v2349
        %v2383 = vpack.c.bf16 %v2360, %v2357
        %v2384 = vld [vmem:[#allocation8] sm:$0xff]
        %v2385 = vld [vmem:[#allocation8 + $0x8] sm:$0xff]
        %v2386 = vld [vmem:[#allocation8 + $0x10] sm:$0xff]
        %v2387 = vld [vmem:[#allocation8 + $0x18] sm:$0xff]
        %v2388 = vld [vmem:[#allocation8 + $0x20] sm:$0xff]
        %v2389 = vld [vmem:[#allocation8 + $0x28] sm:$0xff]
        %v2390 = vld [vmem:[#allocation8 + $0x30] sm:$0xff]
        %v2391 = vld [vmem:[#allocation8 + $0x38] sm:$0xff]
        %v2393 = vsel %vm751, %v2372, 0
        %v2396 = vsel %vm751, %v2373, 0
        %v2399 = vsel %vm751, %v2374, 0
        %v2402 = vsel %vm751, %v2375, 0
        %v2405 = vsel %vm751, %v2376, 0
        %v2408 = vsel %vm751, %v2377, 0
        %v2411 = vsel %vm751, %v2378, 0
        %v2414 = vsel %vm751, %v2379, 0
        %2416 = vmatprep.subr.bf16.mxu0 0
        %2417 = vmatpush1.bf16.xpose.msra.mxu0 %v2405
        %2418 = vmatprep.subr.bf16.mxu0 0
        %2419 = vmatpush1.bf16.xpose.msra.mxu0 %v2408
        %2420 = vmatprep.subr.bf16.mxu0 0
        %2421 = vmatpush1.bf16.xpose.msra.mxu0 %v2411
        %2422 = vmatprep.subr.bf16.mxu0 0
        %2423 = vmatpush1.bf16.xpose.msra.mxu0 %v2414
        %2424 = vmatprep.subr.bf16.mxu0 0
        %2425 = vmatpush1.bf16.xpose.msra.mxu0 0
        %2426 = vmatprep.subr.bf16.mxu0 0
        %2427 = vmatpush1.bf16.xpose.msra.mxu0 0
        %2428 = vmatprep.subr.bf16.mxu0 0
        %2429 = vmatpush1.bf16.xpose.msra.mxu0 0
        %2430 = vmatprep.subr.bf16.mxu0 0
        %2431 = vmatpush1.bf16.xpose.msra.mxu0 0
        %2432 = vmatprep.subr.bf16.mxu0 0
        %2433 = vmatpush1.bf16.xpose.msra.mxu0 0
        %2434 = vmatprep.subr.bf16.mxu0 0
        %2435 = vmatpush1.bf16.xpose.msra.mxu0 0
        %2436 = vmatprep.subr.bf16.mxu0 0
        %2437 = vmatpush1.bf16.xpose.msra.mxu0 0
        %2438 = vmatprep.subr.bf16.mxu0 0
        %2439 = vmatpush1.bf16.xpose.msra.mxu0 0
        %2440 = vmatprep.subr.bf16.mxu0 0
        %2441 = vmatpush1.bf16.xpose.msra.mxu0 0
        %2442 = vmatprep.subr.bf16.mxu0 0
        %2443 = vmatpush1.bf16.xpose.msra.mxu0 0
        %2444 = vmatprep.subr.bf16.mxu0 0
        %2445 = vmatpush1.bf16.xpose.msra.mxu0 0
        %2446 = vmatprep.subr.bf16.mxu0 0
        %2447 = vmatpush1.bf16.xpose.msra.mxu0 0
        %2448 = vmatprep.mubr.bf16.mxu0 0
        %2449 = vmatmul.mubr.bf16.gmra.mrb[0].mxu0 %v2393
        %v2450 = vpop.f32.mrb[0].mxu0
        %v2451 = vadd.f32 %v2384, %v2450
        %v2452 = vpop.f32.mrb[0].mxu0
        %v2453 = vpop.f32.mrb[0].mxu0
        %v2454 = vadd.f32 %v2385, %v2453
        %v2455 = vpop.f32.mrb[0].mxu0
        %2456 = vmatprep.mubr.bf16.mxu0 0
        %2457 = vmatmul.mubr.bf16.gmra.mrb[0].mxu0 %v2396
        %v2458 = vpop.f32.mrb[0].mxu0
        %v2459 = vadd.f32 %v2386, %v2458
        %v2460 = vpop.f32.mrb[0].mxu0
        %v2461 = vpop.f32.mrb[0].mxu0
        %v2462 = vadd.f32 %v2387, %v2461
        %v2463 = vpop.f32.mrb[0].mxu0
        %2464 = vmatprep.mubr.bf16.mxu0 0
        %2465 = vmatmul.mubr.bf16.gmra.mrb[0].mxu0 %v2399
        %v2466 = vpop.f32.mrb[0].mxu0
        %v2467 = vadd.f32 %v2388, %v2466
        %v2468 = vpop.f32.mrb[0].mxu0
        %v2469 = vpop.f32.mrb[0].mxu0
        %v2470 = vadd.f32 %v2389, %v2469
        %v2471 = vpop.f32.mrb[0].mxu0
        %2472 = vmatprep.mubr.bf16.mxu0 0
        %2473 = vmatmul.mubr.bf16.gmra.mrb[0].mxu0 %v2402
        %v2474 = vpop.f32.mrb[0].mxu0
        %v2475 = vadd.f32 %v2390, %v2474
        %v2476 = vpop.f32.mrb[0].mxu0
        %v2477 = vpop.f32.mrb[0].mxu0
        %v2478 = vadd.f32 %v2391, %v2477
        %v2479 = vpop.f32.mrb[0].mxu0
        %2480 = vdwg.mxu0
        %v2481 = vadd.f32 %v2451, %v2364
        %v2482 = vadd.f32 %v2454, %v2365
        %v2483 = vadd.f32 %v2459, %v2366
        %v2484 = vadd.f32 %v2462, %v2367
        %v2485 = vadd.f32 %v2467, %v2368
        %v2486 = vadd.f32 %v2470, %v2369
        %v2487 = vadd.f32 %v2475, %v2370
        %v2488 = vadd.f32 %v2478, %v2371
        %v2489 = vsel %vm849, %v2481, -inf
        %2490 = vmax.xlane.f32.xlu0 %v2489
        %v2491 = vpop.xlane.xlu0 %2490
        %v2492 = vsel %vm849, %v2482, -inf
        %2493 = vmax.xlane.f32.xlu0 %v2492
        %v2494 = vpop.xlane.xlu0 %2493
        %v2495 = vsel %vm849, %v2483, -inf
        %2496 = vmax.xlane.f32.xlu0 %v2495
        %v2497 = vpop.xlane.xlu0 %2496
        %v2498 = vsel %vm849, %v2484, -inf
        %2499 = vmax.xlane.f32.xlu0 %v2498
        %v2500 = vpop.xlane.xlu0 %2499
        %v2501 = vsel %vm849, %v2485, -inf
        %2502 = vmax.xlane.f32.xlu0 %v2501
        %v2503 = vpop.xlane.xlu0 %2502
        %v2504 = vsel %vm849, %v2486, -inf
        %2505 = vmax.xlane.f32.xlu0 %v2504
        %v2506 = vpop.xlane.xlu0 %2505
        %v2507 = vsel %vm849, %v2487, -inf
        %2508 = vmax.xlane.f32.xlu0 %v2507
        %v2509 = vpop.xlane.xlu0 %2508
        %v2510 = vsel %vm849, %v2488, -inf
        %2511 = vmax.xlane.f32.xlu0 %v2510
        %v2512 = vpop.xlane.xlu0 %2511
        %v2513 = vsub.f32 %v2481, %v2491
        %v2514 = vsub.f32 %v2482, %v2494
        %v2515 = vsub.f32 %v2483, %v2497
        %v2516 = vsub.f32 %v2484, %v2500
        %v2517 = vsub.f32 %v2485, %v2503
        %v2518 = vsub.f32 %v2486, %v2506
        %v2519 = vsub.f32 %v2487, %v2509
        %v2520 = vsub.f32 %v2488, %v2512
        %v2521 = vmul.f32 %v2513, 1.442695
        %v2522 = vpow.pop %v2521
        %v2523 = vmul.f32 %v2514, 1.442695
        %v2524 = vpow.pop %v2523
        %v2525 = vmul.f32 %v2515, 1.442695
        %v2526 = vpow.pop %v2525
        %v2527 = vmul.f32 %v2516, 1.442695
        %v2528 = vpow.pop %v2527
        %v2529 = vmul.f32 %v2517, 1.442695
        %v2530 = vpow.pop %v2529
        %v2531 = vmul.f32 %v2518, 1.442695
        %v2532 = vpow.pop %v2531
        %v2533 = vmul.f32 %v2519, 1.442695
        %v2534 = vpow.pop %v2533
        %v2535 = vmul.f32 %v2520, 1.442695
        %v2536 = vpow.pop %v2535
        %v2537 = vsel %vm849, %v2522, 0.0
        %2538 = vadd.xlane.f32.xlu0 %v2537
        %v2539 = vpop.xlane.xlu0 %2538
        %v2540 = vsel %vm849, %v2524, 0.0
        %2541 = vadd.xlane.f32.xlu0 %v2540
        %v2542 = vpop.xlane.xlu0 %2541
        %v2543 = vsel %vm849, %v2526, 0.0
        %2544 = vadd.xlane.f32.xlu0 %v2543
        %v2545 = vpop.xlane.xlu0 %2544
        %v2546 = vsel %vm849, %v2528, 0.0
        %2547 = vadd.xlane.f32.xlu0 %v2546
        %v2548 = vpop.xlane.xlu0 %2547
        %v2549 = vsel %vm849, %v2530, 0.0
        %2550 = vadd.xlane.f32.xlu0 %v2549
        %v2551 = vpop.xlane.xlu0 %2550
        %v2552 = vsel %vm849, %v2532, 0.0
        %2553 = vadd.xlane.f32.xlu0 %v2552
        %v2554 = vpop.xlane.xlu0 %2553
        %v2555 = vsel %vm849, %v2534, 0.0
        %2556 = vadd.xlane.f32.xlu0 %v2555
        %v2557 = vpop.xlane.xlu0 %2556
        %v2558 = vsel %vm849, %v2536, 0.0
        %2559 = vadd.xlane.f32.xlu0 %v2558
        %v2560 = vpop.xlane.xlu0 %2559
        %v2561 = vrcp.pop %v2539
        %v2562 = vrcp.pop %v2542
        %v2563 = vrcp.pop %v2545
        %v2564 = vrcp.pop %v2548
        %v2565 = vrcp.pop %v2551
        %v2566 = vrcp.pop %v2554
        %v2567 = vrcp.pop %v2557
        %v2568 = vrcp.pop %v2560
        %v2569 = vmul.f32 %v2522, %v2561
        %v2570 = vmul.f32 %v2524, %v2562
        %v2571 = vmul.f32 %v2526, %v2563
        %v2572 = vmul.f32 %v2528, %v2564
        %v2573 = vmul.f32 %v2530, %v2565
        %v2574 = vmul.f32 %v2532, %v2566
        %v2575 = vmul.f32 %v2534, %v2567
        %v2576 = vmul.f32 %v2536, %v2568
        %v2577 = vpack.c.bf16 %v2570, %v2569
        %v2578 = vpack.c.bf16 %v2572, %v2571
        %v2579 = vpack.c.bf16 %v2574, %v2573
        %v2580 = vpack.c.bf16 %v2576, %v2575
        %v2582 = vsel %vm849, %v2577, 0
        %v2585 = vsel %vm849, %v2578, 0
        %v2588 = vsel %vm849, %v2579, 0
        %v2591 = vsel %vm849, %v2580, 0
        %2593 = vmatprep.subr.bf16.mxu0 0
        %2594 = vmatpush1.bf16.msra.mxu0 %v2380
        %2595 = vmatprep.subr.bf16.mxu0 0
        %2596 = vmatpush1.bf16.msra.mxu0 %v2381
        %2597 = vmatprep.subr.bf16.mxu0 0
        %2598 = vmatpush1.bf16.msra.mxu0 %v2382
        %2599 = vmatprep.subr.bf16.mxu0 0
        %2600 = vmatpush1.bf16.msra.mxu0 %v2383
        %2601 = vmatprep.subr.bf16.mxu0 0
        %2602 = vmatpush1.bf16.msra.mxu0 0
        %2603 = vmatprep.subr.bf16.mxu0 0
        %2604 = vmatpush1.bf16.msra.mxu0 0
        %2605 = vmatprep.subr.bf16.mxu0 0
        %2606 = vmatpush1.bf16.msra.mxu0 0
        %2607 = vmatprep.subr.bf16.mxu0 0
        %2608 = vmatpush1.bf16.msra.mxu0 0
        %2609 = vmatprep.subr.bf16.mxu0 0
        %2610 = vmatpush1.bf16.msra.mxu0 0
        %2611 = vmatprep.subr.bf16.mxu0 0
        %2612 = vmatpush1.bf16.msra.mxu0 0
        %2613 = vmatprep.subr.bf16.mxu0 0
        %2614 = vmatpush1.bf16.msra.mxu0 0
        %2615 = vmatprep.subr.bf16.mxu0 0
        %2616 = vmatpush1.bf16.msra.mxu0 0
        %2617 = vmatprep.subr.bf16.mxu0 0
        %2618 = vmatpush1.bf16.msra.mxu0 0
        %2619 = vmatprep.subr.bf16.mxu0 0
        %2620 = vmatpush1.bf16.msra.mxu0 0
        %2621 = vmatprep.subr.bf16.mxu0 0
        %2622 = vmatpush1.bf16.msra.mxu0 0
        %2623 = vmatprep.subr.bf16.mxu0 0
        %2624 = vmatpush1.bf16.msra.mxu0 0
        %2625 = vmatprep.mubr.bf16.mxu0 0
        %2626 = vmatmul.mubr.bf16.gmra.mrb[0].mxu0 %v2582
        %v2627 = vpop.f32.mrb[0].mxu0
        %v2628 = vadd.f32 0.0, %v2627
        %v2629 = vpop.f32.mrb[0].mxu0
        %v2630 = vpop.f32.mrb[0].mxu0
        %v2631 = vadd.f32 0.0, %v2630
        %v2632 = vpop.f32.mrb[0].mxu0
        %2633 = vmatprep.mubr.bf16.mxu0 0
        %2634 = vmatmul.mubr.bf16.gmra.mrb[0].mxu0 %v2585
        %v2635 = vpop.f32.mrb[0].mxu0
        %v2636 = vadd.f32 0.0, %v2635
        %v2637 = vpop.f32.mrb[0].mxu0
        %v2638 = vpop.f32.mrb[0].mxu0
        %v2639 = vadd.f32 0.0, %v2638
        %v2640 = vpop.f32.mrb[0].mxu0
        %2641 = vmatprep.mubr.bf16.mxu0 0
        %2642 = vmatmul.mubr.bf16.gmra.mrb[0].mxu0 %v2588
        %v2643 = vpop.f32.mrb[0].mxu0
        %v2644 = vadd.f32 0.0, %v2643
        %v2645 = vpop.f32.mrb[0].mxu0
        %v2646 = vpop.f32.mrb[0].mxu0
        %v2647 = vadd.f32 0.0, %v2646
        %v2648 = vpop.f32.mrb[0].mxu0
        %2649 = vmatprep.mubr.bf16.mxu0 0
        %2650 = vmatmul.mubr.bf16.gmra.mrb[0].mxu0 %v2591
        %v2651 = vpop.f32.mrb[0].mxu0
        %v2652 = vadd.f32 0.0, %v2651
        %v2653 = vpop.f32.mrb[0].mxu0
        %v2654 = vpop.f32.mrb[0].mxu0
        %v2655 = vadd.f32 0.0, %v2654
        %v2656 = vpop.f32.mrb[0].mxu0
        %2657 = vdwg.mxu0
        %v2658 = vld [vmem:[%s1019] sm:$0xff]
        %v2659 = vld [vmem:[%s1019 + $0x8] sm:$0xff]
        %v2660 = vld [vmem:[%s1019 + $0x10] sm:$0xff]
        %v2661 = vld [vmem:[%s1019 + $0x18] sm:$0xff]
        %v2662 = vld [vmem:[%s1019 + $0x20] sm:$0xff]
        %v2663 = vld [vmem:[%s1019 + $0x28] sm:$0xff]
        %v2664 = vld [vmem:[%s1019 + $0x30] sm:$0xff]
        %v2665 = vld [vmem:[%s1019 + $0x38] sm:$0xff]
        %2670 = vrot.lane.b32.xlu0 %v2372, 96
        %v2671 = vpop.permute.xlu0 %2670
        %2672 = vrot.lane.b32.xlu0 %v2373, 96
        %v2673 = vpop.permute.xlu0 %2672
        %2674 = vrot.lane.b32.xlu0 %v2374, 96
        %v2675 = vpop.permute.xlu0 %2674
        %2676 = vrot.lane.b32.xlu0 %v2375, 96
        %v2677 = vpop.permute.xlu0 %2676
        %2682 = vrot.lane.b32.xlu0 %v2376, 96
        %v2683 = vpop.permute.xlu0 %2682
        %2684 = vrot.lane.b32.xlu0 %v2377, 96
        %v2685 = vpop.permute.xlu0 %2684
        %2686 = vrot.lane.b32.xlu0 %v2378, 96
        %v2687 = vpop.permute.xlu0 %2686
        %2688 = vrot.lane.b32.xlu0 %v2379, 96
        %v2689 = vpop.permute.xlu0 %2688
        %v2691 = vsel %vm751, %v2671, 0
        %v2694 = vsel %vm751, %v2673, 0
        %v2697 = vsel %vm751, %v2675, 0
        %v2700 = vsel %vm751, %v2677, 0
        %v2703 = vsel %vm751, %v2683, 0
        %v2706 = vsel %vm751, %v2685, 0
        %v2709 = vsel %vm751, %v2687, 0
        %v2712 = vsel %vm751, %v2689, 0
        %2714 = vmatprep.subr.bf16.mxu0 0
        %2715 = vmatpush1.bf16.xpose.msra.mxu0 %v2703
        %2716 = vmatprep.subr.bf16.mxu0 0
        %2717 = vmatpush1.bf16.xpose.msra.mxu0 %v2706
        %2718 = vmatprep.subr.bf16.mxu0 0
        %2719 = vmatpush1.bf16.xpose.msra.mxu0 %v2709
        %2720 = vmatprep.subr.bf16.mxu0 0
        %2721 = vmatpush1.bf16.xpose.msra.mxu0 %v2712
        %2722 = vmatprep.subr.bf16.mxu0 0
        %2723 = vmatpush1.bf16.xpose.msra.mxu0 0
        %2724 = vmatprep.subr.bf16.mxu0 0
        %2725 = vmatpush1.bf16.xpose.msra.mxu0 0
        %2726 = vmatprep.subr.bf16.mxu0 0
        %2727 = vmatpush1.bf16.xpose.msra.mxu0 0
        %2728 = vmatprep.subr.bf16.mxu0 0
        %2729 = vmatpush1.bf16.xpose.msra.mxu0 0
        %2730 = vmatprep.subr.bf16.mxu0 0
        %2731 = vmatpush1.bf16.xpose.msra.mxu0 0
        %2732 = vmatprep.subr.bf16.mxu0 0
        %2733 = vmatpush1.bf16.xpose.msra.mxu0 0
        %2734 = vmatprep.subr.bf16.mxu0 0
        %2735 = vmatpush1.bf16.xpose.msra.mxu0 0
        %2736 = vmatprep.subr.bf16.mxu0 0
        %2737 = vmatpush1.bf16.xpose.msra.mxu0 0
        %2738 = vmatprep.subr.bf16.mxu0 0
        %2739 = vmatpush1.bf16.xpose.msra.mxu0 0
        %2740 = vmatprep.subr.bf16.mxu0 0
        %2741 = vmatpush1.bf16.xpose.msra.mxu0 0
        %2742 = vmatprep.subr.bf16.mxu0 0
        %2743 = vmatpush1.bf16.xpose.msra.mxu0 0
        %2744 = vmatprep.subr.bf16.mxu0 0
        %2745 = vmatpush1.bf16.xpose.msra.mxu0 0
        %2746 = vmatprep.mubr.bf16.mxu0 0
        %2747 = vmatmul.mubr.bf16.gmra.mrb[0].mxu0 %v2691
        %v2748 = vpop.f32.mrb[0].mxu0
        %v2749 = vadd.f32 %v2658, %v2748
        %v2750 = vpop.f32.mrb[0].mxu0
        %v2751 = vpop.f32.mrb[0].mxu0
        %v2752 = vadd.f32 %v2659, %v2751
        %v2753 = vpop.f32.mrb[0].mxu0
        %2754 = vmatprep.mubr.bf16.mxu0 0
        %2755 = vmatmul.mubr.bf16.gmra.mrb[0].mxu0 %v2694
        %v2756 = vpop.f32.mrb[0].mxu0
        %v2757 = vadd.f32 %v2660, %v2756
        %v2758 = vpop.f32.mrb[0].mxu0
        %v2759 = vpop.f32.mrb[0].mxu0
        %v2760 = vadd.f32 %v2661, %v2759
        %v2761 = vpop.f32.mrb[0].mxu0
        %2762 = vmatprep.mubr.bf16.mxu0 0
        %2763 = vmatmul.mubr.bf16.gmra.mrb[0].mxu0 %v2697
        %v2764 = vpop.f32.mrb[0].mxu0
        %v2765 = vadd.f32 %v2662, %v2764
        %v2766 = vpop.f32.mrb[0].mxu0
        %v2767 = vpop.f32.mrb[0].mxu0
        %v2768 = vadd.f32 %v2663, %v2767
        %v2769 = vpop.f32.mrb[0].mxu0
        %2770 = vmatprep.mubr.bf16.mxu0 0
        %2771 = vmatmul.mubr.bf16.gmra.mrb[0].mxu0 %v2700
        %v2772 = vpop.f32.mrb[0].mxu0
        %v2773 = vadd.f32 %v2664, %v2772
        %v2774 = vpop.f32.mrb[0].mxu0
        %v2775 = vpop.f32.mrb[0].mxu0
        %v2776 = vadd.f32 %v2665, %v2775
        %v2777 = vpop.f32.mrb[0].mxu0
        %2778 = vdwg.mxu0
        %v2779 = vadd.f32 %v2749, %v2364
        %v2780 = vadd.f32 %v2752, %v2365
        %v2781 = vadd.f32 %v2757, %v2366
        %v2782 = vadd.f32 %v2760, %v2367
        %v2783 = vadd.f32 %v2765, %v2368
        %v2784 = vadd.f32 %v2768, %v2369
        %v2785 = vadd.f32 %v2773, %v2370
        %v2786 = vadd.f32 %v2776, %v2371
        %v2787 = vsel %vm849, %v2779, -inf
        %2788 = vmax.xlane.f32.xlu0 %v2787
        %v2789 = vpop.xlane.xlu0 %2788
        %v2790 = vsel %vm849, %v2780, -inf
        %2791 = vmax.xlane.f32.xlu0 %v2790
        %v2792 = vpop.xlane.xlu0 %2791
        %v2793 = vsel %vm849, %v2781, -inf
        %2794 = vmax.xlane.f32.xlu0 %v2793
        %v2795 = vpop.xlane.xlu0 %2794
        %v2796 = vsel %vm849, %v2782, -inf
        %2797 = vmax.xlane.f32.xlu0 %v2796
        %v2798 = vpop.xlane.xlu0 %2797
        %v2799 = vsel %vm849, %v2783, -inf
        %2800 = vmax.xlane.f32.xlu0 %v2799
        %v2801 = vpop.xlane.xlu0 %2800
        %v2802 = vsel %vm849, %v2784, -inf
        %2803 = vmax.xlane.f32.xlu0 %v2802
        %v2804 = vpop.xlane.xlu0 %2803
        %v2805 = vsel %vm849, %v2785, -inf
        %2806 = vmax.xlane.f32.xlu0 %v2805
        %v2807 = vpop.xlane.xlu0 %2806
        %v2808 = vsel %vm849, %v2786, -inf
        %2809 = vmax.xlane.f32.xlu0 %v2808
        %v2810 = vpop.xlane.xlu0 %2809
        %v2811 = vsub.f32 %v2779, %v2789
        %v2812 = vsub.f32 %v2780, %v2792
        %v2813 = vsub.f32 %v2781, %v2795
        %v2814 = vsub.f32 %v2782, %v2798
        %v2815 = vsub.f32 %v2783, %v2801
        %v2816 = vsub.f32 %v2784, %v2804
        %v2817 = vsub.f32 %v2785, %v2807
        %v2818 = vsub.f32 %v2786, %v2810
        %v2819 = vmul.f32 %v2811, 1.442695
        %v2820 = vpow.pop %v2819
        %v2821 = vmul.f32 %v2812, 1.442695
        %v2822 = vpow.pop %v2821
        %v2823 = vmul.f32 %v2813, 1.442695
        %v2824 = vpow.pop %v2823
        %v2825 = vmul.f32 %v2814, 1.442695
        %v2826 = vpow.pop %v2825
        %v2827 = vmul.f32 %v2815, 1.442695
        %v2828 = vpow.pop %v2827
        %v2829 = vmul.f32 %v2816, 1.442695
        %v2830 = vpow.pop %v2829
        %v2831 = vmul.f32 %v2817, 1.442695
        %v2832 = vpow.pop %v2831
        %v2833 = vmul.f32 %v2818, 1.442695
        %v2834 = vpow.pop %v2833
        %v2835 = vsel %vm849, %v2820, 0.0
        %2836 = vadd.xlane.f32.xlu0 %v2835
        %v2837 = vpop.xlane.xlu0 %2836
        %v2838 = vsel %vm849, %v2822, 0.0
        %2839 = vadd.xlane.f32.xlu0 %v2838
        %v2840 = vpop.xlane.xlu0 %2839
        %v2841 = vsel %vm849, %v2824, 0.0
        %2842 = vadd.xlane.f32.xlu0 %v2841
        %v2843 = vpop.xlane.xlu0 %2842
        %v2844 = vsel %vm849, %v2826, 0.0
        %2845 = vadd.xlane.f32.xlu0 %v2844
        %v2846 = vpop.xlane.xlu0 %2845
        %v2847 = vsel %vm849, %v2828, 0.0
        %2848 = vadd.xlane.f32.xlu0 %v2847
        %v2849 = vpop.xlane.xlu0 %2848
        %v2850 = vsel %vm849, %v2830, 0.0
        %2851 = vadd.xlane.f32.xlu0 %v2850
        %v2852 = vpop.xlane.xlu0 %2851
        %v2853 = vsel %vm849, %v2832, 0.0
        %2854 = vadd.xlane.f32.xlu0 %v2853
        %v2855 = vpop.xlane.xlu0 %2854
        %v2856 = vsel %vm849, %v2834, 0.0
        %2857 = vadd.xlane.f32.xlu0 %v2856
        %v2858 = vpop.xlane.xlu0 %2857
        %v2859 = vrcp.pop %v2837
        %v2860 = vrcp.pop %v2840
        %v2861 = vrcp.pop %v2843
        %v2862 = vrcp.pop %v2846
        %v2863 = vrcp.pop %v2849
        %v2864 = vrcp.pop %v2852
        %v2865 = vrcp.pop %v2855
        %v2866 = vrcp.pop %v2858
        %v2867 = vmul.f32 %v2820, %v2859
        %v2868 = vmul.f32 %v2822, %v2860
        %v2869 = vmul.f32 %v2824, %v2861
        %v2870 = vmul.f32 %v2826, %v2862
        %v2871 = vmul.f32 %v2828, %v2863
        %v2872 = vmul.f32 %v2830, %v2864
        %v2873 = vmul.f32 %v2832, %v2865
        %v2874 = vmul.f32 %v2834, %v2866
        %v2875 = vpack.c.bf16 %v2868, %v2867
        %v2876 = vpack.c.bf16 %v2870, %v2869
        %v2877 = vpack.c.bf16 %v2872, %v2871
        %v2878 = vpack.c.bf16 %v2874, %v2873
        %2883 = vrot.lane.b32.xlu0 %v2380, 96
        %v2884 = vpop.permute.xlu0 %2883
        %2885 = vrot.lane.b32.xlu0 %v2381, 96
        %v2886 = vpop.permute.xlu0 %2885
        %2887 = vrot.lane.b32.xlu0 %v2382, 96
        %v2888 = vpop.permute.xlu0 %2887
        %2889 = vrot.lane.b32.xlu0 %v2383, 96
        %v2890 = vpop.permute.xlu0 %2889
        %v2896 = vsel %vm849, %v2875, 0
        %v2899 = vsel %vm849, %v2876, 0
        %v2902 = vsel %vm849, %v2877, 0
        %v2905 = vsel %vm849, %v2878, 0
        %2907 = vmatprep.subr.bf16.mxu0 0
        %2908 = vmatpush1.bf16.msra.mxu0 %v2884
        %2909 = vmatprep.subr.bf16.mxu0 0
        %2910 = vmatpush1.bf16.msra.mxu0 %v2886
        %2911 = vmatprep.subr.bf16.mxu0 0
        %2912 = vmatpush1.bf16.msra.mxu0 %v2888
        %2913 = vmatprep.subr.bf16.mxu0 0
        %2914 = vmatpush1.bf16.msra.mxu0 %v2890
        %2915 = vmatprep.subr.bf16.mxu0 0
        %2916 = vmatpush1.bf16.msra.mxu0 0
        %2917 = vmatprep.subr.bf16.mxu0 0
        %2918 = vmatpush1.bf16.msra.mxu0 0
        %2919 = vmatprep.subr.bf16.mxu0 0
        %2920 = vmatpush1.bf16.msra.mxu0 0
        %2921 = vmatprep.subr.bf16.mxu0 0
        %2922 = vmatpush1.bf16.msra.mxu0 0
        %2923 = vmatprep.subr.bf16.mxu0 0
        %2924 = vmatpush1.bf16.msra.mxu0 0
        %2925 = vmatprep.subr.bf16.mxu0 0
        %2926 = vmatpush1.bf16.msra.mxu0 0
        %2927 = vmatprep.subr.bf16.mxu0 0
        %2928 = vmatpush1.bf16.msra.mxu0 0
        %2929 = vmatprep.subr.bf16.mxu0 0
        %2930 = vmatpush1.bf16.msra.mxu0 0
        %2931 = vmatprep.subr.bf16.mxu0 0
        %2932 = vmatpush1.bf16.msra.mxu0 0
        %2933 = vmatprep.subr.bf16.mxu0 0
        %2934 = vmatpush1.bf16.msra.mxu0 0
        %2935 = vmatprep.subr.bf16.mxu0 0
        %2936 = vmatpush1.bf16.msra.mxu0 0
        %2937 = vmatprep.subr.bf16.mxu0 0
        %2938 = vmatpush1.bf16.msra.mxu0 0
        %2939 = vmatprep.mubr.bf16.mxu0 0
        %2940 = vmatmul.mubr.bf16.gmra.mrb[0].mxu0 %v2896
        %v2941 = vpop.f32.mrb[0].mxu0
        %v2942 = vadd.f32 0.0, %v2941
        %v2943 = vpop.f32.mrb[0].mxu0
        %v2944 = vpop.f32.mrb[0].mxu0
        %v2945 = vadd.f32 0.0, %v2944
        %v2946 = vpop.f32.mrb[0].mxu0
        %2947 = vmatprep.mubr.bf16.mxu0 0
        %2948 = vmatmul.mubr.bf16.gmra.mrb[0].mxu0 %v2899
        %v2949 = vpop.f32.mrb[0].mxu0
        %v2950 = vadd.f32 0.0, %v2949
        %v2951 = vpop.f32.mrb[0].mxu0
        %v2952 = vpop.f32.mrb[0].mxu0
        %v2953 = vadd.f32 0.0, %v2952
        %v2954 = vpop.f32.mrb[0].mxu0
        %2955 = vmatprep.mubr.bf16.mxu0 0
        %2956 = vmatmul.mubr.bf16.gmra.mrb[0].mxu0 %v2902
        %v2957 = vpop.f32.mrb[0].mxu0
        %v2958 = vadd.f32 0.0, %v2957
        %v2959 = vpop.f32.mrb[0].mxu0
        %v2960 = vpop.f32.mrb[0].mxu0
        %v2961 = vadd.f32 0.0, %v2960
        %v2962 = vpop.f32.mrb[0].mxu0
        %2963 = vmatprep.mubr.bf16.mxu0 0
        %2964 = vmatmul.mubr.bf16.gmra.mrb[0].mxu0 %v2905
        %v2965 = vpop.f32.mrb[0].mxu0
        %v2966 = vadd.f32 0.0, %v2965
        %v2967 = vpop.f32.mrb[0].mxu0
        %v2968 = vpop.f32.mrb[0].mxu0
        %v2969 = vadd.f32 0.0, %v2968
        %v2970 = vpop.f32.mrb[0].mxu0
        %2971 = vdwg.mxu0
        %v2972 = vld [vmem:[%s1334] sm:$0xff]
        %v2973 = vld [vmem:[%s1334 + $0x8] sm:$0xff]
        %v2974 = vld [vmem:[%s1334 + $0x10] sm:$0xff]
        %v2975 = vld [vmem:[%s1334 + $0x18] sm:$0xff]
        %v2976 = vld [vmem:[%s1334 + $0x20] sm:$0xff]
        %v2977 = vld [vmem:[%s1334 + $0x28] sm:$0xff]
        %v2978 = vld [vmem:[%s1334 + $0x30] sm:$0xff]
        %v2979 = vld [vmem:[%s1334 + $0x38] sm:$0xff]
        %2980 = vrot.lane.b32.xlu0 %v2372, 64
        %v2981 = vpop.permute.xlu0 %2980
        %2982 = vrot.lane.b32.xlu0 %v2373, 64
        %v2983 = vpop.permute.xlu0 %2982
        %2984 = vrot.lane.b32.xlu0 %v2374, 64
        %v2985 = vpop.permute.xlu0 %2984
        %2986 = vrot.lane.b32.xlu0 %v2375, 64
        %v2987 = vpop.permute.xlu0 %2986
        %2988 = vrot.lane.b32.xlu0 %v2376, 64
        %v2989 = vpop.permute.xlu0 %2988
        %2990 = vrot.lane.b32.xlu0 %v2377, 64
        %v2991 = vpop.permute.xlu0 %2990
        %2992 = vrot.lane.b32.xlu0 %v2378, 64
        %v2993 = vpop.permute.xlu0 %2992
        %2994 = vrot.lane.b32.xlu0 %v2379, 64
        %v2995 = vpop.permute.xlu0 %2994
        %v2997 = vsel %vm751, %v2981, 0
        %v3000 = vsel %vm751, %v2983, 0
        %v3003 = vsel %vm751, %v2985, 0
        %v3006 = vsel %vm751, %v2987, 0
        %v3009 = vsel %vm751, %v2989, 0
        %v3012 = vsel %vm751, %v2991, 0
        %v3015 = vsel %vm751, %v2993, 0
        %v3018 = vsel %vm751, %v2995, 0
        %3020 = vmatprep.subr.bf16.mxu0 0
        %3021 = vmatpush1.bf16.xpose.msra.mxu0 %v3009
        %3022 = vmatprep.subr.bf16.mxu0 0
        %3023 = vmatpush1.bf16.xpose.msra.mxu0 %v3012
        %3024 = vmatprep.subr.bf16.mxu0 0
        %3025 = vmatpush1.bf16.xpose.msra.mxu0 %v3015
        %3026 = vmatprep.subr.bf16.mxu0 0
        %3027 = vmatpush1.bf16.xpose.msra.mxu0 %v3018
        %3028 = vmatprep.subr.bf16.mxu0 0
        %3029 = vmatpush1.bf16.xpose.msra.mxu0 0
        %3030 = vmatprep.subr.bf16.mxu0 0
        %3031 = vmatpush1.bf16.xpose.msra.mxu0 0
        %3032 = vmatprep.subr.bf16.mxu0 0
        %3033 = vmatpush1.bf16.xpose.msra.mxu0 0
        %3034 = vmatprep.subr.bf16.mxu0 0
        %3035 = vmatpush1.bf16.xpose.msra.mxu0 0
        %3036 = vmatprep.subr.bf16.mxu0 0
        %3037 = vmatpush1.bf16.xpose.msra.mxu0 0
        %3038 = vmatprep.subr.bf16.mxu0 0
        %3039 = vmatpush1.bf16.xpose.msra.mxu0 0
        %3040 = vmatprep.subr.bf16.mxu0 0
        %3041 = vmatpush1.bf16.xpose.msra.mxu0 0
        %3042 = vmatprep.subr.bf16.mxu0 0
        %3043 = vmatpush1.bf16.xpose.msra.mxu0 0
        %3044 = vmatprep.subr.bf16.mxu0 0
        %3045 = vmatpush1.bf16.xpose.msra.mxu0 0
        %3046 = vmatprep.subr.bf16.mxu0 0
        %3047 = vmatpush1.bf16.xpose.msra.mxu0 0
        %3048 = vmatprep.subr.bf16.mxu0 0
        %3049 = vmatpush1.bf16.xpose.msra.mxu0 0
        %3050 = vmatprep.subr.bf16.mxu0 0
        %3051 = vmatpush1.bf16.xpose.msra.mxu0 0
        %3052 = vmatprep.mubr.bf16.mxu0 0
        %3053 = vmatmul.mubr.bf16.gmra.mrb[0].mxu0 %v2997
        %v3054 = vpop.f32.mrb[0].mxu0
        %v3055 = vadd.f32 %v2972, %v3054
        %v3056 = vpop.f32.mrb[0].mxu0
        %v3057 = vpop.f32.mrb[0].mxu0
        %v3058 = vadd.f32 %v2973, %v3057
        %v3059 = vpop.f32.mrb[0].mxu0
        %3060 = vmatprep.mubr.bf16.mxu0 0
        %3061 = vmatmul.mubr.bf16.gmra.mrb[0].mxu0 %v3000
        %v3062 = vpop.f32.mrb[0].mxu0
        %v3063 = vadd.f32 %v2974, %v3062
        %v3064 = vpop.f32.mrb[0].mxu0
        %v3065 = vpop.f32.mrb[0].mxu0
        %v3066 = vadd.f32 %v2975, %v3065
        %v3067 = vpop.f32.mrb[0].mxu0
        %3068 = vmatprep.mubr.bf16.mxu0 0
        %3069 = vmatmul.mubr.bf16.gmra.mrb[0].mxu0 %v3003
        %v3070 = vpop.f32.mrb[0].mxu0
        %v3071 = vadd.f32 %v2976, %v3070
        %v3072 = vpop.f32.mrb[0].mxu0
        %v3073 = vpop.f32.mrb[0].mxu0
        %v3074 = vadd.f32 %v2977, %v3073
        %v3075 = vpop.f32.mrb[0].mxu0
        %3076 = vmatprep.mubr.bf16.mxu0 0
        %3077 = vmatmul.mubr.bf16.gmra.mrb[0].mxu0 %v3006
        %v3078 = vpop.f32.mrb[0].mxu0
        %v3079 = vadd.f32 %v2978, %v3078
        %v3080 = vpop.f32.mrb[0].mxu0
        %v3081 = vpop.f32.mrb[0].mxu0
        %v3082 = vadd.f32 %v2979, %v3081
        %v3083 = vpop.f32.mrb[0].mxu0
        %3084 = vdwg.mxu0
        %v3085 = vadd.f32 %v3055, %v2364
        %v3086 = vadd.f32 %v3058, %v2365
        %v3087 = vadd.f32 %v3063, %v2366
        %v3088 = vadd.f32 %v3066, %v2367
        %v3089 = vadd.f32 %v3071, %v2368
        %v3090 = vadd.f32 %v3074, %v2369
        %v3091 = vadd.f32 %v3079, %v2370
        %v3092 = vadd.f32 %v3082, %v2371
        %v3093 = vsel %vm849, %v3085, -inf
        %3094 = vmax.xlane.f32.xlu0 %v3093
        %v3095 = vpop.xlane.xlu0 %3094
        %v3096 = vsel %vm849, %v3086, -inf
        %3097 = vmax.xlane.f32.xlu0 %v3096
        %v3098 = vpop.xlane.xlu0 %3097
        %v3099 = vsel %vm849, %v3087, -inf
        %3100 = vmax.xlane.f32.xlu0 %v3099
        %v3101 = vpop.xlane.xlu0 %3100
        %v3102 = vsel %vm849, %v3088, -inf
        %3103 = vmax.xlane.f32.xlu0 %v3102
        %v3104 = vpop.xlane.xlu0 %3103
        %v3105 = vsel %vm849, %v3089, -inf
        %3106 = vmax.xlane.f32.xlu0 %v3105
        %v3107 = vpop.xlane.xlu0 %3106
        %v3108 = vsel %vm849, %v3090, -inf
        %3109 = vmax.xlane.f32.xlu0 %v3108
        %v3110 = vpop.xlane.xlu0 %3109
        %v3111 = vsel %vm849, %v3091, -inf
        %3112 = vmax.xlane.f32.xlu0 %v3111
        %v3113 = vpop.xlane.xlu0 %3112
        %v3114 = vsel %vm849, %v3092, -inf
        %3115 = vmax.xlane.f32.xlu0 %v3114
        %v3116 = vpop.xlane.xlu0 %3115
        %v3117 = vsub.f32 %v3085, %v3095
        %v3118 = vsub.f32 %v3086, %v3098
        %v3119 = vsub.f32 %v3087, %v3101
        %v3120 = vsub.f32 %v3088, %v3104
        %v3121 = vsub.f32 %v3089, %v3107
        %v3122 = vsub.f32 %v3090, %v3110
        %v3123 = vsub.f32 %v3091, %v3113
        %v3124 = vsub.f32 %v3092, %v3116
        %v3125 = vmul.f32 %v3117, 1.442695
        %v3126 = vpow.pop %v3125
        %v3127 = vmul.f32 %v3118, 1.442695
        %v3128 = vpow.pop %v3127
        %v3129 = vmul.f32 %v3119, 1.442695
        %v3130 = vpow.pop %v3129
        %v3131 = vmul.f32 %v3120, 1.442695
        %v3132 = vpow.pop %v3131
        %v3133 = vmul.f32 %v3121, 1.442695
        %v3134 = vpow.pop %v3133
        %v3135 = vmul.f32 %v3122, 1.442695
        %v3136 = vpow.pop %v3135
        %v3137 = vmul.f32 %v3123, 1.442695
        %v3138 = vpow.pop %v3137
        %v3139 = vmul.f32 %v3124, 1.442695
        %v3140 = vpow.pop %v3139
        %v3141 = vsel %vm849, %v3126, 0.0
        %3142 = vadd.xlane.f32.xlu0 %v3141
        %v3143 = vpop.xlane.xlu0 %3142
        %v3144 = vsel %vm849, %v3128, 0.0
        %3145 = vadd.xlane.f32.xlu0 %v3144
        %v3146 = vpop.xlane.xlu0 %3145
        %v3147 = vsel %vm849, %v3130, 0.0
        %3148 = vadd.xlane.f32.xlu0 %v3147
        %v3149 = vpop.xlane.xlu0 %3148
        %v3150 = vsel %vm849, %v3132, 0.0
        %3151 = vadd.xlane.f32.xlu0 %v3150
        %v3152 = vpop.xlane.xlu0 %3151
        %v3153 = vsel %vm849, %v3134, 0.0
        %3154 = vadd.xlane.f32.xlu0 %v3153
        %v3155 = vpop.xlane.xlu0 %3154
        %v3156 = vsel %vm849, %v3136, 0.0
        %3157 = vadd.xlane.f32.xlu0 %v3156
        %v3158 = vpop.xlane.xlu0 %3157
        %v3159 = vsel %vm849, %v3138, 0.0
        %3160 = vadd.xlane.f32.xlu0 %v3159
        %v3161 = vpop.xlane.xlu0 %3160
        %v3162 = vsel %vm849, %v3140, 0.0
        %3163 = vadd.xlane.f32.xlu0 %v3162
        %v3164 = vpop.xlane.xlu0 %3163
        %v3165 = vrcp.pop %v3143
        %v3166 = vrcp.pop %v3146
        %v3167 = vrcp.pop %v3149
        %v3168 = vrcp.pop %v3152
        %v3169 = vrcp.pop %v3155
        %v3170 = vrcp.pop %v3158
        %v3171 = vrcp.pop %v3161
        %v3172 = vrcp.pop %v3164
        %v3173 = vmul.f32 %v3126, %v3165
        %v3174 = vmul.f32 %v3128, %v3166
        %v3175 = vmul.f32 %v3130, %v3167
        %v3176 = vmul.f32 %v3132, %v3168
        %v3177 = vmul.f32 %v3134, %v3169
        %v3178 = vmul.f32 %v3136, %v3170
        %v3179 = vmul.f32 %v3138, %v3171
        %v3180 = vmul.f32 %v3140, %v3172
        %v3181 = vpack.c.bf16 %v3174, %v3173
        %v3182 = vpack.c.bf16 %v3176, %v3175
        %v3183 = vpack.c.bf16 %v3178, %v3177
        %v3184 = vpack.c.bf16 %v3180, %v3179
        %3185 = vrot.lane.b32.xlu0 %v2380, 64
        %v3186 = vpop.permute.xlu0 %3185
        %3187 = vrot.lane.b32.xlu0 %v2381, 64
        %v3188 = vpop.permute.xlu0 %3187
        %3189 = vrot.lane.b32.xlu0 %v2382, 64
        %v3190 = vpop.permute.xlu0 %3189
        %3191 = vrot.lane.b32.xlu0 %v2383, 64
        %v3192 = vpop.permute.xlu0 %3191
        %v3198 = vsel %vm849, %v3181, 0
        %v3201 = vsel %vm849, %v3182, 0
        %v3204 = vsel %vm849, %v3183, 0
        %v3207 = vsel %vm849, %v3184, 0
        %3209 = vmatprep.subr.bf16.mxu0 0
        %3210 = vmatpush1.bf16.msra.mxu0 %v3186
        %3211 = vmatprep.subr.bf16.mxu0 0
        %3212 = vmatpush1.bf16.msra.mxu0 %v3188
        %3213 = vmatprep.subr.bf16.mxu0 0
        %3214 = vmatpush1.bf16.msra.mxu0 %v3190
        %3215 = vmatprep.subr.bf16.mxu0 0
        %3216 = vmatpush1.bf16.msra.mxu0 %v3192
        %3217 = vmatprep.subr.bf16.mxu0 0
        %3218 = vmatpush1.bf16.msra.mxu0 0
        %3219 = vmatprep.subr.bf16.mxu0 0
        %3220 = vmatpush1.bf16.msra.mxu0 0
        %3221 = vmatprep.subr.bf16.mxu0 0
        %3222 = vmatpush1.bf16.msra.mxu0 0
        %3223 = vmatprep.subr.bf16.mxu0 0
        %3224 = vmatpush1.bf16.msra.mxu0 0
        %3225 = vmatprep.subr.bf16.mxu0 0
        %3226 = vmatpush1.bf16.msra.mxu0 0
        %3227 = vmatprep.subr.bf16.mxu0 0
        %3228 = vmatpush1.bf16.msra.mxu0 0
        %3229 = vmatprep.subr.bf16.mxu0 0
        %3230 = vmatpush1.bf16.msra.mxu0 0
        %3231 = vmatprep.subr.bf16.mxu0 0
        %3232 = vmatpush1.bf16.msra.mxu0 0
        %3233 = vmatprep.subr.bf16.mxu0 0
        %3234 = vmatpush1.bf16.msra.mxu0 0
        %3235 = vmatprep.subr.bf16.mxu0 0
        %3236 = vmatpush1.bf16.msra.mxu0 0
        %3237 = vmatprep.subr.bf16.mxu0 0
        %3238 = vmatpush1.bf16.msra.mxu0 0
        %3239 = vmatprep.subr.bf16.mxu0 0
        %3240 = vmatpush1.bf16.msra.mxu0 0
        %3241 = vmatprep.mubr.bf16.mxu0 0
        %3242 = vmatmul.mubr.bf16.gmra.mrb[0].mxu0 %v3198
        %v3243 = vpop.f32.mrb[0].mxu0
        %v3244 = vadd.f32 0.0, %v3243
        %v3245 = vpop.f32.mrb[0].mxu0
        %v3246 = vpop.f32.mrb[0].mxu0
        %v3247 = vadd.f32 0.0, %v3246
        %v3248 = vpop.f32.mrb[0].mxu0
        %3249 = vmatprep.mubr.bf16.mxu0 0
        %3250 = vmatmul.mubr.bf16.gmra.mrb[0].mxu0 %v3201
        %v3251 = vpop.f32.mrb[0].mxu0
        %v3252 = vadd.f32 0.0, %v3251
        %v3253 = vpop.f32.mrb[0].mxu0
        %v3254 = vpop.f32.mrb[0].mxu0
        %v3255 = vadd.f32 0.0, %v3254
        %v3256 = vpop.f32.mrb[0].mxu0
        %3257 = vmatprep.mubr.bf16.mxu0 0
        %3258 = vmatmul.mubr.bf16.gmra.mrb[0].mxu0 %v3204
        %v3259 = vpop.f32.mrb[0].mxu0
        %v3260 = vadd.f32 0.0, %v3259
        %v3261 = vpop.f32.mrb[0].mxu0
        %v3262 = vpop.f32.mrb[0].mxu0
        %v3263 = vadd.f32 0.0, %v3262
        %v3264 = vpop.f32.mrb[0].mxu0
        %3265 = vmatprep.mubr.bf16.mxu0 0
        %3266 = vmatmul.mubr.bf16.gmra.mrb[0].mxu0 %v3207
        %v3267 = vpop.f32.mrb[0].mxu0
        %v3268 = vadd.f32 0.0, %v3267
        %v3269 = vpop.f32.mrb[0].mxu0
        %v3270 = vpop.f32.mrb[0].mxu0
        %v3271 = vadd.f32 0.0, %v3270
        %v3272 = vpop.f32.mrb[0].mxu0
        %3273 = vdwg.mxu0
        %v3274 = vld [vmem:[%s1637] sm:$0xff]
        %v3275 = vld [vmem:[%s1637 + $0x8] sm:$0xff]
        %v3276 = vld [vmem:[%s1637 + $0x10] sm:$0xff]
        %v3277 = vld [vmem:[%s1637 + $0x18] sm:$0xff]
        %v3278 = vld [vmem:[%s1637 + $0x20] sm:$0xff]
        %v3279 = vld [vmem:[%s1637 + $0x28] sm:$0xff]
        %v3280 = vld [vmem:[%s1637 + $0x30] sm:$0xff]
        %v3281 = vld [vmem:[%s1637 + $0x38] sm:$0xff]
        %3282 = vrot.lane.b32.xlu0 %v2372, 32
        %v3283 = vpop.permute.xlu0 %3282
        %3284 = vrot.lane.b32.xlu0 %v2373, 32
        %v3285 = vpop.permute.xlu0 %3284
        %3286 = vrot.lane.b32.xlu0 %v2374, 32
        %v3287 = vpop.permute.xlu0 %3286
        %3288 = vrot.lane.b32.xlu0 %v2375, 32
        %v3289 = vpop.permute.xlu0 %3288
        %3290 = vrot.lane.b32.xlu0 %v2376, 32
        %v3291 = vpop.permute.xlu0 %3290
        %3292 = vrot.lane.b32.xlu0 %v2377, 32
        %v3293 = vpop.permute.xlu0 %3292
        %3294 = vrot.lane.b32.xlu0 %v2378, 32
        %v3295 = vpop.permute.xlu0 %3294
        %3296 = vrot.lane.b32.xlu0 %v2379, 32
        %v3297 = vpop.permute.xlu0 %3296
        %v3299 = vsel %vm751, %v3283, 0
        %v3302 = vsel %vm751, %v3285, 0
        %v3305 = vsel %vm751, %v3287, 0
        %v3308 = vsel %vm751, %v3289, 0
        %v3311 = vsel %vm751, %v3291, 0
        %v3314 = vsel %vm751, %v3293, 0
        %v3317 = vsel %vm751, %v3295, 0
        %v3320 = vsel %vm751, %v3297, 0
        %3322 = vmatprep.subr.bf16.mxu0 0
        %3323 = vmatpush1.bf16.xpose.msra.mxu0 %v3311
        %3324 = vmatprep.subr.bf16.mxu0 0
        %3325 = vmatpush1.bf16.xpose.msra.mxu0 %v3314
        %3326 = vmatprep.subr.bf16.mxu0 0
        %3327 = vmatpush1.bf16.xpose.msra.mxu0 %v3317
        %3328 = vmatprep.subr.bf16.mxu0 0
        %3329 = vmatpush1.bf16.xpose.msra.mxu0 %v3320
        %3330 = vmatprep.subr.bf16.mxu0 0
        %3331 = vmatpush1.bf16.xpose.msra.mxu0 0
        %3332 = vmatprep.subr.bf16.mxu0 0
        %3333 = vmatpush1.bf16.xpose.msra.mxu0 0
        %3334 = vmatprep.subr.bf16.mxu0 0
        %3335 = vmatpush1.bf16.xpose.msra.mxu0 0
        %3336 = vmatprep.subr.bf16.mxu0 0
        %3337 = vmatpush1.bf16.xpose.msra.mxu0 0
        %3338 = vmatprep.subr.bf16.mxu0 0
        %3339 = vmatpush1.bf16.xpose.msra.mxu0 0
        %3340 = vmatprep.subr.bf16.mxu0 0
        %3341 = vmatpush1.bf16.xpose.msra.mxu0 0
        %3342 = vmatprep.subr.bf16.mxu0 0
        %3343 = vmatpush1.bf16.xpose.msra.mxu0 0
        %3344 = vmatprep.subr.bf16.mxu0 0
        %3345 = vmatpush1.bf16.xpose.msra.mxu0 0
        %3346 = vmatprep.subr.bf16.mxu0 0
        %3347 = vmatpush1.bf16.xpose.msra.mxu0 0
        %3348 = vmatprep.subr.bf16.mxu0 0
        %3349 = vmatpush1.bf16.xpose.msra.mxu0 0
        %3350 = vmatprep.subr.bf16.mxu0 0
        %3351 = vmatpush1.bf16.xpose.msra.mxu0 0
        %3352 = vmatprep.subr.bf16.mxu0 0
        %3353 = vmatpush1.bf16.xpose.msra.mxu0 0
        %3354 = vmatprep.mubr.bf16.mxu0 0
        %3355 = vmatmul.mubr.bf16.gmra.mrb[0].mxu0 %v3299
        %v3356 = vpop.f32.mrb[0].mxu0
        %v3357 = vadd.f32 %v3274, %v3356
        %v3358 = vpop.f32.mrb[0].mxu0
        %v3359 = vpop.f32.mrb[0].mxu0
        %v3360 = vadd.f32 %v3275, %v3359
        %v3361 = vpop.f32.mrb[0].mxu0
        %3362 = vmatprep.mubr.bf16.mxu0 0
        %3363 = vmatmul.mubr.bf16.gmra.mrb[0].mxu0 %v3302
        %v3364 = vpop.f32.mrb[0].mxu0
        %v3365 = vadd.f32 %v3276, %v3364
        %v3366 = vpop.f32.mrb[0].mxu0
        %v3367 = vpop.f32.mrb[0].mxu0
        %v3368 = vadd.f32 %v3277, %v3367
        %v3369 = vpop.f32.mrb[0].mxu0
        %3370 = vmatprep.mubr.bf16.mxu0 0
        %3371 = vmatmul.mubr.bf16.gmra.mrb[0].mxu0 %v3305
        %v3372 = vpop.f32.mrb[0].mxu0
        %v3373 = vadd.f32 %v3278, %v3372
        %v3374 = vpop.f32.mrb[0].mxu0
        %v3375 = vpop.f32.mrb[0].mxu0
        %v3376 = vadd.f32 %v3279, %v3375
        %v3377 = vpop.f32.mrb[0].mxu0
        %3378 = vmatprep.mubr.bf16.mxu0 0
        %3379 = vmatmul.mubr.bf16.gmra.mrb[0].mxu0 %v3308
        %v3380 = vpop.f32.mrb[0].mxu0
        %v3381 = vadd.f32 %v3280, %v3380
        %v3382 = vpop.f32.mrb[0].mxu0
        %v3383 = vpop.f32.mrb[0].mxu0
        %v3384 = vadd.f32 %v3281, %v3383
        %v3385 = vpop.f32.mrb[0].mxu0
        %3386 = vdwg.mxu0
        %v3387 = vadd.f32 %v3357, %v2364
        %v3388 = vadd.f32 %v3360, %v2365
        %v3389 = vadd.f32 %v3365, %v2366
        %v3390 = vadd.f32 %v3368, %v2367
        %v3391 = vadd.f32 %v3373, %v2368
        %v3392 = vadd.f32 %v3376, %v2369
        %v3393 = vadd.f32 %v3381, %v2370
        %v3394 = vadd.f32 %v3384, %v2371
        %v3395 = vsel %vm849, %v3387, -inf
        %3396 = vmax.xlane.f32.xlu0 %v3395
        %v3397 = vpop.xlane.xlu0 %3396
        %v3398 = vsel %vm849, %v3388, -inf
        %3399 = vmax.xlane.f32.xlu0 %v3398
        %v3400 = vpop.xlane.xlu0 %3399
        %v3401 = vsel %vm849, %v3389, -inf
        %3402 = vmax.xlane.f32.xlu0 %v3401
        %v3403 = vpop.xlane.xlu0 %3402
        %v3404 = vsel %vm849, %v3390, -inf
        %3405 = vmax.xlane.f32.xlu0 %v3404
        %v3406 = vpop.xlane.xlu0 %3405
        %v3407 = vsel %vm849, %v3391, -inf
        %3408 = vmax.xlane.f32.xlu0 %v3407
        %v3409 = vpop.xlane.xlu0 %3408
        %v3410 = vsel %vm849, %v3392, -inf
        %3411 = vmax.xlane.f32.xlu0 %v3410
        %v3412 = vpop.xlane.xlu0 %3411
        %v3413 = vsel %vm849, %v3393, -inf
        %3414 = vmax.xlane.f32.xlu0 %v3413
        %v3415 = vpop.xlane.xlu0 %3414
        %v3416 = vsel %vm849, %v3394, -inf
        %3417 = vmax.xlane.f32.xlu0 %v3416
        %v3418 = vpop.xlane.xlu0 %3417
        %v3419 = vsub.f32 %v3387, %v3397
        %v3420 = vsub.f32 %v3388, %v3400
        %v3421 = vsub.f32 %v3389, %v3403
        %v3422 = vsub.f32 %v3390, %v3406
        %v3423 = vsub.f32 %v3391, %v3409
        %v3424 = vsub.f32 %v3392, %v3412
        %v3425 = vsub.f32 %v3393, %v3415
        %v3426 = vsub.f32 %v3394, %v3418
        %v3427 = vmul.f32 %v3419, 1.442695
        %v3428 = vpow.pop %v3427
        %v3429 = vmul.f32 %v3420, 1.442695
        %v3430 = vpow.pop %v3429
        %v3431 = vmul.f32 %v3421, 1.442695
        %v3432 = vpow.pop %v3431
        %v3433 = vmul.f32 %v3422, 1.442695
        %v3434 = vpow.pop %v3433
        %v3435 = vmul.f32 %v3423, 1.442695
        %v3436 = vpow.pop %v3435
        %v3437 = vmul.f32 %v3424, 1.442695
        %v3438 = vpow.pop %v3437
        %v3439 = vmul.f32 %v3425, 1.442695
        %v3440 = vpow.pop %v3439
        %v3441 = vmul.f32 %v3426, 1.442695
        %v3442 = vpow.pop %v3441
        %v3443 = vsel %vm849, %v3428, 0.0
        %3444 = vadd.xlane.f32.xlu0 %v3443
        %v3445 = vpop.xlane.xlu0 %3444
        %v3446 = vsel %vm849, %v3430, 0.0
        %3447 = vadd.xlane.f32.xlu0 %v3446
        %v3448 = vpop.xlane.xlu0 %3447
        %v3449 = vsel %vm849, %v3432, 0.0
        %3450 = vadd.xlane.f32.xlu0 %v3449
        %v3451 = vpop.xlane.xlu0 %3450
        %v3452 = vsel %vm849, %v3434, 0.0
        %3453 = vadd.xlane.f32.xlu0 %v3452
        %v3454 = vpop.xlane.xlu0 %3453
        %v3455 = vsel %vm849, %v3436, 0.0
        %3456 = vadd.xlane.f32.xlu0 %v3455
        %v3457 = vpop.xlane.xlu0 %3456
        %v3458 = vsel %vm849, %v3438, 0.0
        %3459 = vadd.xlane.f32.xlu0 %v3458
        %v3460 = vpop.xlane.xlu0 %3459
        %v3461 = vsel %vm849, %v3440, 0.0
        %3462 = vadd.xlane.f32.xlu0 %v3461
        %v3463 = vpop.xlane.xlu0 %3462
        %v3464 = vsel %vm849, %v3442, 0.0
        %3465 = vadd.xlane.f32.xlu0 %v3464
        %v3466 = vpop.xlane.xlu0 %3465
        %v3467 = vrcp.pop %v3445
        %v3468 = vrcp.pop %v3448
        %v3469 = vrcp.pop %v3451
        %v3470 = vrcp.pop %v3454
        %v3471 = vrcp.pop %v3457
        %v3472 = vrcp.pop %v3460
        %v3473 = vrcp.pop %v3463
        %v3474 = vrcp.pop %v3466
        %v3475 = vmul.f32 %v3428, %v3467
        %v3476 = vmul.f32 %v3430, %v3468
        %v3477 = vmul.f32 %v3432, %v3469
        %v3478 = vmul.f32 %v3434, %v3470
        %v3479 = vmul.f32 %v3436, %v3471
        %v3480 = vmul.f32 %v3438, %v3472
        %v3481 = vmul.f32 %v3440, %v3473
        %v3482 = vmul.f32 %v3442, %v3474
        %v3483 = vpack.c.bf16 %v3476, %v3475
        %v3484 = vpack.c.bf16 %v3478, %v3477
        %v3485 = vpack.c.bf16 %v3480, %v3479
        %v3486 = vpack.c.bf16 %v3482, %v3481
        %3487 = vrot.lane.b32.xlu0 %v2380, 32
        %v3488 = vpop.permute.xlu0 %3487
        %3489 = vrot.lane.b32.xlu0 %v2381, 32
        %v3490 = vpop.permute.xlu0 %3489
        %3491 = vrot.lane.b32.xlu0 %v2382, 32
        %v3492 = vpop.permute.xlu0 %3491
        %3493 = vrot.lane.b32.xlu0 %v2383, 32
        %v3494 = vpop.permute.xlu0 %3493
        %v3500 = vsel %vm849, %v3483, 0
        %v3503 = vsel %vm849, %v3484, 0
        %v3506 = vsel %vm849, %v3485, 0
        %v3509 = vsel %vm849, %v3486, 0
        %3511 = vmatprep.subr.bf16.mxu0 0
        %3512 = vmatpush1.bf16.msra.mxu0 %v3488
        %3513 = vmatprep.subr.bf16.mxu0 0
        %3514 = vmatpush1.bf16.msra.mxu0 %v3490
        %3515 = vmatprep.subr.bf16.mxu0 0
        %3516 = vmatpush1.bf16.msra.mxu0 %v3492
        %3517 = vmatprep.subr.bf16.mxu0 0
        %3518 = vmatpush1.bf16.msra.mxu0 %v3494
        %3519 = vmatprep.subr.bf16.mxu0 0
        %3520 = vmatpush1.bf16.msra.mxu0 0
        %3521 = vmatprep.subr.bf16.mxu0 0
        %3522 = vmatpush1.bf16.msra.mxu0 0
        %3523 = vmatprep.subr.bf16.mxu0 0
        %3524 = vmatpush1.bf16.msra.mxu0 0
        %3525 = vmatprep.subr.bf16.mxu0 0
        %3526 = vmatpush1.bf16.msra.mxu0 0
        %3527 = vmatprep.subr.bf16.mxu0 0
        %3528 = vmatpush1.bf16.msra.mxu0 0
        %3529 = vmatprep.subr.bf16.mxu0 0
        %3530 = vmatpush1.bf16.msra.mxu0 0
        %3531 = vmatprep.subr.bf16.mxu0 0
        %3532 = vmatpush1.bf16.msra.mxu0 0
        %3533 = vmatprep.subr.bf16.mxu0 0
        %3534 = vmatpush1.bf16.msra.mxu0 0
        %3535 = vmatprep.subr.bf16.mxu0 0
        %3536 = vmatpush1.bf16.msra.mxu0 0
        %3537 = vmatprep.subr.bf16.mxu0 0
        %3538 = vmatpush1.bf16.msra.mxu0 0
        %3539 = vmatprep.subr.bf16.mxu0 0
        %3540 = vmatpush1.bf16.msra.mxu0 0
        %3541 = vmatprep.subr.bf16.mxu0 0
        %3542 = vmatpush1.bf16.msra.mxu0 0
        %3543 = vmatprep.mubr.bf16.mxu0 0
        %3544 = vmatmul.mubr.bf16.gmra.mrb[0].mxu0 %v3500
        %v3545 = vpop.f32.mrb[0].mxu0
        %v3546 = vadd.f32 0.0, %v3545
        %v3547 = vpop.f32.mrb[0].mxu0
        %v3548 = vpop.f32.mrb[0].mxu0
        %v3549 = vadd.f32 0.0, %v3548
        %v3550 = vpop.f32.mrb[0].mxu0
        %3551 = vmatprep.mubr.bf16.mxu0 0
        %3552 = vmatmul.mubr.bf16.gmra.mrb[0].mxu0 %v3503
        %v3553 = vpop.f32.mrb[0].mxu0
        %v3554 = vadd.f32 0.0, %v3553
        %v3555 = vpop.f32.mrb[0].mxu0
        %v3556 = vpop.f32.mrb[0].mxu0
        %v3557 = vadd.f32 0.0, %v3556
        %v3558 = vpop.f32.mrb[0].mxu0
        %3559 = vmatprep.mubr.bf16.mxu0 0
        %3560 = vmatmul.mubr.bf16.gmra.mrb[0].mxu0 %v3506
        %v3561 = vpop.f32.mrb[0].mxu0
        %v3562 = vadd.f32 0.0, %v3561
        %v3563 = vpop.f32.mrb[0].mxu0
        %v3564 = vpop.f32.mrb[0].mxu0
        %v3565 = vadd.f32 0.0, %v3564
        %v3566 = vpop.f32.mrb[0].mxu0
        %3567 = vmatprep.mubr.bf16.mxu0 0
        %3568 = vmatmul.mubr.bf16.gmra.mrb[0].mxu0 %v3509
        %v3569 = vpop.f32.mrb[0].mxu0
        %v3570 = vadd.f32 0.0, %v3569
        %v3571 = vpop.f32.mrb[0].mxu0
        %v3572 = vpop.f32.mrb[0].mxu0
        %v3573 = vadd.f32 0.0, %v3572
        %v3574 = vpop.f32.mrb[0].mxu0
        %3575 = vdwg.mxu0
        %3584 = vrot.lane.b32.xlu0 %v2942, 32
        %v3585 = vpop.permute.xlu0 %3584
        %3586 = vrot.lane.b32.xlu0 %v2945, 32
        %v3587 = vpop.permute.xlu0 %3586
        %3588 = vrot.lane.b32.xlu0 %v2950, 32
        %v3589 = vpop.permute.xlu0 %3588
        %3590 = vrot.lane.b32.xlu0 %v2953, 32
        %v3591 = vpop.permute.xlu0 %3590
        %3592 = vrot.lane.b32.xlu0 %v2958, 32
        %v3593 = vpop.permute.xlu0 %3592
        %3594 = vrot.lane.b32.xlu0 %v2961, 32
        %v3595 = vpop.permute.xlu0 %3594
        %3596 = vrot.lane.b32.xlu0 %v2966, 32
        %v3597 = vpop.permute.xlu0 %3596
        %3598 = vrot.lane.b32.xlu0 %v2969, 32
        %v3599 = vpop.permute.xlu0 %3598
        %3616 = vrot.lane.b32.xlu0 %v3244, 64
        %v3617 = vpop.permute.xlu0 %3616
        %3618 = vrot.lane.b32.xlu0 %v3247, 64
        %v3619 = vpop.permute.xlu0 %3618
        %3620 = vrot.lane.b32.xlu0 %v3252, 64
        %v3621 = vpop.permute.xlu0 %3620
        %3622 = vrot.lane.b32.xlu0 %v3255, 64
        %v3623 = vpop.permute.xlu0 %3622
        %3624 = vrot.lane.b32.xlu0 %v3260, 64
        %v3625 = vpop.permute.xlu0 %3624
        %3626 = vrot.lane.b32.xlu0 %v3263, 64
        %v3627 = vpop.permute.xlu0 %3626
        %3628 = vrot.lane.b32.xlu0 %v3268, 64
        %v3629 = vpop.permute.xlu0 %3628
        %3630 = vrot.lane.b32.xlu0 %v3271, 64
        %v3631 = vpop.permute.xlu0 %3630
        %3648 = vrot.lane.b32.xlu0 %v3546, 96
        %v3649 = vpop.permute.xlu0 %3648
        %3650 = vrot.lane.b32.xlu0 %v3549, 96
        %v3651 = vpop.permute.xlu0 %3650
        %3652 = vrot.lane.b32.xlu0 %v3554, 96
        %v3653 = vpop.permute.xlu0 %3652
        %3654 = vrot.lane.b32.xlu0 %v3557, 96
        %v3655 = vpop.permute.xlu0 %3654
        %3656 = vrot.lane.b32.xlu0 %v3562, 96
        %v3657 = vpop.permute.xlu0 %3656
        %3658 = vrot.lane.b32.xlu0 %v3565, 96
        %v3659 = vpop.permute.xlu0 %3658
        %3660 = vrot.lane.b32.xlu0 %v3570, 96
        %v3661 = vpop.permute.xlu0 %3660
        %3662 = vrot.lane.b32.xlu0 %v3573, 96
        %v3663 = vpop.permute.xlu0 %3662
        %v3672 = vsel %vm751, %v2628, %v3585
        %v3673 = vsel %vm751, %v2631, %v3587
        %v3674 = vsel %vm751, %v2636, %v3589
        %v3675 = vsel %vm751, %v2639, %v3591
        %v3676 = vsel %vm751, %v2644, %v3593
        %v3677 = vsel %vm751, %v2647, %v3595
        %v3678 = vsel %vm751, %v2652, %v3597
        %v3679 = vsel %vm751, %v2655, %v3599
        %v3680 = vsel %vm849, %v3672, %v3617
        %v3681 = vsel %vm849, %v3673, %v3619
        %v3682 = vsel %vm849, %v3674, %v3621
        %v3683 = vsel %vm849, %v3675, %v3623
        %v3684 = vsel %vm849, %v3676, %v3625
        %v3685 = vsel %vm849, %v3677, %v3627
        %v3686 = vsel %vm849, %v3678, %v3629
        %v3687 = vsel %vm849, %v3679, %v3631
        %v3688 = vsel %vm2052, %v3680, %v3649
        %v3689 = vsel %vm2052, %v3681, %v3651
        %v3690 = vsel %vm2052, %v3682, %v3653
        %v3691 = vsel %vm2052, %v3683, %v3655
        %v3692 = vsel %vm2052, %v3684, %v3657
        %v3693 = vsel %vm2052, %v3685, %v3659
        %v3694 = vsel %vm2052, %v3686, %v3661
        %v3695 = vsel %vm2052, %v3687, %v3663
        %v3696 = vpack.c.bf16 %v3689, %v3688
        %v3697 = vpack.c.bf16 %v3691, %v3690
        %v3698 = vpack.c.bf16 %v3693, %v3692
        %v3699 = vpack.c.bf16 %v3695, %v3694
        %3700 = vmatprep.subr.bf16.mxu0 0
        %3701 = vmatpush1.bf16.msra.mxu0 %v2103
        %3702 = vmatprep.subr.bf16.mxu0 0
        %3703 = vmatpush1.bf16.msra.mxu0 %v2104
        %3704 = vmatprep.subr.bf16.mxu0 0
        %3705 = vmatpush1.bf16.msra.mxu0 %v2105
        %3706 = vmatprep.subr.bf16.mxu0 0
        %3707 = vmatpush1.bf16.msra.mxu0 %v2106
        %3708 = vmatprep.subr.bf16.mxu0 0
        %3709 = vmatpush1.bf16.msra.mxu0 %v2107
        %3710 = vmatprep.subr.bf16.mxu0 0
        %3711 = vmatpush1.bf16.msra.mxu0 %v2108
        %3712 = vmatprep.subr.bf16.mxu0 0
        %3713 = vmatpush1.bf16.msra.mxu0 %v2109
        %3714 = vmatprep.subr.bf16.mxu0 0
        %3715 = vmatpush1.bf16.msra.mxu0 %v2110
        %3716 = vmatprep.subr.bf16.mxu0 0
        %3717 = vmatpush1.bf16.msra.mxu0 0
        %3718 = vmatprep.subr.bf16.mxu0 0
        %3719 = vmatpush1.bf16.msra.mxu0 0
        %3720 = vmatprep.subr.bf16.mxu0 0
        %3721 = vmatpush1.bf16.msra.mxu0 0
        %3722 = vmatprep.subr.bf16.mxu0 0
        %3723 = vmatpush1.bf16.msra.mxu0 0
        %3724 = vmatprep.subr.bf16.mxu0 0
        %3725 = vmatpush1.bf16.msra.mxu0 0
        %3726 = vmatprep.subr.bf16.mxu0 0
        %3727 = vmatpush1.bf16.msra.mxu0 0
        %3728 = vmatprep.subr.bf16.mxu0 0
        %3729 = vmatpush1.bf16.msra.mxu0 0
        %3730 = vmatprep.subr.bf16.mxu0 0
        %3731 = vmatpush1.bf16.msra.mxu0 0
        %3732 = vmatprep.mubr.bf16.mxu0 0
        %3733 = vmatmul.mubr.bf16.gmra.mrb[0].mxu0 %v3696
        %v3734 = vpop.f32.mrb[0].mxu0
        %v3735 = vadd.f32 %v2069, %v3734
        %v3736 = vpop.f32.mrb[0].mxu0
        %v3737 = vpop.f32.mrb[0].mxu0
        %v3738 = vadd.f32 %v2069, %v3737
        %v3739 = vpop.f32.mrb[0].mxu0
        %3740 = vmatprep.mubr.bf16.mxu0 0
        %3741 = vmatmul.mubr.bf16.gmra.mrb[0].mxu0 %v3697
        %v3742 = vpop.f32.mrb[0].mxu0
        %v3743 = vadd.f32 %v2069, %v3742
        %v3744 = vpop.f32.mrb[0].mxu0
        %v3745 = vpop.f32.mrb[0].mxu0
        %v3746 = vadd.f32 %v2069, %v3745
        %v3747 = vpop.f32.mrb[0].mxu0
        %3748 = vmatprep.mubr.bf16.mxu0 0
        %3749 = vmatmul.mubr.bf16.gmra.mrb[0].mxu0 %v3698
        %v3750 = vpop.f32.mrb[0].mxu0
        %v3751 = vadd.f32 %v2069, %v3750
        %v3752 = vpop.f32.mrb[0].mxu0
        %v3753 = vpop.f32.mrb[0].mxu0
        %v3754 = vadd.f32 %v2069, %v3753
        %v3755 = vpop.f32.mrb[0].mxu0
        %3756 = vmatprep.mubr.bf16.mxu0 0
        %3757 = vmatmul.mubr.bf16.gmra.mrb[0].mxu0 %v3699
        %v3758 = vpop.f32.mrb[0].mxu0
        %v3759 = vadd.f32 %v2069, %v3758
        %v3760 = vpop.f32.mrb[0].mxu0
        %v3761 = vpop.f32.mrb[0].mxu0
        %v3762 = vadd.f32 %v2069, %v3761
        %v3763 = vpop.f32.mrb[0].mxu0
        %3764 = vdwg.mxu0
        %s3765 = scalar_lea.vmem %s355, 64 [#allocation11]
        %3766 = vst [vmem:[%s3765] sm:$0xff] %v3735
        %3767 = vst [vmem:[%s3765 + $0x8] sm:$0xff] %v3738
        %3768 = vst [vmem:[%s3765 + $0x10] sm:$0xff] %v3743
        %3769 = vst [vmem:[%s3765 + $0x18] sm:$0xff] %v3746
        %3770 = vst [vmem:[%s3765 + $0x20] sm:$0xff] %v3751
        %3771 = vst [vmem:[%s3765 + $0x28] sm:$0xff] %v3754
        %3772 = vst [vmem:[%s3765 + $0x30] sm:$0xff] %v3759
        %3773 = vst [vmem:[%s3765 + $0x38] sm:$0xff] %v3762
        %s3774 = scalar_lea.vmem %s309, 64 [#allocation2]
        %v3775 = vld [vmem:[%s3774] sm:$0xf]
        %v3776 = vld [vmem:[%s3774 + $0x4] sm:$0xf]
        %v3777 = vld [vmem:[%s3774 + $0x8] sm:$0xf]
        %v3778 = vld [vmem:[%s3774 + $0xc] sm:$0xf]
        %v3779 = vld [vmem:[%s3774 + $0x10] sm:$0xf]
        %v3780 = vld [vmem:[%s3774 + $0x14] sm:$0xf]
        %v3781 = vld [vmem:[%s3774 + $0x18] sm:$0xf]
        %v3782 = vld [vmem:[%s3774 + $0x1c] sm:$0xf]
        %v3791 = vunpack.c.l.b16 %v3775
        %v3792 = vunpack.c.l.b16 %v3776
        %v3793 = vunpack.c.l.b16 %v3777
        %v3794 = vunpack.c.l.b16 %v3778
        %v3795 = vunpack.c.l.b16 %v3779
        %v3796 = vunpack.c.l.b16 %v3780
        %v3797 = vunpack.c.l.b16 %v3781
        %v3798 = vunpack.c.l.b16 %v3782
        %v3799 = vpack.c.b16 %v3792, %v3791
        %v3800 = vpack.c.b16 %v3794, %v3793
        %v3801 = vpack.c.b16 %v3796, %v3795
        %v3802 = vpack.c.b16 %v3798, %v3797
        %3807 = vmatprep.subr.bf16.mxu0 %v538
        %3808 = vmatpush1.bf16.msra.mxu0 %v537
        %3809 = vmatprep.subr.bf16.mxu0 %v541
        %3810 = vmatpush1.bf16.msra.mxu0 %v540
        %3811 = vmatprep.subr.bf16.mxu0 %v544
        %3812 = vmatpush1.bf16.msra.mxu0 %v543
        %3813 = vmatprep.subr.bf16.mxu0 %v547
        %3814 = vmatpush1.bf16.msra.mxu0 %v546
        %3815 = vmatprep.subr.bf16.mxu0 %v550
        %3816 = vmatpush1.bf16.msra.mxu0 %v549
        %3817 = vmatprep.subr.bf16.mxu0 %v553
        %3818 = vmatpush1.bf16.msra.mxu0 %v552
        %3819 = vmatprep.subr.bf16.mxu0 %v556
        %3820 = vmatpush1.bf16.msra.mxu0 %v555
        %3821 = vmatprep.subr.bf16.mxu0 %v559
        %3822 = vmatpush1.bf16.msra.mxu0 %v558
        %3823 = vmatprep.subr.bf16.mxu0 0
        %3824 = vmatpush1.bf16.msra.mxu0 0
        %3825 = vmatprep.subr.bf16.mxu0 0
        %3826 = vmatpush1.bf16.msra.mxu0 0
        %3827 = vmatprep.subr.bf16.mxu0 0
        %3828 = vmatpush1.bf16.msra.mxu0 0
        %3829 = vmatprep.subr.bf16.mxu0 0
        %3830 = vmatpush1.bf16.msra.mxu0 0
        %3831 = vmatprep.subr.bf16.mxu0 0
        %3832 = vmatpush1.bf16.msra.mxu0 0
        %3833 = vmatprep.subr.bf16.mxu0 0
        %3834 = vmatpush1.bf16.msra.mxu0 0
        %3835 = vmatprep.subr.bf16.mxu0 0
        %3836 = vmatpush1.bf16.msra.mxu0 0
        %3837 = vmatprep.subr.bf16.mxu0 0
        %3838 = vmatpush1.bf16.msra.mxu0 0
        %3839 = vmatprep.mubr.bf16.mxu0 0
        %3840 = vmatmul.mubr.bf16.gmra.mrb[0].mxu0 %v3799
        %v3841 = vpop.f32.mrb[0].mxu0
        %v3842 = vadd.f32 %v421, %v3841
        %v3843 = vpop.f32.mrb[0].mxu0
        %v3844 = vadd.f32 %v425, %v3843
        %v3845 = vpop.f32.mrb[0].mxu0
        %v3846 = vadd.f32 %v421, %v3845
        %v3847 = vpop.f32.mrb[0].mxu0
        %v3848 = vadd.f32 %v425, %v3847
        %3849 = vmatprep.mubr.bf16.mxu0 0
        %3850 = vmatmul.mubr.bf16.gmra.mrb[0].mxu0 %v3800
        %v3851 = vpop.f32.mrb[0].mxu0
        %v3852 = vadd.f32 %v421, %v3851
        %v3853 = vpop.f32.mrb[0].mxu0
        %v3854 = vadd.f32 %v425, %v3853
        %v3855 = vpop.f32.mrb[0].mxu0
        %v3856 = vadd.f32 %v421, %v3855
        %v3857 = vpop.f32.mrb[0].mxu0
        %v3858 = vadd.f32 %v425, %v3857
        %3859 = vmatprep.mubr.bf16.mxu0 0
        %3860 = vmatmul.mubr.bf16.gmra.mrb[0].mxu0 %v3801
        %v3861 = vpop.f32.mrb[0].mxu0
        %v3862 = vadd.f32 %v421, %v3861
        %v3863 = vpop.f32.mrb[0].mxu0
        %v3864 = vadd.f32 %v425, %v3863
        %v3865 = vpop.f32.mrb[0].mxu0
        %v3866 = vadd.f32 %v421, %v3865
        %v3867 = vpop.f32.mrb[0].mxu0
        %v3868 = vadd.f32 %v425, %v3867
        %3869 = vmatprep.mubr.bf16.mxu0 0
        %3870 = vmatmul.mubr.bf16.gmra.mrb[0].mxu0 %v3802
        %v3871 = vpop.f32.mrb[0].mxu0
        %v3872 = vadd.f32 %v421, %v3871
        %v3873 = vpop.f32.mrb[0].mxu0
        %v3874 = vadd.f32 %v425, %v3873
        %v3875 = vpop.f32.mrb[0].mxu0
        %v3876 = vadd.f32 %v421, %v3875
        %v3877 = vpop.f32.mrb[0].mxu0
        %v3878 = vadd.f32 %v425, %v3877
        %3879 = vdwg.mxu0
        %3880 = vmatprep.subr.bf16.mxu0 0
        %3881 = vmatpush1.bf16.msra.mxu0 %v539
        %3882 = vmatprep.subr.bf16.mxu0 0
        %3883 = vmatpush1.bf16.msra.mxu0 %v542
        %3884 = vmatprep.subr.bf16.mxu0 0
        %3885 = vmatpush1.bf16.msra.mxu0 %v545
        %3886 = vmatprep.subr.bf16.mxu0 0
        %3887 = vmatpush1.bf16.msra.mxu0 %v548
        %3888 = vmatprep.subr.bf16.mxu0 0
        %3889 = vmatpush1.bf16.msra.mxu0 %v551
        %3890 = vmatprep.subr.bf16.mxu0 0
        %3891 = vmatpush1.bf16.msra.mxu0 %v554
        %3892 = vmatprep.subr.bf16.mxu0 0
        %3893 = vmatpush1.bf16.msra.mxu0 %v557
        %3894 = vmatprep.subr.bf16.mxu0 0
        %3895 = vmatpush1.bf16.msra.mxu0 %v560
        %3896 = vmatprep.subr.bf16.mxu0 0
        %3897 = vmatpush1.bf16.msra.mxu0 0
        %3898 = vmatprep.subr.bf16.mxu0 0
        %3899 = vmatpush1.bf16.msra.mxu0 0
        %3900 = vmatprep.subr.bf16.mxu0 0
        %3901 = vmatpush1.bf16.msra.mxu0 0
        %3902 = vmatprep.subr.bf16.mxu0 0
        %3903 = vmatpush1.bf16.msra.mxu0 0
        %3904 = vmatprep.subr.bf16.mxu0 0
        %3905 = vmatpush1.bf16.msra.mxu0 0
        %3906 = vmatprep.subr.bf16.mxu0 0
        %3907 = vmatpush1.bf16.msra.mxu0 0
        %3908 = vmatprep.subr.bf16.mxu0 0
        %3909 = vmatpush1.bf16.msra.mxu0 0
        %3910 = vmatprep.subr.bf16.mxu0 0
        %3911 = vmatpush1.bf16.msra.mxu0 0
        %3912 = vmatprep.mubr.bf16.mxu0 0
        %3913 = vmatmul.mubr.bf16.gmra.mrb[0].mxu0 %v3799
        %v3914 = vpop.f32.mrb[0].mxu0
        %v3915 = vadd.f32 %v429, %v3914
        %v3916 = vpop.f32.mrb[0].mxu0
        %v3917 = vpop.f32.mrb[0].mxu0
        %v3918 = vadd.f32 %v429, %v3917
        %v3919 = vpop.f32.mrb[0].mxu0
        %3920 = vmatprep.mubr.bf16.mxu0 0
        %3921 = vmatmul.mubr.bf16.gmra.mrb[0].mxu0 %v3800
        %v3922 = vpop.f32.mrb[0].mxu0
        %v3923 = vadd.f32 %v429, %v3922
        %v3924 = vpop.f32.mrb[0].mxu0
        %v3925 = vpop.f32.mrb[0].mxu0
        %v3926 = vadd.f32 %v429, %v3925
        %v3927 = vpop.f32.mrb[0].mxu0
        %3928 = vmatprep.mubr.bf16.mxu0 0
        %3929 = vmatmul.mubr.bf16.gmra.mrb[0].mxu0 %v3801
        %v3930 = vpop.f32.mrb[0].mxu0
        %v3931 = vadd.f32 %v429, %v3930
        %v3932 = vpop.f32.mrb[0].mxu0
        %v3933 = vpop.f32.mrb[0].mxu0
        %v3934 = vadd.f32 %v429, %v3933
        %v3935 = vpop.f32.mrb[0].mxu0
        %3936 = vmatprep.mubr.bf16.mxu0 0
        %3937 = vmatmul.mubr.bf16.gmra.mrb[0].mxu0 %v3802
        %v3938 = vpop.f32.mrb[0].mxu0
        %v3939 = vadd.f32 %v429, %v3938
        %v3940 = vpop.f32.mrb[0].mxu0
        %v3941 = vpop.f32.mrb[0].mxu0
        %v3942 = vadd.f32 %v429, %v3941
        %v3943 = vpop.f32.mrb[0].mxu0
        %3944 = vdwg.mxu0
        %s3945 = scalar_lea.vmem [#allocation10], 128
        %v3946 = vld [vmem:[%s3945] sm:$0xff]
        %v3947 = vld [vmem:[%s3945 + $0x8] sm:$0xff]
        %v3948 = vld [vmem:[%s3945 + $0x10] sm:$0xff]
        %v3949 = vld [vmem:[%s3945 + $0x18] sm:$0xff]
        %v3950 = vld [vmem:[%s3945 + $0x20] sm:$0xff]
        %v3951 = vld [vmem:[%s3945 + $0x28] sm:$0xff]
        %v3952 = vld [vmem:[%s3945 + $0x30] sm:$0xff]
        %v3953 = vld [vmem:[%s3945 + $0x38] sm:$0xff]
        %v3954 = vpack.c.bf16 %v3846, %v3842
        %v3955 = vpack.c.bf16 %v3856, %v3852
        %v3956 = vpack.c.bf16 %v3866, %v3862
        %v3957 = vpack.c.bf16 %v3876, %v3872
        %v3958 = vpack.c.bf16 %v3848, %v3844
        %v3959 = vpack.c.bf16 %v3858, %v3854
        %v3960 = vpack.c.bf16 %v3868, %v3864
        %v3961 = vpack.c.bf16 %v3878, %v3874
        %v3962 = vpack.c.bf16 %v3918, %v3915
        %v3963 = vpack.c.bf16 %v3926, %v3923
        %v3964 = vpack.c.bf16 %v3934, %v3931
        %v3965 = vpack.c.bf16 %v3942, %v3939
        %v3966 = vld [vmem:[#allocation8] sm:$0xff]
        %v3967 = vld [vmem:[#allocation8 + $0x8] sm:$0xff]
        %v3968 = vld [vmem:[#allocation8 + $0x10] sm:$0xff]
        %v3969 = vld [vmem:[#allocation8 + $0x18] sm:$0xff]
        %v3970 = vld [vmem:[#allocation8 + $0x20] sm:$0xff]
        %v3971 = vld [vmem:[#allocation8 + $0x28] sm:$0xff]
        %v3972 = vld [vmem:[#allocation8 + $0x30] sm:$0xff]
        %v3973 = vld [vmem:[#allocation8 + $0x38] sm:$0xff]
        %v3975 = vsel %vm751, %v3954, 0
        %v3978 = vsel %vm751, %v3955, 0
        %v3981 = vsel %vm751, %v3956, 0
        %v3984 = vsel %vm751, %v3957, 0
        %v3987 = vsel %vm751, %v3958, 0
        %v3990 = vsel %vm751, %v3959, 0
        %v3993 = vsel %vm751, %v3960, 0
        %v3996 = vsel %vm751, %v3961, 0
        %3998 = vmatprep.subr.bf16.mxu0 0
        %3999 = vmatpush1.bf16.xpose.msra.mxu0 %v3987
        %4000 = vmatprep.subr.bf16.mxu0 0
        %4001 = vmatpush1.bf16.xpose.msra.mxu0 %v3990
        %4002 = vmatprep.subr.bf16.mxu0 0
        %4003 = vmatpush1.bf16.xpose.msra.mxu0 %v3993
        %4004 = vmatprep.subr.bf16.mxu0 0
        %4005 = vmatpush1.bf16.xpose.msra.mxu0 %v3996
        %4006 = vmatprep.subr.bf16.mxu0 0
        %4007 = vmatpush1.bf16.xpose.msra.mxu0 0
        %4008 = vmatprep.subr.bf16.mxu0 0
        %4009 = vmatpush1.bf16.xpose.msra.mxu0 0
        %4010 = vmatprep.subr.bf16.mxu0 0
        %4011 = vmatpush1.bf16.xpose.msra.mxu0 0
        %4012 = vmatprep.subr.bf16.mxu0 0
        %4013 = vmatpush1.bf16.xpose.msra.mxu0 0
        %4014 = vmatprep.subr.bf16.mxu0 0
        %4015 = vmatpush1.bf16.xpose.msra.mxu0 0
        %4016 = vmatprep.subr.bf16.mxu0 0
        %4017 = vmatpush1.bf16.xpose.msra.mxu0 0
        %4018 = vmatprep.subr.bf16.mxu0 0
        %4019 = vmatpush1.bf16.xpose.msra.mxu0 0
        %4020 = vmatprep.subr.bf16.mxu0 0
        %4021 = vmatpush1.bf16.xpose.msra.mxu0 0
        %4022 = vmatprep.subr.bf16.mxu0 0
        %4023 = vmatpush1.bf16.xpose.msra.mxu0 0
        %4024 = vmatprep.subr.bf16.mxu0 0
        %4025 = vmatpush1.bf16.xpose.msra.mxu0 0
        %4026 = vmatprep.subr.bf16.mxu0 0
        %4027 = vmatpush1.bf16.xpose.msra.mxu0 0
        %4028 = vmatprep.subr.bf16.mxu0 0
        %4029 = vmatpush1.bf16.xpose.msra.mxu0 0
        %4030 = vmatprep.mubr.bf16.mxu0 0
        %4031 = vmatmul.mubr.bf16.gmra.mrb[0].mxu0 %v3975
        %v4032 = vpop.f32.mrb[0].mxu0
        %v4033 = vadd.f32 %v3966, %v4032
        %v4034 = vpop.f32.mrb[0].mxu0
        %v4035 = vpop.f32.mrb[0].mxu0
        %v4036 = vadd.f32 %v3967, %v4035
        %v4037 = vpop.f32.mrb[0].mxu0
        %4038 = vmatprep.mubr.bf16.mxu0 0
        %4039 = vmatmul.mubr.bf16.gmra.mrb[0].mxu0 %v3978
        %v4040 = vpop.f32.mrb[0].mxu0
        %v4041 = vadd.f32 %v3968, %v4040
        %v4042 = vpop.f32.mrb[0].mxu0
        %v4043 = vpop.f32.mrb[0].mxu0
        %v4044 = vadd.f32 %v3969, %v4043
        %v4045 = vpop.f32.mrb[0].mxu0
        %4046 = vmatprep.mubr.bf16.mxu0 0
        %4047 = vmatmul.mubr.bf16.gmra.mrb[0].mxu0 %v3981
        %v4048 = vpop.f32.mrb[0].mxu0
        %v4049 = vadd.f32 %v3970, %v4048
        %v4050 = vpop.f32.mrb[0].mxu0
        %v4051 = vpop.f32.mrb[0].mxu0
        %v4052 = vadd.f32 %v3971, %v4051
        %v4053 = vpop.f32.mrb[0].mxu0
        %4054 = vmatprep.mubr.bf16.mxu0 0
        %4055 = vmatmul.mubr.bf16.gmra.mrb[0].mxu0 %v3984
        %v4056 = vpop.f32.mrb[0].mxu0
        %v4057 = vadd.f32 %v3972, %v4056
        %v4058 = vpop.f32.mrb[0].mxu0
        %v4059 = vpop.f32.mrb[0].mxu0
        %v4060 = vadd.f32 %v3973, %v4059
        %v4061 = vpop.f32.mrb[0].mxu0
        %4062 = vdwg.mxu0
        %v4063 = vadd.f32 %v4033, %v3946
        %v4064 = vadd.f32 %v4036, %v3947
        %v4065 = vadd.f32 %v4041, %v3948
        %v4066 = vadd.f32 %v4044, %v3949
        %v4067 = vadd.f32 %v4049, %v3950
        %v4068 = vadd.f32 %v4052, %v3951
        %v4069 = vadd.f32 %v4057, %v3952
        %v4070 = vadd.f32 %v4060, %v3953
        %v4071 = vsel %vm849, %v4063, -inf
        %4072 = vmax.xlane.f32.xlu0 %v4071
        %v4073 = vpop.xlane.xlu0 %4072
        %v4074 = vsel %vm849, %v4064, -inf
        %4075 = vmax.xlane.f32.xlu0 %v4074
        %v4076 = vpop.xlane.xlu0 %4075
        %v4077 = vsel %vm849, %v4065, -inf
        %4078 = vmax.xlane.f32.xlu0 %v4077
        %v4079 = vpop.xlane.xlu0 %4078
        %v4080 = vsel %vm849, %v4066, -inf
        %4081 = vmax.xlane.f32.xlu0 %v4080
        %v4082 = vpop.xlane.xlu0 %4081
        %v4083 = vsel %vm849, %v4067, -inf
        %4084 = vmax.xlane.f32.xlu0 %v4083
        %v4085 = vpop.xlane.xlu0 %4084
        %v4086 = vsel %vm849, %v4068, -inf
        %4087 = vmax.xlane.f32.xlu0 %v4086
        %v4088 = vpop.xlane.xlu0 %4087
        %v4089 = vsel %vm849, %v4069, -inf
        %4090 = vmax.xlane.f32.xlu0 %v4089
        %v4091 = vpop.xlane.xlu0 %4090
        %v4092 = vsel %vm849, %v4070, -inf
        %4093 = vmax.xlane.f32.xlu0 %v4092
        %v4094 = vpop.xlane.xlu0 %4093
        %v4095 = vsub.f32 %v4063, %v4073
        %v4096 = vsub.f32 %v4064, %v4076
        %v4097 = vsub.f32 %v4065, %v4079
        %v4098 = vsub.f32 %v4066, %v4082
        %v4099 = vsub.f32 %v4067, %v4085
        %v4100 = vsub.f32 %v4068, %v4088
        %v4101 = vsub.f32 %v4069, %v4091
        %v4102 = vsub.f32 %v4070, %v4094
        %v4103 = vmul.f32 %v4095, 1.442695
        %v4104 = vpow.pop %v4103
        %v4105 = vmul.f32 %v4096, 1.442695
        %v4106 = vpow.pop %v4105
        %v4107 = vmul.f32 %v4097, 1.442695
        %v4108 = vpow.pop %v4107
        %v4109 = vmul.f32 %v4098, 1.442695
        %v4110 = vpow.pop %v4109
        %v4111 = vmul.f32 %v4099, 1.442695
        %v4112 = vpow.pop %v4111
        %v4113 = vmul.f32 %v4100, 1.442695
        %v4114 = vpow.pop %v4113
        %v4115 = vmul.f32 %v4101, 1.442695
        %v4116 = vpow.pop %v4115
        %v4117 = vmul.f32 %v4102, 1.442695
        %v4118 = vpow.pop %v4117
        %v4119 = vsel %vm849, %v4104, 0.0
        %4120 = vadd.xlane.f32.xlu0 %v4119
        %v4121 = vpop.xlane.xlu0 %4120
        %v4122 = vsel %vm849, %v4106, 0.0
        %4123 = vadd.xlane.f32.xlu0 %v4122
        %v4124 = vpop.xlane.xlu0 %4123
        %v4125 = vsel %vm849, %v4108, 0.0
        %4126 = vadd.xlane.f32.xlu0 %v4125
        %v4127 = vpop.xlane.xlu0 %4126
        %v4128 = vsel %vm849, %v4110, 0.0
        %4129 = vadd.xlane.f32.xlu0 %v4128
        %v4130 = vpop.xlane.xlu0 %4129
        %v4131 = vsel %vm849, %v4112, 0.0
        %4132 = vadd.xlane.f32.xlu0 %v4131
        %v4133 = vpop.xlane.xlu0 %4132
        %v4134 = vsel %vm849, %v4114, 0.0
        %4135 = vadd.xlane.f32.xlu0 %v4134
        %v4136 = vpop.xlane.xlu0 %4135
        %v4137 = vsel %vm849, %v4116, 0.0
        %4138 = vadd.xlane.f32.xlu0 %v4137
        %v4139 = vpop.xlane.xlu0 %4138
        %v4140 = vsel %vm849, %v4118, 0.0
        %4141 = vadd.xlane.f32.xlu0 %v4140
        %v4142 = vpop.xlane.xlu0 %4141
        %v4143 = vrcp.pop %v4121
        %v4144 = vrcp.pop %v4124
        %v4145 = vrcp.pop %v4127
        %v4146 = vrcp.pop %v4130
        %v4147 = vrcp.pop %v4133
        %v4148 = vrcp.pop %v4136
        %v4149 = vrcp.pop %v4139
        %v4150 = vrcp.pop %v4142
        %v4151 = vmul.f32 %v4104, %v4143
        %v4152 = vmul.f32 %v4106, %v4144
        %v4153 = vmul.f32 %v4108, %v4145
        %v4154 = vmul.f32 %v4110, %v4146
        %v4155 = vmul.f32 %v4112, %v4147
        %v4156 = vmul.f32 %v4114, %v4148
        %v4157 = vmul.f32 %v4116, %v4149
        %v4158 = vmul.f32 %v4118, %v4150
        %v4159 = vpack.c.bf16 %v4152, %v4151
        %v4160 = vpack.c.bf16 %v4154, %v4153
        %v4161 = vpack.c.bf16 %v4156, %v4155
        %v4162 = vpack.c.bf16 %v4158, %v4157
        %v4164 = vsel %vm849, %v4159, 0
        %v4167 = vsel %vm849, %v4160, 0
        %v4170 = vsel %vm849, %v4161, 0
        %v4173 = vsel %vm849, %v4162, 0
        %4175 = vmatprep.subr.bf16.mxu0 0
        %4176 = vmatpush1.bf16.msra.mxu0 %v3962
        %4177 = vmatprep.subr.bf16.mxu0 0
        %4178 = vmatpush1.bf16.msra.mxu0 %v3963
        %4179 = vmatprep.subr.bf16.mxu0 0
        %4180 = vmatpush1.bf16.msra.mxu0 %v3964
        %4181 = vmatprep.subr.bf16.mxu0 0
        %4182 = vmatpush1.bf16.msra.mxu0 %v3965
        %4183 = vmatprep.subr.bf16.mxu0 0
        %4184 = vmatpush1.bf16.msra.mxu0 0
        %4185 = vmatprep.subr.bf16.mxu0 0
        %4186 = vmatpush1.bf16.msra.mxu0 0
        %4187 = vmatprep.subr.bf16.mxu0 0
        %4188 = vmatpush1.bf16.msra.mxu0 0
        %4189 = vmatprep.subr.bf16.mxu0 0
        %4190 = vmatpush1.bf16.msra.mxu0 0
        %4191 = vmatprep.subr.bf16.mxu0 0
        %4192 = vmatpush1.bf16.msra.mxu0 0
        %4193 = vmatprep.subr.bf16.mxu0 0
        %4194 = vmatpush1.bf16.msra.mxu0 0
        %4195 = vmatprep.subr.bf16.mxu0 0
        %4196 = vmatpush1.bf16.msra.mxu0 0
        %4197 = vmatprep.subr.bf16.mxu0 0
        %4198 = vmatpush1.bf16.msra.mxu0 0
        %4199 = vmatprep.subr.bf16.mxu0 0
        %4200 = vmatpush1.bf16.msra.mxu0 0
        %4201 = vmatprep.subr.bf16.mxu0 0
        %4202 = vmatpush1.bf16.msra.mxu0 0
        %4203 = vmatprep.subr.bf16.mxu0 0
        %4204 = vmatpush1.bf16.msra.mxu0 0
        %4205 = vmatprep.subr.bf16.mxu0 0
        %4206 = vmatpush1.bf16.msra.mxu0 0
        %4207 = vmatprep.mubr.bf16.mxu0 0
        %4208 = vmatmul.mubr.bf16.gmra.mrb[0].mxu0 %v4164
        %v4209 = vpop.f32.mrb[0].mxu0
        %v4210 = vadd.f32 0.0, %v4209
        %v4211 = vpop.f32.mrb[0].mxu0
        %v4212 = vpop.f32.mrb[0].mxu0
        %v4213 = vadd.f32 0.0, %v4212
        %v4214 = vpop.f32.mrb[0].mxu0
        %4215 = vmatprep.mubr.bf16.mxu0 0
        %4216 = vmatmul.mubr.bf16.gmra.mrb[0].mxu0 %v4167
        %v4217 = vpop.f32.mrb[0].mxu0
        %v4218 = vadd.f32 0.0, %v4217
        %v4219 = vpop.f32.mrb[0].mxu0
        %v4220 = vpop.f32.mrb[0].mxu0
        %v4221 = vadd.f32 0.0, %v4220
        %v4222 = vpop.f32.mrb[0].mxu0
        %4223 = vmatprep.mubr.bf16.mxu0 0
        %4224 = vmatmul.mubr.bf16.gmra.mrb[0].mxu0 %v4170
        %v4225 = vpop.f32.mrb[0].mxu0
        %v4226 = vadd.f32 0.0, %v4225
        %v4227 = vpop.f32.mrb[0].mxu0
        %v4228 = vpop.f32.mrb[0].mxu0
        %v4229 = vadd.f32 0.0, %v4228
        %v4230 = vpop.f32.mrb[0].mxu0
        %4231 = vmatprep.mubr.bf16.mxu0 0
        %4232 = vmatmul.mubr.bf16.gmra.mrb[0].mxu0 %v4173
        %v4233 = vpop.f32.mrb[0].mxu0
        %v4234 = vadd.f32 0.0, %v4233
        %v4235 = vpop.f32.mrb[0].mxu0
        %v4236 = vpop.f32.mrb[0].mxu0
        %v4237 = vadd.f32 0.0, %v4236
        %v4238 = vpop.f32.mrb[0].mxu0
        %4239 = vdwg.mxu0
        %v4240 = vld [vmem:[%s1019] sm:$0xff]
        %v4241 = vld [vmem:[%s1019 + $0x8] sm:$0xff]
        %v4242 = vld [vmem:[%s1019 + $0x10] sm:$0xff]
        %v4243 = vld [vmem:[%s1019 + $0x18] sm:$0xff]
        %v4244 = vld [vmem:[%s1019 + $0x20] sm:$0xff]
        %v4245 = vld [vmem:[%s1019 + $0x28] sm:$0xff]
        %v4246 = vld [vmem:[%s1019 + $0x30] sm:$0xff]
        %v4247 = vld [vmem:[%s1019 + $0x38] sm:$0xff]
        %4252 = vrot.lane.b32.xlu0 %v3954, 96
        %v4253 = vpop.permute.xlu0 %4252
        %4254 = vrot.lane.b32.xlu0 %v3955, 96
        %v4255 = vpop.permute.xlu0 %4254
        %4256 = vrot.lane.b32.xlu0 %v3956, 96
        %v4257 = vpop.permute.xlu0 %4256
        %4258 = vrot.lane.b32.xlu0 %v3957, 96
        %v4259 = vpop.permute.xlu0 %4258
        %4264 = vrot.lane.b32.xlu0 %v3958, 96
        %v4265 = vpop.permute.xlu0 %4264
        %4266 = vrot.lane.b32.xlu0 %v3959, 96
        %v4267 = vpop.permute.xlu0 %4266
        %4268 = vrot.lane.b32.xlu0 %v3960, 96
        %v4269 = vpop.permute.xlu0 %4268
        %4270 = vrot.lane.b32.xlu0 %v3961, 96
        %v4271 = vpop.permute.xlu0 %4270
        %v4273 = vsel %vm751, %v4253, 0
        %v4276 = vsel %vm751, %v4255, 0
        %v4279 = vsel %vm751, %v4257, 0
        %v4282 = vsel %vm751, %v4259, 0
        %v4285 = vsel %vm751, %v4265, 0
        %v4288 = vsel %vm751, %v4267, 0
        %v4291 = vsel %vm751, %v4269, 0
        %v4294 = vsel %vm751, %v4271, 0
        %4296 = vmatprep.subr.bf16.mxu0 0
        %4297 = vmatpush1.bf16.xpose.msra.mxu0 %v4285
        %4298 = vmatprep.subr.bf16.mxu0 0
        %4299 = vmatpush1.bf16.xpose.msra.mxu0 %v4288
        %4300 = vmatprep.subr.bf16.mxu0 0
        %4301 = vmatpush1.bf16.xpose.msra.mxu0 %v4291
        %4302 = vmatprep.subr.bf16.mxu0 0
        %4303 = vmatpush1.bf16.xpose.msra.mxu0 %v4294
        %4304 = vmatprep.subr.bf16.mxu0 0
        %4305 = vmatpush1.bf16.xpose.msra.mxu0 0
        %4306 = vmatprep.subr.bf16.mxu0 0
        %4307 = vmatpush1.bf16.xpose.msra.mxu0 0
        %4308 = vmatprep.subr.bf16.mxu0 0
        %4309 = vmatpush1.bf16.xpose.msra.mxu0 0
        %4310 = vmatprep.subr.bf16.mxu0 0
        %4311 = vmatpush1.bf16.xpose.msra.mxu0 0
        %4312 = vmatprep.subr.bf16.mxu0 0
        %4313 = vmatpush1.bf16.xpose.msra.mxu0 0
        %4314 = vmatprep.subr.bf16.mxu0 0
        %4315 = vmatpush1.bf16.xpose.msra.mxu0 0
        %4316 = vmatprep.subr.bf16.mxu0 0
        %4317 = vmatpush1.bf16.xpose.msra.mxu0 0
        %4318 = vmatprep.subr.bf16.mxu0 0
        %4319 = vmatpush1.bf16.xpose.msra.mxu0 0
        %4320 = vmatprep.subr.bf16.mxu0 0
        %4321 = vmatpush1.bf16.xpose.msra.mxu0 0
        %4322 = vmatprep.subr.bf16.mxu0 0
        %4323 = vmatpush1.bf16.xpose.msra.mxu0 0
        %4324 = vmatprep.subr.bf16.mxu0 0
        %4325 = vmatpush1.bf16.xpose.msra.mxu0 0
        %4326 = vmatprep.subr.bf16.mxu0 0
        %4327 = vmatpush1.bf16.xpose.msra.mxu0 0
        %4328 = vmatprep.mubr.bf16.mxu0 0
        %4329 = vmatmul.mubr.bf16.gmra.mrb[0].mxu0 %v4273
        %v4330 = vpop.f32.mrb[0].mxu0
        %v4331 = vadd.f32 %v4240, %v4330
        %v4332 = vpop.f32.mrb[0].mxu0
        %v4333 = vpop.f32.mrb[0].mxu0
        %v4334 = vadd.f32 %v4241, %v4333
        %v4335 = vpop.f32.mrb[0].mxu0
        %4336 = vmatprep.mubr.bf16.mxu0 0
        %4337 = vmatmul.mubr.bf16.gmra.mrb[0].mxu0 %v4276
        %v4338 = vpop.f32.mrb[0].mxu0
        %v4339 = vadd.f32 %v4242, %v4338
        %v4340 = vpop.f32.mrb[0].mxu0
        %v4341 = vpop.f32.mrb[0].mxu0
        %v4342 = vadd.f32 %v4243, %v4341
        %v4343 = vpop.f32.mrb[0].mxu0
        %4344 = vmatprep.mubr.bf16.mxu0 0
        %4345 = vmatmul.mubr.bf16.gmra.mrb[0].mxu0 %v4279
        %v4346 = vpop.f32.mrb[0].mxu0
        %v4347 = vadd.f32 %v4244, %v4346
        %v4348 = vpop.f32.mrb[0].mxu0
        %v4349 = vpop.f32.mrb[0].mxu0
        %v4350 = vadd.f32 %v4245, %v4349
        %v4351 = vpop.f32.mrb[0].mxu0
        %4352 = vmatprep.mubr.bf16.mxu0 0
        %4353 = vmatmul.mubr.bf16.gmra.mrb[0].mxu0 %v4282
        %v4354 = vpop.f32.mrb[0].mxu0
        %v4355 = vadd.f32 %v4246, %v4354
        %v4356 = vpop.f32.mrb[0].mxu0
        %v4357 = vpop.f32.mrb[0].mxu0
        %v4358 = vadd.f32 %v4247, %v4357
        %v4359 = vpop.f32.mrb[0].mxu0
        %4360 = vdwg.mxu0
        %v4361 = vadd.f32 %v4331, %v3946
        %v4362 = vadd.f32 %v4334, %v3947
        %v4363 = vadd.f32 %v4339, %v3948
        %v4364 = vadd.f32 %v4342, %v3949
        %v4365 = vadd.f32 %v4347, %v3950
        %v4366 = vadd.f32 %v4350, %v3951
        %v4367 = vadd.f32 %v4355, %v3952
        %v4368 = vadd.f32 %v4358, %v3953
        %v4369 = vsel %vm849, %v4361, -inf
        %4370 = vmax.xlane.f32.xlu0 %v4369
        %v4371 = vpop.xlane.xlu0 %4370
        %v4372 = vsel %vm849, %v4362, -inf
        %4373 = vmax.xlane.f32.xlu0 %v4372
        %v4374 = vpop.xlane.xlu0 %4373
        %v4375 = vsel %vm849, %v4363, -inf
        %4376 = vmax.xlane.f32.xlu0 %v4375
        %v4377 = vpop.xlane.xlu0 %4376
        %v4378 = vsel %vm849, %v4364, -inf
        %4379 = vmax.xlane.f32.xlu0 %v4378
        %v4380 = vpop.xlane.xlu0 %4379
        %v4381 = vsel %vm849, %v4365, -inf
        %4382 = vmax.xlane.f32.xlu0 %v4381
        %v4383 = vpop.xlane.xlu0 %4382
        %v4384 = vsel %vm849, %v4366, -inf
        %4385 = vmax.xlane.f32.xlu0 %v4384
        %v4386 = vpop.xlane.xlu0 %4385
        %v4387 = vsel %vm849, %v4367, -inf
        %4388 = vmax.xlane.f32.xlu0 %v4387
        %v4389 = vpop.xlane.xlu0 %4388
        %v4390 = vsel %vm849, %v4368, -inf
        %4391 = vmax.xlane.f32.xlu0 %v4390
        %v4392 = vpop.xlane.xlu0 %4391
        %v4393 = vsub.f32 %v4361, %v4371
        %v4394 = vsub.f32 %v4362, %v4374
        %v4395 = vsub.f32 %v4363, %v4377
        %v4396 = vsub.f32 %v4364, %v4380
        %v4397 = vsub.f32 %v4365, %v4383
        %v4398 = vsub.f32 %v4366, %v4386
        %v4399 = vsub.f32 %v4367, %v4389
        %v4400 = vsub.f32 %v4368, %v4392
        %v4401 = vmul.f32 %v4393, 1.442695
        %v4402 = vpow.pop %v4401
        %v4403 = vmul.f32 %v4394, 1.442695
        %v4404 = vpow.pop %v4403
        %v4405 = vmul.f32 %v4395, 1.442695
        %v4406 = vpow.pop %v4405
        %v4407 = vmul.f32 %v4396, 1.442695
        %v4408 = vpow.pop %v4407
        %v4409 = vmul.f32 %v4397, 1.442695
        %v4410 = vpow.pop %v4409
        %v4411 = vmul.f32 %v4398, 1.442695
        %v4412 = vpow.pop %v4411
        %v4413 = vmul.f32 %v4399, 1.442695
        %v4414 = vpow.pop %v4413
        %v4415 = vmul.f32 %v4400, 1.442695
        %v4416 = vpow.pop %v4415
        %v4417 = vsel %vm849, %v4402, 0.0
        %4418 = vadd.xlane.f32.xlu0 %v4417
        %v4419 = vpop.xlane.xlu0 %4418
        %v4420 = vsel %vm849, %v4404, 0.0
        %4421 = vadd.xlane.f32.xlu0 %v4420
        %v4422 = vpop.xlane.xlu0 %4421
        %v4423 = vsel %vm849, %v4406, 0.0
        %4424 = vadd.xlane.f32.xlu0 %v4423
        %v4425 = vpop.xlane.xlu0 %4424
        %v4426 = vsel %vm849, %v4408, 0.0
        %4427 = vadd.xlane.f32.xlu0 %v4426
        %v4428 = vpop.xlane.xlu0 %4427
        %v4429 = vsel %vm849, %v4410, 0.0
        %4430 = vadd.xlane.f32.xlu0 %v4429
        %v4431 = vpop.xlane.xlu0 %4430
        %v4432 = vsel %vm849, %v4412, 0.0
        %4433 = vadd.xlane.f32.xlu0 %v4432
        %v4434 = vpop.xlane.xlu0 %4433
        %v4435 = vsel %vm849, %v4414, 0.0
        %4436 = vadd.xlane.f32.xlu0 %v4435
        %v4437 = vpop.xlane.xlu0 %4436
        %v4438 = vsel %vm849, %v4416, 0.0
        %4439 = vadd.xlane.f32.xlu0 %v4438
        %v4440 = vpop.xlane.xlu0 %4439
        %v4441 = vrcp.pop %v4419
        %v4442 = vrcp.pop %v4422
        %v4443 = vrcp.pop %v4425
        %v4444 = vrcp.pop %v4428
        %v4445 = vrcp.pop %v4431
        %v4446 = vrcp.pop %v4434
        %v4447 = vrcp.pop %v4437
        %v4448 = vrcp.pop %v4440
        %v4449 = vmul.f32 %v4402, %v4441
        %v4450 = vmul.f32 %v4404, %v4442
        %v4451 = vmul.f32 %v4406, %v4443
        %v4452 = vmul.f32 %v4408, %v4444
        %v4453 = vmul.f32 %v4410, %v4445
        %v4454 = vmul.f32 %v4412, %v4446
        %v4455 = vmul.f32 %v4414, %v4447
        %v4456 = vmul.f32 %v4416, %v4448
        %v4457 = vpack.c.bf16 %v4450, %v4449
        %v4458 = vpack.c.bf16 %v4452, %v4451
        %v4459 = vpack.c.bf16 %v4454, %v4453
        %v4460 = vpack.c.bf16 %v4456, %v4455
        %4465 = vrot.lane.b32.xlu0 %v3962, 96
        %v4466 = vpop.permute.xlu0 %4465
        %4467 = vrot.lane.b32.xlu0 %v3963, 96
        %v4468 = vpop.permute.xlu0 %4467
        %4469 = vrot.lane.b32.xlu0 %v3964, 96
        %v4470 = vpop.permute.xlu0 %4469
        %4471 = vrot.lane.b32.xlu0 %v3965, 96
        %v4472 = vpop.permute.xlu0 %4471
        %v4478 = vsel %vm849, %v4457, 0
        %v4481 = vsel %vm849, %v4458, 0
        %v4484 = vsel %vm849, %v4459, 0
        %v4487 = vsel %vm849, %v4460, 0
        %4489 = vmatprep.subr.bf16.mxu0 0
        %4490 = vmatpush1.bf16.msra.mxu0 %v4466
        %4491 = vmatprep.subr.bf16.mxu0 0
        %4492 = vmatpush1.bf16.msra.mxu0 %v4468
        %4493 = vmatprep.subr.bf16.mxu0 0
        %4494 = vmatpush1.bf16.msra.mxu0 %v4470
        %4495 = vmatprep.subr.bf16.mxu0 0
        %4496 = vmatpush1.bf16.msra.mxu0 %v4472
        %4497 = vmatprep.subr.bf16.mxu0 0
        %4498 = vmatpush1.bf16.msra.mxu0 0
        %4499 = vmatprep.subr.bf16.mxu0 0
        %4500 = vmatpush1.bf16.msra.mxu0 0
        %4501 = vmatprep.subr.bf16.mxu0 0
        %4502 = vmatpush1.bf16.msra.mxu0 0
        %4503 = vmatprep.subr.bf16.mxu0 0
        %4504 = vmatpush1.bf16.msra.mxu0 0
        %4505 = vmatprep.subr.bf16.mxu0 0
        %4506 = vmatpush1.bf16.msra.mxu0 0
        %4507 = vmatprep.subr.bf16.mxu0 0
        %4508 = vmatpush1.bf16.msra.mxu0 0
        %4509 = vmatprep.subr.bf16.mxu0 0
        %4510 = vmatpush1.bf16.msra.mxu0 0
        %4511 = vmatprep.subr.bf16.mxu0 0
        %4512 = vmatpush1.bf16.msra.mxu0 0
        %4513 = vmatprep.subr.bf16.mxu0 0
        %4514 = vmatpush1.bf16.msra.mxu0 0
        %4515 = vmatprep.subr.bf16.mxu0 0
        %4516 = vmatpush1.bf16.msra.mxu0 0
        %4517 = vmatprep.subr.bf16.mxu0 0
        %4518 = vmatpush1.bf16.msra.mxu0 0
        %4519 = vmatprep.subr.bf16.mxu0 0
        %4520 = vmatpush1.bf16.msra.mxu0 0
        %4521 = vmatprep.mubr.bf16.mxu0 0
        %4522 = vmatmul.mubr.bf16.gmra.mrb[0].mxu0 %v4478
        %v4523 = vpop.f32.mrb[0].mxu0
        %v4524 = vadd.f32 0.0, %v4523
        %v4525 = vpop.f32.mrb[0].mxu0
        %v4526 = vpop.f32.mrb[0].mxu0
        %v4527 = vadd.f32 0.0, %v4526
        %v4528 = vpop.f32.mrb[0].mxu0
        %4529 = vmatprep.mubr.bf16.mxu0 0
        %4530 = vmatmul.mubr.bf16.gmra.mrb[0].mxu0 %v4481
        %v4531 = vpop.f32.mrb[0].mxu0
        %v4532 = vadd.f32 0.0, %v4531
        %v4533 = vpop.f32.mrb[0].mxu0
        %v4534 = vpop.f32.mrb[0].mxu0
        %v4535 = vadd.f32 0.0, %v4534
        %v4536 = vpop.f32.mrb[0].mxu0
        %4537 = vmatprep.mubr.bf16.mxu0 0
        %4538 = vmatmul.mubr.bf16.gmra.mrb[0].mxu0 %v4484
        %v4539 = vpop.f32.mrb[0].mxu0
        %v4540 = vadd.f32 0.0, %v4539
        %v4541 = vpop.f32.mrb[0].mxu0
        %v4542 = vpop.f32.mrb[0].mxu0
        %v4543 = vadd.f32 0.0, %v4542
        %v4544 = vpop.f32.mrb[0].mxu0
        %4545 = vmatprep.mubr.bf16.mxu0 0
        %4546 = vmatmul.mubr.bf16.gmra.mrb[0].mxu0 %v4487
        %v4547 = vpop.f32.mrb[0].mxu0
        %v4548 = vadd.f32 0.0, %v4547
        %v4549 = vpop.f32.mrb[0].mxu0
        %v4550 = vpop.f32.mrb[0].mxu0
        %v4551 = vadd.f32 0.0, %v4550
        %v4552 = vpop.f32.mrb[0].mxu0
        %4553 = vdwg.mxu0
        %v4554 = vld [vmem:[%s1334] sm:$0xff]
        %v4555 = vld [vmem:[%s1334 + $0x8] sm:$0xff]
        %v4556 = vld [vmem:[%s1334 + $0x10] sm:$0xff]
        %v4557 = vld [vmem:[%s1334 + $0x18] sm:$0xff]
        %v4558 = vld [vmem:[%s1334 + $0x20] sm:$0xff]
        %v4559 = vld [vmem:[%s1334 + $0x28] sm:$0xff]
        %v4560 = vld [vmem:[%s1334 + $0x30] sm:$0xff]
        %v4561 = vld [vmem:[%s1334 + $0x38] sm:$0xff]
        %4562 = vrot.lane.b32.xlu0 %v3954, 64
        %v4563 = vpop.permute.xlu0 %4562
        %4564 = vrot.lane.b32.xlu0 %v3955, 64
        %v4565 = vpop.permute.xlu0 %4564
        %4566 = vrot.lane.b32.xlu0 %v3956, 64
        %v4567 = vpop.permute.xlu0 %4566
        %4568 = vrot.lane.b32.xlu0 %v3957, 64
        %v4569 = vpop.permute.xlu0 %4568
        %4570 = vrot.lane.b32.xlu0 %v3958, 64
        %v4571 = vpop.permute.xlu0 %4570
        %4572 = vrot.lane.b32.xlu0 %v3959, 64
        %v4573 = vpop.permute.xlu0 %4572
        %4574 = vrot.lane.b32.xlu0 %v3960, 64
        %v4575 = vpop.permute.xlu0 %4574
        %4576 = vrot.lane.b32.xlu0 %v3961, 64
        %v4577 = vpop.permute.xlu0 %4576
        %v4579 = vsel %vm751, %v4563, 0
        %v4582 = vsel %vm751, %v4565, 0
        %v4585 = vsel %vm751, %v4567, 0
        %v4588 = vsel %vm751, %v4569, 0
        %v4591 = vsel %vm751, %v4571, 0
        %v4594 = vsel %vm751, %v4573, 0
        %v4597 = vsel %vm751, %v4575, 0
        %v4600 = vsel %vm751, %v4577, 0
        %4602 = vmatprep.subr.bf16.mxu0 0
        %4603 = vmatpush1.bf16.xpose.msra.mxu0 %v4591
        %4604 = vmatprep.subr.bf16.mxu0 0
        %4605 = vmatpush1.bf16.xpose.msra.mxu0 %v4594
        %4606 = vmatprep.subr.bf16.mxu0 0
        %4607 = vmatpush1.bf16.xpose.msra.mxu0 %v4597
        %4608 = vmatprep.subr.bf16.mxu0 0
        %4609 = vmatpush1.bf16.xpose.msra.mxu0 %v4600
        %4610 = vmatprep.subr.bf16.mxu0 0
        %4611 = vmatpush1.bf16.xpose.msra.mxu0 0
        %4612 = vmatprep.subr.bf16.mxu0 0
        %4613 = vmatpush1.bf16.xpose.msra.mxu0 0
        %4614 = vmatprep.subr.bf16.mxu0 0
        %4615 = vmatpush1.bf16.xpose.msra.mxu0 0
        %4616 = vmatprep.subr.bf16.mxu0 0
        %4617 = vmatpush1.bf16.xpose.msra.mxu0 0
        %4618 = vmatprep.subr.bf16.mxu0 0
        %4619 = vmatpush1.bf16.xpose.msra.mxu0 0
        %4620 = vmatprep.subr.bf16.mxu0 0
        %4621 = vmatpush1.bf16.xpose.msra.mxu0 0
        %4622 = vmatprep.subr.bf16.mxu0 0
        %4623 = vmatpush1.bf16.xpose.msra.mxu0 0
        %4624 = vmatprep.subr.bf16.mxu0 0
        %4625 = vmatpush1.bf16.xpose.msra.mxu0 0
        %4626 = vmatprep.subr.bf16.mxu0 0
        %4627 = vmatpush1.bf16.xpose.msra.mxu0 0
        %4628 = vmatprep.subr.bf16.mxu0 0
        %4629 = vmatpush1.bf16.xpose.msra.mxu0 0
        %4630 = vmatprep.subr.bf16.mxu0 0
        %4631 = vmatpush1.bf16.xpose.msra.mxu0 0
        %4632 = vmatprep.subr.bf16.mxu0 0
        %4633 = vmatpush1.bf16.xpose.msra.mxu0 0
        %4634 = vmatprep.mubr.bf16.mxu0 0
        %4635 = vmatmul.mubr.bf16.gmra.mrb[0].mxu0 %v4579
        %v4636 = vpop.f32.mrb[0].mxu0
        %v4637 = vadd.f32 %v4554, %v4636
        %v4638 = vpop.f32.mrb[0].mxu0
        %v4639 = vpop.f32.mrb[0].mxu0
        %v4640 = vadd.f32 %v4555, %v4639
        %v4641 = vpop.f32.mrb[0].mxu0
        %4642 = vmatprep.mubr.bf16.mxu0 0
        %4643 = vmatmul.mubr.bf16.gmra.mrb[0].mxu0 %v4582
        %v4644 = vpop.f32.mrb[0].mxu0
        %v4645 = vadd.f32 %v4556, %v4644
        %v4646 = vpop.f32.mrb[0].mxu0
        %v4647 = vpop.f32.mrb[0].mxu0
        %v4648 = vadd.f32 %v4557, %v4647
        %v4649 = vpop.f32.mrb[0].mxu0
        %4650 = vmatprep.mubr.bf16.mxu0 0
        %4651 = vmatmul.mubr.bf16.gmra.mrb[0].mxu0 %v4585
        %v4652 = vpop.f32.mrb[0].mxu0
        %v4653 = vadd.f32 %v4558, %v4652
        %v4654 = vpop.f32.mrb[0].mxu0
        %v4655 = vpop.f32.mrb[0].mxu0
        %v4656 = vadd.f32 %v4559, %v4655
        %v4657 = vpop.f32.mrb[0].mxu0
        %4658 = vmatprep.mubr.bf16.mxu0 0
        %4659 = vmatmul.mubr.bf16.gmra.mrb[0].mxu0 %v4588
        %v4660 = vpop.f32.mrb[0].mxu0
        %v4661 = vadd.f32 %v4560, %v4660
        %v4662 = vpop.f32.mrb[0].mxu0
        %v4663 = vpop.f32.mrb[0].mxu0
        %v4664 = vadd.f32 %v4561, %v4663
        %v4665 = vpop.f32.mrb[0].mxu0
        %4666 = vdwg.mxu0
        %v4667 = vadd.f32 %v4637, %v3946
        %v4668 = vadd.f32 %v4640, %v3947
        %v4669 = vadd.f32 %v4645, %v3948
        %v4670 = vadd.f32 %v4648, %v3949
        %v4671 = vadd.f32 %v4653, %v3950
        %v4672 = vadd.f32 %v4656, %v3951
        %v4673 = vadd.f32 %v4661, %v3952
        %v4674 = vadd.f32 %v4664, %v3953
        %v4675 = vsel %vm849, %v4667, -inf
        %4676 = vmax.xlane.f32.xlu0 %v4675
        %v4677 = vpop.xlane.xlu0 %4676
        %v4678 = vsel %vm849, %v4668, -inf
        %4679 = vmax.xlane.f32.xlu0 %v4678
        %v4680 = vpop.xlane.xlu0 %4679
        %v4681 = vsel %vm849, %v4669, -inf
        %4682 = vmax.xlane.f32.xlu0 %v4681
        %v4683 = vpop.xlane.xlu0 %4682
        %v4684 = vsel %vm849, %v4670, -inf
        %4685 = vmax.xlane.f32.xlu0 %v4684
        %v4686 = vpop.xlane.xlu0 %4685
        %v4687 = vsel %vm849, %v4671, -inf
        %4688 = vmax.xlane.f32.xlu0 %v4687
        %v4689 = vpop.xlane.xlu0 %4688
        %v4690 = vsel %vm849, %v4672, -inf
        %4691 = vmax.xlane.f32.xlu0 %v4690
        %v4692 = vpop.xlane.xlu0 %4691
        %v4693 = vsel %vm849, %v4673, -inf
        %4694 = vmax.xlane.f32.xlu0 %v4693
        %v4695 = vpop.xlane.xlu0 %4694
        %v4696 = vsel %vm849, %v4674, -inf
        %4697 = vmax.xlane.f32.xlu0 %v4696
        %v4698 = vpop.xlane.xlu0 %4697
        %v4699 = vsub.f32 %v4667, %v4677
        %v4700 = vsub.f32 %v4668, %v4680
        %v4701 = vsub.f32 %v4669, %v4683
        %v4702 = vsub.f32 %v4670, %v4686
        %v4703 = vsub.f32 %v4671, %v4689
        %v4704 = vsub.f32 %v4672, %v4692
        %v4705 = vsub.f32 %v4673, %v4695
        %v4706 = vsub.f32 %v4674, %v4698
        %v4707 = vmul.f32 %v4699, 1.442695
        %v4708 = vpow.pop %v4707
        %v4709 = vmul.f32 %v4700, 1.442695
        %v4710 = vpow.pop %v4709
        %v4711 = vmul.f32 %v4701, 1.442695
        %v4712 = vpow.pop %v4711
        %v4713 = vmul.f32 %v4702, 1.442695
        %v4714 = vpow.pop %v4713
        %v4715 = vmul.f32 %v4703, 1.442695
        %v4716 = vpow.pop %v4715
        %v4717 = vmul.f32 %v4704, 1.442695
        %v4718 = vpow.pop %v4717
        %v4719 = vmul.f32 %v4705, 1.442695
        %v4720 = vpow.pop %v4719
        %v4721 = vmul.f32 %v4706, 1.442695
        %v4722 = vpow.pop %v4721
        %v4723 = vsel %vm849, %v4708, 0.0
        %4724 = vadd.xlane.f32.xlu0 %v4723
        %v4725 = vpop.xlane.xlu0 %4724
        %v4726 = vsel %vm849, %v4710, 0.0
        %4727 = vadd.xlane.f32.xlu0 %v4726
        %v4728 = vpop.xlane.xlu0 %4727
        %v4729 = vsel %vm849, %v4712, 0.0
        %4730 = vadd.xlane.f32.xlu0 %v4729
        %v4731 = vpop.xlane.xlu0 %4730
        %v4732 = vsel %vm849, %v4714, 0.0
        %4733 = vadd.xlane.f32.xlu0 %v4732
        %v4734 = vpop.xlane.xlu0 %4733
        %v4735 = vsel %vm849, %v4716, 0.0
        %4736 = vadd.xlane.f32.xlu0 %v4735
        %v4737 = vpop.xlane.xlu0 %4736
        %v4738 = vsel %vm849, %v4718, 0.0
        %4739 = vadd.xlane.f32.xlu0 %v4738
        %v4740 = vpop.xlane.xlu0 %4739
        %v4741 = vsel %vm849, %v4720, 0.0
        %4742 = vadd.xlane.f32.xlu0 %v4741
        %v4743 = vpop.xlane.xlu0 %4742
        %v4744 = vsel %vm849, %v4722, 0.0
        %4745 = vadd.xlane.f32.xlu0 %v4744
        %v4746 = vpop.xlane.xlu0 %4745
        %v4747 = vrcp.pop %v4725
        %v4748 = vrcp.pop %v4728
        %v4749 = vrcp.pop %v4731
        %v4750 = vrcp.pop %v4734
        %v4751 = vrcp.pop %v4737
        %v4752 = vrcp.pop %v4740
        %v4753 = vrcp.pop %v4743
        %v4754 = vrcp.pop %v4746
        %v4755 = vmul.f32 %v4708, %v4747
        %v4756 = vmul.f32 %v4710, %v4748
        %v4757 = vmul.f32 %v4712, %v4749
        %v4758 = vmul.f32 %v4714, %v4750
        %v4759 = vmul.f32 %v4716, %v4751
        %v4760 = vmul.f32 %v4718, %v4752
        %v4761 = vmul.f32 %v4720, %v4753
        %v4762 = vmul.f32 %v4722, %v4754
        %v4763 = vpack.c.bf16 %v4756, %v4755
        %v4764 = vpack.c.bf16 %v4758, %v4757
        %v4765 = vpack.c.bf16 %v4760, %v4759
        %v4766 = vpack.c.bf16 %v4762, %v4761
        %4767 = vrot.lane.b32.xlu0 %v3962, 64
        %v4768 = vpop.permute.xlu0 %4767
        %4769 = vrot.lane.b32.xlu0 %v3963, 64
        %v4770 = vpop.permute.xlu0 %4769
        %4771 = vrot.lane.b32.xlu0 %v3964, 64
        %v4772 = vpop.permute.xlu0 %4771
        %4773 = vrot.lane.b32.xlu0 %v3965, 64
        %v4774 = vpop.permute.xlu0 %4773
        %v4780 = vsel %vm849, %v4763, 0
        %v4783 = vsel %vm849, %v4764, 0
        %v4786 = vsel %vm849, %v4765, 0
        %v4789 = vsel %vm849, %v4766, 0
        %4791 = vmatprep.subr.bf16.mxu0 0
        %4792 = vmatpush1.bf16.msra.mxu0 %v4768
        %4793 = vmatprep.subr.bf16.mxu0 0
        %4794 = vmatpush1.bf16.msra.mxu0 %v4770
        %4795 = vmatprep.subr.bf16.mxu0 0
        %4796 = vmatpush1.bf16.msra.mxu0 %v4772
        %4797 = vmatprep.subr.bf16.mxu0 0
        %4798 = vmatpush1.bf16.msra.mxu0 %v4774
        %4799 = vmatprep.subr.bf16.mxu0 0
        %4800 = vmatpush1.bf16.msra.mxu0 0
        %4801 = vmatprep.subr.bf16.mxu0 0
        %4802 = vmatpush1.bf16.msra.mxu0 0
        %4803 = vmatprep.subr.bf16.mxu0 0
        %4804 = vmatpush1.bf16.msra.mxu0 0
        %4805 = vmatprep.subr.bf16.mxu0 0
        %4806 = vmatpush1.bf16.msra.mxu0 0
        %4807 = vmatprep.subr.bf16.mxu0 0
        %4808 = vmatpush1.bf16.msra.mxu0 0
        %4809 = vmatprep.subr.bf16.mxu0 0
        %4810 = vmatpush1.bf16.msra.mxu0 0
        %4811 = vmatprep.subr.bf16.mxu0 0
        %4812 = vmatpush1.bf16.msra.mxu0 0
        %4813 = vmatprep.subr.bf16.mxu0 0
        %4814 = vmatpush1.bf16.msra.mxu0 0
        %4815 = vmatprep.subr.bf16.mxu0 0
        %4816 = vmatpush1.bf16.msra.mxu0 0
        %4817 = vmatprep.subr.bf16.mxu0 0
        %4818 = vmatpush1.bf16.msra.mxu0 0
        %4819 = vmatprep.subr.bf16.mxu0 0
        %4820 = vmatpush1.bf16.msra.mxu0 0
        %4821 = vmatprep.subr.bf16.mxu0 0
        %4822 = vmatpush1.bf16.msra.mxu0 0
        %4823 = vmatprep.mubr.bf16.mxu0 0
        %4824 = vmatmul.mubr.bf16.gmra.mrb[0].mxu0 %v4780
        %v4825 = vpop.f32.mrb[0].mxu0
        %v4826 = vadd.f32 0.0, %v4825
        %v4827 = vpop.f32.mrb[0].mxu0
        %v4828 = vpop.f32.mrb[0].mxu0
        %v4829 = vadd.f32 0.0, %v4828
        %v4830 = vpop.f32.mrb[0].mxu0
        %4831 = vmatprep.mubr.bf16.mxu0 0
        %4832 = vmatmul.mubr.bf16.gmra.mrb[0].mxu0 %v4783
        %v4833 = vpop.f32.mrb[0].mxu0
        %v4834 = vadd.f32 0.0, %v4833
        %v4835 = vpop.f32.mrb[0].mxu0
        %v4836 = vpop.f32.mrb[0].mxu0
        %v4837 = vadd.f32 0.0, %v4836
        %v4838 = vpop.f32.mrb[0].mxu0
        %4839 = vmatprep.mubr.bf16.mxu0 0
        %4840 = vmatmul.mubr.bf16.gmra.mrb[0].mxu0 %v4786
        %v4841 = vpop.f32.mrb[0].mxu0
        %v4842 = vadd.f32 0.0, %v4841
        %v4843 = vpop.f32.mrb[0].mxu0
        %v4844 = vpop.f32.mrb[0].mxu0
        %v4845 = vadd.f32 0.0, %v4844
        %v4846 = vpop.f32.mrb[0].mxu0
        %4847 = vmatprep.mubr.bf16.mxu0 0
        %4848 = vmatmul.mubr.bf16.gmra.mrb[0].mxu0 %v4789
        %v4849 = vpop.f32.mrb[0].mxu0
        %v4850 = vadd.f32 0.0, %v4849
        %v4851 = vpop.f32.mrb[0].mxu0
        %v4852 = vpop.f32.mrb[0].mxu0
        %v4853 = vadd.f32 0.0, %v4852
        %v4854 = vpop.f32.mrb[0].mxu0
        %4855 = vdwg.mxu0
        %v4856 = vld [vmem:[%s1637] sm:$0xff]
        %v4857 = vld [vmem:[%s1637 + $0x8] sm:$0xff]
        %v4858 = vld [vmem:[%s1637 + $0x10] sm:$0xff]
        %v4859 = vld [vmem:[%s1637 + $0x18] sm:$0xff]
        %v4860 = vld [vmem:[%s1637 + $0x20] sm:$0xff]
        %v4861 = vld [vmem:[%s1637 + $0x28] sm:$0xff]
        %v4862 = vld [vmem:[%s1637 + $0x30] sm:$0xff]
        %v4863 = vld [vmem:[%s1637 + $0x38] sm:$0xff]
        %4864 = vrot.lane.b32.xlu0 %v3954, 32
        %v4865 = vpop.permute.xlu0 %4864
        %4866 = vrot.lane.b32.xlu0 %v3955, 32
        %v4867 = vpop.permute.xlu0 %4866
        %4868 = vrot.lane.b32.xlu0 %v3956, 32
        %v4869 = vpop.permute.xlu0 %4868
        %4870 = vrot.lane.b32.xlu0 %v3957, 32
        %v4871 = vpop.permute.xlu0 %4870
        %4872 = vrot.lane.b32.xlu0 %v3958, 32
        %v4873 = vpop.permute.xlu0 %4872
        %4874 = vrot.lane.b32.xlu0 %v3959, 32
        %v4875 = vpop.permute.xlu0 %4874
        %4876 = vrot.lane.b32.xlu0 %v3960, 32
        %v4877 = vpop.permute.xlu0 %4876
        %4878 = vrot.lane.b32.xlu0 %v3961, 32
        %v4879 = vpop.permute.xlu0 %4878
        %v4881 = vsel %vm751, %v4865, 0
        %v4884 = vsel %vm751, %v4867, 0
        %v4887 = vsel %vm751, %v4869, 0
        %v4890 = vsel %vm751, %v4871, 0
        %v4893 = vsel %vm751, %v4873, 0
        %v4896 = vsel %vm751, %v4875, 0
        %v4899 = vsel %vm751, %v4877, 0
        %v4902 = vsel %vm751, %v4879, 0
        %4904 = vmatprep.subr.bf16.mxu0 0
        %4905 = vmatpush1.bf16.xpose.msra.mxu0 %v4893
        %4906 = vmatprep.subr.bf16.mxu0 0
        %4907 = vmatpush1.bf16.xpose.msra.mxu0 %v4896
        %4908 = vmatprep.subr.bf16.mxu0 0
        %4909 = vmatpush1.bf16.xpose.msra.mxu0 %v4899
        %4910 = vmatprep.subr.bf16.mxu0 0
        %4911 = vmatpush1.bf16.xpose.msra.mxu0 %v4902
        %4912 = vmatprep.subr.bf16.mxu0 0
        %4913 = vmatpush1.bf16.xpose.msra.mxu0 0
        %4914 = vmatprep.subr.bf16.mxu0 0
        %4915 = vmatpush1.bf16.xpose.msra.mxu0 0
        %4916 = vmatprep.subr.bf16.mxu0 0
        %4917 = vmatpush1.bf16.xpose.msra.mxu0 0
        %4918 = vmatprep.subr.bf16.mxu0 0
        %4919 = vmatpush1.bf16.xpose.msra.mxu0 0
        %4920 = vmatprep.subr.bf16.mxu0 0
        %4921 = vmatpush1.bf16.xpose.msra.mxu0 0
        %4922 = vmatprep.subr.bf16.mxu0 0
        %4923 = vmatpush1.bf16.xpose.msra.mxu0 0
        %4924 = vmatprep.subr.bf16.mxu0 0
        %4925 = vmatpush1.bf16.xpose.msra.mxu0 0
        %4926 = vmatprep.subr.bf16.mxu0 0
        %4927 = vmatpush1.bf16.xpose.msra.mxu0 0
        %4928 = vmatprep.subr.bf16.mxu0 0
        %4929 = vmatpush1.bf16.xpose.msra.mxu0 0
        %4930 = vmatprep.subr.bf16.mxu0 0
        %4931 = vmatpush1.bf16.xpose.msra.mxu0 0
        %4932 = vmatprep.subr.bf16.mxu0 0
        %4933 = vmatpush1.bf16.xpose.msra.mxu0 0
        %4934 = vmatprep.subr.bf16.mxu0 0
        %4935 = vmatpush1.bf16.xpose.msra.mxu0 0
        %4936 = vmatprep.mubr.bf16.mxu0 0
        %4937 = vmatmul.mubr.bf16.gmra.mrb[0].mxu0 %v4881
        %v4938 = vpop.f32.mrb[0].mxu0
        %v4939 = vadd.f32 %v4856, %v4938
        %v4940 = vpop.f32.mrb[0].mxu0
        %v4941 = vpop.f32.mrb[0].mxu0
        %v4942 = vadd.f32 %v4857, %v4941
        %v4943 = vpop.f32.mrb[0].mxu0
        %4944 = vmatprep.mubr.bf16.mxu0 0
        %4945 = vmatmul.mubr.bf16.gmra.mrb[0].mxu0 %v4884
        %v4946 = vpop.f32.mrb[0].mxu0
        %v4947 = vadd.f32 %v4858, %v4946
        %v4948 = vpop.f32.mrb[0].mxu0
        %v4949 = vpop.f32.mrb[0].mxu0
        %v4950 = vadd.f32 %v4859, %v4949
        %v4951 = vpop.f32.mrb[0].mxu0
        %4952 = vmatprep.mubr.bf16.mxu0 0
        %4953 = vmatmul.mubr.bf16.gmra.mrb[0].mxu0 %v4887
        %v4954 = vpop.f32.mrb[0].mxu0
        %v4955 = vadd.f32 %v4860, %v4954
        %v4956 = vpop.f32.mrb[0].mxu0
        %v4957 = vpop.f32.mrb[0].mxu0
        %v4958 = vadd.f32 %v4861, %v4957
        %v4959 = vpop.f32.mrb[0].mxu0
        %4960 = vmatprep.mubr.bf16.mxu0 0
        %4961 = vmatmul.mubr.bf16.gmra.mrb[0].mxu0 %v4890
        %v4962 = vpop.f32.mrb[0].mxu0
        %v4963 = vadd.f32 %v4862, %v4962
        %v4964 = vpop.f32.mrb[0].mxu0
        %v4965 = vpop.f32.mrb[0].mxu0
        %v4966 = vadd.f32 %v4863, %v4965
        %v4967 = vpop.f32.mrb[0].mxu0
        %4968 = vdwg.mxu0
        %v4969 = vadd.f32 %v4939, %v3946
        %v4970 = vadd.f32 %v4942, %v3947
        %v4971 = vadd.f32 %v4947, %v3948
        %v4972 = vadd.f32 %v4950, %v3949
        %v4973 = vadd.f32 %v4955, %v3950
        %v4974 = vadd.f32 %v4958, %v3951
        %v4975 = vadd.f32 %v4963, %v3952
        %v4976 = vadd.f32 %v4966, %v3953
        %v4977 = vsel %vm849, %v4969, -inf
        %4978 = vmax.xlane.f32.xlu0 %v4977
        %v4979 = vpop.xlane.xlu0 %4978
        %v4980 = vsel %vm849, %v4970, -inf
        %4981 = vmax.xlane.f32.xlu0 %v4980
        %v4982 = vpop.xlane.xlu0 %4981
        %v4983 = vsel %vm849, %v4971, -inf
        %4984 = vmax.xlane.f32.xlu0 %v4983
        %v4985 = vpop.xlane.xlu0 %4984
        %v4986 = vsel %vm849, %v4972, -inf
        %4987 = vmax.xlane.f32.xlu0 %v4986
        %v4988 = vpop.xlane.xlu0 %4987
        %v4989 = vsel %vm849, %v4973, -inf
        %4990 = vmax.xlane.f32.xlu0 %v4989
        %v4991 = vpop.xlane.xlu0 %4990
        %v4992 = vsel %vm849, %v4974, -inf
        %4993 = vmax.xlane.f32.xlu0 %v4992
        %v4994 = vpop.xlane.xlu0 %4993
        %v4995 = vsel %vm849, %v4975, -inf
        %4996 = vmax.xlane.f32.xlu0 %v4995
        %v4997 = vpop.xlane.xlu0 %4996
        %v4998 = vsel %vm849, %v4976, -inf
        %4999 = vmax.xlane.f32.xlu0 %v4998
        %v5000 = vpop.xlane.xlu0 %4999
        %v5001 = vsub.f32 %v4969, %v4979
        %v5002 = vsub.f32 %v4970, %v4982
        %v5003 = vsub.f32 %v4971, %v4985
        %v5004 = vsub.f32 %v4972, %v4988
        %v5005 = vsub.f32 %v4973, %v4991
        %v5006 = vsub.f32 %v4974, %v4994
        %v5007 = vsub.f32 %v4975, %v4997
        %v5008 = vsub.f32 %v4976, %v5000
        %v5009 = vmul.f32 %v5001, 1.442695
        %v5010 = vpow.pop %v5009
        %v5011 = vmul.f32 %v5002, 1.442695
        %v5012 = vpow.pop %v5011
        %v5013 = vmul.f32 %v5003, 1.442695
        %v5014 = vpow.pop %v5013
        %v5015 = vmul.f32 %v5004, 1.442695
        %v5016 = vpow.pop %v5015
        %v5017 = vmul.f32 %v5005, 1.442695
        %v5018 = vpow.pop %v5017
        %v5019 = vmul.f32 %v5006, 1.442695
        %v5020 = vpow.pop %v5019
        %v5021 = vmul.f32 %v5007, 1.442695
        %v5022 = vpow.pop %v5021
        %v5023 = vmul.f32 %v5008, 1.442695
        %v5024 = vpow.pop %v5023
        %v5025 = vsel %vm849, %v5010, 0.0
        %5026 = vadd.xlane.f32.xlu0 %v5025
        %v5027 = vpop.xlane.xlu0 %5026
        %v5028 = vsel %vm849, %v5012, 0.0
        %5029 = vadd.xlane.f32.xlu0 %v5028
        %v5030 = vpop.xlane.xlu0 %5029
        %v5031 = vsel %vm849, %v5014, 0.0
        %5032 = vadd.xlane.f32.xlu0 %v5031
        %v5033 = vpop.xlane.xlu0 %5032
        %v5034 = vsel %vm849, %v5016, 0.0
        %5035 = vadd.xlane.f32.xlu0 %v5034
        %v5036 = vpop.xlane.xlu0 %5035
        %v5037 = vsel %vm849, %v5018, 0.0
        %5038 = vadd.xlane.f32.xlu0 %v5037
        %v5039 = vpop.xlane.xlu0 %5038
        %v5040 = vsel %vm849, %v5020, 0.0
        %5041 = vadd.xlane.f32.xlu0 %v5040
        %v5042 = vpop.xlane.xlu0 %5041
        %v5043 = vsel %vm849, %v5022, 0.0
        %5044 = vadd.xlane.f32.xlu0 %v5043
        %v5045 = vpop.xlane.xlu0 %5044
        %v5046 = vsel %vm849, %v5024, 0.0
        %5047 = vadd.xlane.f32.xlu0 %v5046
        %v5048 = vpop.xlane.xlu0 %5047
        %v5049 = vrcp.pop %v5027
        %v5050 = vrcp.pop %v5030
        %v5051 = vrcp.pop %v5033
        %v5052 = vrcp.pop %v5036
        %v5053 = vrcp.pop %v5039
        %v5054 = vrcp.pop %v5042
        %v5055 = vrcp.pop %v5045
        %v5056 = vrcp.pop %v5048
        %v5057 = vmul.f32 %v5010, %v5049
        %v5058 = vmul.f32 %v5012, %v5050
        %v5059 = vmul.f32 %v5014, %v5051
        %v5060 = vmul.f32 %v5016, %v5052
        %v5061 = vmul.f32 %v5018, %v5053
        %v5062 = vmul.f32 %v5020, %v5054
        %v5063 = vmul.f32 %v5022, %v5055
        %v5064 = vmul.f32 %v5024, %v5056
        %v5065 = vpack.c.bf16 %v5058, %v5057
        %v5066 = vpack.c.bf16 %v5060, %v5059
        %v5067 = vpack.c.bf16 %v5062, %v5061
        %v5068 = vpack.c.bf16 %v5064, %v5063
        %5069 = vrot.lane.b32.xlu0 %v3962, 32
        %v5070 = vpop.permute.xlu0 %5069
        %5071 = vrot.lane.b32.xlu0 %v3963, 32
        %v5072 = vpop.permute.xlu0 %5071
        %5073 = vrot.lane.b32.xlu0 %v3964, 32
        %v5074 = vpop.permute.xlu0 %5073
        %5075 = vrot.lane.b32.xlu0 %v3965, 32
        %v5076 = vpop.permute.xlu0 %5075
        %v5082 = vsel %vm849, %v5065, 0
        %v5085 = vsel %vm849, %v5066, 0
        %v5088 = vsel %vm849, %v5067, 0
        %v5091 = vsel %vm849, %v5068, 0
        %5093 = vmatprep.subr.bf16.mxu0 0
        %5094 = vmatpush1.bf16.msra.mxu0 %v5070
        %5095 = vmatprep.subr.bf16.mxu0 0
        %5096 = vmatpush1.bf16.msra.mxu0 %v5072
        %5097 = vmatprep.subr.bf16.mxu0 0
        %5098 = vmatpush1.bf16.msra.mxu0 %v5074
        %5099 = vmatprep.subr.bf16.mxu0 0
        %5100 = vmatpush1.bf16.msra.mxu0 %v5076
        %5101 = vmatprep.subr.bf16.mxu0 0
        %5102 = vmatpush1.bf16.msra.mxu0 0
        %5103 = vmatprep.subr.bf16.mxu0 0
        %5104 = vmatpush1.bf16.msra.mxu0 0
        %5105 = vmatprep.subr.bf16.mxu0 0
        %5106 = vmatpush1.bf16.msra.mxu0 0
        %5107 = vmatprep.subr.bf16.mxu0 0
        %5108 = vmatpush1.bf16.msra.mxu0 0
        %5109 = vmatprep.subr.bf16.mxu0 0
        %5110 = vmatpush1.bf16.msra.mxu0 0
        %5111 = vmatprep.subr.bf16.mxu0 0
        %5112 = vmatpush1.bf16.msra.mxu0 0
        %5113 = vmatprep.subr.bf16.mxu0 0
        %5114 = vmatpush1.bf16.msra.mxu0 0
        %5115 = vmatprep.subr.bf16.mxu0 0
        %5116 = vmatpush1.bf16.msra.mxu0 0
        %5117 = vmatprep.subr.bf16.mxu0 0
        %5118 = vmatpush1.bf16.msra.mxu0 0
        %5119 = vmatprep.subr.bf16.mxu0 0
        %5120 = vmatpush1.bf16.msra.mxu0 0
        %5121 = vmatprep.subr.bf16.mxu0 0
        %5122 = vmatpush1.bf16.msra.mxu0 0
        %5123 = vmatprep.subr.bf16.mxu0 0
        %5124 = vmatpush1.bf16.msra.mxu0 0
        %5125 = vmatprep.mubr.bf16.mxu0 0
        %5126 = vmatmul.mubr.bf16.gmra.mrb[0].mxu0 %v5082
        %v5127 = vpop.f32.mrb[0].mxu0
        %v5128 = vadd.f32 0.0, %v5127
        %v5129 = vpop.f32.mrb[0].mxu0
        %v5130 = vpop.f32.mrb[0].mxu0
        %v5131 = vadd.f32 0.0, %v5130
        %v5132 = vpop.f32.mrb[0].mxu0
        %5133 = vmatprep.mubr.bf16.mxu0 0
        %5134 = vmatmul.mubr.bf16.gmra.mrb[0].mxu0 %v5085
        %v5135 = vpop.f32.mrb[0].mxu0
        %v5136 = vadd.f32 0.0, %v5135
        %v5137 = vpop.f32.mrb[0].mxu0
        %v5138 = vpop.f32.mrb[0].mxu0
        %v5139 = vadd.f32 0.0, %v5138
        %v5140 = vpop.f32.mrb[0].mxu0
        %5141 = vmatprep.mubr.bf16.mxu0 0
        %5142 = vmatmul.mubr.bf16.gmra.mrb[0].mxu0 %v5088
        %v5143 = vpop.f32.mrb[0].mxu0
        %v5144 = vadd.f32 0.0, %v5143
        %v5145 = vpop.f32.mrb[0].mxu0
        %v5146 = vpop.f32.mrb[0].mxu0
        %v5147 = vadd.f32 0.0, %v5146
        %v5148 = vpop.f32.mrb[0].mxu0
        %5149 = vmatprep.mubr.bf16.mxu0 0
        %5150 = vmatmul.mubr.bf16.gmra.mrb[0].mxu0 %v5091
        %v5151 = vpop.f32.mrb[0].mxu0
        %v5152 = vadd.f32 0.0, %v5151
        %v5153 = vpop.f32.mrb[0].mxu0
        %v5154 = vpop.f32.mrb[0].mxu0
        %v5155 = vadd.f32 0.0, %v5154
        %v5156 = vpop.f32.mrb[0].mxu0
        %5157 = vdwg.mxu0
        %5166 = vrot.lane.b32.xlu0 %v4524, 32
        %v5167 = vpop.permute.xlu0 %5166
        %5168 = vrot.lane.b32.xlu0 %v4527, 32
        %v5169 = vpop.permute.xlu0 %5168
        %5170 = vrot.lane.b32.xlu0 %v4532, 32
        %v5171 = vpop.permute.xlu0 %5170
        %5172 = vrot.lane.b32.xlu0 %v4535, 32
        %v5173 = vpop.permute.xlu0 %5172
        %5174 = vrot.lane.b32.xlu0 %v4540, 32
        %v5175 = vpop.permute.xlu0 %5174
        %5176 = vrot.lane.b32.xlu0 %v4543, 32
        %v5177 = vpop.permute.xlu0 %5176
        %5178 = vrot.lane.b32.xlu0 %v4548, 32
        %v5179 = vpop.permute.xlu0 %5178
        %5180 = vrot.lane.b32.xlu0 %v4551, 32
        %v5181 = vpop.permute.xlu0 %5180
        %5198 = vrot.lane.b32.xlu0 %v4826, 64
        %v5199 = vpop.permute.xlu0 %5198
        %5200 = vrot.lane.b32.xlu0 %v4829, 64
        %v5201 = vpop.permute.xlu0 %5200
        %5202 = vrot.lane.b32.xlu0 %v4834, 64
        %v5203 = vpop.permute.xlu0 %5202
        %5204 = vrot.lane.b32.xlu0 %v4837, 64
        %v5205 = vpop.permute.xlu0 %5204
        %5206 = vrot.lane.b32.xlu0 %v4842, 64
        %v5207 = vpop.permute.xlu0 %5206
        %5208 = vrot.lane.b32.xlu0 %v4845, 64
        %v5209 = vpop.permute.xlu0 %5208
        %5210 = vrot.lane.b32.xlu0 %v4850, 64
        %v5211 = vpop.permute.xlu0 %5210
        %5212 = vrot.lane.b32.xlu0 %v4853, 64
        %v5213 = vpop.permute.xlu0 %5212
        %5230 = vrot.lane.b32.xlu0 %v5128, 96
        %v5231 = vpop.permute.xlu0 %5230
        %5232 = vrot.lane.b32.xlu0 %v5131, 96
        %v5233 = vpop.permute.xlu0 %5232
        %5234 = vrot.lane.b32.xlu0 %v5136, 96
        %v5235 = vpop.permute.xlu0 %5234
        %5236 = vrot.lane.b32.xlu0 %v5139, 96
        %v5237 = vpop.permute.xlu0 %5236
        %5238 = vrot.lane.b32.xlu0 %v5144, 96
        %v5239 = vpop.permute.xlu0 %5238
        %5240 = vrot.lane.b32.xlu0 %v5147, 96
        %v5241 = vpop.permute.xlu0 %5240
        %5242 = vrot.lane.b32.xlu0 %v5152, 96
        %v5243 = vpop.permute.xlu0 %5242
        %5244 = vrot.lane.b32.xlu0 %v5155, 96
        %v5245 = vpop.permute.xlu0 %5244
        %v5254 = vsel %vm751, %v4210, %v5167
        %v5255 = vsel %vm751, %v4213, %v5169
        %v5256 = vsel %vm751, %v4218, %v5171
        %v5257 = vsel %vm751, %v4221, %v5173
        %v5258 = vsel %vm751, %v4226, %v5175
        %v5259 = vsel %vm751, %v4229, %v5177
        %v5260 = vsel %vm751, %v4234, %v5179
        %v5261 = vsel %vm751, %v4237, %v5181
        %v5262 = vsel %vm849, %v5254, %v5199
        %v5263 = vsel %vm849, %v5255, %v5201
        %v5264 = vsel %vm849, %v5256, %v5203
        %v5265 = vsel %vm849, %v5257, %v5205
        %v5266 = vsel %vm849, %v5258, %v5207
        %v5267 = vsel %vm849, %v5259, %v5209
        %v5268 = vsel %vm849, %v5260, %v5211
        %v5269 = vsel %vm849, %v5261, %v5213
        %v5270 = vsel %vm2052, %v5262, %v5231
        %v5271 = vsel %vm2052, %v5263, %v5233
        %v5272 = vsel %vm2052, %v5264, %v5235
        %v5273 = vsel %vm2052, %v5265, %v5237
        %v5274 = vsel %vm2052, %v5266, %v5239
        %v5275 = vsel %vm2052, %v5267, %v5241
        %v5276 = vsel %vm2052, %v5268, %v5243
        %v5277 = vsel %vm2052, %v5269, %v5245
        %v5278 = vpack.c.bf16 %v5271, %v5270
        %v5279 = vpack.c.bf16 %v5273, %v5272
        %v5280 = vpack.c.bf16 %v5275, %v5274
        %v5281 = vpack.c.bf16 %v5277, %v5276
        %5282 = vmatprep.subr.bf16.mxu0 0
        %5283 = vmatpush1.bf16.msra.mxu0 %v2103
        %5284 = vmatprep.subr.bf16.mxu0 0
        %5285 = vmatpush1.bf16.msra.mxu0 %v2104
        %5286 = vmatprep.subr.bf16.mxu0 0
        %5287 = vmatpush1.bf16.msra.mxu0 %v2105
        %5288 = vmatprep.subr.bf16.mxu0 0
        %5289 = vmatpush1.bf16.msra.mxu0 %v2106
        %5290 = vmatprep.subr.bf16.mxu0 0
        %5291 = vmatpush1.bf16.msra.mxu0 %v2107
        %5292 = vmatprep.subr.bf16.mxu0 0
        %5293 = vmatpush1.bf16.msra.mxu0 %v2108
        %5294 = vmatprep.subr.bf16.mxu0 0
        %5295 = vmatpush1.bf16.msra.mxu0 %v2109
        %5296 = vmatprep.subr.bf16.mxu0 0
        %5297 = vmatpush1.bf16.msra.mxu0 %v2110
        %5298 = vmatprep.subr.bf16.mxu0 0
        %5299 = vmatpush1.bf16.msra.mxu0 0
        %5300 = vmatprep.subr.bf16.mxu0 0
        %5301 = vmatpush1.bf16.msra.mxu0 0
        %5302 = vmatprep.subr.bf16.mxu0 0
        %5303 = vmatpush1.bf16.msra.mxu0 0
        %5304 = vmatprep.subr.bf16.mxu0 0
        %5305 = vmatpush1.bf16.msra.mxu0 0
        %5306 = vmatprep.subr.bf16.mxu0 0
        %5307 = vmatpush1.bf16.msra.mxu0 0
        %5308 = vmatprep.subr.bf16.mxu0 0
        %5309 = vmatpush1.bf16.msra.mxu0 0
        %5310 = vmatprep.subr.bf16.mxu0 0
        %5311 = vmatpush1.bf16.msra.mxu0 0
        %5312 = vmatprep.subr.bf16.mxu0 0
        %5313 = vmatpush1.bf16.msra.mxu0 0
        %5314 = vmatprep.mubr.bf16.mxu0 0
        %5315 = vmatmul.mubr.bf16.gmra.mrb[0].mxu0 %v5278
        %v5316 = vpop.f32.mrb[0].mxu0
        %v5317 = vadd.f32 %v2069, %v5316
        %v5318 = vpop.f32.mrb[0].mxu0
        %v5319 = vpop.f32.mrb[0].mxu0
        %v5320 = vadd.f32 %v2069, %v5319
        %v5321 = vpop.f32.mrb[0].mxu0
        %5322 = vmatprep.mubr.bf16.mxu0 0
        %5323 = vmatmul.mubr.bf16.gmra.mrb[0].mxu0 %v5279
        %v5324 = vpop.f32.mrb[0].mxu0
        %v5325 = vadd.f32 %v2069, %v5324
        %v5326 = vpop.f32.mrb[0].mxu0
        %v5327 = vpop.f32.mrb[0].mxu0
        %v5328 = vadd.f32 %v2069, %v5327
        %v5329 = vpop.f32.mrb[0].mxu0
        %5330 = vmatprep.mubr.bf16.mxu0 0
        %5331 = vmatmul.mubr.bf16.gmra.mrb[0].mxu0 %v5280
        %v5332 = vpop.f32.mrb[0].mxu0
        %v5333 = vadd.f32 %v2069, %v5332
        %v5334 = vpop.f32.mrb[0].mxu0
        %v5335 = vpop.f32.mrb[0].mxu0
        %v5336 = vadd.f32 %v2069, %v5335
        %v5337 = vpop.f32.mrb[0].mxu0
        %5338 = vmatprep.mubr.bf16.mxu0 0
        %5339 = vmatmul.mubr.bf16.gmra.mrb[0].mxu0 %v5281
        %v5340 = vpop.f32.mrb[0].mxu0
        %v5341 = vadd.f32 %v2069, %v5340
        %v5342 = vpop.f32.mrb[0].mxu0
        %v5343 = vpop.f32.mrb[0].mxu0
        %v5344 = vadd.f32 %v2069, %v5343
        %v5345 = vpop.f32.mrb[0].mxu0
        %5346 = vdwg.mxu0
        %s5347 = scalar_lea.vmem %s355, 128 [#allocation11]
        %5348 = vst [vmem:[%s5347] sm:$0xff] %v5317
        %5349 = vst [vmem:[%s5347 + $0x8] sm:$0xff] %v5320
        %5350 = vst [vmem:[%s5347 + $0x10] sm:$0xff] %v5325
        %5351 = vst [vmem:[%s5347 + $0x18] sm:$0xff] %v5328
        %5352 = vst [vmem:[%s5347 + $0x20] sm:$0xff] %v5333
        %5353 = vst [vmem:[%s5347 + $0x28] sm:$0xff] %v5336
        %5354 = vst [vmem:[%s5347 + $0x30] sm:$0xff] %v5341
        %5355 = vst [vmem:[%s5347 + $0x38] sm:$0xff] %v5344
        %s5356 = scalar_lea.vmem %s309, 96 [#allocation2]
        %v5357 = vld [vmem:[%s5356] sm:$0xf]
        %v5358 = vld [vmem:[%s5356 + $0x4] sm:$0xf]
        %v5359 = vld [vmem:[%s5356 + $0x8] sm:$0xf]
        %v5360 = vld [vmem:[%s5356 + $0xc] sm:$0xf]
        %v5361 = vld [vmem:[%s5356 + $0x10] sm:$0xf]
        %v5362 = vld [vmem:[%s5356 + $0x14] sm:$0xf]
        %v5363 = vld [vmem:[%s5356 + $0x18] sm:$0xf]
        %v5364 = vld [vmem:[%s5356 + $0x1c] sm:$0xf]
        %v5373 = vunpack.c.l.b16 %v5357
        %v5374 = vunpack.c.l.b16 %v5358
        %v5375 = vunpack.c.l.b16 %v5359
        %v5376 = vunpack.c.l.b16 %v5360
        %v5377 = vunpack.c.l.b16 %v5361
        %v5378 = vunpack.c.l.b16 %v5362
        %v5379 = vunpack.c.l.b16 %v5363
        %v5380 = vunpack.c.l.b16 %v5364
        %v5381 = vpack.c.b16 %v5374, %v5373
        %v5382 = vpack.c.b16 %v5376, %v5375
        %v5383 = vpack.c.b16 %v5378, %v5377
        %v5384 = vpack.c.b16 %v5380, %v5379
        %5389 = vmatprep.subr.bf16.mxu0 %v538
        %5390 = vmatpush1.bf16.msra.mxu0 %v537
        %5391 = vmatprep.subr.bf16.mxu0 %v541
        %5392 = vmatpush1.bf16.msra.mxu0 %v540
        %5393 = vmatprep.subr.bf16.mxu0 %v544
        %5394 = vmatpush1.bf16.msra.mxu0 %v543
        %5395 = vmatprep.subr.bf16.mxu0 %v547
        %5396 = vmatpush1.bf16.msra.mxu0 %v546
        %5397 = vmatprep.subr.bf16.mxu0 %v550
        %5398 = vmatpush1.bf16.msra.mxu0 %v549
        %5399 = vmatprep.subr.bf16.mxu0 %v553
        %5400 = vmatpush1.bf16.msra.mxu0 %v552
        %5401 = vmatprep.subr.bf16.mxu0 %v556
        %5402 = vmatpush1.bf16.msra.mxu0 %v555
        %5403 = vmatprep.subr.bf16.mxu0 %v559
        %5404 = vmatpush1.bf16.msra.mxu0 %v558
        %5405 = vmatprep.subr.bf16.mxu0 0
        %5406 = vmatpush1.bf16.msra.mxu0 0
        %5407 = vmatprep.subr.bf16.mxu0 0
        %5408 = vmatpush1.bf16.msra.mxu0 0
        %5409 = vmatprep.subr.bf16.mxu0 0
        %5410 = vmatpush1.bf16.msra.mxu0 0
        %5411 = vmatprep.subr.bf16.mxu0 0
        %5412 = vmatpush1.bf16.msra.mxu0 0
        %5413 = vmatprep.subr.bf16.mxu0 0
        %5414 = vmatpush1.bf16.msra.mxu0 0
        %5415 = vmatprep.subr.bf16.mxu0 0
        %5416 = vmatpush1.bf16.msra.mxu0 0
        %5417 = vmatprep.subr.bf16.mxu0 0
        %5418 = vmatpush1.bf16.msra.mxu0 0
        %5419 = vmatprep.subr.bf16.mxu0 0
        %5420 = vmatpush1.bf16.msra.mxu0 0
        %5421 = vmatprep.mubr.bf16.mxu0 0
        %5422 = vmatmul.mubr.bf16.gmra.mrb[0].mxu0 %v5381
        %v5423 = vpop.f32.mrb[0].mxu0
        %v5424 = vadd.f32 %v421, %v5423
        %v5425 = vpop.f32.mrb[0].mxu0
        %v5426 = vadd.f32 %v425, %v5425
        %v5427 = vpop.f32.mrb[0].mxu0
        %v5428 = vadd.f32 %v421, %v5427
        %v5429 = vpop.f32.mrb[0].mxu0
        %v5430 = vadd.f32 %v425, %v5429
        %5431 = vmatprep.mubr.bf16.mxu0 0
        %5432 = vmatmul.mubr.bf16.gmra.mrb[0].mxu0 %v5382
        %v5433 = vpop.f32.mrb[0].mxu0
        %v5434 = vadd.f32 %v421, %v5433
        %v5435 = vpop.f32.mrb[0].mxu0
        %v5436 = vadd.f32 %v425, %v5435
        %v5437 = vpop.f32.mrb[0].mxu0
        %v5438 = vadd.f32 %v421, %v5437
        %v5439 = vpop.f32.mrb[0].mxu0
        %v5440 = vadd.f32 %v425, %v5439
        %5441 = vmatprep.mubr.bf16.mxu0 0
        %5442 = vmatmul.mubr.bf16.gmra.mrb[0].mxu0 %v5383
        %v5443 = vpop.f32.mrb[0].mxu0
        %v5444 = vadd.f32 %v421, %v5443
        %v5445 = vpop.f32.mrb[0].mxu0
        %v5446 = vadd.f32 %v425, %v5445
        %v5447 = vpop.f32.mrb[0].mxu0
        %v5448 = vadd.f32 %v421, %v5447
        %v5449 = vpop.f32.mrb[0].mxu0
        %v5450 = vadd.f32 %v425, %v5449
        %5451 = vmatprep.mubr.bf16.mxu0 0
        %5452 = vmatmul.mubr.bf16.gmra.mrb[0].mxu0 %v5384
        %v5453 = vpop.f32.mrb[0].mxu0
        %v5454 = vadd.f32 %v421, %v5453
        %v5455 = vpop.f32.mrb[0].mxu0
        %v5456 = vadd.f32 %v425, %v5455
        %v5457 = vpop.f32.mrb[0].mxu0
        %v5458 = vadd.f32 %v421, %v5457
        %v5459 = vpop.f32.mrb[0].mxu0
        %v5460 = vadd.f32 %v425, %v5459
        %5461 = vdwg.mxu0
        %5462 = vmatprep.subr.bf16.mxu0 0
        %5463 = vmatpush1.bf16.msra.mxu0 %v539
        %5464 = vmatprep.subr.bf16.mxu0 0
        %5465 = vmatpush1.bf16.msra.mxu0 %v542
        %5466 = vmatprep.subr.bf16.mxu0 0
        %5467 = vmatpush1.bf16.msra.mxu0 %v545
        %5468 = vmatprep.subr.bf16.mxu0 0
        %5469 = vmatpush1.bf16.msra.mxu0 %v548
        %5470 = vmatprep.subr.bf16.mxu0 0
        %5471 = vmatpush1.bf16.msra.mxu0 %v551
        %5472 = vmatprep.subr.bf16.mxu0 0
        %5473 = vmatpush1.bf16.msra.mxu0 %v554
        %5474 = vmatprep.subr.bf16.mxu0 0
        %5475 = vmatpush1.bf16.msra.mxu0 %v557
        %5476 = vmatprep.subr.bf16.mxu0 0
        %5477 = vmatpush1.bf16.msra.mxu0 %v560
        %5478 = vmatprep.subr.bf16.mxu0 0
        %5479 = vmatpush1.bf16.msra.mxu0 0
        %5480 = vmatprep.subr.bf16.mxu0 0
        %5481 = vmatpush1.bf16.msra.mxu0 0
        %5482 = vmatprep.subr.bf16.mxu0 0
        %5483 = vmatpush1.bf16.msra.mxu0 0
        %5484 = vmatprep.subr.bf16.mxu0 0
        %5485 = vmatpush1.bf16.msra.mxu0 0
        %5486 = vmatprep.subr.bf16.mxu0 0
        %5487 = vmatpush1.bf16.msra.mxu0 0
        %5488 = vmatprep.subr.bf16.mxu0 0
        %5489 = vmatpush1.bf16.msra.mxu0 0
        %5490 = vmatprep.subr.bf16.mxu0 0
        %5491 = vmatpush1.bf16.msra.mxu0 0
        %5492 = vmatprep.subr.bf16.mxu0 0
        %5493 = vmatpush1.bf16.msra.mxu0 0
        %5494 = vmatprep.mubr.bf16.mxu0 0
        %5495 = vmatmul.mubr.bf16.gmra.mrb[0].mxu0 %v5381
        %v5496 = vpop.f32.mrb[0].mxu0
        %v5497 = vadd.f32 %v429, %v5496
        %v5498 = vpop.f32.mrb[0].mxu0
        %v5499 = vpop.f32.mrb[0].mxu0
        %v5500 = vadd.f32 %v429, %v5499
        %v5501 = vpop.f32.mrb[0].mxu0
        %5502 = vmatprep.mubr.bf16.mxu0 0
        %5503 = vmatmul.mubr.bf16.gmra.mrb[0].mxu0 %v5382
        %v5504 = vpop.f32.mrb[0].mxu0
        %v5505 = vadd.f32 %v429, %v5504
        %v5506 = vpop.f32.mrb[0].mxu0
        %v5507 = vpop.f32.mrb[0].mxu0
        %v5508 = vadd.f32 %v429, %v5507
        %v5509 = vpop.f32.mrb[0].mxu0
        %5510 = vmatprep.mubr.bf16.mxu0 0
        %5511 = vmatmul.mubr.bf16.gmra.mrb[0].mxu0 %v5383
        %v5512 = vpop.f32.mrb[0].mxu0
        %v5513 = vadd.f32 %v429, %v5512
        %v5514 = vpop.f32.mrb[0].mxu0
        %v5515 = vpop.f32.mrb[0].mxu0
        %v5516 = vadd.f32 %v429, %v5515
        %v5517 = vpop.f32.mrb[0].mxu0
        %5518 = vmatprep.mubr.bf16.mxu0 0
        %5519 = vmatmul.mubr.bf16.gmra.mrb[0].mxu0 %v5384
        %v5520 = vpop.f32.mrb[0].mxu0
        %v5521 = vadd.f32 %v429, %v5520
        %v5522 = vpop.f32.mrb[0].mxu0
        %v5523 = vpop.f32.mrb[0].mxu0
        %v5524 = vadd.f32 %v429, %v5523
        %v5525 = vpop.f32.mrb[0].mxu0
        %5526 = vdwg.mxu0
        %s5527 = scalar_lea.vmem [#allocation10], 192
        %v5528 = vld [vmem:[%s5527] sm:$0xff]
        %v5529 = vld [vmem:[%s5527 + $0x8] sm:$0xff]
        %v5530 = vld [vmem:[%s5527 + $0x10] sm:$0xff]
        %v5531 = vld [vmem:[%s5527 + $0x18] sm:$0xff]
        %v5532 = vld [vmem:[%s5527 + $0x20] sm:$0xff]
        %v5533 = vld [vmem:[%s5527 + $0x28] sm:$0xff]
        %v5534 = vld [vmem:[%s5527 + $0x30] sm:$0xff]
        %v5535 = vld [vmem:[%s5527 + $0x38] sm:$0xff]
        %v5536 = vpack.c.bf16 %v5428, %v5424
        %v5537 = vpack.c.bf16 %v5438, %v5434
        %v5538 = vpack.c.bf16 %v5448, %v5444
        %v5539 = vpack.c.bf16 %v5458, %v5454
        %v5540 = vpack.c.bf16 %v5430, %v5426
        %v5541 = vpack.c.bf16 %v5440, %v5436
        %v5542 = vpack.c.bf16 %v5450, %v5446
        %v5543 = vpack.c.bf16 %v5460, %v5456
        %v5544 = vpack.c.bf16 %v5500, %v5497
        %v5545 = vpack.c.bf16 %v5508, %v5505
        %v5546 = vpack.c.bf16 %v5516, %v5513
        %v5547 = vpack.c.bf16 %v5524, %v5521
        %v5548 = vld [vmem:[#allocation8] sm:$0xff]
        %v5549 = vld [vmem:[#allocation8 + $0x8] sm:$0xff]
        %v5550 = vld [vmem:[#allocation8 + $0x10] sm:$0xff]
        %v5551 = vld [vmem:[#allocation8 + $0x18] sm:$0xff]
        %v5552 = vld [vmem:[#allocation8 + $0x20] sm:$0xff]
        %v5553 = vld [vmem:[#allocation8 + $0x28] sm:$0xff]
        %v5554 = vld [vmem:[#allocation8 + $0x30] sm:$0xff]
        %v5555 = vld [vmem:[#allocation8 + $0x38] sm:$0xff]
        %v5557 = vsel %vm751, %v5536, 0
        %v5560 = vsel %vm751, %v5537, 0
        %v5563 = vsel %vm751, %v5538, 0
        %v5566 = vsel %vm751, %v5539, 0
        %v5569 = vsel %vm751, %v5540, 0
        %v5572 = vsel %vm751, %v5541, 0
        %v5575 = vsel %vm751, %v5542, 0
        %v5578 = vsel %vm751, %v5543, 0
        %5580 = vmatprep.subr.bf16.mxu0 0
        %5581 = vmatpush1.bf16.xpose.msra.mxu0 %v5569
        %5582 = vmatprep.subr.bf16.mxu0 0
        %5583 = vmatpush1.bf16.xpose.msra.mxu0 %v5572
        %5584 = vmatprep.subr.bf16.mxu0 0
        %5585 = vmatpush1.bf16.xpose.msra.mxu0 %v5575
        %5586 = vmatprep.subr.bf16.mxu0 0
        %5587 = vmatpush1.bf16.xpose.msra.mxu0 %v5578
        %5588 = vmatprep.subr.bf16.mxu0 0
        %5589 = vmatpush1.bf16.xpose.msra.mxu0 0
        %5590 = vmatprep.subr.bf16.mxu0 0
        %5591 = vmatpush1.bf16.xpose.msra.mxu0 0
        %5592 = vmatprep.subr.bf16.mxu0 0
        %5593 = vmatpush1.bf16.xpose.msra.mxu0 0
        %5594 = vmatprep.subr.bf16.mxu0 0
        %5595 = vmatpush1.bf16.xpose.msra.mxu0 0
        %5596 = vmatprep.subr.bf16.mxu0 0
        %5597 = vmatpush1.bf16.xpose.msra.mxu0 0
        %5598 = vmatprep.subr.bf16.mxu0 0
        %5599 = vmatpush1.bf16.xpose.msra.mxu0 0
        %5600 = vmatprep.subr.bf16.mxu0 0
        %5601 = vmatpush1.bf16.xpose.msra.mxu0 0
        %5602 = vmatprep.subr.bf16.mxu0 0
        %5603 = vmatpush1.bf16.xpose.msra.mxu0 0
        %5604 = vmatprep.subr.bf16.mxu0 0
        %5605 = vmatpush1.bf16.xpose.msra.mxu0 0
        %5606 = vmatprep.subr.bf16.mxu0 0
        %5607 = vmatpush1.bf16.xpose.msra.mxu0 0
        %5608 = vmatprep.subr.bf16.mxu0 0
        %5609 = vmatpush1.bf16.xpose.msra.mxu0 0
        %5610 = vmatprep.subr.bf16.mxu0 0
        %5611 = vmatpush1.bf16.xpose.msra.mxu0 0
        %5612 = vmatprep.mubr.bf16.mxu0 0
        %5613 = vmatmul.mubr.bf16.gmra.mrb[0].mxu0 %v5557
        %v5614 = vpop.f32.mrb[0].mxu0
        %v5615 = vadd.f32 %v5548, %v5614
        %v5616 = vpop.f32.mrb[0].mxu0
        %v5617 = vpop.f32.mrb[0].mxu0
        %v5618 = vadd.f32 %v5549, %v5617
        %v5619 = vpop.f32.mrb[0].mxu0
        %5620 = vmatprep.mubr.bf16.mxu0 0
        %5621 = vmatmul.mubr.bf16.gmra.mrb[0].mxu0 %v5560
        %v5622 = vpop.f32.mrb[0].mxu0
        %v5623 = vadd.f32 %v5550, %v5622
        %v5624 = vpop.f32.mrb[0].mxu0
        %v5625 = vpop.f32.mrb[0].mxu0
        %v5626 = vadd.f32 %v5551, %v5625
        %v5627 = vpop.f32.mrb[0].mxu0
        %5628 = vmatprep.mubr.bf16.mxu0 0
        %5629 = vmatmul.mubr.bf16.gmra.mrb[0].mxu0 %v5563
        %v5630 = vpop.f32.mrb[0].mxu0
        %v5631 = vadd.f32 %v5552, %v5630
        %v5632 = vpop.f32.mrb[0].mxu0
        %v5633 = vpop.f32.mrb[0].mxu0
        %v5634 = vadd.f32 %v5553, %v5633
        %v5635 = vpop.f32.mrb[0].mxu0
        %5636 = vmatprep.mubr.bf16.mxu0 0
        %5637 = vmatmul.mubr.bf16.gmra.mrb[0].mxu0 %v5566
        %v5638 = vpop.f32.mrb[0].mxu0
        %v5639 = vadd.f32 %v5554, %v5638
        %v5640 = vpop.f32.mrb[0].mxu0
        %v5641 = vpop.f32.mrb[0].mxu0
        %v5642 = vadd.f32 %v5555, %v5641
        %v5643 = vpop.f32.mrb[0].mxu0
        %5644 = vdwg.mxu0
        %v5645 = vadd.f32 %v5615, %v5528
        %v5646 = vadd.f32 %v5618, %v5529
        %v5647 = vadd.f32 %v5623, %v5530
        %v5648 = vadd.f32 %v5626, %v5531
        %v5649 = vadd.f32 %v5631, %v5532
        %v5650 = vadd.f32 %v5634, %v5533
        %v5651 = vadd.f32 %v5639, %v5534
        %v5652 = vadd.f32 %v5642, %v5535
        %v5653 = vsel %vm849, %v5645, -inf
        %5654 = vmax.xlane.f32.xlu0 %v5653
        %v5655 = vpop.xlane.xlu0 %5654
        %v5656 = vsel %vm849, %v5646, -inf
        %5657 = vmax.xlane.f32.xlu0 %v5656
        %v5658 = vpop.xlane.xlu0 %5657
        %v5659 = vsel %vm849, %v5647, -inf
        %5660 = vmax.xlane.f32.xlu0 %v5659
        %v5661 = vpop.xlane.xlu0 %5660
        %v5662 = vsel %vm849, %v5648, -inf
        %5663 = vmax.xlane.f32.xlu0 %v5662
        %v5664 = vpop.xlane.xlu0 %5663
        %v5665 = vsel %vm849, %v5649, -inf
        %5666 = vmax.xlane.f32.xlu0 %v5665
        %v5667 = vpop.xlane.xlu0 %5666
        %v5668 = vsel %vm849, %v5650, -inf
        %5669 = vmax.xlane.f32.xlu0 %v5668
        %v5670 = vpop.xlane.xlu0 %5669
        %v5671 = vsel %vm849, %v5651, -inf
        %5672 = vmax.xlane.f32.xlu0 %v5671
        %v5673 = vpop.xlane.xlu0 %5672
        %v5674 = vsel %vm849, %v5652, -inf
        %5675 = vmax.xlane.f32.xlu0 %v5674
        %v5676 = vpop.xlane.xlu0 %5675
        %v5677 = vsub.f32 %v5645, %v5655
        %v5678 = vsub.f32 %v5646, %v5658
        %v5679 = vsub.f32 %v5647, %v5661
        %v5680 = vsub.f32 %v5648, %v5664
        %v5681 = vsub.f32 %v5649, %v5667
        %v5682 = vsub.f32 %v5650, %v5670
        %v5683 = vsub.f32 %v5651, %v5673
        %v5684 = vsub.f32 %v5652, %v5676
        %v5685 = vmul.f32 %v5677, 1.442695
        %v5686 = vpow.pop %v5685
        %v5687 = vmul.f32 %v5678, 1.442695
        %v5688 = vpow.pop %v5687
        %v5689 = vmul.f32 %v5679, 1.442695
        %v5690 = vpow.pop %v5689
        %v5691 = vmul.f32 %v5680, 1.442695
        %v5692 = vpow.pop %v5691
        %v5693 = vmul.f32 %v5681, 1.442695
        %v5694 = vpow.pop %v5693
        %v5695 = vmul.f32 %v5682, 1.442695
        %v5696 = vpow.pop %v5695
        %v5697 = vmul.f32 %v5683, 1.442695
        %v5698 = vpow.pop %v5697
        %v5699 = vmul.f32 %v5684, 1.442695
        %v5700 = vpow.pop %v5699
        %v5701 = vsel %vm849, %v5686, 0.0
        %5702 = vadd.xlane.f32.xlu0 %v5701
        %v5703 = vpop.xlane.xlu0 %5702
        %v5704 = vsel %vm849, %v5688, 0.0
        %5705 = vadd.xlane.f32.xlu0 %v5704
        %v5706 = vpop.xlane.xlu0 %5705
        %v5707 = vsel %vm849, %v5690, 0.0
        %5708 = vadd.xlane.f32.xlu0 %v5707
        %v5709 = vpop.xlane.xlu0 %5708
        %v5710 = vsel %vm849, %v5692, 0.0
        %5711 = vadd.xlane.f32.xlu0 %v5710
        %v5712 = vpop.xlane.xlu0 %5711
        %v5713 = vsel %vm849, %v5694, 0.0
        %5714 = vadd.xlane.f32.xlu0 %v5713
        %v5715 = vpop.xlane.xlu0 %5714
        %v5716 = vsel %vm849, %v5696, 0.0
        %5717 = vadd.xlane.f32.xlu0 %v5716
        %v5718 = vpop.xlane.xlu0 %5717
        %v5719 = vsel %vm849, %v5698, 0.0
        %5720 = vadd.xlane.f32.xlu0 %v5719
        %v5721 = vpop.xlane.xlu0 %5720
        %v5722 = vsel %vm849, %v5700, 0.0
        %5723 = vadd.xlane.f32.xlu0 %v5722
        %v5724 = vpop.xlane.xlu0 %5723
        %v5725 = vrcp.pop %v5703
        %v5726 = vrcp.pop %v5706
        %v5727 = vrcp.pop %v5709
        %v5728 = vrcp.pop %v5712
        %v5729 = vrcp.pop %v5715
        %v5730 = vrcp.pop %v5718
        %v5731 = vrcp.pop %v5721
        %v5732 = vrcp.pop %v5724
        %v5733 = vmul.f32 %v5686, %v5725
        %v5734 = vmul.f32 %v5688, %v5726
        %v5735 = vmul.f32 %v5690, %v5727
        %v5736 = vmul.f32 %v5692, %v5728
        %v5737 = vmul.f32 %v5694, %v5729
        %v5738 = vmul.f32 %v5696, %v5730
        %v5739 = vmul.f32 %v5698, %v5731
        %v5740 = vmul.f32 %v5700, %v5732
        %v5741 = vpack.c.bf16 %v5734, %v5733
        %v5742 = vpack.c.bf16 %v5736, %v5735
        %v5743 = vpack.c.bf16 %v5738, %v5737
        %v5744 = vpack.c.bf16 %v5740, %v5739
        %v5746 = vsel %vm849, %v5741, 0
        %v5749 = vsel %vm849, %v5742, 0
        %v5752 = vsel %vm849, %v5743, 0
        %v5755 = vsel %vm849, %v5744, 0
        %5757 = vmatprep.subr.bf16.mxu0 0
        %5758 = vmatpush1.bf16.msra.mxu0 %v5544
        %5759 = vmatprep.subr.bf16.mxu0 0
        %5760 = vmatpush1.bf16.msra.mxu0 %v5545
        %5761 = vmatprep.subr.bf16.mxu0 0
        %5762 = vmatpush1.bf16.msra.mxu0 %v5546
        %5763 = vmatprep.subr.bf16.mxu0 0
        %5764 = vmatpush1.bf16.msra.mxu0 %v5547
        %5765 = vmatprep.subr.bf16.mxu0 0
        %5766 = vmatpush1.bf16.msra.mxu0 0
        %5767 = vmatprep.subr.bf16.mxu0 0
        %5768 = vmatpush1.bf16.msra.mxu0 0
        %5769 = vmatprep.subr.bf16.mxu0 0
        %5770 = vmatpush1.bf16.msra.mxu0 0
        %5771 = vmatprep.subr.bf16.mxu0 0
        %5772 = vmatpush1.bf16.msra.mxu0 0
        %5773 = vmatprep.subr.bf16.mxu0 0
        %5774 = vmatpush1.bf16.msra.mxu0 0
        %5775 = vmatprep.subr.bf16.mxu0 0
        %5776 = vmatpush1.bf16.msra.mxu0 0
        %5777 = vmatprep.subr.bf16.mxu0 0
        %5778 = vmatpush1.bf16.msra.mxu0 0
        %5779 = vmatprep.subr.bf16.mxu0 0
        %5780 = vmatpush1.bf16.msra.mxu0 0
        %5781 = vmatprep.subr.bf16.mxu0 0
        %5782 = vmatpush1.bf16.msra.mxu0 0
        %5783 = vmatprep.subr.bf16.mxu0 0
        %5784 = vmatpush1.bf16.msra.mxu0 0
        %5785 = vmatprep.subr.bf16.mxu0 0
        %5786 = vmatpush1.bf16.msra.mxu0 0
        %5787 = vmatprep.subr.bf16.mxu0 0
        %5788 = vmatpush1.bf16.msra.mxu0 0
        %5789 = vmatprep.mubr.bf16.mxu0 0
        %5790 = vmatmul.mubr.bf16.gmra.mrb[0].mxu0 %v5746
        %v5791 = vpop.f32.mrb[0].mxu0
        %v5792 = vadd.f32 0.0, %v5791
        %v5793 = vpop.f32.mrb[0].mxu0
        %v5794 = vpop.f32.mrb[0].mxu0
        %v5795 = vadd.f32 0.0, %v5794
        %v5796 = vpop.f32.mrb[0].mxu0
        %5797 = vmatprep.mubr.bf16.mxu0 0
        %5798 = vmatmul.mubr.bf16.gmra.mrb[0].mxu0 %v5749
        %v5799 = vpop.f32.mrb[0].mxu0
        %v5800 = vadd.f32 0.0, %v5799
        %v5801 = vpop.f32.mrb[0].mxu0
        %v5802 = vpop.f32.mrb[0].mxu0
        %v5803 = vadd.f32 0.0, %v5802
        %v5804 = vpop.f32.mrb[0].mxu0
        %5805 = vmatprep.mubr.bf16.mxu0 0
        %5806 = vmatmul.mubr.bf16.gmra.mrb[0].mxu0 %v5752
        %v5807 = vpop.f32.mrb[0].mxu0
        %v5808 = vadd.f32 0.0, %v5807
        %v5809 = vpop.f32.mrb[0].mxu0
        %v5810 = vpop.f32.mrb[0].mxu0
        %v5811 = vadd.f32 0.0, %v5810
        %v5812 = vpop.f32.mrb[0].mxu0
        %5813 = vmatprep.mubr.bf16.mxu0 0
        %5814 = vmatmul.mubr.bf16.gmra.mrb[0].mxu0 %v5755
        %v5815 = vpop.f32.mrb[0].mxu0
        %v5816 = vadd.f32 0.0, %v5815
        %v5817 = vpop.f32.mrb[0].mxu0
        %v5818 = vpop.f32.mrb[0].mxu0
        %v5819 = vadd.f32 0.0, %v5818
        %v5820 = vpop.f32.mrb[0].mxu0
        %5821 = vdwg.mxu0
        %v5822 = vld [vmem:[%s1019] sm:$0xff]
        %v5823 = vld [vmem:[%s1019 + $0x8] sm:$0xff]
        %v5824 = vld [vmem:[%s1019 + $0x10] sm:$0xff]
        %v5825 = vld [vmem:[%s1019 + $0x18] sm:$0xff]
        %v5826 = vld [vmem:[%s1019 + $0x20] sm:$0xff]
        %v5827 = vld [vmem:[%s1019 + $0x28] sm:$0xff]
        %v5828 = vld [vmem:[%s1019 + $0x30] sm:$0xff]
        %v5829 = vld [vmem:[%s1019 + $0x38] sm:$0xff]
        %5834 = vrot.lane.b32.xlu0 %v5536, 96
        %v5835 = vpop.permute.xlu0 %5834
        %5836 = vrot.lane.b32.xlu0 %v5537, 96
        %v5837 = vpop.permute.xlu0 %5836
        %5838 = vrot.lane.b32.xlu0 %v5538, 96
        %v5839 = vpop.permute.xlu0 %5838
        %5840 = vrot.lane.b32.xlu0 %v5539, 96
        %v5841 = vpop.permute.xlu0 %5840
        %5846 = vrot.lane.b32.xlu0 %v5540, 96
        %v5847 = vpop.permute.xlu0 %5846
        %5848 = vrot.lane.b32.xlu0 %v5541, 96
        %v5849 = vpop.permute.xlu0 %5848
        %5850 = vrot.lane.b32.xlu0 %v5542, 96
        %v5851 = vpop.permute.xlu0 %5850
        %5852 = vrot.lane.b32.xlu0 %v5543, 96
        %v5853 = vpop.permute.xlu0 %5852
        %v5855 = vsel %vm751, %v5835, 0
        %v5858 = vsel %vm751, %v5837, 0
        %v5861 = vsel %vm751, %v5839, 0
        %v5864 = vsel %vm751, %v5841, 0
        %v5867 = vsel %vm751, %v5847, 0
        %v5870 = vsel %vm751, %v5849, 0
        %v5873 = vsel %vm751, %v5851, 0
        %v5876 = vsel %vm751, %v5853, 0
        %5878 = vmatprep.subr.bf16.mxu0 0
        %5879 = vmatpush1.bf16.xpose.msra.mxu0 %v5867
        %5880 = vmatprep.subr.bf16.mxu0 0
        %5881 = vmatpush1.bf16.xpose.msra.mxu0 %v5870
        %5882 = vmatprep.subr.bf16.mxu0 0
        %5883 = vmatpush1.bf16.xpose.msra.mxu0 %v5873
        %5884 = vmatprep.subr.bf16.mxu0 0
        %5885 = vmatpush1.bf16.xpose.msra.mxu0 %v5876
        %5886 = vmatprep.subr.bf16.mxu0 0
        %5887 = vmatpush1.bf16.xpose.msra.mxu0 0
        %5888 = vmatprep.subr.bf16.mxu0 0
        %5889 = vmatpush1.bf16.xpose.msra.mxu0 0
        %5890 = vmatprep.subr.bf16.mxu0 0
        %5891 = vmatpush1.bf16.xpose.msra.mxu0 0
        %5892 = vmatprep.subr.bf16.mxu0 0
        %5893 = vmatpush1.bf16.xpose.msra.mxu0 0
        %5894 = vmatprep.subr.bf16.mxu0 0
        %5895 = vmatpush1.bf16.xpose.msra.mxu0 0
        %5896 = vmatprep.subr.bf16.mxu0 0
        %5897 = vmatpush1.bf16.xpose.msra.mxu0 0
        %5898 = vmatprep.subr.bf16.mxu0 0
        %5899 = vmatpush1.bf16.xpose.msra.mxu0 0
        %5900 = vmatprep.subr.bf16.mxu0 0
        %5901 = vmatpush1.bf16.xpose.msra.mxu0 0
        %5902 = vmatprep.subr.bf16.mxu0 0
        %5903 = vmatpush1.bf16.xpose.msra.mxu0 0
        %5904 = vmatprep.subr.bf16.mxu0 0
        %5905 = vmatpush1.bf16.xpose.msra.mxu0 0
        %5906 = vmatprep.subr.bf16.mxu0 0
        %5907 = vmatpush1.bf16.xpose.msra.mxu0 0
        %5908 = vmatprep.subr.bf16.mxu0 0
        %5909 = vmatpush1.bf16.xpose.msra.mxu0 0
        %5910 = vmatprep.mubr.bf16.mxu0 0
        %5911 = vmatmul.mubr.bf16.gmra.mrb[0].mxu0 %v5855
        %v5912 = vpop.f32.mrb[0].mxu0
        %v5913 = vadd.f32 %v5822, %v5912
        %v5914 = vpop.f32.mrb[0].mxu0
        %v5915 = vpop.f32.mrb[0].mxu0
        %v5916 = vadd.f32 %v5823, %v5915
        %v5917 = vpop.f32.mrb[0].mxu0
        %5918 = vmatprep.mubr.bf16.mxu0 0
        %5919 = vmatmul.mubr.bf16.gmra.mrb[0].mxu0 %v5858
        %v5920 = vpop.f32.mrb[0].mxu0
        %v5921 = vadd.f32 %v5824, %v5920
        %v5922 = vpop.f32.mrb[0].mxu0
        %v5923 = vpop.f32.mrb[0].mxu0
        %v5924 = vadd.f32 %v5825, %v5923
        %v5925 = vpop.f32.mrb[0].mxu0
        %5926 = vmatprep.mubr.bf16.mxu0 0
        %5927 = vmatmul.mubr.bf16.gmra.mrb[0].mxu0 %v5861
        %v5928 = vpop.f32.mrb[0].mxu0
        %v5929 = vadd.f32 %v5826, %v5928
        %v5930 = vpop.f32.mrb[0].mxu0
        %v5931 = vpop.f32.mrb[0].mxu0
        %v5932 = vadd.f32 %v5827, %v5931
        %v5933 = vpop.f32.mrb[0].mxu0
        %5934 = vmatprep.mubr.bf16.mxu0 0
        %5935 = vmatmul.mubr.bf16.gmra.mrb[0].mxu0 %v5864
        %v5936 = vpop.f32.mrb[0].mxu0
        %v5937 = vadd.f32 %v5828, %v5936
        %v5938 = vpop.f32.mrb[0].mxu0
        %v5939 = vpop.f32.mrb[0].mxu0
        %v5940 = vadd.f32 %v5829, %v5939
        %v5941 = vpop.f32.mrb[0].mxu0
        %5942 = vdwg.mxu0
        %v5943 = vadd.f32 %v5913, %v5528
        %v5944 = vadd.f32 %v5916, %v5529
        %v5945 = vadd.f32 %v5921, %v5530
        %v5946 = vadd.f32 %v5924, %v5531
        %v5947 = vadd.f32 %v5929, %v5532
        %v5948 = vadd.f32 %v5932, %v5533
        %v5949 = vadd.f32 %v5937, %v5534
        %v5950 = vadd.f32 %v5940, %v5535
        %v5951 = vsel %vm849, %v5943, -inf
        %5952 = vmax.xlane.f32.xlu0 %v5951
        %v5953 = vpop.xlane.xlu0 %5952
        %v5954 = vsel %vm849, %v5944, -inf
        %5955 = vmax.xlane.f32.xlu0 %v5954
        %v5956 = vpop.xlane.xlu0 %5955
        %v5957 = vsel %vm849, %v5945, -inf
        %5958 = vmax.xlane.f32.xlu0 %v5957
        %v5959 = vpop.xlane.xlu0 %5958
        %v5960 = vsel %vm849, %v5946, -inf
        %5961 = vmax.xlane.f32.xlu0 %v5960
        %v5962 = vpop.xlane.xlu0 %5961
        %v5963 = vsel %vm849, %v5947, -inf
        %5964 = vmax.xlane.f32.xlu0 %v5963
        %v5965 = vpop.xlane.xlu0 %5964
        %v5966 = vsel %vm849, %v5948, -inf
        %5967 = vmax.xlane.f32.xlu0 %v5966
        %v5968 = vpop.xlane.xlu0 %5967
        %v5969 = vsel %vm849, %v5949, -inf
        %5970 = vmax.xlane.f32.xlu0 %v5969
        %v5971 = vpop.xlane.xlu0 %5970
        %v5972 = vsel %vm849, %v5950, -inf
        %5973 = vmax.xlane.f32.xlu0 %v5972
        %v5974 = vpop.xlane.xlu0 %5973
        %v5975 = vsub.f32 %v5943, %v5953
        %v5976 = vsub.f32 %v5944, %v5956
        %v5977 = vsub.f32 %v5945, %v5959
        %v5978 = vsub.f32 %v5946, %v5962
        %v5979 = vsub.f32 %v5947, %v5965
        %v5980 = vsub.f32 %v5948, %v5968
        %v5981 = vsub.f32 %v5949, %v5971
        %v5982 = vsub.f32 %v5950, %v5974
        %v5983 = vmul.f32 %v5975, 1.442695
        %v5984 = vpow.pop %v5983
        %v5985 = vmul.f32 %v5976, 1.442695
        %v5986 = vpow.pop %v5985
        %v5987 = vmul.f32 %v5977, 1.442695
        %v5988 = vpow.pop %v5987
        %v5989 = vmul.f32 %v5978, 1.442695
        %v5990 = vpow.pop %v5989
        %v5991 = vmul.f32 %v5979, 1.442695
        %v5992 = vpow.pop %v5991
        %v5993 = vmul.f32 %v5980, 1.442695
        %v5994 = vpow.pop %v5993
        %v5995 = vmul.f32 %v5981, 1.442695
        %v5996 = vpow.pop %v5995
        %v5997 = vmul.f32 %v5982, 1.442695
        %v5998 = vpow.pop %v5997
        %v5999 = vsel %vm849, %v5984, 0.0
        %6000 = vadd.xlane.f32.xlu0 %v5999
        %v6001 = vpop.xlane.xlu0 %6000
        %v6002 = vsel %vm849, %v5986, 0.0
        %6003 = vadd.xlane.f32.xlu0 %v6002
        %v6004 = vpop.xlane.xlu0 %6003
        %v6005 = vsel %vm849, %v5988, 0.0
        %6006 = vadd.xlane.f32.xlu0 %v6005
        %v6007 = vpop.xlane.xlu0 %6006
        %v6008 = vsel %vm849, %v5990, 0.0
        %6009 = vadd.xlane.f32.xlu0 %v6008
        %v6010 = vpop.xlane.xlu0 %6009
        %v6011 = vsel %vm849, %v5992, 0.0
        %6012 = vadd.xlane.f32.xlu0 %v6011
        %v6013 = vpop.xlane.xlu0 %6012
        %v6014 = vsel %vm849, %v5994, 0.0
        %6015 = vadd.xlane.f32.xlu0 %v6014
        %v6016 = vpop.xlane.xlu0 %6015
        %v6017 = vsel %vm849, %v5996, 0.0
        %6018 = vadd.xlane.f32.xlu0 %v6017
        %v6019 = vpop.xlane.xlu0 %6018
        %v6020 = vsel %vm849, %v5998, 0.0
        %6021 = vadd.xlane.f32.xlu0 %v6020
        %v6022 = vpop.xlane.xlu0 %6021
        %v6023 = vrcp.pop %v6001
        %v6024 = vrcp.pop %v6004
        %v6025 = vrcp.pop %v6007
        %v6026 = vrcp.pop %v6010
        %v6027 = vrcp.pop %v6013
        %v6028 = vrcp.pop %v6016
        %v6029 = vrcp.pop %v6019
        %v6030 = vrcp.pop %v6022
        %v6031 = vmul.f32 %v5984, %v6023
        %v6032 = vmul.f32 %v5986, %v6024
        %v6033 = vmul.f32 %v5988, %v6025
        %v6034 = vmul.f32 %v5990, %v6026
        %v6035 = vmul.f32 %v5992, %v6027
        %v6036 = vmul.f32 %v5994, %v6028
        %v6037 = vmul.f32 %v5996, %v6029
        %v6038 = vmul.f32 %v5998, %v6030
        %v6039 = vpack.c.bf16 %v6032, %v6031
        %v6040 = vpack.c.bf16 %v6034, %v6033
        %v6041 = vpack.c.bf16 %v6036, %v6035
        %v6042 = vpack.c.bf16 %v6038, %v6037
        %6047 = vrot.lane.b32.xlu0 %v5544, 96
        %v6048 = vpop.permute.xlu0 %6047
        %6049 = vrot.lane.b32.xlu0 %v5545, 96
        %v6050 = vpop.permute.xlu0 %6049
        %6051 = vrot.lane.b32.xlu0 %v5546, 96
        %v6052 = vpop.permute.xlu0 %6051
        %6053 = vrot.lane.b32.xlu0 %v5547, 96
        %v6054 = vpop.permute.xlu0 %6053
        %v6060 = vsel %vm849, %v6039, 0
        %v6063 = vsel %vm849, %v6040, 0
        %v6066 = vsel %vm849, %v6041, 0
        %v6069 = vsel %vm849, %v6042, 0
        %6071 = vmatprep.subr.bf16.mxu0 0
        %6072 = vmatpush1.bf16.msra.mxu0 %v6048
        %6073 = vmatprep.subr.bf16.mxu0 0
        %6074 = vmatpush1.bf16.msra.mxu0 %v6050
        %6075 = vmatprep.subr.bf16.mxu0 0
        %6076 = vmatpush1.bf16.msra.mxu0 %v6052
        %6077 = vmatprep.subr.bf16.mxu0 0
        %6078 = vmatpush1.bf16.msra.mxu0 %v6054
        %6079 = vmatprep.subr.bf16.mxu0 0
        %6080 = vmatpush1.bf16.msra.mxu0 0
        %6081 = vmatprep.subr.bf16.mxu0 0
        %6082 = vmatpush1.bf16.msra.mxu0 0
        %6083 = vmatprep.subr.bf16.mxu0 0
        %6084 = vmatpush1.bf16.msra.mxu0 0
        %6085 = vmatprep.subr.bf16.mxu0 0
        %6086 = vmatpush1.bf16.msra.mxu0 0
        %6087 = vmatprep.subr.bf16.mxu0 0
        %6088 = vmatpush1.bf16.msra.mxu0 0
        %6089 = vmatprep.subr.bf16.mxu0 0
        %6090 = vmatpush1.bf16.msra.mxu0 0
        %6091 = vmatprep.subr.bf16.mxu0 0
        %6092 = vmatpush1.bf16.msra.mxu0 0
        %6093 = vmatprep.subr.bf16.mxu0 0
        %6094 = vmatpush1.bf16.msra.mxu0 0
        %6095 = vmatprep.subr.bf16.mxu0 0
        %6096 = vmatpush1.bf16.msra.mxu0 0
        %6097 = vmatprep.subr.bf16.mxu0 0
        %6098 = vmatpush1.bf16.msra.mxu0 0
        %6099 = vmatprep.subr.bf16.mxu0 0
        %6100 = vmatpush1.bf16.msra.mxu0 0
        %6101 = vmatprep.subr.bf16.mxu0 0
        %6102 = vmatpush1.bf16.msra.mxu0 0
        %6103 = vmatprep.mubr.bf16.mxu0 0
        %6104 = vmatmul.mubr.bf16.gmra.mrb[0].mxu0 %v6060
        %v6105 = vpop.f32.mrb[0].mxu0
        %v6106 = vadd.f32 0.0, %v6105
        %v6107 = vpop.f32.mrb[0].mxu0
        %v6108 = vpop.f32.mrb[0].mxu0
        %v6109 = vadd.f32 0.0, %v6108
        %v6110 = vpop.f32.mrb[0].mxu0
        %6111 = vmatprep.mubr.bf16.mxu0 0
        %6112 = vmatmul.mubr.bf16.gmra.mrb[0].mxu0 %v6063
        %v6113 = vpop.f32.mrb[0].mxu0
        %v6114 = vadd.f32 0.0, %v6113
        %v6115 = vpop.f32.mrb[0].mxu0
        %v6116 = vpop.f32.mrb[0].mxu0
        %v6117 = vadd.f32 0.0, %v6116
        %v6118 = vpop.f32.mrb[0].mxu0
        %6119 = vmatprep.mubr.bf16.mxu0 0
        %6120 = vmatmul.mubr.bf16.gmra.mrb[0].mxu0 %v6066
        %v6121 = vpop.f32.mrb[0].mxu0
        %v6122 = vadd.f32 0.0, %v6121
        %v6123 = vpop.f32.mrb[0].mxu0
        %v6124 = vpop.f32.mrb[0].mxu0
        %v6125 = vadd.f32 0.0, %v6124
        %v6126 = vpop.f32.mrb[0].mxu0
        %6127 = vmatprep.mubr.bf16.mxu0 0
        %6128 = vmatmul.mubr.bf16.gmra.mrb[0].mxu0 %v6069
        %v6129 = vpop.f32.mrb[0].mxu0
        %v6130 = vadd.f32 0.0, %v6129
        %v6131 = vpop.f32.mrb[0].mxu0
        %v6132 = vpop.f32.mrb[0].mxu0
        %v6133 = vadd.f32 0.0, %v6132
        %v6134 = vpop.f32.mrb[0].mxu0
        %6135 = vdwg.mxu0
        %v6136 = vld [vmem:[%s1334] sm:$0xff]
        %v6137 = vld [vmem:[%s1334 + $0x8] sm:$0xff]
        %v6138 = vld [vmem:[%s1334 + $0x10] sm:$0xff]
        %v6139 = vld [vmem:[%s1334 + $0x18] sm:$0xff]
        %v6140 = vld [vmem:[%s1334 + $0x20] sm:$0xff]
        %v6141 = vld [vmem:[%s1334 + $0x28] sm:$0xff]
        %v6142 = vld [vmem:[%s1334 + $0x30] sm:$0xff]
        %v6143 = vld [vmem:[%s1334 + $0x38] sm:$0xff]
        %6144 = vrot.lane.b32.xlu0 %v5536, 64
        %v6145 = vpop.permute.xlu0 %6144
        %6146 = vrot.lane.b32.xlu0 %v5537, 64
        %v6147 = vpop.permute.xlu0 %6146
        %6148 = vrot.lane.b32.xlu0 %v5538, 64
        %v6149 = vpop.permute.xlu0 %6148
        %6150 = vrot.lane.b32.xlu0 %v5539, 64
        %v6151 = vpop.permute.xlu0 %6150
        %6152 = vrot.lane.b32.xlu0 %v5540, 64
        %v6153 = vpop.permute.xlu0 %6152
        %6154 = vrot.lane.b32.xlu0 %v5541, 64
        %v6155 = vpop.permute.xlu0 %6154
        %6156 = vrot.lane.b32.xlu0 %v5542, 64
        %v6157 = vpop.permute.xlu0 %6156
        %6158 = vrot.lane.b32.xlu0 %v5543, 64
        %v6159 = vpop.permute.xlu0 %6158
        %v6161 = vsel %vm751, %v6145, 0
        %v6164 = vsel %vm751, %v6147, 0
        %v6167 = vsel %vm751, %v6149, 0
        %v6170 = vsel %vm751, %v6151, 0
        %v6173 = vsel %vm751, %v6153, 0
        %v6176 = vsel %vm751, %v6155, 0
        %v6179 = vsel %vm751, %v6157, 0
        %v6182 = vsel %vm751, %v6159, 0
        %6184 = vmatprep.subr.bf16.mxu0 0
        %6185 = vmatpush1.bf16.xpose.msra.mxu0 %v6173
        %6186 = vmatprep.subr.bf16.mxu0 0
        %6187 = vmatpush1.bf16.xpose.msra.mxu0 %v6176
        %6188 = vmatprep.subr.bf16.mxu0 0
        %6189 = vmatpush1.bf16.xpose.msra.mxu0 %v6179
        %6190 = vmatprep.subr.bf16.mxu0 0
        %6191 = vmatpush1.bf16.xpose.msra.mxu0 %v6182
        %6192 = vmatprep.subr.bf16.mxu0 0
        %6193 = vmatpush1.bf16.xpose.msra.mxu0 0
        %6194 = vmatprep.subr.bf16.mxu0 0
        %6195 = vmatpush1.bf16.xpose.msra.mxu0 0
        %6196 = vmatprep.subr.bf16.mxu0 0
        %6197 = vmatpush1.bf16.xpose.msra.mxu0 0
        %6198 = vmatprep.subr.bf16.mxu0 0
        %6199 = vmatpush1.bf16.xpose.msra.mxu0 0
        %6200 = vmatprep.subr.bf16.mxu0 0
        %6201 = vmatpush1.bf16.xpose.msra.mxu0 0
        %6202 = vmatprep.subr.bf16.mxu0 0
        %6203 = vmatpush1.bf16.xpose.msra.mxu0 0
        %6204 = vmatprep.subr.bf16.mxu0 0
        %6205 = vmatpush1.bf16.xpose.msra.mxu0 0
        %6206 = vmatprep.subr.bf16.mxu0 0
        %6207 = vmatpush1.bf16.xpose.msra.mxu0 0
        %6208 = vmatprep.subr.bf16.mxu0 0
        %6209 = vmatpush1.bf16.xpose.msra.mxu0 0
        %6210 = vmatprep.subr.bf16.mxu0 0
        %6211 = vmatpush1.bf16.xpose.msra.mxu0 0
        %6212 = vmatprep.subr.bf16.mxu0 0
        %6213 = vmatpush1.bf16.xpose.msra.mxu0 0
        %6214 = vmatprep.subr.bf16.mxu0 0
        %6215 = vmatpush1.bf16.xpose.msra.mxu0 0
        %6216 = vmatprep.mubr.bf16.mxu0 0
        %6217 = vmatmul.mubr.bf16.gmra.mrb[0].mxu0 %v6161
        %v6218 = vpop.f32.mrb[0].mxu0
        %v6219 = vadd.f32 %v6136, %v6218
        %v6220 = vpop.f32.mrb[0].mxu0
        %v6221 = vpop.f32.mrb[0].mxu0
        %v6222 = vadd.f32 %v6137, %v6221
        %v6223 = vpop.f32.mrb[0].mxu0
        %6224 = vmatprep.mubr.bf16.mxu0 0
        %6225 = vmatmul.mubr.bf16.gmra.mrb[0].mxu0 %v6164
        %v6226 = vpop.f32.mrb[0].mxu0
        %v6227 = vadd.f32 %v6138, %v6226
        %v6228 = vpop.f32.mrb[0].mxu0
        %v6229 = vpop.f32.mrb[0].mxu0
        %v6230 = vadd.f32 %v6139, %v6229
        %v6231 = vpop.f32.mrb[0].mxu0
        %6232 = vmatprep.mubr.bf16.mxu0 0
        %6233 = vmatmul.mubr.bf16.gmra.mrb[0].mxu0 %v6167
        %v6234 = vpop.f32.mrb[0].mxu0
        %v6235 = vadd.f32 %v6140, %v6234
        %v6236 = vpop.f32.mrb[0].mxu0
        %v6237 = vpop.f32.mrb[0].mxu0
        %v6238 = vadd.f32 %v6141, %v6237
        %v6239 = vpop.f32.mrb[0].mxu0
        %6240 = vmatprep.mubr.bf16.mxu0 0
        %6241 = vmatmul.mubr.bf16.gmra.mrb[0].mxu0 %v6170
        %v6242 = vpop.f32.mrb[0].mxu0
        %v6243 = vadd.f32 %v6142, %v6242
        %v6244 = vpop.f32.mrb[0].mxu0
        %v6245 = vpop.f32.mrb[0].mxu0
        %v6246 = vadd.f32 %v6143, %v6245
        %v6247 = vpop.f32.mrb[0].mxu0
        %6248 = vdwg.mxu0
        %v6249 = vadd.f32 %v6219, %v5528
        %v6250 = vadd.f32 %v6222, %v5529
        %v6251 = vadd.f32 %v6227, %v5530
        %v6252 = vadd.f32 %v6230, %v5531
        %v6253 = vadd.f32 %v6235, %v5532
        %v6254 = vadd.f32 %v6238, %v5533
        %v6255 = vadd.f32 %v6243, %v5534
        %v6256 = vadd.f32 %v6246, %v5535
        %v6257 = vsel %vm849, %v6249, -inf
        %6258 = vmax.xlane.f32.xlu0 %v6257
        %v6259 = vpop.xlane.xlu0 %6258
        %v6260 = vsel %vm849, %v6250, -inf
        %6261 = vmax.xlane.f32.xlu0 %v6260
        %v6262 = vpop.xlane.xlu0 %6261
        %v6263 = vsel %vm849, %v6251, -inf
        %6264 = vmax.xlane.f32.xlu0 %v6263
        %v6265 = vpop.xlane.xlu0 %6264
        %v6266 = vsel %vm849, %v6252, -inf
        %6267 = vmax.xlane.f32.xlu0 %v6266
        %v6268 = vpop.xlane.xlu0 %6267
        %v6269 = vsel %vm849, %v6253, -inf
        %6270 = vmax.xlane.f32.xlu0 %v6269
        %v6271 = vpop.xlane.xlu0 %6270
        %v6272 = vsel %vm849, %v6254, -inf
        %6273 = vmax.xlane.f32.xlu0 %v6272
        %v6274 = vpop.xlane.xlu0 %6273
        %v6275 = vsel %vm849, %v6255, -inf
        %6276 = vmax.xlane.f32.xlu0 %v6275
        %v6277 = vpop.xlane.xlu0 %6276
        %v6278 = vsel %vm849, %v6256, -inf
        %6279 = vmax.xlane.f32.xlu0 %v6278
        %v6280 = vpop.xlane.xlu0 %6279
        %v6281 = vsub.f32 %v6249, %v6259
        %v6282 = vsub.f32 %v6250, %v6262
        %v6283 = vsub.f32 %v6251, %v6265
        %v6284 = vsub.f32 %v6252, %v6268
        %v6285 = vsub.f32 %v6253, %v6271
        %v6286 = vsub.f32 %v6254, %v6274
        %v6287 = vsub.f32 %v6255, %v6277
        %v6288 = vsub.f32 %v6256, %v6280
        %v6289 = vmul.f32 %v6281, 1.442695
        %v6290 = vpow.pop %v6289
        %v6291 = vmul.f32 %v6282, 1.442695
        %v6292 = vpow.pop %v6291
        %v6293 = vmul.f32 %v6283, 1.442695
        %v6294 = vpow.pop %v6293
        %v6295 = vmul.f32 %v6284, 1.442695
        %v6296 = vpow.pop %v6295
        %v6297 = vmul.f32 %v6285, 1.442695
        %v6298 = vpow.pop %v6297
        %v6299 = vmul.f32 %v6286, 1.442695
        %v6300 = vpow.pop %v6299
        %v6301 = vmul.f32 %v6287, 1.442695
        %v6302 = vpow.pop %v6301
        %v6303 = vmul.f32 %v6288, 1.442695
        %v6304 = vpow.pop %v6303
        %v6305 = vsel %vm849, %v6290, 0.0
        %6306 = vadd.xlane.f32.xlu0 %v6305
        %v6307 = vpop.xlane.xlu0 %6306
        %v6308 = vsel %vm849, %v6292, 0.0
        %6309 = vadd.xlane.f32.xlu0 %v6308
        %v6310 = vpop.xlane.xlu0 %6309
        %v6311 = vsel %vm849, %v6294, 0.0
        %6312 = vadd.xlane.f32.xlu0 %v6311
        %v6313 = vpop.xlane.xlu0 %6312
        %v6314 = vsel %vm849, %v6296, 0.0
        %6315 = vadd.xlane.f32.xlu0 %v6314
        %v6316 = vpop.xlane.xlu0 %6315
        %v6317 = vsel %vm849, %v6298, 0.0
        %6318 = vadd.xlane.f32.xlu0 %v6317
        %v6319 = vpop.xlane.xlu0 %6318
        %v6320 = vsel %vm849, %v6300, 0.0
        %6321 = vadd.xlane.f32.xlu0 %v6320
        %v6322 = vpop.xlane.xlu0 %6321
        %v6323 = vsel %vm849, %v6302, 0.0
        %6324 = vadd.xlane.f32.xlu0 %v6323
        %v6325 = vpop.xlane.xlu0 %6324
        %v6326 = vsel %vm849, %v6304, 0.0
        %6327 = vadd.xlane.f32.xlu0 %v6326
        %v6328 = vpop.xlane.xlu0 %6327
        %v6329 = vrcp.pop %v6307
        %v6330 = vrcp.pop %v6310
        %v6331 = vrcp.pop %v6313
        %v6332 = vrcp.pop %v6316
        %v6333 = vrcp.pop %v6319
        %v6334 = vrcp.pop %v6322
        %v6335 = vrcp.pop %v6325
        %v6336 = vrcp.pop %v6328
        %v6337 = vmul.f32 %v6290, %v6329
        %v6338 = vmul.f32 %v6292, %v6330
        %v6339 = vmul.f32 %v6294, %v6331
        %v6340 = vmul.f32 %v6296, %v6332
        %v6341 = vmul.f32 %v6298, %v6333
        %v6342 = vmul.f32 %v6300, %v6334
        %v6343 = vmul.f32 %v6302, %v6335
        %v6344 = vmul.f32 %v6304, %v6336
        %v6345 = vpack.c.bf16 %v6338, %v6337
        %v6346 = vpack.c.bf16 %v6340, %v6339
        %v6347 = vpack.c.bf16 %v6342, %v6341
        %v6348 = vpack.c.bf16 %v6344, %v6343
        %6349 = vrot.lane.b32.xlu0 %v5544, 64
        %v6350 = vpop.permute.xlu0 %6349
        %6351 = vrot.lane.b32.xlu0 %v5545, 64
        %v6352 = vpop.permute.xlu0 %6351
        %6353 = vrot.lane.b32.xlu0 %v5546, 64
        %v6354 = vpop.permute.xlu0 %6353
        %6355 = vrot.lane.b32.xlu0 %v5547, 64
        %v6356 = vpop.permute.xlu0 %6355
        %v6362 = vsel %vm849, %v6345, 0
        %v6365 = vsel %vm849, %v6346, 0
        %v6368 = vsel %vm849, %v6347, 0
        %v6371 = vsel %vm849, %v6348, 0
        %6373 = vmatprep.subr.bf16.mxu0 0
        %6374 = vmatpush1.bf16.msra.mxu0 %v6350
        %6375 = vmatprep.subr.bf16.mxu0 0
        %6376 = vmatpush1.bf16.msra.mxu0 %v6352
        %6377 = vmatprep.subr.bf16.mxu0 0
        %6378 = vmatpush1.bf16.msra.mxu0 %v6354
        %6379 = vmatprep.subr.bf16.mxu0 0
        %6380 = vmatpush1.bf16.msra.mxu0 %v6356
        %6381 = vmatprep.subr.bf16.mxu0 0
        %6382 = vmatpush1.bf16.msra.mxu0 0
        %6383 = vmatprep.subr.bf16.mxu0 0
        %6384 = vmatpush1.bf16.msra.mxu0 0
        %6385 = vmatprep.subr.bf16.mxu0 0
        %6386 = vmatpush1.bf16.msra.mxu0 0
        %6387 = vmatprep.subr.bf16.mxu0 0
        %6388 = vmatpush1.bf16.msra.mxu0 0
        %6389 = vmatprep.subr.bf16.mxu0 0
        %6390 = vmatpush1.bf16.msra.mxu0 0
        %6391 = vmatprep.subr.bf16.mxu0 0
        %6392 = vmatpush1.bf16.msra.mxu0 0
        %6393 = vmatprep.subr.bf16.mxu0 0
        %6394 = vmatpush1.bf16.msra.mxu0 0
        %6395 = vmatprep.subr.bf16.mxu0 0
        %6396 = vmatpush1.bf16.msra.mxu0 0
        %6397 = vmatprep.subr.bf16.mxu0 0
        %6398 = vmatpush1.bf16.msra.mxu0 0
        %6399 = vmatprep.subr.bf16.mxu0 0
        %6400 = vmatpush1.bf16.msra.mxu0 0
        %6401 = vmatprep.subr.bf16.mxu0 0
        %6402 = vmatpush1.bf16.msra.mxu0 0
        %6403 = vmatprep.subr.bf16.mxu0 0
        %6404 = vmatpush1.bf16.msra.mxu0 0
        %6405 = vmatprep.mubr.bf16.mxu0 0
        %6406 = vmatmul.mubr.bf16.gmra.mrb[0].mxu0 %v6362
        %v6407 = vpop.f32.mrb[0].mxu0
        %v6408 = vadd.f32 0.0, %v6407
        %v6409 = vpop.f32.mrb[0].mxu0
        %v6410 = vpop.f32.mrb[0].mxu0
        %v6411 = vadd.f32 0.0, %v6410
        %v6412 = vpop.f32.mrb[0].mxu0
        %6413 = vmatprep.mubr.bf16.mxu0 0
        %6414 = vmatmul.mubr.bf16.gmra.mrb[0].mxu0 %v6365
        %v6415 = vpop.f32.mrb[0].mxu0
        %v6416 = vadd.f32 0.0, %v6415
        %v6417 = vpop.f32.mrb[0].mxu0
        %v6418 = vpop.f32.mrb[0].mxu0
        %v6419 = vadd.f32 0.0, %v6418
        %v6420 = vpop.f32.mrb[0].mxu0
        %6421 = vmatprep.mubr.bf16.mxu0 0
        %6422 = vmatmul.mubr.bf16.gmra.mrb[0].mxu0 %v6368
        %v6423 = vpop.f32.mrb[0].mxu0
        %v6424 = vadd.f32 0.0, %v6423
        %v6425 = vpop.f32.mrb[0].mxu0
        %v6426 = vpop.f32.mrb[0].mxu0
        %v6427 = vadd.f32 0.0, %v6426
        %v6428 = vpop.f32.mrb[0].mxu0
        %6429 = vmatprep.mubr.bf16.mxu0 0
        %6430 = vmatmul.mubr.bf16.gmra.mrb[0].mxu0 %v6371
        %v6431 = vpop.f32.mrb[0].mxu0
        %v6432 = vadd.f32 0.0, %v6431
        %v6433 = vpop.f32.mrb[0].mxu0
        %v6434 = vpop.f32.mrb[0].mxu0
        %v6435 = vadd.f32 0.0, %v6434
        %v6436 = vpop.f32.mrb[0].mxu0
        %6437 = vdwg.mxu0
        %v6438 = vld [vmem:[%s1637] sm:$0xff]
        %v6439 = vld [vmem:[%s1637 + $0x8] sm:$0xff]
        %v6440 = vld [vmem:[%s1637 + $0x10] sm:$0xff]
        %v6441 = vld [vmem:[%s1637 + $0x18] sm:$0xff]
        %v6442 = vld [vmem:[%s1637 + $0x20] sm:$0xff]
        %v6443 = vld [vmem:[%s1637 + $0x28] sm:$0xff]
        %v6444 = vld [vmem:[%s1637 + $0x30] sm:$0xff]
        %v6445 = vld [vmem:[%s1637 + $0x38] sm:$0xff]
        %6446 = vrot.lane.b32.xlu0 %v5536, 32
        %v6447 = vpop.permute.xlu0 %6446
        %6448 = vrot.lane.b32.xlu0 %v5537, 32
        %v6449 = vpop.permute.xlu0 %6448
        %6450 = vrot.lane.b32.xlu0 %v5538, 32
        %v6451 = vpop.permute.xlu0 %6450
        %6452 = vrot.lane.b32.xlu0 %v5539, 32
        %v6453 = vpop.permute.xlu0 %6452
        %6454 = vrot.lane.b32.xlu0 %v5540, 32
        %v6455 = vpop.permute.xlu0 %6454
        %6456 = vrot.lane.b32.xlu0 %v5541, 32
        %v6457 = vpop.permute.xlu0 %6456
        %6458 = vrot.lane.b32.xlu0 %v5542, 32
        %v6459 = vpop.permute.xlu0 %6458
        %6460 = vrot.lane.b32.xlu0 %v5543, 32
        %v6461 = vpop.permute.xlu0 %6460
        %v6463 = vsel %vm751, %v6447, 0
        %v6466 = vsel %vm751, %v6449, 0
        %v6469 = vsel %vm751, %v6451, 0
        %v6472 = vsel %vm751, %v6453, 0
        %v6475 = vsel %vm751, %v6455, 0
        %v6478 = vsel %vm751, %v6457, 0
        %v6481 = vsel %vm751, %v6459, 0
        %v6484 = vsel %vm751, %v6461, 0
        %6486 = vmatprep.subr.bf16.mxu0 0
        %6487 = vmatpush1.bf16.xpose.msra.mxu0 %v6475
        %6488 = vmatprep.subr.bf16.mxu0 0
        %6489 = vmatpush1.bf16.xpose.msra.mxu0 %v6478
        %6490 = vmatprep.subr.bf16.mxu0 0
        %6491 = vmatpush1.bf16.xpose.msra.mxu0 %v6481
        %6492 = vmatprep.subr.bf16.mxu0 0
        %6493 = vmatpush1.bf16.xpose.msra.mxu0 %v6484
        %6494 = vmatprep.subr.bf16.mxu0 0
        %6495 = vmatpush1.bf16.xpose.msra.mxu0 0
        %6496 = vmatprep.subr.bf16.mxu0 0
        %6497 = vmatpush1.bf16.xpose.msra.mxu0 0
        %6498 = vmatprep.subr.bf16.mxu0 0
        %6499 = vmatpush1.bf16.xpose.msra.mxu0 0
        %6500 = vmatprep.subr.bf16.mxu0 0
        %6501 = vmatpush1.bf16.xpose.msra.mxu0 0
        %6502 = vmatprep.subr.bf16.mxu0 0
        %6503 = vmatpush1.bf16.xpose.msra.mxu0 0
        %6504 = vmatprep.subr.bf16.mxu0 0
        %6505 = vmatpush1.bf16.xpose.msra.mxu0 0
        %6506 = vmatprep.subr.bf16.mxu0 0
        %6507 = vmatpush1.bf16.xpose.msra.mxu0 0
        %6508 = vmatprep.subr.bf16.mxu0 0
        %6509 = vmatpush1.bf16.xpose.msra.mxu0 0
        %6510 = vmatprep.subr.bf16.mxu0 0
        %6511 = vmatpush1.bf16.xpose.msra.mxu0 0
        %6512 = vmatprep.subr.bf16.mxu0 0
        %6513 = vmatpush1.bf16.xpose.msra.mxu0 0
        %6514 = vmatprep.subr.bf16.mxu0 0
        %6515 = vmatpush1.bf16.xpose.msra.mxu0 0
        %6516 = vmatprep.subr.bf16.mxu0 0
        %6517 = vmatpush1.bf16.xpose.msra.mxu0 0
        %6518 = vmatprep.mubr.bf16.mxu0 0
        %6519 = vmatmul.mubr.bf16.gmra.mrb[0].mxu0 %v6463
        %v6520 = vpop.f32.mrb[0].mxu0
        %v6521 = vadd.f32 %v6438, %v6520
        %v6522 = vpop.f32.mrb[0].mxu0
        %v6523 = vpop.f32.mrb[0].mxu0
        %v6524 = vadd.f32 %v6439, %v6523
        %v6525 = vpop.f32.mrb[0].mxu0
        %6526 = vmatprep.mubr.bf16.mxu0 0
        %6527 = vmatmul.mubr.bf16.gmra.mrb[0].mxu0 %v6466
        %v6528 = vpop.f32.mrb[0].mxu0
        %v6529 = vadd.f32 %v6440, %v6528
        %v6530 = vpop.f32.mrb[0].mxu0
        %v6531 = vpop.f32.mrb[0].mxu0
        %v6532 = vadd.f32 %v6441, %v6531
        %v6533 = vpop.f32.mrb[0].mxu0
        %6534 = vmatprep.mubr.bf16.mxu0 0
        %6535 = vmatmul.mubr.bf16.gmra.mrb[0].mxu0 %v6469
        %v6536 = vpop.f32.mrb[0].mxu0
        %v6537 = vadd.f32 %v6442, %v6536
        %v6538 = vpop.f32.mrb[0].mxu0
        %v6539 = vpop.f32.mrb[0].mxu0
        %v6540 = vadd.f32 %v6443, %v6539
        %v6541 = vpop.f32.mrb[0].mxu0
        %6542 = vmatprep.mubr.bf16.mxu0 0
        %6543 = vmatmul.mubr.bf16.gmra.mrb[0].mxu0 %v6472
        %v6544 = vpop.f32.mrb[0].mxu0
        %v6545 = vadd.f32 %v6444, %v6544
        %v6546 = vpop.f32.mrb[0].mxu0
        %v6547 = vpop.f32.mrb[0].mxu0
        %v6548 = vadd.f32 %v6445, %v6547
        %v6549 = vpop.f32.mrb[0].mxu0
        %6550 = vdwg.mxu0
        %v6551 = vadd.f32 %v6521, %v5528
        %v6552 = vadd.f32 %v6524, %v5529
        %v6553 = vadd.f32 %v6529, %v5530
        %v6554 = vadd.f32 %v6532, %v5531
        %v6555 = vadd.f32 %v6537, %v5532
        %v6556 = vadd.f32 %v6540, %v5533
        %v6557 = vadd.f32 %v6545, %v5534
        %v6558 = vadd.f32 %v6548, %v5535
        %v6559 = vsel %vm849, %v6551, -inf
        %6560 = vmax.xlane.f32.xlu0 %v6559
        %v6561 = vpop.xlane.xlu0 %6560
        %v6562 = vsel %vm849, %v6552, -inf
        %6563 = vmax.xlane.f32.xlu0 %v6562
        %v6564 = vpop.xlane.xlu0 %6563
        %v6565 = vsel %vm849, %v6553, -inf
        %6566 = vmax.xlane.f32.xlu0 %v6565
        %v6567 = vpop.xlane.xlu0 %6566
        %v6568 = vsel %vm849, %v6554, -inf
        %6569 = vmax.xlane.f32.xlu0 %v6568
        %v6570 = vpop.xlane.xlu0 %6569
        %v6571 = vsel %vm849, %v6555, -inf
        %6572 = vmax.xlane.f32.xlu0 %v6571
        %v6573 = vpop.xlane.xlu0 %6572
        %v6574 = vsel %vm849, %v6556, -inf
        %6575 = vmax.xlane.f32.xlu0 %v6574
        %v6576 = vpop.xlane.xlu0 %6575
        %v6577 = vsel %vm849, %v6557, -inf
        %6578 = vmax.xlane.f32.xlu0 %v6577
        %v6579 = vpop.xlane.xlu0 %6578
        %v6580 = vsel %vm849, %v6558, -inf
        %6581 = vmax.xlane.f32.xlu0 %v6580
        %v6582 = vpop.xlane.xlu0 %6581
        %v6583 = vsub.f32 %v6551, %v6561
        %v6584 = vsub.f32 %v6552, %v6564
        %v6585 = vsub.f32 %v6553, %v6567
        %v6586 = vsub.f32 %v6554, %v6570
        %v6587 = vsub.f32 %v6555, %v6573
        %v6588 = vsub.f32 %v6556, %v6576
        %v6589 = vsub.f32 %v6557, %v6579
        %v6590 = vsub.f32 %v6558, %v6582
        %v6591 = vmul.f32 %v6583, 1.442695
        %v6592 = vpow.pop %v6591
        %v6593 = vmul.f32 %v6584, 1.442695
        %v6594 = vpow.pop %v6593
        %v6595 = vmul.f32 %v6585, 1.442695
        %v6596 = vpow.pop %v6595
        %v6597 = vmul.f32 %v6586, 1.442695
        %v6598 = vpow.pop %v6597
        %v6599 = vmul.f32 %v6587, 1.442695
        %v6600 = vpow.pop %v6599
        %v6601 = vmul.f32 %v6588, 1.442695
        %v6602 = vpow.pop %v6601
        %v6603 = vmul.f32 %v6589, 1.442695
        %v6604 = vpow.pop %v6603
        %v6605 = vmul.f32 %v6590, 1.442695
        %v6606 = vpow.pop %v6605
        %v6607 = vsel %vm849, %v6592, 0.0
        %6608 = vadd.xlane.f32.xlu0 %v6607
        %v6609 = vpop.xlane.xlu0 %6608
        %v6610 = vsel %vm849, %v6594, 0.0
        %6611 = vadd.xlane.f32.xlu0 %v6610
        %v6612 = vpop.xlane.xlu0 %6611
        %v6613 = vsel %vm849, %v6596, 0.0
        %6614 = vadd.xlane.f32.xlu0 %v6613
        %v6615 = vpop.xlane.xlu0 %6614
        %v6616 = vsel %vm849, %v6598, 0.0
        %6617 = vadd.xlane.f32.xlu0 %v6616
        %v6618 = vpop.xlane.xlu0 %6617
        %v6619 = vsel %vm849, %v6600, 0.0
        %6620 = vadd.xlane.f32.xlu0 %v6619
        %v6621 = vpop.xlane.xlu0 %6620
        %v6622 = vsel %vm849, %v6602, 0.0
        %6623 = vadd.xlane.f32.xlu0 %v6622
        %v6624 = vpop.xlane.xlu0 %6623
        %v6625 = vsel %vm849, %v6604, 0.0
        %6626 = vadd.xlane.f32.xlu0 %v6625
        %v6627 = vpop.xlane.xlu0 %6626
        %v6628 = vsel %vm849, %v6606, 0.0
        %6629 = vadd.xlane.f32.xlu0 %v6628
        %v6630 = vpop.xlane.xlu0 %6629
        %v6631 = vrcp.pop %v6609
        %v6632 = vrcp.pop %v6612
        %v6633 = vrcp.pop %v6615
        %v6634 = vrcp.pop %v6618
        %v6635 = vrcp.pop %v6621
        %v6636 = vrcp.pop %v6624
        %v6637 = vrcp.pop %v6627
        %v6638 = vrcp.pop %v6630
        %v6639 = vmul.f32 %v6592, %v6631
        %v6640 = vmul.f32 %v6594, %v6632
        %v6641 = vmul.f32 %v6596, %v6633
        %v6642 = vmul.f32 %v6598, %v6634
        %v6643 = vmul.f32 %v6600, %v6635
        %v6644 = vmul.f32 %v6602, %v6636
        %v6645 = vmul.f32 %v6604, %v6637
        %v6646 = vmul.f32 %v6606, %v6638
        %v6647 = vpack.c.bf16 %v6640, %v6639
        %v6648 = vpack.c.bf16 %v6642, %v6641
        %v6649 = vpack.c.bf16 %v6644, %v6643
        %v6650 = vpack.c.bf16 %v6646, %v6645
        %6651 = vrot.lane.b32.xlu0 %v5544, 32
        %v6652 = vpop.permute.xlu0 %6651
        %6653 = vrot.lane.b32.xlu0 %v5545, 32
        %v6654 = vpop.permute.xlu0 %6653
        %6655 = vrot.lane.b32.xlu0 %v5546, 32
        %v6656 = vpop.permute.xlu0 %6655
        %6657 = vrot.lane.b32.xlu0 %v5547, 32
        %v6658 = vpop.permute.xlu0 %6657
        %v6664 = vsel %vm849, %v6647, 0
        %v6667 = vsel %vm849, %v6648, 0
        %v6670 = vsel %vm849, %v6649, 0
        %v6673 = vsel %vm849, %v6650, 0
        %6675 = vmatprep.subr.bf16.mxu0 0
        %6676 = vmatpush1.bf16.msra.mxu0 %v6652
        %6677 = vmatprep.subr.bf16.mxu0 0
        %6678 = vmatpush1.bf16.msra.mxu0 %v6654
        %6679 = vmatprep.subr.bf16.mxu0 0
        %6680 = vmatpush1.bf16.msra.mxu0 %v6656
        %6681 = vmatprep.subr.bf16.mxu0 0
        %6682 = vmatpush1.bf16.msra.mxu0 %v6658
        %6683 = vmatprep.subr.bf16.mxu0 0
        %6684 = vmatpush1.bf16.msra.mxu0 0
        %6685 = vmatprep.subr.bf16.mxu0 0
        %6686 = vmatpush1.bf16.msra.mxu0 0
        %6687 = vmatprep.subr.bf16.mxu0 0
        %6688 = vmatpush1.bf16.msra.mxu0 0
        %6689 = vmatprep.subr.bf16.mxu0 0
        %6690 = vmatpush1.bf16.msra.mxu0 0
        %6691 = vmatprep.subr.bf16.mxu0 0
        %6692 = vmatpush1.bf16.msra.mxu0 0
        %6693 = vmatprep.subr.bf16.mxu0 0
        %6694 = vmatpush1.bf16.msra.mxu0 0
        %6695 = vmatprep.subr.bf16.mxu0 0
        %6696 = vmatpush1.bf16.msra.mxu0 0
        %6697 = vmatprep.subr.bf16.mxu0 0
        %6698 = vmatpush1.bf16.msra.mxu0 0
        %6699 = vmatprep.subr.bf16.mxu0 0
        %6700 = vmatpush1.bf16.msra.mxu0 0
        %6701 = vmatprep.subr.bf16.mxu0 0
        %6702 = vmatpush1.bf16.msra.mxu0 0
        %6703 = vmatprep.subr.bf16.mxu0 0
        %6704 = vmatpush1.bf16.msra.mxu0 0
        %6705 = vmatprep.subr.bf16.mxu0 0
        %6706 = vmatpush1.bf16.msra.mxu0 0
        %6707 = vmatprep.mubr.bf16.mxu0 0
        %6708 = vmatmul.mubr.bf16.gmra.mrb[0].mxu0 %v6664
        %v6709 = vpop.f32.mrb[0].mxu0
        %v6710 = vadd.f32 0.0, %v6709
        %v6711 = vpop.f32.mrb[0].mxu0
        %v6712 = vpop.f32.mrb[0].mxu0
        %v6713 = vadd.f32 0.0, %v6712
        %v6714 = vpop.f32.mrb[0].mxu0
        %6715 = vmatprep.mubr.bf16.mxu0 0
        %6716 = vmatmul.mubr.bf16.gmra.mrb[0].mxu0 %v6667
        %v6717 = vpop.f32.mrb[0].mxu0
        %v6718 = vadd.f32 0.0, %v6717
        %v6719 = vpop.f32.mrb[0].mxu0
        %v6720 = vpop.f32.mrb[0].mxu0
        %v6721 = vadd.f32 0.0, %v6720
        %v6722 = vpop.f32.mrb[0].mxu0
        %6723 = vmatprep.mubr.bf16.mxu0 0
        %6724 = vmatmul.mubr.bf16.gmra.mrb[0].mxu0 %v6670
        %v6725 = vpop.f32.mrb[0].mxu0
        %v6726 = vadd.f32 0.0, %v6725
        %v6727 = vpop.f32.mrb[0].mxu0
        %v6728 = vpop.f32.mrb[0].mxu0
        %v6729 = vadd.f32 0.0, %v6728
        %v6730 = vpop.f32.mrb[0].mxu0
        %6731 = vmatprep.mubr.bf16.mxu0 0
        %6732 = vmatmul.mubr.bf16.gmra.mrb[0].mxu0 %v6673
        %v6733 = vpop.f32.mrb[0].mxu0
        %v6734 = vadd.f32 0.0, %v6733
        %v6735 = vpop.f32.mrb[0].mxu0
        %v6736 = vpop.f32.mrb[0].mxu0
        %v6737 = vadd.f32 0.0, %v6736
        %v6738 = vpop.f32.mrb[0].mxu0
        %6739 = vdwg.mxu0
        %6748 = vrot.lane.b32.xlu0 %v6106, 32
        %v6749 = vpop.permute.xlu0 %6748
        %6750 = vrot.lane.b32.xlu0 %v6109, 32
        %v6751 = vpop.permute.xlu0 %6750
        %6752 = vrot.lane.b32.xlu0 %v6114, 32
        %v6753 = vpop.permute.xlu0 %6752
        %6754 = vrot.lane.b32.xlu0 %v6117, 32
        %v6755 = vpop.permute.xlu0 %6754
        %6756 = vrot.lane.b32.xlu0 %v6122, 32
        %v6757 = vpop.permute.xlu0 %6756
        %6758 = vrot.lane.b32.xlu0 %v6125, 32
        %v6759 = vpop.permute.xlu0 %6758
        %6760 = vrot.lane.b32.xlu0 %v6130, 32
        %v6761 = vpop.permute.xlu0 %6760
        %6762 = vrot.lane.b32.xlu0 %v6133, 32
        %v6763 = vpop.permute.xlu0 %6762
        %6780 = vrot.lane.b32.xlu0 %v6408, 64
        %v6781 = vpop.permute.xlu0 %6780
        %6782 = vrot.lane.b32.xlu0 %v6411, 64
        %v6783 = vpop.permute.xlu0 %6782
        %6784 = vrot.lane.b32.xlu0 %v6416, 64
        %v6785 = vpop.permute.xlu0 %6784
        %6786 = vrot.lane.b32.xlu0 %v6419, 64
        %v6787 = vpop.permute.xlu0 %6786
        %6788 = vrot.lane.b32.xlu0 %v6424, 64
        %v6789 = vpop.permute.xlu0 %6788
        %6790 = vrot.lane.b32.xlu0 %v6427, 64
        %v6791 = vpop.permute.xlu0 %6790
        %6792 = vrot.lane.b32.xlu0 %v6432, 64
        %v6793 = vpop.permute.xlu0 %6792
        %6794 = vrot.lane.b32.xlu0 %v6435, 64
        %v6795 = vpop.permute.xlu0 %6794
        %6812 = vrot.lane.b32.xlu0 %v6710, 96
        %v6813 = vpop.permute.xlu0 %6812
        %6814 = vrot.lane.b32.xlu0 %v6713, 96
        %v6815 = vpop.permute.xlu0 %6814
        %6816 = vrot.lane.b32.xlu0 %v6718, 96
        %v6817 = vpop.permute.xlu0 %6816
        %6818 = vrot.lane.b32.xlu0 %v6721, 96
        %v6819 = vpop.permute.xlu0 %6818
        %6820 = vrot.lane.b32.xlu0 %v6726, 96
        %v6821 = vpop.permute.xlu0 %6820
        %6822 = vrot.lane.b32.xlu0 %v6729, 96
        %v6823 = vpop.permute.xlu0 %6822
        %6824 = vrot.lane.b32.xlu0 %v6734, 96
        %v6825 = vpop.permute.xlu0 %6824
        %6826 = vrot.lane.b32.xlu0 %v6737, 96
        %v6827 = vpop.permute.xlu0 %6826
        %v6836 = vsel %vm751, %v5792, %v6749
        %v6837 = vsel %vm751, %v5795, %v6751
        %v6838 = vsel %vm751, %v5800, %v6753
        %v6839 = vsel %vm751, %v5803, %v6755
        %v6840 = vsel %vm751, %v5808, %v6757
        %v6841 = vsel %vm751, %v5811, %v6759
        %v6842 = vsel %vm751, %v5816, %v6761
        %v6843 = vsel %vm751, %v5819, %v6763
        %v6844 = vsel %vm849, %v6836, %v6781
        %v6845 = vsel %vm849, %v6837, %v6783
        %v6846 = vsel %vm849, %v6838, %v6785
        %v6847 = vsel %vm849, %v6839, %v6787
        %v6848 = vsel %vm849, %v6840, %v6789
        %v6849 = vsel %vm849, %v6841, %v6791
        %v6850 = vsel %vm849, %v6842, %v6793
        %v6851 = vsel %vm849, %v6843, %v6795
        %v6852 = vsel %vm2052, %v6844, %v6813
        %v6853 = vsel %vm2052, %v6845, %v6815
        %v6854 = vsel %vm2052, %v6846, %v6817
        %v6855 = vsel %vm2052, %v6847, %v6819
        %v6856 = vsel %vm2052, %v6848, %v6821
        %v6857 = vsel %vm2052, %v6849, %v6823
        %v6858 = vsel %vm2052, %v6850, %v6825
        %v6859 = vsel %vm2052, %v6851, %v6827
        %v6860 = vpack.c.bf16 %v6853, %v6852
        %v6861 = vpack.c.bf16 %v6855, %v6854
        %v6862 = vpack.c.bf16 %v6857, %v6856
        %v6863 = vpack.c.bf16 %v6859, %v6858
        %6864 = vmatprep.subr.bf16.mxu0 0
        %6865 = vmatpush1.bf16.msra.mxu0 %v2103
        %6866 = vmatprep.subr.bf16.mxu0 0
        %6867 = vmatpush1.bf16.msra.mxu0 %v2104
        %6868 = vmatprep.subr.bf16.mxu0 0
        %6869 = vmatpush1.bf16.msra.mxu0 %v2105
        %6870 = vmatprep.subr.bf16.mxu0 0
        %6871 = vmatpush1.bf16.msra.mxu0 %v2106
        %6872 = vmatprep.subr.bf16.mxu0 0
        %6873 = vmatpush1.bf16.msra.mxu0 %v2107
        %6874 = vmatprep.subr.bf16.mxu0 0
        %6875 = vmatpush1.bf16.msra.mxu0 %v2108
        %6876 = vmatprep.subr.bf16.mxu0 0
        %6877 = vmatpush1.bf16.msra.mxu0 %v2109
        %6878 = vmatprep.subr.bf16.mxu0 0
        %6879 = vmatpush1.bf16.msra.mxu0 %v2110
        %6880 = vmatprep.subr.bf16.mxu0 0
        %6881 = vmatpush1.bf16.msra.mxu0 0
        %6882 = vmatprep.subr.bf16.mxu0 0
        %6883 = vmatpush1.bf16.msra.mxu0 0
        %6884 = vmatprep.subr.bf16.mxu0 0
        %6885 = vmatpush1.bf16.msra.mxu0 0
        %6886 = vmatprep.subr.bf16.mxu0 0
        %6887 = vmatpush1.bf16.msra.mxu0 0
        %6888 = vmatprep.subr.bf16.mxu0 0
        %6889 = vmatpush1.bf16.msra.mxu0 0
        %6890 = vmatprep.subr.bf16.mxu0 0
        %6891 = vmatpush1.bf16.msra.mxu0 0
        %6892 = vmatprep.subr.bf16.mxu0 0
        %6893 = vmatpush1.bf16.msra.mxu0 0
        %6894 = vmatprep.subr.bf16.mxu0 0
        %6895 = vmatpush1.bf16.msra.mxu0 0
        %6896 = vmatprep.mubr.bf16.mxu0 0
        %6897 = vmatmul.mubr.bf16.gmra.mrb[0].mxu0 %v6860
        %v6898 = vpop.f32.mrb[0].mxu0
        %v6899 = vadd.f32 %v2069, %v6898
        %v6900 = vpop.f32.mrb[0].mxu0
        %v6901 = vpop.f32.mrb[0].mxu0
        %v6902 = vadd.f32 %v2069, %v6901
        %v6903 = vpop.f32.mrb[0].mxu0
        %6904 = vmatprep.mubr.bf16.mxu0 0
        %6905 = vmatmul.mubr.bf16.gmra.mrb[0].mxu0 %v6861
        %v6906 = vpop.f32.mrb[0].mxu0
        %v6907 = vadd.f32 %v2069, %v6906
        %v6908 = vpop.f32.mrb[0].mxu0
        %v6909 = vpop.f32.mrb[0].mxu0
        %v6910 = vadd.f32 %v2069, %v6909
        %v6911 = vpop.f32.mrb[0].mxu0
        %6912 = vmatprep.mubr.bf16.mxu0 0
        %6913 = vmatmul.mubr.bf16.gmra.mrb[0].mxu0 %v6862
        %v6914 = vpop.f32.mrb[0].mxu0
        %v6915 = vadd.f32 %v2069, %v6914
        %v6916 = vpop.f32.mrb[0].mxu0
        %v6917 = vpop.f32.mrb[0].mxu0
        %v6918 = vadd.f32 %v2069, %v6917
        %v6919 = vpop.f32.mrb[0].mxu0
        %6920 = vmatprep.mubr.bf16.mxu0 0
        %6921 = vmatmul.mubr.bf16.gmra.mrb[0].mxu0 %v6863
        %v6922 = vpop.f32.mrb[0].mxu0
        %v6923 = vadd.f32 %v2069, %v6922
        %v6924 = vpop.f32.mrb[0].mxu0
        %v6925 = vpop.f32.mrb[0].mxu0
        %v6926 = vadd.f32 %v2069, %v6925
        %v6927 = vpop.f32.mrb[0].mxu0
        %6928 = vdwg.mxu0
        %s6929 = scalar_lea.vmem %s355, 192 [#allocation11]
        %6930 = vst [vmem:[%s6929] sm:$0xff] %v6899
        %6931 = vst [vmem:[%s6929 + $0x8] sm:$0xff] %v6902
        %6932 = vst [vmem:[%s6929 + $0x10] sm:$0xff] %v6907
        %6933 = vst [vmem:[%s6929 + $0x18] sm:$0xff] %v6910
        %6934 = vst [vmem:[%s6929 + $0x20] sm:$0xff] %v6915
        %6935 = vst [vmem:[%s6929 + $0x28] sm:$0xff] %v6918
        %6936 = vst [vmem:[%s6929 + $0x30] sm:$0xff] %v6923
        %6937 = vst [vmem:[%s6929 + $0x38] sm:$0xff] %v6926
        %s6938 = sand.u32 %s186, 1
        %s6939 = scalar_lea.sflag [#allocation4], %s6938
        %s6940 = sand.u32 %s186, 1
        %s6941 = smul.addr %s6940, 256
        %s6942 = scalar_lea.vmem [#allocation11], %s6941
        // Predicated region
        $region69: #{tpu_custom_call.1} parent=47 // pred_check
          %p6943 = pneg %p196
        $region70: #{tpu_custom_call.1} parent=47 // pred_check_branch
          %6945 = sbr.rel (%p6943) target = $region72
        $region71: #{tpu_custom_call.1} parent=47 // pred_region
          %s6946 = smul.u32 4, %s26
          %s6948 = ssub.s32 4096, 4096
          %6949 = vsyncadd %s6939, %s6948
          %s6950 = smul.addr %s6946, 8
          %s6951 = smul.addr %s6950, 128
          %s6952 = scalar_lea.hbm %s7, %s6951
          %s6953 = sshll.u32 %s6942, 4
          %s6954 = int_to_ptr.vmem [resolvable:$true] %s6953
          %6959 = dma.vmem_to_hbm [thread:$0]  %s6954, 4096, %s6952, %s6939, 128, 128, 8
        $region72: #{tpu_custom_call.1} parent=47 // pred_fallthru
          _
      $region48: #{tpu_custom_call.1} parent=5 // pred_fallthru
        _
      %p6960 = scmp.le.s32.totalorder 2, %s21
      // Predicated region
      $region73: #{tpu_custom_call.1} parent=5 // pred_check
        %p6961 = pneg %p6960
      $region74: #{tpu_custom_call.1} parent=5 // pred_check_branch
        %6963 = sbr.rel (%p6961) target = $region76
      $region75: #{tpu_custom_call.1} parent=5 // pred_region
        %s6964 = ssub.s32 %s21, 2
        // Predicated region
        $region77: #{tpu_custom_call.1} parent=75 // pred_check
          %p6965 = pneg %p202
        $region78: #{tpu_custom_call.1} parent=75 // pred_check_branch
          %6967 = sbr.rel (%p6965) target = $region80
        $region79: #{tpu_custom_call.1} parent=75 // pred_region
          %s6968 = sand.u32 %s187, 1
          %s6969 = scalar_lea.sflag [#allocation4], %s6968
          %s6970 = sand.u32 %s187, 1
          %s6971 = smul.addr %s6970, 256
          %s6972 = scalar_lea.vmem [#allocation11], %s6971
          %6973 = dma.done %s6969, 4096
        $region80: #{tpu_custom_call.1} parent=75 // pred_fallthru
          _
      $region76: #{tpu_custom_call.1} parent=5 // pred_fallthru
        _
    $region6: #{tpu_custom_call.1} parent=1 // loop_footer
      %s25 = sadd.s32 1, %s21
    $region7: #{tpu_custom_call.1} parent=1 // loop_footer_branch
      %20 = sbr.rel target = $region3
    $region8: #{tpu_custom_call.1} parent=1 // loop_exit
      _
    %6974 = vsyncpa [#allocation3], 1
    %s6975 = scalar_lea.sflag [#allocation3], 1
    %6976 = vsyncpa %s6975, 1
    %6977 = vsyncpa [#allocation6], 1
    %6978 = vsyncpa [#allocation9], 1
    %6979 = vsyncpa [#allocation4], 1
    %s6980 = scalar_lea.sflag [#allocation4], 1
    %6981 = vsyncpa %s6980, 1

</llo_original>
